<compile_context>
chip_gen: v5e
topology: v5e:2x2
jax: 0.10.0
libtpu: 0.0.40
codegen_flags: <defaults>
</compile_context>

<pallas_src>
import math
import jax
import jax.numpy as jnp
from jax.experimental import pallas as pl
from jax.experimental.pallas import tpu as pltpu

# ------------------ configuration (from Vit_MLP2) ------------------
B = 2                                   # batch
IN_CH = 3                               # in_channels
IMG = (10, 10, 40)                      # img_size (D, H, W)
PATCH = (10, 10, 20)                    # patch_size
GRID3 = tuple(i // p for i, p in zip(IMG, PATCH))   # (1, 1, 2)
SEQ = GRID3[0] * GRID3[1] * GRID3[2]    # 2 tokens per sample
HIDDEN = 128
MLP_DIM = 256
NUM_LAYERS = 3
NUM_HEADS = 16
HEAD_DIM = HIDDEN // NUM_HEADS          # 8
TOK = B * SEQ                           # 4 tokens total (batch-flattened)
PATCH_DIM = IN_CH * PATCH[0] * PATCH[1] * PATCH[2]      # 6000
PATCH_DIM_PAD = ((PATCH_DIM + 127) // 128) * 128        # 6016 (lane aligned, zero padded)
FLAT = SEQ * HIDDEN                     # 256
H1, H2, OUT = 512, 128, 3               # MLP head widths
LN_EPS = 1e-5                           # nn.LayerNorm default
BN_EPS = 1e-5                           # nn.BatchNorm1d default
NEG_INF = -1e30                         # cross-batch attention mask bias


# ------------------ in-kernel helpers ------------------
def _layernorm(x, gamma, beta):
    mu = jnp.mean(x, axis=-1, keepdims=True)
    xc = x - mu
    var = jnp.mean(xc * xc, axis=-1, keepdims=True)
    return xc * jax.lax.rsqrt(var + LN_EPS) * gamma + beta


# ------------------ wrapper-side constants ------------------
def _same_head_matrix():
    # M[c, c'] = 1/sqrt(HEAD_DIM) if channels c and c' belong to the same head, else 0.
    # (prod @ M)[.., c] = per-head scaled q.k dot product broadcast to the head's 8 lanes,
    # keeping every attention intermediate 128 lanes wide.
    r = jax.lax.broadcasted_iota(jnp.int32, (HIDDEN, HIDDEN), 0)
    c = jax.lax.broadcasted_iota(jnp.int32, (HIDDEN, HIDDEN), 1)
    m = (r // HEAD_DIM == c // HEAD_DIM).astype(jnp.float32)
    return m * (1.0 / math.sqrt(HEAD_DIM))


def _batch_mask_bias():
    # Row r = i*TOK + j over all (query i, key j) token pairs; -inf bias on cross-batch pairs
    # so the batch block-diagonal structure of attention falls out of one masked softmax.
    i = jnp.arange(TOK * TOK) // TOK
    j = jnp.arange(TOK * TOK) % TOK
    same = (i // SEQ) == (j // SEQ)
    return jnp.where(same, 0.0, NEG_INF).astype(jnp.float32).reshape(TOK * TOK, 1)


# ------------------ the fused kernel (grid over transformer layers) ------------------
def vit_mlp2_kernel(
        # step-invariant operands
        patches_ref, pe_w_ref, emb_ref, same_head_ref, nbias_ref,
        # per-layer operands (layer axis squeezed by BlockSpec)
        ln1g_ref, ln1b_ref, wqkv_ref, wo_ref, bo_ref,
        ln2g_ref, ln2b_ref, w1_ref, b1_ref, w2_ref, b2_ref,
        # final norm + MLP head operands
        fng_ref, fnb_ref,
        h1w_ref, h1b_ref, bn1s_ref, bn1h_ref,
        h2w_ref, h2b_ref, bn2s_ref, bn2h_ref,
        h3w_ref, h3b_ref,
        # output + carried residual stream
        out_ref, x_sc):
    f32 = jnp.float32
    bf16 = jnp.bfloat16
    layer = pl.program_id(0)

    # ---- patch embedding: Conv3d(k=stride=patch) folded into one matmul (layer 0 only) ----
    @pl.when(layer == 0)
    def _():
        pe = jnp.dot(patches_ref[...], pe_w_ref[...], preferred_element_type=f32)
        x_sc[...] = pe + emb_ref[...]      # conv bias + position embedding, pre-tiled (TOK,128)
        # TODO(synk): dropout_rate = 0 -> all dropouts are the identity (nothing to emit).

    # ---- transformer block `layer` ----
    x = x_sc[...]                                            # (TOK, HIDDEN) f32 residual

    # -- self-attention branch --
    hn = _layernorm(x, ln1g_ref[...], ln1b_ref[...])
    qkv = jnp.dot(hn.astype(bf16), wqkv_ref[...], preferred_element_type=f32)  # (TOK, 3*HIDDEN)
    q = qkv[:, 0 * HIDDEN:1 * HIDDEN]
    k = qkv[:, 1 * HIDDEN:2 * HIDDEN]
    v = qkv[:, 2 * HIDDEN:3 * HIDDEN]
    # all-pair elementwise q*k products, kept 128 lanes wide (broadcast, no slicing/concat)
    prod = (q[:, None, :] * k[None, :, :]).reshape(TOK * TOK, HIDDEN)          # (16, 128)
    # per-head scaled scores via block-diagonal matmul; mask cross-batch token pairs
    scores = jnp.dot(prod, same_head_ref[...], preferred_element_type=f32) + nbias_ref[...]
    s3 = scores.reshape(TOK, TOK, HIDDEN)                     # (query, key, head-lane)
    s3 = s3 - jnp.max(s3, axis=1, keepdims=True)
    p3 = jnp.exp(s3)
    p3 = p3 / jnp.sum(p3, axis=1, keepdims=True)              # masked keys contribute exactly 0
    ctx = jnp.sum(p3 * v[None, :, :], axis=1)                 # (TOK, HIDDEN)
    x = x + jnp.dot(ctx.astype(bf16), wo_ref[...], preferred_element_type=f32) + bo_ref[...]

    # -- MLP branch --
    h = _layernorm(x, ln2g_ref[...], ln2b_ref[...])
    h = jnp.dot(h.astype(bf16), w1_ref[...], preferred_element_type=f32) + b1_ref[...]
    h = 0.5 * h * (1.0 + jax.lax.erf(h / math.sqrt(2.0)))     # exact (erf) GELU
    h = jnp.dot(h.astype(bf16), w2_ref[...], preferred_element_type=f32) + b2_ref[...]
    x = x + h
    x_sc[...] = x                                             # carry residual to next grid step

    # ---- final LayerNorm + flatten + MLP head (last layer only) ----
    @pl.when(layer == NUM_LAYERS - 1)
    def _():
        xf = _layernorm(x, fng_ref[...], fnb_ref[...]).astype(bf16)
        x3 = xf.reshape(B, SEQ, HIDDEN)
        # nn.Flatten + Linear(SEQ*HIDDEN, H1) as a sum of per-token row-block matmuls
        # (no (B, SEQ*HIDDEN) lane-concat is ever materialised)
        hm = h1b_ref[...]
        for t in range(SEQ):
            hm = hm + jnp.dot(x3[:, t, :], h1w_ref[t], preferred_element_type=jnp.float32)
        hm = hm * bn1s_ref[...] + bn1h_ref[...]               # BatchNorm1d folded (eval stats)
        hm = jnp.where(hm >= 0.0, hm, 0.01 * hm)              # LeakyReLU(0.01)
        hm = jnp.dot(hm.astype(bf16), h2w_ref[...], preferred_element_type=jnp.float32)
        hm = hm + h2b_ref[...]
        hm = hm * bn2s_ref[...] + bn2h_ref[...]
        hm = jnp.where(hm >= 0.0, hm, 0.01 * hm)
        y = jnp.dot(hm, h3w_ref[...], preferred_element_type=jnp.float32) + h3b_ref[...]  # (B,3)
        # HailingDirectNorm: F.normalize(p=2, dim=1, eps=1e-12)
        nrm = jnp.sqrt(jnp.sum(y * y, axis=-1, keepdims=True))
        out_ref[...] = (y / jnp.maximum(nrm, 1e-12)).astype(out_ref.dtype)


# ------------------ wrapper ------------------
def extract_patches(x):
    # x: (B, C, D, H, W) -> (B*SEQ, PATCH_DIM_PAD) bf16; patch content order (C, pD, pH, pW)
    # and patch order (d, h, w) match Conv3d(k=stride=patch) + flatten(2).transpose(-1,-2).
    b = x.shape[0]
    pd, ph, pw = PATCH
    gd, gh, gw = GRID3
    x = x.reshape(b, IN_CH, gd, pd, gh, ph, gw, pw)
    x = x.transpose(0, 2, 4, 6, 1, 3, 5, 7)
    p = x.reshape(b * SEQ, PATCH_DIM)
    p = jnp.pad(p, ((0, 0), (0, PATCH_DIM_PAD - PATCH_DIM)))
    return p.astype(jnp.bfloat16)


@jax.jit
def vit_mlp2_forward(x, params):
    (pe_w, emb, ln1g, ln1b, wqkv, wo, bo, ln2g, ln2b, w1, b1, w2, b2,
     fng, fnb, h1w, h1b, bn1s, bn1h, h2w, h2b, bn2s, bn2h, h3w, h3b) = params

    patches = extract_patches(x)
    same_head = _same_head_matrix()
    nbias = _batch_mask_bias()

    def whole(arr):
        idx = (0,) * arr.ndim
        return pl.BlockSpec(arr.shape, lambda l, _i=idx: _i)

    def per_layer(arr):
        tail = arr.shape[1:]
        zeros = (0,) * len(tail)
        return pl.BlockSpec((None,) + tail, lambda l, _z=zeros: (l,) + _z)

    in_specs = [
        whole(patches), whole(pe_w), whole(emb), whole(same_head), whole(nbias),
        per_layer(ln1g), per_layer(ln1b), per_layer(wqkv), per_layer(wo), per_layer(bo),
        per_layer(ln2g), per_layer(ln2b), per_layer(w1), per_layer(b1),
        per_layer(w2), per_layer(b2),
        whole(fng), whole(fnb),
        whole(h1w), whole(h1b), whole(bn1s), whole(bn1h),
        whole(h2w), whole(h2b), whole(bn2s), whole(bn2h),
        whole(h3w), whole(h3b),
    ]

    return pl.pallas_call(
        vit_mlp2_kernel,
        out_shape=jax.ShapeDtypeStruct((B, OUT), jnp.float32),
        grid_spec=pltpu.PrefetchScalarGridSpec(
            num_scalar_prefetch=0,
            grid=(NUM_LAYERS,),
            in_specs=in_specs,
            out_specs=pl.BlockSpec((B, OUT), lambda l: (0, 0)),
            scratch_shapes=[pltpu.VMEM((TOK, HIDDEN), jnp.float32)],
        ),
        compiler_params=pltpu.CompilerParams(
            dimension_semantics=("arbitrary",),
            vmem_limit_bytes=32 * 1024 * 1024,
        ),
    )(patches, pe_w, emb, same_head, nbias,
      ln1g, ln1b, wqkv, wo, bo, ln2g, ln2b, w1, b1, w2, b2,
      fng, fnb, h1w, h1b, bn1s, bn1h, h2w, h2b, bn2s, bn2h, h3w, h3b)


# ------------------ deterministic parameter init ------------------
def init_params(key):
    f32, bf16 = jnp.float32, jnp.bfloat16

    def nrm(k, shape, scale=0.02):
        return (scale * jax.random.normal(k, shape)).astype(f32)

    ks = jax.random.split(key, 24)
    L = NUM_LAYERS

    # patch embedding: Conv3d weight reshaped to (PATCH_DIM, HIDDEN), zero-padded rows, bf16
    pe_w = jnp.pad(nrm(ks[0], (PATCH_DIM, HIDDEN)),
                   ((0, PATCH_DIM_PAD - PATCH_DIM), (0, 0))).astype(bf16)
    pe_b = nrm(ks[1], (1, HIDDEN))
    pos = nrm(ks[2], (SEQ, HIDDEN))
    emb = (jnp.tile(pos, (B, 1)) + pe_b).astype(f32)          # pre-tiled over batch

    ln1g = jnp.ones((L, 1, HIDDEN), f32)
    ln1b = jnp.zeros((L, 1, HIDDEN), f32)
    wqkv = nrm(ks[3], (L, HIDDEN, 3 * HIDDEN)).astype(bf16)   # fused q/k/v Linear (no bias)
    wo = nrm(ks[4], (L, HIDDEN, HIDDEN)).astype(bf16)
    bo = nrm(ks[5], (L, 1, HIDDEN))
    ln2g = jnp.ones((L, 1, HIDDEN), f32)
    ln2b = jnp.zeros((L, 1, HIDDEN), f32)
    w1 = nrm(ks[6], (L, HIDDEN, MLP_DIM)).astype(bf16)
    b1 = nrm(ks[7], (L, 1, MLP_DIM))
    w2 = nrm(ks[8], (L, MLP_DIM, HIDDEN)).astype(bf16)
    b2 = nrm(ks[9], (L, 1, HIDDEN))

    fng = jnp.ones((1, HIDDEN), f32)
    fnb = jnp.zeros((1, HIDDEN), f32)

    # MLP head; h1w stored as (SEQ, HIDDEN, H1) row blocks of the (SEQ*HIDDEN, H1) Linear
    h1w = nrm(ks[10], (SEQ, HIDDEN, H1)).astype(bf16)
    h1b = nrm(ks[11], (1, H1))
    h2w = nrm(ks[12], (H1, H2)).astype(bf16)
    h2b = nrm(ks[13], (1, H2))
    h3w = nrm(ks[14], (H2, OUT), scale=0.05)
    h3b = nrm(ks[15], (1, OUT), scale=0.1)

    # BatchNorm1d folded to per-channel scale/shift (eval-mode running stats)
    # TODO(synk): training-mode batch statistics are not implemented.
    def bn_fold(kg, kb, km, kv, n):
        gamma = 1.0 + 0.1 * jax.random.normal(kg, (n,))
        beta = 0.1 * jax.random.normal(kb, (n,))
        mean = 0.1 * jax.random.normal(km, (n,))
        var = 1.0 + 0.1 * jnp.abs(jax.random.normal(kv, (n,)))
        s = gamma / jnp.sqrt(var + BN_EPS)
        return (s.reshape(1, n).astype(f32), (beta - mean * s).reshape(1, n).astype(f32))

    bn1s, bn1h = bn_fold(ks[16], ks[17], ks[18], ks[19], H1)
    bn2s, bn2h = bn_fold(ks[20], ks[21], ks[22], ks[23], H2)

    return (pe_w, emb, ln1g, ln1b, wqkv, wo, bo, ln2g, ln2b, w1, b1, w2, b2,
            fng, fnb, h1w, h1b, bn1s, bn1h, h2w, h2b, bn2s, bn2h, h3w, h3b)


# ------------------ pure-JAX reference (for self-check) ------------------
def reference_forward(x, params):
    (pe_w, emb, ln1g, ln1b, wqkv, wo, bo, ln2g, ln2b, w1, b1, w2, b2,
     fng, fnb, h1w, h1b, bn1s, bn1h, h2w, h2b, bn2s, bn2h, h3w, h3b) = params
    f32 = jnp.float32

    def ln(t, g, bb):
        mu = jnp.mean(t, axis=-1, keepdims=True)
        var = jnp.mean((t - mu) ** 2, axis=-1, keepdims=True)
        return (t - mu) / jnp.sqrt(var + LN_EPS) * g + bb

    patches = extract_patches(x).astype(f32)
    tok = patches @ pe_w.astype(f32) + emb
    for l in range(NUM_LAYERS):
        h = ln(tok, ln1g[l], ln1b[l])
        qkv = h @ wqkv[l].astype(f32)
        q = qkv[:, :HIDDEN].reshape(B, SEQ, NUM_HEADS, HEAD_DIM)
        k = qkv[:, HIDDEN:2 * HIDDEN].reshape(B, SEQ, NUM_HEADS, HEAD_DIM)
        v = qkv[:, 2 * HIDDEN:].reshape(B, SEQ, NUM_HEADS, HEAD_DIM)
        s = jnp.einsum('bqhd,bkhd->bhqk', q, k) / math.sqrt(HEAD_DIM)
        p = jax.nn.softmax(s, axis=-1)
        o = jnp.einsum('bhqk,bkhd->bqhd', p, v).reshape(B * SEQ, HIDDEN)
        tok = tok + o @ wo[l].astype(f32) + bo[l]
        hm = ln(tok, ln2g[l], ln2b[l]) @ w1[l].astype(f32) + b1[l]
        hm = 0.5 * hm * (1.0 + jax.lax.erf(hm / math.sqrt(2.0)))
        tok = tok + hm @ w2[l].astype(f32) + b2[l]
    tok = ln(tok, fng, fnb)
    flat = tok.reshape(B, FLAT)
    hm = flat @ h1w.astype(f32).reshape(FLAT, H1) + h1b
    hm = hm * bn1s + bn1h
    hm = jnp.where(hm >= 0, hm, 0.01 * hm)
    hm = hm @ h2w.astype(f32) + h2b
    hm = hm * bn2s + bn2h
    hm = jnp.where(hm >= 0, hm, 0.01 * hm)
    y = hm @ h3w + h3b
    n = jnp.sqrt(jnp.sum(y * y, axis=-1, keepdims=True))
    return y / jnp.maximum(n, 1e-12)


if __name__ == "__main__":
    key = jax.random.PRNGKey(0)
    kx, kp = jax.random.split(key)
    x = jax.random.normal(kx, (B, IN_CH) + IMG, dtype=jnp.float32)   # NCDHW
    params = init_params(kp)

    out = jax.block_until_ready(vit_mlp2_forward(x, params))
    assert out.shape == (B, OUT)
    assert bool(jnp.all(jnp.isfinite(out)))

    with jax.default_matmul_precision("highest"):
        ref = jax.block_until_ready(reference_forward(x, params))
    # bf16 weight storage / bf16 MXU operands (applied per perf review) are numerics-changing
    # vs the f32 PyTorch math; 2e-2 tolerance on the L2-normalized 3-vector output.
    max_diff = float(jnp.max(jnp.abs(out - ref)))
    assert bool(jnp.allclose(out, ref, atol=2e-2, rtol=2e-2)), f"max|diff|={max_diff}"

    print("KERNEL_OK")
</pallas_src>

<mosaic_0001>
module attributes {stable_mosaic.version = 11 : i64} {
  func.func @vit_mlp2_kernel(%arg0: i32, %arg1: memref<4x6016xbf16, #tpu.memory_space<vmem>>, %arg2: memref<6016x128xbf16, #tpu.memory_space<vmem>>, %arg3: memref<4x128xf32, #tpu.memory_space<vmem>>, %arg4: memref<128x128xf32, #tpu.memory_space<vmem>>, %arg5: memref<16x1xf32, #tpu.memory_space<vmem>>, %arg6: memref<1x1x128xf32, #tpu.memory_space<vmem>>, %arg7: memref<1x1x128xf32, #tpu.memory_space<vmem>>, %arg8: memref<1x128x384xbf16, #tpu.memory_space<vmem>>, %arg9: memref<1x128x128xbf16, #tpu.memory_space<vmem>>, %arg10: memref<1x1x128xf32, #tpu.memory_space<vmem>>, %arg11: memref<1x1x128xf32, #tpu.memory_space<vmem>>, %arg12: memref<1x1x128xf32, #tpu.memory_space<vmem>>, %arg13: memref<1x128x256xbf16, #tpu.memory_space<vmem>>, %arg14: memref<1x1x256xf32, #tpu.memory_space<vmem>>, %arg15: memref<1x256x128xbf16, #tpu.memory_space<vmem>>, %arg16: memref<1x1x128xf32, #tpu.memory_space<vmem>>, %arg17: memref<1x128xf32, #tpu.memory_space<vmem>>, %arg18: memref<1x128xf32, #tpu.memory_space<vmem>>, %arg19: memref<2x128x512xbf16, #tpu.memory_space<vmem>>, %arg20: memref<1x512xf32, #tpu.memory_space<vmem>>, %arg21: memref<1x512xf32, #tpu.memory_space<vmem>>, %arg22: memref<1x512xf32, #tpu.memory_space<vmem>>, %arg23: memref<512x128xbf16, #tpu.memory_space<vmem>>, %arg24: memref<1x128xf32, #tpu.memory_space<vmem>>, %arg25: memref<1x128xf32, #tpu.memory_space<vmem>>, %arg26: memref<1x128xf32, #tpu.memory_space<vmem>>, %arg27: memref<128x3xf32, #tpu.memory_space<vmem>>, %arg28: memref<1x3xf32, #tpu.memory_space<vmem>>, %arg29: memref<2x3xf32, #tpu.memory_space<vmem>>, %arg30: memref<4x128xf32, #tpu.memory_space<vmem>>) attributes {dimension_semantics = [#tpu.dimension_semantics<arbitrary>], iteration_bounds = array<i64: 3>, scalar_prefetch = 0 : i64, scratch_operands = 1 : i64, tpu.core_type = #tpu.core_type<tc>, window_params = [{pipeline_mode = #tpu.pipeline_mode<synchronous>, transform_indices = @transform_0, window_bounds = array<i64: 4, 6016>}, {pipeline_mode = #tpu.pipeline_mode<synchronous>, transform_indices = @transform_1, window_bounds = array<i64: 6016, 128>}, {pipeline_mode = #tpu.pipeline_mode<synchronous>, transform_indices = @transform_2, window_bounds = array<i64: 4, 128>}, {pipeline_mode = #tpu.pipeline_mode<synchronous>, transform_indices = @transform_3, window_bounds = array<i64: 128, 128>}, {pipeline_mode = #tpu.pipeline_mode<synchronous>, transform_indices = @transform_4, window_bounds = array<i64: 16, 1>}, {transform_indices = @transform_5, window_bounds = array<i64: 1, 1, 128>}, {transform_indices = @transform_6, window_bounds = array<i64: 1, 1, 128>}, {transform_indices = @transform_7, window_bounds = array<i64: 1, 128, 384>}, {transform_indices = @transform_8, window_bounds = array<i64: 1, 128, 128>}, {transform_indices = @transform_9, window_bounds = array<i64: 1, 1, 128>}, {transform_indices = @transform_10, window_bounds = array<i64: 1, 1, 128>}, {transform_indices = @transform_11, window_bounds = array<i64: 1, 1, 128>}, {transform_indices = @transform_12, window_bounds = array<i64: 1, 128, 256>}, {transform_indices = @transform_13, window_bounds = array<i64: 1, 1, 256>}, {transform_indices = @transform_14, window_bounds = array<i64: 1, 256, 128>}, {transform_indices = @transform_15, window_bounds = array<i64: 1, 1, 128>}, {pipeline_mode = #tpu.pipeline_mode<synchronous>, transform_indices = @transform_16, window_bounds = array<i64: 1, 128>}, {pipeline_mode = #tpu.pipeline_mode<synchronous>, transform_indices = @transform_17, window_bounds = array<i64: 1, 128>}, {pipeline_mode = #tpu.pipeline_mode<synchronous>, transform_indices = @transform_18, window_bounds = array<i64: 2, 128, 512>}, {pipeline_mode = #tpu.pipeline_mode<synchronous>, transform_indices = @transform_19, window_bounds = array<i64: 1, 512>}, {pipeline_mode = #tpu.pipeline_mode<synchronous>, transform_indices = @transform_20, window_bounds = array<i64: 1, 512>}, {pipeline_mode = #tpu.pipeline_mode<synchronous>, transform_indices = @transform_21, window_bounds = array<i64: 1, 512>}, {pipeline_mode = #tpu.pipeline_mode<synchronous>, transform_indices = @transform_22, window_bounds = array<i64: 512, 128>}, {pipeline_mode = #tpu.pipeline_mode<synchronous>, transform_indices = @transform_23, window_bounds = array<i64: 1, 128>}, {pipeline_mode = #tpu.pipeline_mode<synchronous>, transform_indices = @transform_24, window_bounds = array<i64: 1, 128>}, {pipeline_mode = #tpu.pipeline_mode<synchronous>, transform_indices = @transform_25, window_bounds = array<i64: 1, 128>}, {pipeline_mode = #tpu.pipeline_mode<synchronous>, transform_indices = @transform_26, window_bounds = array<i64: 128, 3>}, {pipeline_mode = #tpu.pipeline_mode<synchronous>, transform_indices = @transform_27, window_bounds = array<i64: 1, 3>}, {pipeline_mode = #tpu.pipeline_mode<synchronous>, transform_indices = @transform_28, window_bounds = array<i64: 2, 3>}]} {
    %c0_i32 = arith.constant 0 : i32
    %0 = arith.cmpi eq, %arg0, %c0_i32 : i32
    %1 = arith.extui %0 : i1 to i32
    %c0_i32_0 = arith.constant 0 : i32
    %2 = arith.cmpi ne, %1, %c0_i32_0 : i32
    scf.if %2 {
      %c0_62 = arith.constant 0 : index
      %c0_63 = arith.constant 0 : index
      %122 = vector.load %arg1[%c0_62, %c0_63] : memref<4x6016xbf16, #tpu.memory_space<vmem>>, vector<4x6016xbf16>
      %c0_64 = arith.constant 0 : index
      %c0_65 = arith.constant 0 : index
      %123 = vector.load %arg2[%c0_64, %c0_65] : memref<6016x128xbf16, #tpu.memory_space<vmem>>, vector<6016x128xbf16>
      %cst_66 = arith.constant dense<0.000000e+00> : vector<4x128xf32>
      %124 = tpu.matmul %122, %123, %cst_66 {dimension_numbers = #tpu.dot_dimension_numbers<[1], [0], [0], [1], [0, 0, 1, 1], [], []>} : vector<4x6016xbf16>, vector<6016x128xbf16>, vector<4x128xf32> -> vector<4x128xf32>
      %c0_67 = arith.constant 0 : index
      %c0_68 = arith.constant 0 : index
      %125 = vector.load %arg3[%c0_67, %c0_68] : memref<4x128xf32, #tpu.memory_space<vmem>>, vector<4x128xf32>
      %126 = arith.addf %124, %125 : vector<4x128xf32>
      %c0_69 = arith.constant 0 : index
      %c0_70 = arith.constant 0 : index
      %127 = vector.load %arg30[%c0_69, %c0_70] : memref<4x128xf32, #tpu.memory_space<vmem>>, vector<4x128xf32>
      tpu.vector_store %arg30[%c0_69, %c0_70], %126 {strides = array<i32>} : memref<4x128xf32, #tpu.memory_space<vmem>>, vector<4x128xf32>,
    } else {
    }
    %c0 = arith.constant 0 : index
    %c0_1 = arith.constant 0 : index
    %3 = vector.load %arg30[%c0, %c0_1] : memref<4x128xf32, #tpu.memory_space<vmem>>, vector<4x128xf32>
    %c0_2 = arith.constant 0 : index
    %c0_3 = arith.constant 0 : index
    %c0_4 = arith.constant 0 : index
    %4 = vector.load %arg6[%c0_2, %c0_3, %c0_4] : memref<1x1x128xf32, #tpu.memory_space<vmem>>, vector<1x1x128xf32>
    %5 = vector.shape_cast %4 : vector<1x1x128xf32> to vector<1x128xf32>
    %c0_5 = arith.constant 0 : index
    %c0_6 = arith.constant 0 : index
    %c0_7 = arith.constant 0 : index
    %6 = vector.load %arg7[%c0_5, %c0_6, %c0_7] : memref<1x1x128xf32, #tpu.memory_space<vmem>>, vector<1x1x128xf32>
    %7 = vector.shape_cast %6 : vector<1x1x128xf32> to vector<1x128xf32>
    %cst = arith.constant dense<0.000000e+00> : vector<4xf32>
    %8 = vector.multi_reduction <add>, %3, %cst [1] : vector<4x128xf32> to vector<4xf32>
    %9 = vector.shape_cast %8 : vector<4xf32> to vector<4x1xf32>
    %cst_8 = arith.constant 1.280000e+02 : f32
    %10 = vector.broadcast %cst_8 : f32 to vector<4x1xf32>
    %11 = arith.divf %9, %10 : vector<4x1xf32>
    %12 = vector.broadcast %11 : vector<4x1xf32> to vector<4x128xf32>
    %13 = arith.subf %3, %12 : vector<4x128xf32>
    %14 = arith.mulf %13, %13 : vector<4x128xf32>
    %cst_9 = arith.constant dense<0.000000e+00> : vector<4xf32>
    %15 = vector.multi_reduction <add>, %14, %cst_9 [1] : vector<4x128xf32> to vector<4xf32>
    %16 = vector.shape_cast %15 : vector<4xf32> to vector<4x1xf32>
    %cst_10 = arith.constant 1.280000e+02 : f32
    %17 = vector.broadcast %cst_10 : f32 to vector<4x1xf32>
    %18 = arith.divf %16, %17 : vector<4x1xf32>
    %cst_11 = arith.constant 9.99999974E-6 : f32
    %19 = vector.broadcast %cst_11 : f32 to vector<4x1xf32>
    %20 = arith.addf %18, %19 : vector<4x1xf32>
    %21 = math.rsqrt %20 : vector<4x1xf32>
    %22 = vector.broadcast %21 : vector<4x1xf32> to vector<4x128xf32>
    %23 = arith.mulf %13, %22 : vector<4x128xf32>
    %24 = vector.broadcast %5 : vector<1x128xf32> to vector<4x128xf32>
    %25 = arith.mulf %23, %24 : vector<4x128xf32>
    %26 = vector.broadcast %7 : vector<1x128xf32> to vector<4x128xf32>
    %27 = arith.addf %25, %26 : vector<4x128xf32>
    %28 = arith.truncf %27 : vector<4x128xf32> to vector<4x128xbf16>
    %c0_12 = arith.constant 0 : index
    %c0_13 = arith.constant 0 : index
    %c0_14 = arith.constant 0 : index
    %29 = vector.load %arg8[%c0_12, %c0_13, %c0_14] : memref<1x128x384xbf16, #tpu.memory_space<vmem>>, vector<1x128x384xbf16>
    %30 = vector.shape_cast %29 : vector<1x128x384xbf16> to vector<128x384xbf16>
    %cst_15 = arith.constant dense<0.000000e+00> : vector<4x384xf32>
    %31 = tpu.matmul %28, %30, %cst_15 {dimension_numbers = #tpu.dot_dimension_numbers<[1], [0], [0], [1], [0, 0, 1, 1], [], []>} : vector<4x128xbf16>, vector<128x384xbf16>, vector<4x384xf32> -> vector<4x384xf32>
    %32 = vector.extract_strided_slice %31 {offsets = [0, 0], sizes = [4, 128], strides = [1, 1]} : vector<4x384xf32> to vector<4x128xf32>
    %33 = vector.extract_strided_slice %31 {offsets = [0, 128], sizes = [4, 128], strides = [1, 1]} : vector<4x384xf32> to vector<4x128xf32>
    %34 = vector.extract_strided_slice %31 {offsets = [0, 256], sizes = [4, 128], strides = [1, 1]} : vector<4x384xf32> to vector<4x128xf32>
    %35 = vector.shape_cast %32 : vector<4x128xf32> to vector<4x1x128xf32>
    %36 = vector.shape_cast %33 : vector<4x128xf32> to vector<1x4x128xf32>
    %37 = vector.broadcast %35 : vector<4x1x128xf32> to vector<4x4x128xf32>
    %38 = vector.broadcast %36 : vector<1x4x128xf32> to vector<4x4x128xf32>
    %39 = arith.mulf %37, %38 : vector<4x4x128xf32>
    %40 = vector.shape_cast %39 : vector<4x4x128xf32> to vector<16x128xf32>
    %c0_16 = arith.constant 0 : index
    %c0_17 = arith.constant 0 : index
    %41 = vector.load %arg4[%c0_16, %c0_17] : memref<128x128xf32, #tpu.memory_space<vmem>>, vector<128x128xf32>
    %cst_18 = arith.constant dense<0.000000e+00> : vector<16x128xf32>
    %42 = tpu.matmul %40, %41, %cst_18 {dimension_numbers = #tpu.dot_dimension_numbers<[1], [0], [0], [1], [0, 0, 1, 1], [], []>} : vector<16x128xf32>, vector<128x128xf32>, vector<16x128xf32> -> vector<16x128xf32>
    %c0_19 = arith.constant 0 : index
    %c0_20 = arith.constant 0 : index
    %43 = vector.load %arg5[%c0_19, %c0_20] : memref<16x1xf32, #tpu.memory_space<vmem>>, vector<16x1xf32>
    %44 = vector.broadcast %43 : vector<16x1xf32> to vector<16x128xf32>
    %45 = arith.addf %42, %44 : vector<16x128xf32>
    %46 = vector.shape_cast %45 : vector<16x128xf32> to vector<4x4x128xf32>
    %cst_21 = arith.constant dense<0xFF800000> : vector<4x128xf32>
    %47 = vector.multi_reduction <maximumf>, %46, %cst_21 [1] : vector<4x4x128xf32> to vector<4x128xf32>
    %48 = vector.shape_cast %47 : vector<4x128xf32> to vector<4x1x128xf32>
    %49 = vector.broadcast %48 : vector<4x1x128xf32> to vector<4x4x128xf32>
    %50 = arith.subf %46, %49 : vector<4x4x128xf32>
    %51 = math.exp %50 : vector<4x4x128xf32>
    %cst_22 = arith.constant dense<0.000000e+00> : vector<4x128xf32>
    %52 = vector.multi_reduction <add>, %51, %cst_22 [1] : vector<4x4x128xf32> to vector<4x128xf32>
    %53 = vector.shape_cast %52 : vector<4x128xf32> to vector<4x1x128xf32>
    %54 = vector.broadcast %53 : vector<4x1x128xf32> to vector<4x4x128xf32>
    %55 = arith.divf %51, %54 : vector<4x4x128xf32>
    %56 = vector.shape_cast %34 : vector<4x128xf32> to vector<1x4x128xf32>
    %57 = vector.broadcast %56 : vector<1x4x128xf32> to vector<4x4x128xf32>
    %58 = arith.mulf %55, %57 : vector<4x4x128xf32>
    %cst_23 = arith.constant dense<0.000000e+00> : vector<4x128xf32>
    %59 = vector.multi_reduction <add>, %58, %cst_23 [1] : vector<4x4x128xf32> to vector<4x128xf32>
    %60 = arith.truncf %59 : vector<4x128xf32> to vector<4x128xbf16>
    %c0_24 = arith.constant 0 : index
    %c0_25 = arith.constant 0 : index
    %c0_26 = arith.constant 0 : index
    %61 = vector.load %arg9[%c0_24, %c0_25, %c0_26] : memref<1x128x128xbf16, #tpu.memory_space<vmem>>, vector<1x128x128xbf16>
    %62 = vector.shape_cast %61 : vector<1x128x128xbf16> to vector<128x128xbf16>
    %cst_27 = arith.constant dense<0.000000e+00> : vector<4x128xf32>
    %63 = tpu.matmul %60, %62, %cst_27 {dimension_numbers = #tpu.dot_dimension_numbers<[1], [0], [0], [1], [0, 0, 1, 1], [], []>} : vector<4x128xbf16>, vector<128x128xbf16>, vector<4x128xf32> -> vector<4x128xf32>
    %64 = arith.addf %3, %63 : vector<4x128xf32>
    %c0_28 = arith.constant 0 : index
    %c0_29 = arith.constant 0 : index
    %c0_30 = arith.constant 0 : index
    %65 = vector.load %arg10[%c0_28, %c0_29, %c0_30] : memref<1x1x128xf32, #tpu.memory_space<vmem>>, vector<1x1x128xf32>
    %66 = vector.shape_cast %65 : vector<1x1x128xf32> to vector<1x128xf32>
    %67 = vector.broadcast %66 : vector<1x128xf32> to vector<4x128xf32>
    %68 = arith.addf %64, %67 : vector<4x128xf32>
    %c0_31 = arith.constant 0 : index
    %c0_32 = arith.constant 0 : index
    %c0_33 = arith.constant 0 : index
    %69 = vector.load %arg11[%c0_31, %c0_32, %c0_33] : memref<1x1x128xf32, #tpu.memory_space<vmem>>, vector<1x1x128xf32>
    %70 = vector.shape_cast %69 : vector<1x1x128xf32> to vector<1x128xf32>
    %c0_34 = arith.constant 0 : index
    %c0_35 = arith.constant 0 : index
    %c0_36 = arith.constant 0 : index
    %71 = vector.load %arg12[%c0_34, %c0_35, %c0_36] : memref<1x1x128xf32, #tpu.memory_space<vmem>>, vector<1x1x128xf32>
    %72 = vector.shape_cast %71 : vector<1x1x128xf32> to vector<1x128xf32>
    %cst_37 = arith.constant dense<0.000000e+00> : vector<4xf32>
    %73 = vector.multi_reduction <add>, %68, %cst_37 [1] : vector<4x128xf32> to vector<4xf32>
    %74 = vector.shape_cast %73 : vector<4xf32> to vector<4x1xf32>
    %cst_38 = arith.constant 1.280000e+02 : f32
    %75 = vector.broadcast %cst_38 : f32 to vector<4x1xf32>
    %76 = arith.divf %74, %75 : vector<4x1xf32>
    %77 = vector.broadcast %76 : vector<4x1xf32> to vector<4x128xf32>
    %78 = arith.subf %68, %77 : vector<4x128xf32>
    %79 = arith.mulf %78, %78 : vector<4x128xf32>
    %cst_39 = arith.constant dense<0.000000e+00> : vector<4xf32>
    %80 = vector.multi_reduction <add>, %79, %cst_39 [1] : vector<4x128xf32> to vector<4xf32>
    %81 = vector.shape_cast %80 : vector<4xf32> to vector<4x1xf32>
    %cst_40 = arith.constant 1.280000e+02 : f32
    %82 = vector.broadcast %cst_40 : f32 to vector<4x1xf32>
    %83 = arith.divf %81, %82 : vector<4x1xf32>
    %cst_41 = arith.constant 9.99999974E-6 : f32
    %84 = vector.broadcast %cst_41 : f32 to vector<4x1xf32>
    %85 = arith.addf %83, %84 : vector<4x1xf32>
    %86 = math.rsqrt %85 : vector<4x1xf32>
    %87 = vector.broadcast %86 : vector<4x1xf32> to vector<4x128xf32>
    %88 = arith.mulf %78, %87 : vector<4x128xf32>
    %89 = vector.broadcast %70 : vector<1x128xf32> to vector<4x128xf32>
    %90 = arith.mulf %88, %89 : vector<4x128xf32>
    %91 = vector.broadcast %72 : vector<1x128xf32> to vector<4x128xf32>
    %92 = arith.addf %90, %91 : vector<4x128xf32>
    %93 = arith.truncf %92 : vector<4x128xf32> to vector<4x128xbf16>
    %c0_42 = arith.constant 0 : index
    %c0_43 = arith.constant 0 : index
    %c0_44 = arith.constant 0 : index
    %94 = vector.load %arg13[%c0_42, %c0_43, %c0_44] : memref<1x128x256xbf16, #tpu.memory_space<vmem>>, vector<1x128x256xbf16>
    %95 = vector.shape_cast %94 : vector<1x128x256xbf16> to vector<128x256xbf16>
    %cst_45 = arith.constant dense<0.000000e+00> : vector<4x256xf32>
    %96 = tpu.matmul %93, %95, %cst_45 {dimension_numbers = #tpu.dot_dimension_numbers<[1], [0], [0], [1], [0, 0, 1, 1], [], []>} : vector<4x128xbf16>, vector<128x256xbf16>, vector<4x256xf32> -> vector<4x256xf32>
    %c0_46 = arith.constant 0 : index
    %c0_47 = arith.constant 0 : index
    %c0_48 = arith.constant 0 : index
    %97 = vector.load %arg14[%c0_46, %c0_47, %c0_48] : memref<1x1x256xf32, #tpu.memory_space<vmem>>, vector<1x1x256xf32>
    %98 = vector.shape_cast %97 : vector<1x1x256xf32> to vector<1x256xf32>
    %99 = vector.broadcast %98 : vector<1x256xf32> to vector<4x256xf32>
    %100 = arith.addf %96, %99 : vector<4x256xf32>
    %cst_49 = arith.constant 5.000000e-01 : f32
    %101 = vector.broadcast %cst_49 : f32 to vector<4x256xf32>
    %102 = arith.mulf %101, %100 : vector<4x256xf32>
    %cst_50 = arith.constant 1.41421354 : f32
    %103 = vector.broadcast %cst_50 : f32 to vector<4x256xf32>
    %104 = arith.divf %100, %103 : vector<4x256xf32>
    %105 = math.erf %104 : vector<4x256xf32>
    %cst_51 = arith.constant 1.000000e+00 : f32
    %106 = vector.broadcast %cst_51 : f32 to vector<4x256xf32>
    %107 = arith.addf %106, %105 : vector<4x256xf32>
    %108 = arith.mulf %102, %107 : vector<4x256xf32>
    %109 = arith.truncf %108 : vector<4x256xf32> to vector<4x256xbf16>
    %c0_52 = arith.constant 0 : index
    %c0_53 = arith.constant 0 : index
    %c0_54 = arith.constant 0 : index
    %110 = vector.load %arg15[%c0_52, %c0_53, %c0_54] : memref<1x256x128xbf16, #tpu.memory_space<vmem>>, vector<1x256x128xbf16>
    %111 = vector.shape_cast %110 : vector<1x256x128xbf16> to vector<256x128xbf16>
    %cst_55 = arith.constant dense<0.000000e+00> : vector<4x128xf32>
    %112 = tpu.matmul %109, %111, %cst_55 {dimension_numbers = #tpu.dot_dimension_numbers<[1], [0], [0], [1], [0, 0, 1, 1], [], []>} : vector<4x256xbf16>, vector<256x128xbf16>, vector<4x128xf32> -> vector<4x128xf32>
    %c0_56 = arith.constant 0 : index
    %c0_57 = arith.constant 0 : index
    %c0_58 = arith.constant 0 : index
    %113 = vector.load %arg16[%c0_56, %c0_57, %c0_58] : memref<1x1x128xf32, #tpu.memory_space<vmem>>, vector<1x1x128xf32>
    %114 = vector.shape_cast %113 : vector<1x1x128xf32> to vector<1x128xf32>
    %115 = vector.broadcast %114 : vector<1x128xf32> to vector<4x128xf32>
    %116 = arith.addf %112, %115 : vector<4x128xf32>
    %117 = arith.addf %68, %116 : vector<4x128xf32>
    %c0_59 = arith.constant 0 : index
    %c0_60 = arith.constant 0 : index
    %118 = vector.load %arg30[%c0_59, %c0_60] : memref<4x128xf32, #tpu.memory_space<vmem>>, vector<4x128xf32>
    tpu.vector_store %arg30[%c0_59, %c0_60], %117 {strides = array<i32>} : memref<4x128xf32, #tpu.memory_space<vmem>>, vector<4x128xf32>,
    %c2_i32 = arith.constant 2 : i32
    %119 = arith.cmpi eq, %arg0, %c2_i32 : i32
    %120 = arith.extui %119 : i1 to i32
    %c0_i32_61 = arith.constant 0 : i32
    %121 = arith.cmpi ne, %120, %c0_i32_61 : i32
    scf.if %121 {
      %c0_62 = arith.constant 0 : index
      %c0_63 = arith.constant 0 : index
      %122 = vector.load %arg17[%c0_62, %c0_63] : memref<1x128xf32, #tpu.memory_space<vmem>>, vector<1x128xf32>
      %c0_64 = arith.constant 0 : index
      %c0_65 = arith.constant 0 : index
      %123 = vector.load %arg18[%c0_64, %c0_65] : memref<1x128xf32, #tpu.memory_space<vmem>>, vector<1x128xf32>
      %cst_66 = arith.constant dense<0.000000e+00> : vector<4xf32>
      %124 = vector.multi_reduction <add>, %117, %cst_66 [1] : vector<4x128xf32> to vector<4xf32>
      %125 = vector.shape_cast %124 : vector<4xf32> to vector<4x1xf32>
      %cst_67 = arith.constant 1.280000e+02 : f32
      %126 = vector.broadcast %cst_67 : f32 to vector<4x1xf32>
      %127 = arith.divf %125, %126 : vector<4x1xf32>
      %128 = vector.broadcast %127 : vector<4x1xf32> to vector<4x128xf32>
      %129 = arith.subf %117, %128 : vector<4x128xf32>
      %130 = arith.mulf %129, %129 : vector<4x128xf32>
      %cst_68 = arith.constant dense<0.000000e+00> : vector<4xf32>
      %131 = vector.multi_reduction <add>, %130, %cst_68 [1] : vector<4x128xf32> to vector<4xf32>
      %132 = vector.shape_cast %131 : vector<4xf32> to vector<4x1xf32>
      %cst_69 = arith.constant 1.280000e+02 : f32
      %133 = vector.broadcast %cst_69 : f32 to vector<4x1xf32>
      %134 = arith.divf %132, %133 : vector<4x1xf32>
      %cst_70 = arith.constant 9.99999974E-6 : f32
      %135 = vector.broadcast %cst_70 : f32 to vector<4x1xf32>
      %136 = arith.addf %134, %135 : vector<4x1xf32>
      %137 = math.rsqrt %136 : vector<4x1xf32>
      %138 = vector.broadcast %137 : vector<4x1xf32> to vector<4x128xf32>
      %139 = arith.mulf %129, %138 : vector<4x128xf32>
      %140 = vector.broadcast %122 : vector<1x128xf32> to vector<4x128xf32>
      %141 = arith.mulf %139, %140 : vector<4x128xf32>
      %142 = vector.broadcast %123 : vector<1x128xf32> to vector<4x128xf32>
      %143 = arith.addf %141, %142 : vector<4x128xf32>
      %144 = arith.truncf %143 : vector<4x128xf32> to vector<4x128xbf16>
      %145 = vector.shape_cast %144 : vector<4x128xbf16> to vector<2x2x128xbf16>
      %c0_71 = arith.constant 0 : index
      %c0_72 = arith.constant 0 : index
      %146 = vector.load %arg20[%c0_71, %c0_72] : memref<1x512xf32, #tpu.memory_space<vmem>>, vector<1x512xf32>
      %147 = vector.extract_strided_slice %145 {offsets = [0, 0, 0], sizes = [2, 1, 128], strides = [1, 1, 1]} : vector<2x2x128xbf16> to vector<2x1x128xbf16>
      %148 = vector.shape_cast %147 : vector<2x1x128xbf16> to vector<2x128xbf16>
      %c0_73 = arith.constant 0 : index
      %c0_74 = arith.constant 0 : index
      %c0_75 = arith.constant 0 : index
      %149 = vector.load %arg19[%c0_73, %c0_74, %c0_75] : memref<2x128x512xbf16, #tpu.memory_space<vmem>>, vector<1x128x512xbf16>
      %150 = vector.shape_cast %149 : vector<1x128x512xbf16> to vector<128x512xbf16>
      %cst_76 = arith.constant dense<0.000000e+00> : vector<2x512xf32>
      %151 = tpu.matmul %148, %150, %cst_76 {dimension_numbers = #tpu.dot_dimension_numbers<[1], [0], [0], [1], [0, 0, 1, 1], [], []>} : vector<2x128xbf16>, vector<128x512xbf16>, vector<2x512xf32> -> vector<2x512xf32>
      %152 = vector.broadcast %146 : vector<1x512xf32> to vector<2x512xf32>
      %153 = arith.addf %152, %151 : vector<2x512xf32>
      %154 = vector.extract_strided_slice %145 {offsets = [0, 1, 0], sizes = [2, 1, 128], strides = [1, 1, 1]} : vector<2x2x128xbf16> to vector<2x1x128xbf16>
      %155 = vector.shape_cast %154 : vector<2x1x128xbf16> to vector<2x128xbf16>
      %c1 = arith.constant 1 : index
      %c0_77 = arith.constant 0 : index
      %c0_78 = arith.constant 0 : index
      %156 = vector.load %arg19[%c1, %c0_77, %c0_78] : memref<2x128x512xbf16, #tpu.memory_space<vmem>>, vector<1x128x512xbf16>
      %157 = vector.shape_cast %156 : vector<1x128x512xbf16> to vector<128x512xbf16>
      %cst_79 = arith.constant dense<0.000000e+00> : vector<2x512xf32>
      %158 = tpu.matmul %155, %157, %cst_79 {dimension_numbers = #tpu.dot_dimension_numbers<[1], [0], [0], [1], [0, 0, 1, 1], [], []>} : vector<2x128xbf16>, vector<128x512xbf16>, vector<2x512xf32> -> vector<2x512xf32>
      %159 = arith.addf %153, %158 : vector<2x512xf32>
      %c0_80 = arith.constant 0 : index
      %c0_81 = arith.constant 0 : index
      %160 = vector.load %arg21[%c0_80, %c0_81] : memref<1x512xf32, #tpu.memory_space<vmem>>, vector<1x512xf32>
      %161 = vector.broadcast %160 : vector<1x512xf32> to vector<2x512xf32>
      %162 = arith.mulf %159, %161 : vector<2x512xf32>
      %c0_82 = arith.constant 0 : index
      %c0_83 = arith.constant 0 : index
      %163 = vector.load %arg22[%c0_82, %c0_83] : memref<1x512xf32, #tpu.memory_space<vmem>>, vector<1x512xf32>
      %164 = vector.broadcast %163 : vector<1x512xf32> to vector<2x512xf32>
      %165 = arith.addf %162, %164 : vector<2x512xf32>
      %cst_84 = arith.constant 0.000000e+00 : f32
      %166 = vector.broadcast %cst_84 : f32 to vector<2x512xf32>
      %167 = arith.cmpf oge, %165, %166 : vector<2x512xf32>
      %cst_85 = arith.constant 0.00999999977 : f32
      %168 = vector.broadcast %cst_85 : f32 to vector<2x512xf32>
      %169 = arith.mulf %168, %165 : vector<2x512xf32>
      %170 = arith.select %167, %165, %169 : vector<2x512xi1>, vector<2x512xf32>
      %171 = arith.truncf %170 : vector<2x512xf32> to vector<2x512xbf16>
      %c0_86 = arith.constant 0 : index
      %c0_87 = arith.constant 0 : index
      %172 = vector.load %arg23[%c0_86, %c0_87] : memref<512x128xbf16, #tpu.memory_space<vmem>>, vector<512x128xbf16>
      %cst_88 = arith.constant dense<0.000000e+00> : vector<2x128xf32>
      %173 = tpu.matmul %171, %172, %cst_88 {dimension_numbers = #tpu.dot_dimension_numbers<[1], [0], [0], [1], [0, 0, 1, 1], [], []>} : vector<2x512xbf16>, vector<512x128xbf16>, vector<2x128xf32> -> vector<2x128xf32>
      %c0_89 = arith.constant 0 : index
      %c0_90 = arith.constant 0 : index
      %174 = vector.load %arg24[%c0_89, %c0_90] : memref<1x128xf32, #tpu.memory_space<vmem>>, vector<1x128xf32>
      %175 = vector.broadcast %174 : vector<1x128xf32> to vector<2x128xf32>
      %176 = arith.addf %173, %175 : vector<2x128xf32>
      %c0_91 = arith.constant 0 : index
      %c0_92 = arith.constant 0 : index
      %177 = vector.load %arg25[%c0_91, %c0_92] : memref<1x128xf32, #tpu.memory_space<vmem>>, vector<1x128xf32>
      %178 = vector.broadcast %177 : vector<1x128xf32> to vector<2x128xf32>
      %179 = arith.mulf %176, %178 : vector<2x128xf32>
      %c0_93 = arith.constant 0 : index
      %c0_94 = arith.constant 0 : index
      %180 = vector.load %arg26[%c0_93, %c0_94] : memref<1x128xf32, #tpu.memory_space<vmem>>, vector<1x128xf32>
      %181 = vector.broadcast %180 : vector<1x128xf32> to vector<2x128xf32>
      %182 = arith.addf %179, %181 : vector<2x128xf32>
      %cst_95 = arith.constant 0.000000e+00 : f32
      %183 = vector.broadcast %cst_95 : f32 to vector<2x128xf32>
      %184 = arith.cmpf oge, %182, %183 : vector<2x128xf32>
      %cst_96 = arith.constant 0.00999999977 : f32
      %185 = vector.broadcast %cst_96 : f32 to vector<2x128xf32>
      %186 = arith.mulf %185, %182 : vector<2x128xf32>
      %187 = arith.select %184, %182, %186 : vector<2x128xi1>, vector<2x128xf32>
      %c0_97 = arith.constant 0 : index
      %c0_98 = arith.constant 0 : index
      %188 = vector.load %arg27[%c0_97, %c0_98] : memref<128x3xf32, #tpu.memory_space<vmem>>, vector<128x3xf32>
      %cst_99 = arith.constant dense<0.000000e+00> : vector<2x3xf32>
      %189 = tpu.matmul %187, %188, %cst_99 {dimension_numbers = #tpu.dot_dimension_numbers<[1], [0], [0], [1], [0, 0, 1, 1], [], []>} : vector<2x128xf32>, vector<128x3xf32>, vector<2x3xf32> -> vector<2x3xf32>
      %c0_100 = arith.constant 0 : index
      %c0_101 = arith.constant 0 : index
      %190 = vector.load %arg28[%c0_100, %c0_101] : memref<1x3xf32, #tpu.memory_space<vmem>>, vector<1x3xf32>
      %191 = vector.broadcast %190 : vector<1x3xf32> to vector<2x3xf32>
      %192 = arith.addf %189, %191 : vector<2x3xf32>
      %193 = arith.mulf %192, %192 : vector<2x3xf32>
      %cst_102 = arith.constant dense<0.000000e+00> : vector<2xf32>
      %194 = vector.multi_reduction <add>, %193, %cst_102 [1] : vector<2x3xf32> to vector<2xf32>
      %195 = vector.shape_cast %194 : vector<2xf32> to vector<2x1xf32>
      %196 = math.sqrt %195 : vector<2x1xf32>
      %cst_103 = arith.constant 9.99999996E-13 : f32
      %197 = vector.broadcast %cst_103 : f32 to vector<2x1xf32>
      %198 = arith.maximumf %196, %197 : vector<2x1xf32>
      %199 = vector.broadcast %198 : vector<2x1xf32> to vector<2x3xf32>
      %200 = arith.divf %192, %199 : vector<2x3xf32>
      %c0_104 = arith.constant 0 : index
      %c0_105 = arith.constant 0 : index
      %201 = vector.load %arg29[%c0_104, %c0_105] : memref<2x3xf32, #tpu.memory_space<vmem>>, vector<2x3xf32>
      tpu.vector_store %arg29[%c0_104, %c0_105], %200 {strides = array<i32>} : memref<2x3xf32, #tpu.memory_space<vmem>>, vector<2x3xf32>,
    } else {
    }
    return
  }
  func.func @transform_0(%arg0: i32) -> (i32, i32) {
    %c0_i32 = arith.constant 0 : i32
    %c0_i32_0 = arith.constant 0 : i32
    %c0_i32_1 = arith.constant 0 : i32
    return %c0_i32, %c0_i32_0 : i32, i32
  }
  func.func @transform_1(%arg0: i32) -> (i32, i32) {
    %c0_i32 = arith.constant 0 : i32
    %c0_i32_0 = arith.constant 0 : i32
    %c0_i32_1 = arith.constant 0 : i32
    return %c0_i32, %c0_i32_0 : i32, i32
  }
  func.func @transform_2(%arg0: i32) -> (i32, i32) {
    %c0_i32 = arith.constant 0 : i32
    %c0_i32_0 = arith.constant 0 : i32
    %c0_i32_1 = arith.constant 0 : i32
    return %c0_i32, %c0_i32_0 : i32, i32
  }
  func.func @transform_3(%arg0: i32) -> (i32, i32) {
    %c0_i32 = arith.constant 0 : i32
    %c0_i32_0 = arith.constant 0 : i32
    %c0_i32_1 = arith.constant 0 : i32
    return %c0_i32, %c0_i32_0 : i32, i32
  }
  func.func @transform_4(%arg0: i32) -> (i32, i32) {
    %c0_i32 = arith.constant 0 : i32
    %c0_i32_0 = arith.constant 0 : i32
    %c0_i32_1 = arith.constant 0 : i32
    return %c0_i32, %c0_i32_0 : i32, i32
  }
  func.func @transform_5(%arg0: i32) -> (i32, i32, i32) {
    %c0_i32 = arith.constant 0 : i32
    %c0_i32_0 = arith.constant 0 : i32
    %c0_i32_1 = arith.constant 0 : i32
    return %arg0, %c0_i32, %c0_i32_0 : i32, i32, i32
  }
  func.func @transform_6(%arg0: i32) -> (i32, i32, i32) {
    %c0_i32 = arith.constant 0 : i32
    %c0_i32_0 = arith.constant 0 : i32
    %c0_i32_1 = arith.constant 0 : i32
    return %arg0, %c0_i32, %c0_i32_0 : i32, i32, i32
  }
  func.func @transform_7(%arg0: i32) -> (i32, i32, i32) {
    %c0_i32 = arith.constant 0 : i32
    %c0_i32_0 = arith.constant 0 : i32
    %c0_i32_1 = arith.constant 0 : i32
    return %arg0, %c0_i32, %c0_i32_0 : i32, i32, i32
  }
  func.func @transform_8(%arg0: i32) -> (i32, i32, i32) {
    %c0_i32 = arith.constant 0 : i32
    %c0_i32_0 = arith.constant 0 : i32
    %c0_i32_1 = arith.constant 0 : i32
    return %arg0, %c0_i32, %c0_i32_0 : i32, i32, i32
  }
  func.func @transform_9(%arg0: i32) -> (i32, i32, i32) {
    %c0_i32 = arith.constant 0 : i32
    %c0_i32_0 = arith.constant 0 : i32
    %c0_i32_1 = arith.constant 0 : i32
    return %arg0, %c0_i32, %c0_i32_0 : i32, i32, i32
  }
  func.func @transform_10(%arg0: i32) -> (i32, i32, i32) {
    %c0_i32 = arith.constant 0 : i32
    %c0_i32_0 = arith.constant 0 : i32
    %c0_i32_1 = arith.constant 0 : i32
    return %arg0, %c0_i32, %c0_i32_0 : i32, i32, i32
  }
  func.func @transform_11(%arg0: i32) -> (i32, i32, i32) {
    %c0_i32 = arith.constant 0 : i32
    %c0_i32_0 = arith.constant 0 : i32
    %c0_i32_1 = arith.constant 0 : i32
    return %arg0, %c0_i32, %c0_i32_0 : i32, i32, i32
  }
  func.func @transform_12(%arg0: i32) -> (i32, i32, i32) {
    %c0_i32 = arith.constant 0 : i32
    %c0_i32_0 = arith.constant 0 : i32
    %c0_i32_1 = arith.constant 0 : i32
    return %arg0, %c0_i32, %c0_i32_0 : i32, i32, i32
  }
  func.func @transform_13(%arg0: i32) -> (i32, i32, i32) {
    %c0_i32 = arith.constant 0 : i32
    %c0_i32_0 = arith.constant 0 : i32
    %c0_i32_1 = arith.constant 0 : i32
    return %arg0, %c0_i32, %c0_i32_0 : i32, i32, i32
  }
  func.func @transform_14(%arg0: i32) -> (i32, i32, i32) {
    %c0_i32 = arith.constant 0 : i32
    %c0_i32_0 = arith.constant 0 : i32
    %c0_i32_1 = arith.constant 0 : i32
    return %arg0, %c0_i32, %c0_i32_0 : i32, i32, i32
  }
  func.func @transform_15(%arg0: i32) -> (i32, i32, i32) {
    %c0_i32 = arith.constant 0 : i32
    %c0_i32_0 = arith.constant 0 : i32
    %c0_i32_1 = arith.constant 0 : i32
    return %arg0, %c0_i32, %c0_i32_0 : i32, i32, i32
  }
  func.func @transform_16(%arg0: i32) -> (i32, i32) {
    %c0_i32 = arith.constant 0 : i32
    %c0_i32_0 = arith.constant 0 : i32
    %c0_i32_1 = arith.constant 0 : i32
    return %c0_i32, %c0_i32_0 : i32, i32
  }
  func.func @transform_17(%arg0: i32) -> (i32, i32) {
    %c0_i32 = arith.constant 0 : i32
    %c0_i32_0 = arith.constant 0 : i32
    %c0_i32_1 = arith.constant 0 : i32
    return %c0_i32, %c0_i32_0 : i32, i32
  }
  func.func @transform_18(%arg0: i32) -> (i32, i32, i32) {
    %c0_i32 = arith.constant 0 : i32
    %c0_i32_0 = arith.constant 0 : i32
    %c0_i32_1 = arith.constant 0 : i32
    %c0_i32_2 = arith.constant 0 : i32
    return %c0_i32, %c0_i32_0, %c0_i32_1 : i32, i32, i32
  }
  func.func @transform_19(%arg0: i32) -> (i32, i32) {
    %c0_i32 = arith.constant 0 : i32
    %c0_i32_0 = arith.constant 0 : i32
    %c0_i32_1 = arith.constant 0 : i32
    return %c0_i32, %c0_i32_0 : i32, i32
  }
  func.func @transform_20(%arg0: i32) -> (i32, i32) {
    %c0_i32 = arith.constant 0 : i32
    %c0_i32_0 = arith.constant 0 : i32
    %c0_i32_1 = arith.constant 0 : i32
    return %c0_i32, %c0_i32_0 : i32, i32
  }
  func.func @transform_21(%arg0: i32) -> (i32, i32) {
    %c0_i32 = arith.constant 0 : i32
    %c0_i32_0 = arith.constant 0 : i32
    %c0_i32_1 = arith.constant 0 : i32
    return %c0_i32, %c0_i32_0 : i32, i32
  }
  func.func @transform_22(%arg0: i32) -> (i32, i32) {
    %c0_i32 = arith.constant 0 : i32
    %c0_i32_0 = arith.constant 0 : i32
    %c0_i32_1 = arith.constant 0 : i32
    return %c0_i32, %c0_i32_0 : i32, i32
  }
  func.func @transform_23(%arg0: i32) -> (i32, i32) {
    %c0_i32 = arith.constant 0 : i32
    %c0_i32_0 = arith.constant 0 : i32
    %c0_i32_1 = arith.constant 0 : i32
    return %c0_i32, %c0_i32_0 : i32, i32
  }
  func.func @transform_24(%arg0: i32) -> (i32, i32) {
    %c0_i32 = arith.constant 0 : i32
    %c0_i32_0 = arith.constant 0 : i32
    %c0_i32_1 = arith.constant 0 : i32
    return %c0_i32, %c0_i32_0 : i32, i32
  }
  func.func @transform_25(%arg0: i32) -> (i32, i32) {
    %c0_i32 = arith.constant 0 : i32
    %c0_i32_0 = arith.constant 0 : i32
    %c0_i32_1 = arith.constant 0 : i32
    return %c0_i32, %c0_i32_0 : i32, i32
  }
  func.func @transform_26(%arg0: i32) -> (i32, i32) {
    %c0_i32 = arith.constant 0 : i32
    %c0_i32_0 = arith.constant 0 : i32
    %c0_i32_1 = arith.constant 0 : i32
    return %c0_i32, %c0_i32_0 : i32, i32
  }
  func.func @transform_27(%arg0: i32) -> (i32, i32) {
    %c0_i32 = arith.constant 0 : i32
    %c0_i32_0 = arith.constant 0 : i32
    %c0_i32_1 = arith.constant 0 : i32
    return %c0_i32, %c0_i32_0 : i32, i32
  }
  func.func @transform_28(%arg0: i32) -> (i32, i32) {
    %c0_i32 = arith.constant 0 : i32
    %c0_i32_0 = arith.constant 0 : i32
    %c0_i32_1 = arith.constant 0 : i32
    return %c0_i32, %c0_i32_0 : i32, i32
  }
}

</mosaic_0001>

<llo_original>
// kernel: vit_mlp2_forward.1
$region0: #{vit_mlp2_forward.1}
  #allocation0 [shape = 'u32[]', space=smem, size = 0x4, offset = 0x4, fixed_abs, tag = 'smem constant byte address 0x4 - core index']
  #allocation1 [shape = 'u32[72,128]{1,0:T(1,128)}', space=vmem, size = 0x9000, scoped, tag = 'internal scratch']
  #allocation2 [shape = 'f32[4,128]{1,0:T(4,128)}', space=vmem, size = 0x800, scoped, tag = 'scratch operand']
  %s0 = inlined_call_operand.vmem [shape: bf16[4,6016], index: 0, kind: input, shape index: {}]
  %s1 = inlined_call_operand.vmem [shape: bf16[6016,128], index: 1, kind: input, shape index: {}]
  %s2 = inlined_call_operand.vmem [shape: f32[4,128], index: 2, kind: input, shape index: {}]
  %s3 = inlined_call_operand.vmem [shape: f32[128,128], index: 3, kind: input, shape index: {}]
  %s4 = inlined_call_operand.vmem [shape: f32[16,1], index: 4, kind: input, shape index: {}]
  %s5 = inlined_call_operand.vmem [shape: f32[3,1,128], index: 5, kind: input, shape index: {}]
  %s6 = inlined_call_operand.vmem [shape: f32[3,1,128], index: 6, kind: input, shape index: {}]
  %s7 = inlined_call_operand.vmem [shape: bf16[3,128,384], index: 7, kind: input, shape index: {}]
  %s8 = inlined_call_operand.hbm [shape: bf16[3,128,128], index: 8, kind: input, shape index: {}]
  %s9 = inlined_call_operand.vmem [shape: f32[3,1,128], index: 9, kind: input, shape index: {}]
  %s10 = inlined_call_operand.vmem [shape: f32[3,1,128], index: 10, kind: input, shape index: {}]
  %s11 = inlined_call_operand.vmem [shape: f32[3,1,128], index: 11, kind: input, shape index: {}]
  %s12 = inlined_call_operand.vmem [shape: bf16[3,128,256], index: 12, kind: input, shape index: {}]
  %s13 = inlined_call_operand.vmem [shape: f32[3,1,256], index: 13, kind: input, shape index: {}]
  %s14 = inlined_call_operand.vmem [shape: bf16[3,256,128], index: 14, kind: input, shape index: {}]
  %s15 = inlined_call_operand.vmem [shape: f32[3,1,128], index: 15, kind: input, shape index: {}]
  %s16 = inlined_call_operand.vmem [shape: f32[1,128], index: 16, kind: input, shape index: {}]
  %s17 = inlined_call_operand.vmem [shape: f32[1,128], index: 17, kind: input, shape index: {}]
  %s18 = inlined_call_operand.vmem [shape: bf16[2,128,512], index: 18, kind: input, shape index: {}]
  %s19 = inlined_call_operand.vmem [shape: f32[1,512], index: 19, kind: input, shape index: {}]
  %s20 = inlined_call_operand.vmem [shape: f32[1,512], index: 20, kind: input, shape index: {}]
  %s21 = inlined_call_operand.vmem [shape: f32[1,512], index: 21, kind: input, shape index: {}]
  %s22 = inlined_call_operand.hbm [shape: bf16[512,128], index: 22, kind: input, shape index: {}]
  %s23 = inlined_call_operand.vmem [shape: f32[1,128], index: 23, kind: input, shape index: {}]
  %s24 = inlined_call_operand.hbm [shape: f32[1,128], index: 24, kind: input, shape index: {}]
  %s25 = inlined_call_operand.hbm [shape: f32[1,128], index: 25, kind: input, shape index: {}]
  %s26 = inlined_call_operand.vmem [shape: f32[128,3], index: 26, kind: input, shape index: {}]
  %s27 = inlined_call_operand.hbm [shape: f32[1,3], index: 27, kind: input, shape index: {}]
  %s28 = inlined_call_operand.hbm [shape: f32[2,3], index: 28, kind: output, shape index: {}]
  %s29 = sld [smem:[#allocation0]]
  $region173: #{vit_mlp2_forward.1} parent=0
    _
  %s31 = ssub.s32 1, %s29
  %s32 = scalar_select 0, %s31, %s29
  $region1: #{vit_mlp2_forward.1} parent=0
    #allocation3 [shape = 'u8[65536]{0}', space=vmem, size = 0x10000, scoped, tag = 'input window, operand 8']
    #allocation4 [shape = 's32[2]{0}', space=sflag, size = 0x8, scoped, tag = 'scoped memory for vit_mlp2_forward.1']
    #allocation5 [shape = 's32[2]{0}', space=sflag, size = 0x8, scoped, tag = 'scoped memory for vit_mlp2_forward.1']
    #allocation6 [shape = 'u8[131072]{0}', space=vmem, size = 0x20000, scoped, tag = 'input window, operand 22, single buffered']
    #allocation7 [shape = 's32[1]{0}', space=sflag, size = 0x4, scoped, tag = 'scoped memory for vit_mlp2_forward.1']
    #allocation8 [shape = 'u8[512]{0}', space=vmem, size = 0x400, scoped, tag = 'input window, operand 24, single buffered']
    #allocation9 [shape = 'u8[512]{0}', space=vmem, size = 0x400, scoped, tag = 'input window, operand 25, single buffered']
    #allocation10 [shape = 's32[1]{0}', space=sflag, size = 0x4, scoped, tag = 'scoped memory for vit_mlp2_forward.1']
    #allocation11 [shape = 'u8[512]{0}', space=vmem, size = 0x400, scoped, tag = 'input window, operand 27, single buffered']
    #allocation12 [shape = 'u8[1024]{0}', space=vmem, size = 0x400, scoped, tag = 'output window, operand 0, single buffered']
    %33 = vsyncpa [#allocation4], 0
    %s34 = scalar_lea.sflag [#allocation4], 1
    %35 = vsyncpa %s34, 0
    %36 = vsyncpa [#allocation7], 0
    %37 = vsyncpa [#allocation10], 0
    %38 = vsyncpa [#allocation5], 0
    loop: start=0, step=1, limit=5
    $region2: #{vit_mlp2_forward.1} parent=1 // loop_pre_header
      _
    $region3: #{vit_mlp2_forward.1} parent=1 // loop_header
      %s40 = sphi 0, %s44
      %p41 = scmp.ge.s32.totalorder %s40, 5
      %s48 = sphi 0, %s48
      %s50 = sphi 0, %s48
      %s51 = sphi 0, %s50
      %s65 = sphi 0, %s51
      %s69 = sphi 0, %s69
      %s71 = sphi 0, %s69
      %s72 = sphi 0, %s71
      %s86 = sphi 0, %s72
      %s90 = sphi 0, %s90
      %s92 = sphi 0, %s90
      %s93 = sphi 0, %s92
      %s107 = sphi 0, %s93
      %s111 = sphi 0, %s111
      %s113 = sphi 0, %s111
      %s114 = sphi 0, %s113
      %s128 = sphi 0, %s114
      %s132 = sphi 0, %s132
      %s134 = sphi 0, %s132
      %s135 = sphi 0, %s134
      %s149 = sphi 0, %s135
      %s155 = sphi 0, %s157
      %s158 = sphi 0, %s155
      %s159 = sphi 0, %s158
      %s175 = sphi 0, %s159
      %s181 = sphi 0, %s183
      %s184 = sphi 0, %s181
      %s185 = sphi 0, %s184
      %s201 = sphi 0, %s185
      %s207 = sphi 0, %s209
      %s210 = sphi 0, %s207
      %s211 = sphi 0, %s210
      %s227 = sphi 0, %s211
      %s233 = sphi 0, %s235
      %s236 = sphi 0, %s233
      %s237 = sphi 0, %s236
      %s253 = sphi 0, %s237
      %s259 = sphi 0, %s261
      %s262 = sphi 0, %s259
      %s263 = sphi 0, %s262
      %s279 = sphi 0, %s263
      %s285 = sphi 0, %s287
      %s288 = sphi 0, %s285
      %s289 = sphi 0, %s288
      %s305 = sphi 0, %s289
      %s311 = sphi 0, %s313
      %s314 = sphi 0, %s311
      %s315 = sphi 0, %s314
      %s331 = sphi 0, %s315
      %s337 = sphi 0, %s339
      %s340 = sphi 0, %s337
      %s341 = sphi 0, %s340
      %s357 = sphi 0, %s341
      %s363 = sphi 0, %s365
      %s366 = sphi 0, %s363
      %s367 = sphi 0, %s366
      %s383 = sphi 0, %s367
      %s389 = sphi 0, %s391
      %s392 = sphi 0, %s389
      %s393 = sphi 0, %s392
      %s409 = sphi 0, %s393
      %s415 = sphi 0, %s417
      %s418 = sphi 0, %s415
      %s419 = sphi 0, %s418
      %s435 = sphi 0, %s419
      %s439 = sphi 0, %s439
      %s441 = sphi 0, %s439
      %s442 = sphi 0, %s441
      %s456 = sphi 0, %s442
      %s460 = sphi 0, %s460
      %s462 = sphi 0, %s460
      %s463 = sphi 0, %s462
      %s477 = sphi 0, %s463
      %s481 = sphi 0, %s481
      %s483 = sphi 0, %s481
      %s484 = sphi 0, %s483
      %s498 = sphi 0, %s484
      %s502 = sphi 0, %s502
      %s504 = sphi 0, %s502
      %s505 = sphi 0, %s504
      %s519 = sphi 0, %s505
      %s523 = sphi 0, %s523
      %s525 = sphi 0, %s523
      %s526 = sphi 0, %s525
      %s540 = sphi 0, %s526
      %s544 = sphi 0, %s544
      %s546 = sphi 0, %s544
      %s547 = sphi 0, %s546
      %s561 = sphi 0, %s547
      %s565 = sphi 0, %s565
      %s567 = sphi 0, %s565
      %s568 = sphi 0, %s567
      %s582 = sphi 0, %s568
      %s586 = sphi 0, %s586
      %s588 = sphi 0, %s586
      %s589 = sphi 0, %s588
      %s603 = sphi 0, %s589
      %s607 = sphi 0, %s607
      %s609 = sphi 0, %s607
      %s610 = sphi 0, %s609
      %s624 = sphi 0, %s610
      %s628 = sphi 0, %s628
      %s630 = sphi 0, %s628
      %s631 = sphi 0, %s630
      %s645 = sphi 0, %s631
      %s649 = sphi 0, %s649
      %s651 = sphi 0, %s649
      %s652 = sphi 0, %s651
      %s666 = sphi 0, %s652
      %s670 = sphi 0, %s670
      %s672 = sphi 0, %s670
      %s673 = sphi 0, %s672
      %s687 = sphi 0, %s673
      %s691 = sphi 0, %s691
      %s693 = sphi 0, %s691
      %s694 = sphi 0, %s693
      %s708 = sphi 0, %s694
    $region4: #{vit_mlp2_forward.1} parent=1 // loop_header_branch
      %43 = sbr.rel (%p41) target = $region8
    $region5: #{vit_mlp2_forward.1} parent=1 // loop_body
      %s45 = ssub.s32 %s40, 1
      %s46 = ssub.s32 %s40, 2
      %s47 = sadd.s32 %s40, 1
      %s49 = sadd.s32 %s48, 1
      %p52 = scmp.eq.s32.totalorder %s40, 2
      %p53 = scmp.ne.s32.totalorder %s48, %s50
      %p54 = scmp.eq.s32.totalorder %s40, 0
      %p55 = por %p53, %p54
      %p56 = scmp.ne.s32.totalorder %s48, %s50
      %p57 = scmp.eq.s32.totalorder %s45, 2
      %p58 = por %p56, %p57
      %p59 = scmp.ne.s32.totalorder %s50, %s51
      %p60 = scmp.eq.s32.totalorder %s45, 0
      %p61 = por %p59, %p60
      %p62 = scmp.ne.s32.totalorder %s50, %s51
      %p63 = scmp.eq.s32.totalorder %s46, 2
      %p64 = por %p62, %p63
      %p66 = scmp.ne.s32.totalorder %s51, %s65
      %p67 = scmp.eq.s32.totalorder %s46, 0
      %p68 = por %p66, %p67
      %s70 = sadd.s32 %s69, 1
      %p73 = scmp.eq.s32.totalorder %s40, 2
      %p74 = scmp.ne.s32.totalorder %s69, %s71
      %p75 = scmp.eq.s32.totalorder %s40, 0
      %p76 = por %p74, %p75
      %p77 = scmp.ne.s32.totalorder %s69, %s71
      %p78 = scmp.eq.s32.totalorder %s45, 2
      %p79 = por %p77, %p78
      %p80 = scmp.ne.s32.totalorder %s71, %s72
      %p81 = scmp.eq.s32.totalorder %s45, 0
      %p82 = por %p80, %p81
      %p83 = scmp.ne.s32.totalorder %s71, %s72
      %p84 = scmp.eq.s32.totalorder %s46, 2
      %p85 = por %p83, %p84
      %p87 = scmp.ne.s32.totalorder %s72, %s86
      %p88 = scmp.eq.s32.totalorder %s46, 0
      %p89 = por %p87, %p88
      %s91 = sadd.s32 %s90, 1
      %p94 = scmp.eq.s32.totalorder %s40, 2
      %p95 = scmp.ne.s32.totalorder %s90, %s92
      %p96 = scmp.eq.s32.totalorder %s40, 0
      %p97 = por %p95, %p96
      %p98 = scmp.ne.s32.totalorder %s90, %s92
      %p99 = scmp.eq.s32.totalorder %s45, 2
      %p100 = por %p98, %p99
      %p101 = scmp.ne.s32.totalorder %s92, %s93
      %p102 = scmp.eq.s32.totalorder %s45, 0
      %p103 = por %p101, %p102
      %p104 = scmp.ne.s32.totalorder %s92, %s93
      %p105 = scmp.eq.s32.totalorder %s46, 2
      %p106 = por %p104, %p105
      %p108 = scmp.ne.s32.totalorder %s93, %s107
      %p109 = scmp.eq.s32.totalorder %s46, 0
      %p110 = por %p108, %p109
      %s112 = sadd.s32 %s111, 1
      %p115 = scmp.eq.s32.totalorder %s40, 2
      %p116 = scmp.ne.s32.totalorder %s111, %s113
      %p117 = scmp.eq.s32.totalorder %s40, 0
      %p118 = por %p116, %p117
      %p119 = scmp.ne.s32.totalorder %s111, %s113
      %p120 = scmp.eq.s32.totalorder %s45, 2
      %p121 = por %p119, %p120
      %p122 = scmp.ne.s32.totalorder %s113, %s114
      %p123 = scmp.eq.s32.totalorder %s45, 0
      %p124 = por %p122, %p123
      %p125 = scmp.ne.s32.totalorder %s113, %s114
      %p126 = scmp.eq.s32.totalorder %s46, 2
      %p127 = por %p125, %p126
      %p129 = scmp.ne.s32.totalorder %s114, %s128
      %p130 = scmp.eq.s32.totalorder %s46, 0
      %p131 = por %p129, %p130
      %s133 = sadd.s32 %s132, 1
      %p136 = scmp.eq.s32.totalorder %s40, 2
      %p137 = scmp.ne.s32.totalorder %s132, %s134
      %p138 = scmp.eq.s32.totalorder %s40, 0
      %p139 = por %p137, %p138
      %p140 = scmp.ne.s32.totalorder %s132, %s134
      %p141 = scmp.eq.s32.totalorder %s45, 2
      %p142 = por %p140, %p141
      %p143 = scmp.ne.s32.totalorder %s134, %s135
      %p144 = scmp.eq.s32.totalorder %s45, 0
      %p145 = por %p143, %p144
      %p146 = scmp.ne.s32.totalorder %s134, %s135
      %p147 = scmp.eq.s32.totalorder %s46, 2
      %p148 = por %p146, %p147
      %p150 = scmp.ne.s32.totalorder %s135, %s149
      %p151 = scmp.eq.s32.totalorder %s46, 0
      %p152 = por %p150, %p151
      %s153 = ssub.s32 %s40, %s47
      %p154 = scmp.eq.s32.totalorder %s153, 0
      %s156 = sadd.s32 %s155, 1
      %s157 = scalar_select %p154, %s155, %s156
      %p160 = pneg %p154
      %p161 = scmp.eq.s32.totalorder %s40, 2
      %p162 = por %p160, %p161
      %p163 = scmp.ne.s32.totalorder %s155, %s158
      %p164 = scmp.eq.s32.totalorder %s40, 0
      %p165 = por %p163, %p164
      %p166 = scmp.ne.s32.totalorder %s155, %s158
      %p167 = scmp.eq.s32.totalorder %s45, 2
      %p168 = por %p166, %p167
      %p169 = scmp.ne.s32.totalorder %s158, %s159
      %p170 = scmp.eq.s32.totalorder %s45, 0
      %p171 = por %p169, %p170
      %p172 = scmp.ne.s32.totalorder %s158, %s159
      %p173 = scmp.eq.s32.totalorder %s46, 2
      %p174 = por %p172, %p173
      %p176 = scmp.ne.s32.totalorder %s159, %s175
      %p177 = scmp.eq.s32.totalorder %s46, 0
      %p178 = por %p176, %p177
      %s179 = ssub.s32 %s40, %s47
      %p180 = scmp.eq.s32.totalorder %s179, 0
      %s182 = sadd.s32 %s181, 1
      %s183 = scalar_select %p180, %s181, %s182
      %p186 = pneg %p180
      %p187 = scmp.eq.s32.totalorder %s40, 2
      %p188 = por %p186, %p187
      %p189 = scmp.ne.s32.totalorder %s181, %s184
      %p190 = scmp.eq.s32.totalorder %s40, 0
      %p191 = por %p189, %p190
      %p192 = scmp.ne.s32.totalorder %s181, %s184
      %p193 = scmp.eq.s32.totalorder %s45, 2
      %p194 = por %p192, %p193
      %p195 = scmp.ne.s32.totalorder %s184, %s185
      %p196 = scmp.eq.s32.totalorder %s45, 0
      %p197 = por %p195, %p196
      %p198 = scmp.ne.s32.totalorder %s184, %s185
      %p199 = scmp.eq.s32.totalorder %s46, 2
      %p200 = por %p198, %p199
      %p202 = scmp.ne.s32.totalorder %s185, %s201
      %p203 = scmp.eq.s32.totalorder %s46, 0
      %p204 = por %p202, %p203
      %s205 = ssub.s32 %s40, %s47
      %p206 = scmp.eq.s32.totalorder %s205, 0
      %s208 = sadd.s32 %s207, 1
      %s209 = scalar_select %p206, %s207, %s208
      %p212 = pneg %p206
      %p213 = scmp.eq.s32.totalorder %s40, 2
      %p214 = por %p212, %p213
      %p215 = scmp.ne.s32.totalorder %s207, %s210
      %p216 = scmp.eq.s32.totalorder %s40, 0
      %p217 = por %p215, %p216
      %p218 = scmp.ne.s32.totalorder %s207, %s210
      %p219 = scmp.eq.s32.totalorder %s45, 2
      %p220 = por %p218, %p219
      %p221 = scmp.ne.s32.totalorder %s210, %s211
      %p222 = scmp.eq.s32.totalorder %s45, 0
      %p223 = por %p221, %p222
      %p224 = scmp.ne.s32.totalorder %s210, %s211
      %p225 = scmp.eq.s32.totalorder %s46, 2
      %p226 = por %p224, %p225
      %p228 = scmp.ne.s32.totalorder %s211, %s227
      %p229 = scmp.eq.s32.totalorder %s46, 0
      %p230 = por %p228, %p229
      %s231 = ssub.s32 %s40, %s47
      %p232 = scmp.eq.s32.totalorder %s231, 0
      %s234 = sadd.s32 %s233, 1
      %s235 = scalar_select %p232, %s233, %s234
      %p238 = pneg %p232
      %p239 = scmp.eq.s32.totalorder %s40, 2
      %p240 = por %p238, %p239
      %p241 = scmp.ne.s32.totalorder %s233, %s236
      %p242 = scmp.eq.s32.totalorder %s40, 0
      %p243 = por %p241, %p242
      %p244 = scmp.ne.s32.totalorder %s233, %s236
      %p245 = scmp.eq.s32.totalorder %s45, 2
      %p246 = por %p244, %p245
      %p247 = scmp.ne.s32.totalorder %s236, %s237
      %p248 = scmp.eq.s32.totalorder %s45, 0
      %p249 = por %p247, %p248
      %p250 = scmp.ne.s32.totalorder %s236, %s237
      %p251 = scmp.eq.s32.totalorder %s46, 2
      %p252 = por %p250, %p251
      %p254 = scmp.ne.s32.totalorder %s237, %s253
      %p255 = scmp.eq.s32.totalorder %s46, 0
      %p256 = por %p254, %p255
      %s257 = ssub.s32 %s40, %s47
      %p258 = scmp.eq.s32.totalorder %s257, 0
      %s260 = sadd.s32 %s259, 1
      %s261 = scalar_select %p258, %s259, %s260
      %p264 = pneg %p258
      %p265 = scmp.eq.s32.totalorder %s40, 2
      %p266 = por %p264, %p265
      %p267 = scmp.ne.s32.totalorder %s259, %s262
      %p268 = scmp.eq.s32.totalorder %s40, 0
      %p269 = por %p267, %p268
      %p270 = scmp.ne.s32.totalorder %s259, %s262
      %p271 = scmp.eq.s32.totalorder %s45, 2
      %p272 = por %p270, %p271
      %p273 = scmp.ne.s32.totalorder %s262, %s263
      %p274 = scmp.eq.s32.totalorder %s45, 0
      %p275 = por %p273, %p274
      %p276 = scmp.ne.s32.totalorder %s262, %s263
      %p277 = scmp.eq.s32.totalorder %s46, 2
      %p278 = por %p276, %p277
      %p280 = scmp.ne.s32.totalorder %s263, %s279
      %p281 = scmp.eq.s32.totalorder %s46, 0
      %p282 = por %p280, %p281
      %s283 = ssub.s32 %s40, %s47
      %p284 = scmp.eq.s32.totalorder %s283, 0
      %s286 = sadd.s32 %s285, 1
      %s287 = scalar_select %p284, %s285, %s286
      %p290 = pneg %p284
      %p291 = scmp.eq.s32.totalorder %s40, 2
      %p292 = por %p290, %p291
      %p293 = scmp.ne.s32.totalorder %s285, %s288
      %p294 = scmp.eq.s32.totalorder %s40, 0
      %p295 = por %p293, %p294
      %p296 = scmp.ne.s32.totalorder %s285, %s288
      %p297 = scmp.eq.s32.totalorder %s45, 2
      %p298 = por %p296, %p297
      %p299 = scmp.ne.s32.totalorder %s288, %s289
      %p300 = scmp.eq.s32.totalorder %s45, 0
      %p301 = por %p299, %p300
      %p302 = scmp.ne.s32.totalorder %s288, %s289
      %p303 = scmp.eq.s32.totalorder %s46, 2
      %p304 = por %p302, %p303
      %p306 = scmp.ne.s32.totalorder %s289, %s305
      %p307 = scmp.eq.s32.totalorder %s46, 0
      %p308 = por %p306, %p307
      %s309 = ssub.s32 %s40, %s47
      %p310 = scmp.eq.s32.totalorder %s309, 0
      %s312 = sadd.s32 %s311, 1
      %s313 = scalar_select %p310, %s311, %s312
      %p316 = pneg %p310
      %p317 = scmp.eq.s32.totalorder %s40, 2
      %p318 = por %p316, %p317
      %p319 = scmp.ne.s32.totalorder %s311, %s314
      %p320 = scmp.eq.s32.totalorder %s40, 0
      %p321 = por %p319, %p320
      %p322 = scmp.ne.s32.totalorder %s311, %s314
      %p323 = scmp.eq.s32.totalorder %s45, 2
      %p324 = por %p322, %p323
      %p325 = scmp.ne.s32.totalorder %s314, %s315
      %p326 = scmp.eq.s32.totalorder %s45, 0
      %p327 = por %p325, %p326
      %p328 = scmp.ne.s32.totalorder %s314, %s315
      %p329 = scmp.eq.s32.totalorder %s46, 2
      %p330 = por %p328, %p329
      %p332 = scmp.ne.s32.totalorder %s315, %s331
      %p333 = scmp.eq.s32.totalorder %s46, 0
      %p334 = por %p332, %p333
      %s335 = ssub.s32 %s40, %s47
      %p336 = scmp.eq.s32.totalorder %s335, 0
      %s338 = sadd.s32 %s337, 1
      %s339 = scalar_select %p336, %s337, %s338
      %p342 = pneg %p336
      %p343 = scmp.eq.s32.totalorder %s40, 2
      %p344 = por %p342, %p343
      %p345 = scmp.ne.s32.totalorder %s337, %s340
      %p346 = scmp.eq.s32.totalorder %s40, 0
      %p347 = por %p345, %p346
      %p348 = scmp.ne.s32.totalorder %s337, %s340
      %p349 = scmp.eq.s32.totalorder %s45, 2
      %p350 = por %p348, %p349
      %p351 = scmp.ne.s32.totalorder %s340, %s341
      %p352 = scmp.eq.s32.totalorder %s45, 0
      %p353 = por %p351, %p352
      %p354 = scmp.ne.s32.totalorder %s340, %s341
      %p355 = scmp.eq.s32.totalorder %s46, 2
      %p356 = por %p354, %p355
      %p358 = scmp.ne.s32.totalorder %s341, %s357
      %p359 = scmp.eq.s32.totalorder %s46, 0
      %p360 = por %p358, %p359
      %s361 = ssub.s32 %s40, %s47
      %p362 = scmp.eq.s32.totalorder %s361, 0
      %s364 = sadd.s32 %s363, 1
      %s365 = scalar_select %p362, %s363, %s364
      %p368 = pneg %p362
      %p369 = scmp.eq.s32.totalorder %s40, 2
      %p370 = por %p368, %p369
      %p371 = scmp.ne.s32.totalorder %s363, %s366
      %p372 = scmp.eq.s32.totalorder %s40, 0
      %p373 = por %p371, %p372
      %p374 = scmp.ne.s32.totalorder %s363, %s366
      %p375 = scmp.eq.s32.totalorder %s45, 2
      %p376 = por %p374, %p375
      %p377 = scmp.ne.s32.totalorder %s366, %s367
      %p378 = scmp.eq.s32.totalorder %s45, 0
      %p379 = por %p377, %p378
      %p380 = scmp.ne.s32.totalorder %s366, %s367
      %p381 = scmp.eq.s32.totalorder %s46, 2
      %p382 = por %p380, %p381
      %p384 = scmp.ne.s32.totalorder %s367, %s383
      %p385 = scmp.eq.s32.totalorder %s46, 0
      %p386 = por %p384, %p385
      %s387 = ssub.s32 %s40, %s47
      %p388 = scmp.eq.s32.totalorder %s387, 0
      %s390 = sadd.s32 %s389, 1
      %s391 = scalar_select %p388, %s389, %s390
      %p394 = pneg %p388
      %p395 = scmp.eq.s32.totalorder %s40, 2
      %p396 = por %p394, %p395
      %p397 = scmp.ne.s32.totalorder %s389, %s392
      %p398 = scmp.eq.s32.totalorder %s40, 0
      %p399 = por %p397, %p398
      %p400 = scmp.ne.s32.totalorder %s389, %s392
      %p401 = scmp.eq.s32.totalorder %s45, 2
      %p402 = por %p400, %p401
      %p403 = scmp.ne.s32.totalorder %s392, %s393
      %p404 = scmp.eq.s32.totalorder %s45, 0
      %p405 = por %p403, %p404
      %p406 = scmp.ne.s32.totalorder %s392, %s393
      %p407 = scmp.eq.s32.totalorder %s46, 2
      %p408 = por %p406, %p407
      %p410 = scmp.ne.s32.totalorder %s393, %s409
      %p411 = scmp.eq.s32.totalorder %s46, 0
      %p412 = por %p410, %p411
      %s413 = ssub.s32 %s40, %s47
      %p414 = scmp.eq.s32.totalorder %s413, 0
      %s416 = sadd.s32 %s415, 1
      %s417 = scalar_select %p414, %s415, %s416
      %p420 = pneg %p414
      %p421 = scmp.eq.s32.totalorder %s40, 2
      %p422 = por %p420, %p421
      %p423 = scmp.ne.s32.totalorder %s415, %s418
      %p424 = scmp.eq.s32.totalorder %s40, 0
      %p425 = por %p423, %p424
      %p426 = scmp.ne.s32.totalorder %s415, %s418
      %p427 = scmp.eq.s32.totalorder %s45, 2
      %p428 = por %p426, %p427
      %p429 = scmp.ne.s32.totalorder %s418, %s419
      %p430 = scmp.eq.s32.totalorder %s45, 0
      %p431 = por %p429, %p430
      %p432 = scmp.ne.s32.totalorder %s418, %s419
      %p433 = scmp.eq.s32.totalorder %s46, 2
      %p434 = por %p432, %p433
      %p436 = scmp.ne.s32.totalorder %s419, %s435
      %p437 = scmp.eq.s32.totalorder %s46, 0
      %p438 = por %p436, %p437
      %s440 = sadd.s32 %s439, 1
      %p443 = scmp.eq.s32.totalorder %s40, 2
      %p444 = scmp.ne.s32.totalorder %s439, %s441
      %p445 = scmp.eq.s32.totalorder %s40, 0
      %p446 = por %p444, %p445
      %p447 = scmp.ne.s32.totalorder %s439, %s441
      %p448 = scmp.eq.s32.totalorder %s45, 2
      %p449 = por %p447, %p448
      %p450 = scmp.ne.s32.totalorder %s441, %s442
      %p451 = scmp.eq.s32.totalorder %s45, 0
      %p452 = por %p450, %p451
      %p453 = scmp.ne.s32.totalorder %s441, %s442
      %p454 = scmp.eq.s32.totalorder %s46, 2
      %p455 = por %p453, %p454
      %p457 = scmp.ne.s32.totalorder %s442, %s456
      %p458 = scmp.eq.s32.totalorder %s46, 0
      %p459 = por %p457, %p458
      %s461 = sadd.s32 %s460, 1
      %p464 = scmp.eq.s32.totalorder %s40, 2
      %p465 = scmp.ne.s32.totalorder %s460, %s462
      %p466 = scmp.eq.s32.totalorder %s40, 0
      %p467 = por %p465, %p466
      %p468 = scmp.ne.s32.totalorder %s460, %s462
      %p469 = scmp.eq.s32.totalorder %s45, 2
      %p470 = por %p468, %p469
      %p471 = scmp.ne.s32.totalorder %s462, %s463
      %p472 = scmp.eq.s32.totalorder %s45, 0
      %p473 = por %p471, %p472
      %p474 = scmp.ne.s32.totalorder %s462, %s463
      %p475 = scmp.eq.s32.totalorder %s46, 2
      %p476 = por %p474, %p475
      %p478 = scmp.ne.s32.totalorder %s463, %s477
      %p479 = scmp.eq.s32.totalorder %s46, 0
      %p480 = por %p478, %p479
      %s482 = sadd.s32 %s481, 1
      %p485 = scmp.eq.s32.totalorder %s40, 2
      %p486 = scmp.ne.s32.totalorder %s481, %s483
      %p487 = scmp.eq.s32.totalorder %s40, 0
      %p488 = por %p486, %p487
      %p489 = scmp.ne.s32.totalorder %s481, %s483
      %p490 = scmp.eq.s32.totalorder %s45, 2
      %p491 = por %p489, %p490
      %p492 = scmp.ne.s32.totalorder %s483, %s484
      %p493 = scmp.eq.s32.totalorder %s45, 0
      %p494 = por %p492, %p493
      %p495 = scmp.ne.s32.totalorder %s483, %s484
      %p496 = scmp.eq.s32.totalorder %s46, 2
      %p497 = por %p495, %p496
      %p499 = scmp.ne.s32.totalorder %s484, %s498
      %p500 = scmp.eq.s32.totalorder %s46, 0
      %p501 = por %p499, %p500
      %s503 = sadd.s32 %s502, 1
      %p506 = scmp.eq.s32.totalorder %s40, 2
      %p507 = scmp.ne.s32.totalorder %s502, %s504
      %p508 = scmp.eq.s32.totalorder %s40, 0
      %p509 = por %p507, %p508
      %p510 = scmp.ne.s32.totalorder %s502, %s504
      %p511 = scmp.eq.s32.totalorder %s45, 2
      %p512 = por %p510, %p511
      %p513 = scmp.ne.s32.totalorder %s504, %s505
      %p514 = scmp.eq.s32.totalorder %s45, 0
      %p515 = por %p513, %p514
      %p516 = scmp.ne.s32.totalorder %s504, %s505
      %p517 = scmp.eq.s32.totalorder %s46, 2
      %p518 = por %p516, %p517
      %p520 = scmp.ne.s32.totalorder %s505, %s519
      %p521 = scmp.eq.s32.totalorder %s46, 0
      %p522 = por %p520, %p521
      %s524 = sadd.s32 %s523, 1
      %p527 = scmp.eq.s32.totalorder %s40, 2
      %p528 = scmp.ne.s32.totalorder %s523, %s525
      %p529 = scmp.eq.s32.totalorder %s40, 0
      %p530 = por %p528, %p529
      %p531 = scmp.ne.s32.totalorder %s523, %s525
      %p532 = scmp.eq.s32.totalorder %s45, 2
      %p533 = por %p531, %p532
      %p534 = scmp.ne.s32.totalorder %s525, %s526
      %p535 = scmp.eq.s32.totalorder %s45, 0
      %p536 = por %p534, %p535
      %p537 = scmp.ne.s32.totalorder %s525, %s526
      %p538 = scmp.eq.s32.totalorder %s46, 2
      %p539 = por %p537, %p538
      %p541 = scmp.ne.s32.totalorder %s526, %s540
      %p542 = scmp.eq.s32.totalorder %s46, 0
      %p543 = por %p541, %p542
      %s545 = sadd.s32 %s544, 1
      %p548 = scmp.eq.s32.totalorder %s40, 2
      %p549 = scmp.ne.s32.totalorder %s544, %s546
      %p550 = scmp.eq.s32.totalorder %s40, 0
      %p551 = por %p549, %p550
      %p552 = scmp.ne.s32.totalorder %s544, %s546
      %p553 = scmp.eq.s32.totalorder %s45, 2
      %p554 = por %p552, %p553
      %p555 = scmp.ne.s32.totalorder %s546, %s547
      %p556 = scmp.eq.s32.totalorder %s45, 0
      %p557 = por %p555, %p556
      %p558 = scmp.ne.s32.totalorder %s546, %s547
      %p559 = scmp.eq.s32.totalorder %s46, 2
      %p560 = por %p558, %p559
      %p562 = scmp.ne.s32.totalorder %s547, %s561
      %p563 = scmp.eq.s32.totalorder %s46, 0
      %p564 = por %p562, %p563
      %s566 = sadd.s32 %s565, 1
      %p569 = scmp.eq.s32.totalorder %s40, 2
      %p570 = scmp.ne.s32.totalorder %s565, %s567
      %p571 = scmp.eq.s32.totalorder %s40, 0
      %p572 = por %p570, %p571
      %p573 = scmp.ne.s32.totalorder %s565, %s567
      %p574 = scmp.eq.s32.totalorder %s45, 2
      %p575 = por %p573, %p574
      %p576 = scmp.ne.s32.totalorder %s567, %s568
      %p577 = scmp.eq.s32.totalorder %s45, 0
      %p578 = por %p576, %p577
      %p579 = scmp.ne.s32.totalorder %s567, %s568
      %p580 = scmp.eq.s32.totalorder %s46, 2
      %p581 = por %p579, %p580
      %p583 = scmp.ne.s32.totalorder %s568, %s582
      %p584 = scmp.eq.s32.totalorder %s46, 0
      %p585 = por %p583, %p584
      %s587 = sadd.s32 %s586, 1
      %p590 = scmp.eq.s32.totalorder %s40, 2
      %p591 = scmp.ne.s32.totalorder %s586, %s588
      %p592 = scmp.eq.s32.totalorder %s40, 0
      %p593 = por %p591, %p592
      %p594 = scmp.ne.s32.totalorder %s586, %s588
      %p595 = scmp.eq.s32.totalorder %s45, 2
      %p596 = por %p594, %p595
      %p597 = scmp.ne.s32.totalorder %s588, %s589
      %p598 = scmp.eq.s32.totalorder %s45, 0
      %p599 = por %p597, %p598
      %p600 = scmp.ne.s32.totalorder %s588, %s589
      %p601 = scmp.eq.s32.totalorder %s46, 2
      %p602 = por %p600, %p601
      %p604 = scmp.ne.s32.totalorder %s589, %s603
      %p605 = scmp.eq.s32.totalorder %s46, 0
      %p606 = por %p604, %p605
      %s608 = sadd.s32 %s607, 1
      %p611 = scmp.eq.s32.totalorder %s40, 2
      %p612 = scmp.ne.s32.totalorder %s607, %s609
      %p613 = scmp.eq.s32.totalorder %s40, 0
      %p614 = por %p612, %p613
      %p615 = scmp.ne.s32.totalorder %s607, %s609
      %p616 = scmp.eq.s32.totalorder %s45, 2
      %p617 = por %p615, %p616
      %p618 = scmp.ne.s32.totalorder %s609, %s610
      %p619 = scmp.eq.s32.totalorder %s45, 0
      %p620 = por %p618, %p619
      %p621 = scmp.ne.s32.totalorder %s609, %s610
      %p622 = scmp.eq.s32.totalorder %s46, 2
      %p623 = por %p621, %p622
      %p625 = scmp.ne.s32.totalorder %s610, %s624
      %p626 = scmp.eq.s32.totalorder %s46, 0
      %p627 = por %p625, %p626
      %s629 = sadd.s32 %s628, 1
      %p632 = scmp.eq.s32.totalorder %s40, 2
      %p633 = scmp.ne.s32.totalorder %s628, %s630
      %p634 = scmp.eq.s32.totalorder %s40, 0
      %p635 = por %p633, %p634
      %p636 = scmp.ne.s32.totalorder %s628, %s630
      %p637 = scmp.eq.s32.totalorder %s45, 2
      %p638 = por %p636, %p637
      %p639 = scmp.ne.s32.totalorder %s630, %s631
      %p640 = scmp.eq.s32.totalorder %s45, 0
      %p641 = por %p639, %p640
      %p642 = scmp.ne.s32.totalorder %s630, %s631
      %p643 = scmp.eq.s32.totalorder %s46, 2
      %p644 = por %p642, %p643
      %p646 = scmp.ne.s32.totalorder %s631, %s645
      %p647 = scmp.eq.s32.totalorder %s46, 0
      %p648 = por %p646, %p647
      %s650 = sadd.s32 %s649, 1
      %p653 = scmp.eq.s32.totalorder %s40, 2
      %p654 = scmp.ne.s32.totalorder %s649, %s651
      %p655 = scmp.eq.s32.totalorder %s40, 0
      %p656 = por %p654, %p655
      %p657 = scmp.ne.s32.totalorder %s649, %s651
      %p658 = scmp.eq.s32.totalorder %s45, 2
      %p659 = por %p657, %p658
      %p660 = scmp.ne.s32.totalorder %s651, %s652
      %p661 = scmp.eq.s32.totalorder %s45, 0
      %p662 = por %p660, %p661
      %p663 = scmp.ne.s32.totalorder %s651, %s652
      %p664 = scmp.eq.s32.totalorder %s46, 2
      %p665 = por %p663, %p664
      %p667 = scmp.ne.s32.totalorder %s652, %s666
      %p668 = scmp.eq.s32.totalorder %s46, 0
      %p669 = por %p667, %p668
      %s671 = sadd.s32 %s670, 1
      %p674 = scmp.eq.s32.totalorder %s40, 2
      %p675 = scmp.ne.s32.totalorder %s670, %s672
      %p676 = scmp.eq.s32.totalorder %s40, 0
      %p677 = por %p675, %p676
      %p678 = scmp.ne.s32.totalorder %s670, %s672
      %p679 = scmp.eq.s32.totalorder %s45, 2
      %p680 = por %p678, %p679
      %p681 = scmp.ne.s32.totalorder %s672, %s673
      %p682 = scmp.eq.s32.totalorder %s45, 0
      %p683 = por %p681, %p682
      %p684 = scmp.ne.s32.totalorder %s672, %s673
      %p685 = scmp.eq.s32.totalorder %s46, 2
      %p686 = por %p684, %p685
      %p688 = scmp.ne.s32.totalorder %s673, %s687
      %p689 = scmp.eq.s32.totalorder %s46, 0
      %p690 = por %p688, %p689
      %s692 = sadd.s32 %s691, 1
      %p695 = scmp.eq.s32.totalorder %s40, 2
      %p696 = scmp.ne.s32.totalorder %s691, %s693
      %p697 = scmp.eq.s32.totalorder %s40, 0
      %p698 = por %p696, %p697
      %p699 = scmp.ne.s32.totalorder %s691, %s693
      %p700 = scmp.eq.s32.totalorder %s45, 2
      %p701 = por %p699, %p700
      %p702 = scmp.ne.s32.totalorder %s693, %s694
      %p703 = scmp.eq.s32.totalorder %s45, 0
      %p704 = por %p702, %p703
      %p705 = scmp.ne.s32.totalorder %s693, %s694
      %p706 = scmp.eq.s32.totalorder %s46, 2
      %p707 = por %p705, %p706
      %p709 = scmp.ne.s32.totalorder %s694, %s708
      %p710 = scmp.eq.s32.totalorder %s46, 0
      %p711 = por %p709, %p710
      %p712 = scmp.le.s32.totalorder 1, %s40
      %p713 = scmp.lt.s32.totalorder %s40, 4
      %p714 = pnand %p712, %p713
      %p715 = pneg %p714
      // Predicated region
      $region9: #{vit_mlp2_forward.1} parent=5 // pred_check
        _
      $region10: #{vit_mlp2_forward.1} parent=5 // pred_check_branch
        %717 = sbr.rel (%p714) target = $region12
      $region11: #{vit_mlp2_forward.1} parent=5 // pred_region
        %s718 = ssub.s32 %s40, 1
        // Predicated region
        $region13: #{vit_mlp2_forward.1} parent=11 // pred_check
          %p719 = pneg %p61
        $region14: #{vit_mlp2_forward.1} parent=11 // pred_check_branch
          %721 = sbr.rel (%p719) target = $region16
        $region15: #{vit_mlp2_forward.1} parent=11 // pred_region
          _
        $region16: #{vit_mlp2_forward.1} parent=11 // pred_fallthru
          _
        // Predicated region
        $region17: #{vit_mlp2_forward.1} parent=11 // pred_check
          %p722 = pneg %p82
        $region18: #{vit_mlp2_forward.1} parent=11 // pred_check_branch
          %724 = sbr.rel (%p722) target = $region20
        $region19: #{vit_mlp2_forward.1} parent=11 // pred_region
          _
        $region20: #{vit_mlp2_forward.1} parent=11 // pred_fallthru
          _
        // Predicated region
        $region21: #{vit_mlp2_forward.1} parent=11 // pred_check
          %p725 = pneg %p103
        $region22: #{vit_mlp2_forward.1} parent=11 // pred_check_branch
          %727 = sbr.rel (%p725) target = $region24
        $region23: #{vit_mlp2_forward.1} parent=11 // pred_region
          _
        $region24: #{vit_mlp2_forward.1} parent=11 // pred_fallthru
          _
        // Predicated region
        $region25: #{vit_mlp2_forward.1} parent=11 // pred_check
          %p728 = pneg %p124
        $region26: #{vit_mlp2_forward.1} parent=11 // pred_check_branch
          %730 = sbr.rel (%p728) target = $region28
        $region27: #{vit_mlp2_forward.1} parent=11 // pred_region
          _
        $region28: #{vit_mlp2_forward.1} parent=11 // pred_fallthru
          _
        // Predicated region
        $region29: #{vit_mlp2_forward.1} parent=11 // pred_check
          %p731 = pneg %p145
        $region30: #{vit_mlp2_forward.1} parent=11 // pred_check_branch
          %733 = sbr.rel (%p731) target = $region32
        $region31: #{vit_mlp2_forward.1} parent=11 // pred_region
          _
        $region32: #{vit_mlp2_forward.1} parent=11 // pred_fallthru
          _
        // Predicated region
        $region33: #{vit_mlp2_forward.1} parent=11 // pred_check
          %p734 = pneg %p452
        $region34: #{vit_mlp2_forward.1} parent=11 // pred_check_branch
          %736 = sbr.rel (%p734) target = $region36
        $region35: #{vit_mlp2_forward.1} parent=11 // pred_region
          _
        $region36: #{vit_mlp2_forward.1} parent=11 // pred_fallthru
          _
        // Predicated region
        $region37: #{vit_mlp2_forward.1} parent=11 // pred_check
          %p737 = pneg %p473
        $region38: #{vit_mlp2_forward.1} parent=11 // pred_check_branch
          %739 = sbr.rel (%p737) target = $region40
        $region39: #{vit_mlp2_forward.1} parent=11 // pred_region
          _
        $region40: #{vit_mlp2_forward.1} parent=11 // pred_fallthru
          _
        // Predicated region
        $region41: #{vit_mlp2_forward.1} parent=11 // pred_check
          %p740 = pneg %p494
        $region42: #{vit_mlp2_forward.1} parent=11 // pred_check_branch
          %742 = sbr.rel (%p740) target = $region44
        $region43: #{vit_mlp2_forward.1} parent=11 // pred_region
          _
        $region44: #{vit_mlp2_forward.1} parent=11 // pred_fallthru
          _
        // Predicated region
        $region45: #{vit_mlp2_forward.1} parent=11 // pred_check
          %p743 = pneg %p515
        $region46: #{vit_mlp2_forward.1} parent=11 // pred_check_branch
          %745 = sbr.rel (%p743) target = $region48
        $region47: #{vit_mlp2_forward.1} parent=11 // pred_region
          _
        $region48: #{vit_mlp2_forward.1} parent=11 // pred_fallthru
          _
        // Predicated region
        $region49: #{vit_mlp2_forward.1} parent=11 // pred_check
          %p746 = pneg %p536
        $region50: #{vit_mlp2_forward.1} parent=11 // pred_check_branch
          %748 = sbr.rel (%p746) target = $region52
        $region51: #{vit_mlp2_forward.1} parent=11 // pred_region
          _
        $region52: #{vit_mlp2_forward.1} parent=11 // pred_fallthru
          _
        // Predicated region
        $region53: #{vit_mlp2_forward.1} parent=11 // pred_check
          %p749 = pneg %p557
        $region54: #{vit_mlp2_forward.1} parent=11 // pred_check_branch
          %751 = sbr.rel (%p749) target = $region56
        $region55: #{vit_mlp2_forward.1} parent=11 // pred_region
          _
        $region56: #{vit_mlp2_forward.1} parent=11 // pred_fallthru
          _
        // Predicated region
        $region57: #{vit_mlp2_forward.1} parent=11 // pred_check
          %p752 = pneg %p578
        $region58: #{vit_mlp2_forward.1} parent=11 // pred_check_branch
          %754 = sbr.rel (%p752) target = $region60
        $region59: #{vit_mlp2_forward.1} parent=11 // pred_region
          %756 = vsyncadd [#allocation7], 0
          %s757 = sshll.u32 %s22, 4
          %s758 = int_to_ptr.hbm [resolvable:$true] %s757
          %s759 = sshll.u32 [#allocation6], 4
          %s760 = int_to_ptr.vmem [resolvable:$true] %s759
          %765 = dma.hbm_to_vmem [thread:$0]  %s758, 4096, %s760, [#allocation7], 64, 64, 4
        $region60: #{vit_mlp2_forward.1} parent=11 // pred_fallthru
          _
        // Predicated region
        $region61: #{vit_mlp2_forward.1} parent=11 // pred_check
          %p766 = pneg %p599
        $region62: #{vit_mlp2_forward.1} parent=11 // pred_check_branch
          %768 = sbr.rel (%p766) target = $region64
        $region63: #{vit_mlp2_forward.1} parent=11 // pred_region
          _
        $region64: #{vit_mlp2_forward.1} parent=11 // pred_fallthru
          _
        // Predicated region
        $region65: #{vit_mlp2_forward.1} parent=11 // pred_check
          %p769 = pneg %p620
        $region66: #{vit_mlp2_forward.1} parent=11 // pred_check_branch
          %771 = sbr.rel (%p769) target = $region68
        $region67: #{vit_mlp2_forward.1} parent=11 // pred_region
          %773 = vsyncadd [#allocation7], 0
          %s775 = sshll.u32 %s24, 4
          %s776 = int_to_ptr.hbm [resolvable:$true] %s775
          %s777 = sshll.u32 [#allocation8], 4
          %s778 = int_to_ptr.vmem [resolvable:$true] %s777
          %780 = dma.hbm_to_vmem [thread:$0]  %s776, 16, %s778, [#allocation7]
        $region68: #{vit_mlp2_forward.1} parent=11 // pred_fallthru
          _
        // Predicated region
        $region69: #{vit_mlp2_forward.1} parent=11 // pred_check
          %p781 = pneg %p641
        $region70: #{vit_mlp2_forward.1} parent=11 // pred_check_branch
          %783 = sbr.rel (%p781) target = $region72
        $region71: #{vit_mlp2_forward.1} parent=11 // pred_region
          %785 = vsyncadd [#allocation10], 0
          %s787 = sshll.u32 %s25, 4
          %s788 = int_to_ptr.hbm [resolvable:$true] %s787
          %s789 = sshll.u32 [#allocation9], 4
          %s790 = int_to_ptr.vmem [resolvable:$true] %s789
          %792 = dma.hbm_to_vmem [thread:$0]  %s788, 16, %s790, [#allocation10]
        $region72: #{vit_mlp2_forward.1} parent=11 // pred_fallthru
          _
        // Predicated region
        $region73: #{vit_mlp2_forward.1} parent=11 // pred_check
          %p793 = pneg %p662
        $region74: #{vit_mlp2_forward.1} parent=11 // pred_check_branch
          %795 = sbr.rel (%p793) target = $region76
        $region75: #{vit_mlp2_forward.1} parent=11 // pred_region
          _
        $region76: #{vit_mlp2_forward.1} parent=11 // pred_fallthru
          _
        // Predicated region
        $region77: #{vit_mlp2_forward.1} parent=11 // pred_check
          %p796 = pneg %p683
        $region78: #{vit_mlp2_forward.1} parent=11 // pred_check_branch
          %798 = sbr.rel (%p796) target = $region80
        $region79: #{vit_mlp2_forward.1} parent=11 // pred_region
          %800 = vsyncadd [#allocation10], 0
          %s802 = sshll.u32 %s27, 4
          %s803 = int_to_ptr.hbm [resolvable:$true] %s802
          %s804 = sshll.u32 [#allocation11], 4
          %s805 = int_to_ptr.vmem [resolvable:$true] %s804
          %807 = dma.hbm_to_vmem [thread:$0]  %s803, 16, %s805, [#allocation10]
        $region80: #{vit_mlp2_forward.1} parent=11 // pred_fallthru
          _
      $region12: #{vit_mlp2_forward.1} parent=5 // pred_fallthru
        _
      %p808 = scmp.lt.s32.totalorder %s40, 3
      // Predicated region
      $region81: #{vit_mlp2_forward.1} parent=5 // pred_check
        %p809 = pneg %p808
      $region82: #{vit_mlp2_forward.1} parent=5 // pred_check_branch
        %811 = sbr.rel (%p809) target = $region84
      $region83: #{vit_mlp2_forward.1} parent=5 // pred_region
        // Predicated region
        $region85: #{vit_mlp2_forward.1} parent=83 // pred_check
          %p812 = pneg %p165
        $region86: #{vit_mlp2_forward.1} parent=83 // pred_check_branch
          %814 = sbr.rel (%p812) target = $region88
        $region87: #{vit_mlp2_forward.1} parent=83 // pred_region
          %p815 = scmp.lt.s32.totalorder %s40, 2
          %s816 = scalar_select %p815, %s40, 2
          %s817 = scalar_lea.vmem %s5, %s816
        $region88: #{vit_mlp2_forward.1} parent=83 // pred_fallthru
          _
        // Predicated region
        $region89: #{vit_mlp2_forward.1} parent=83 // pred_check
          %p818 = pneg %p191
        $region90: #{vit_mlp2_forward.1} parent=83 // pred_check_branch
          %820 = sbr.rel (%p818) target = $region92
        $region91: #{vit_mlp2_forward.1} parent=83 // pred_region
          %p821 = scmp.lt.s32.totalorder %s40, 2
          %s822 = scalar_select %p821, %s40, 2
          %s823 = scalar_lea.vmem %s6, %s822
        $region92: #{vit_mlp2_forward.1} parent=83 // pred_fallthru
          _
        // Predicated region
        $region93: #{vit_mlp2_forward.1} parent=83 // pred_check
          %p824 = pneg %p217
        $region94: #{vit_mlp2_forward.1} parent=83 // pred_check_branch
          %826 = sbr.rel (%p824) target = $region96
        $region95: #{vit_mlp2_forward.1} parent=83 // pred_region
          %p827 = scmp.lt.s32.totalorder %s40, 2
          %s828 = scalar_select %p827, %s40, 2
          %s829 = smul.addr %s828, 48
          %s830 = smul.addr %s829, 4
          %s831 = scalar_lea.vmem %s7, %s830
        $region96: #{vit_mlp2_forward.1} parent=83 // pred_fallthru
          _
        // Predicated region
        $region97: #{vit_mlp2_forward.1} parent=83 // pred_check
          %p832 = pneg %p243
        $region98: #{vit_mlp2_forward.1} parent=83 // pred_check_branch
          %834 = sbr.rel (%p832) target = $region100
        $region99: #{vit_mlp2_forward.1} parent=83 // pred_region
          %s835 = sand.u32 %s233, 1
          %s836 = scalar_lea.sflag [#allocation4], %s835
          %s837 = sand.u32 %s233, 1
          %s838 = smul.addr %s837, 64
          %s839 = scalar_lea.vmem [#allocation3], %s838
          %841 = vsyncadd %s836, 0
          %s842 = smul.addr %s40, 16
          %s843 = smul.addr %s842, 4
          %s844 = scalar_lea.hbm %s8, %s843
          %s845 = sshll.u32 %s844, 4
          %s846 = int_to_ptr.hbm [resolvable:$true] %s845
          %s847 = sshll.u32 %s839, 4
          %s848 = int_to_ptr.vmem [resolvable:$true] %s847
          %853 = dma.hbm_to_vmem [thread:$0]  %s846, 1024, %s848, %s836, 64, 64, 4
        $region100: #{vit_mlp2_forward.1} parent=83 // pred_fallthru
          _
        // Predicated region
        $region101: #{vit_mlp2_forward.1} parent=83 // pred_check
          %p854 = pneg %p269
        $region102: #{vit_mlp2_forward.1} parent=83 // pred_check_branch
          %856 = sbr.rel (%p854) target = $region104
        $region103: #{vit_mlp2_forward.1} parent=83 // pred_region
          %p857 = scmp.lt.s32.totalorder %s40, 2
          %s858 = scalar_select %p857, %s40, 2
          %s859 = scalar_lea.vmem %s9, %s858
        $region104: #{vit_mlp2_forward.1} parent=83 // pred_fallthru
          _
        // Predicated region
        $region105: #{vit_mlp2_forward.1} parent=83 // pred_check
          %p860 = pneg %p295
        $region106: #{vit_mlp2_forward.1} parent=83 // pred_check_branch
          %862 = sbr.rel (%p860) target = $region108
        $region107: #{vit_mlp2_forward.1} parent=83 // pred_region
          %p863 = scmp.lt.s32.totalorder %s40, 2
          %s864 = scalar_select %p863, %s40, 2
          %s865 = scalar_lea.vmem %s10, %s864
        $region108: #{vit_mlp2_forward.1} parent=83 // pred_fallthru
          _
        // Predicated region
        $region109: #{vit_mlp2_forward.1} parent=83 // pred_check
          %p866 = pneg %p321
        $region110: #{vit_mlp2_forward.1} parent=83 // pred_check_branch
          %868 = sbr.rel (%p866) target = $region112
        $region111: #{vit_mlp2_forward.1} parent=83 // pred_region
          %p869 = scmp.lt.s32.totalorder %s40, 2
          %s870 = scalar_select %p869, %s40, 2
          %s871 = scalar_lea.vmem %s11, %s870
        $region112: #{vit_mlp2_forward.1} parent=83 // pred_fallthru
          _
        // Predicated region
        $region113: #{vit_mlp2_forward.1} parent=83 // pred_check
          %p872 = pneg %p347
        $region114: #{vit_mlp2_forward.1} parent=83 // pred_check_branch
          %874 = sbr.rel (%p872) target = $region116
        $region115: #{vit_mlp2_forward.1} parent=83 // pred_region
          %p875 = scmp.lt.s32.totalorder %s40, 2
          %s876 = scalar_select %p875, %s40, 2
          %s877 = smul.addr %s876, 32
          %s878 = smul.addr %s877, 4
          %s879 = scalar_lea.vmem %s12, %s878
        $region116: #{vit_mlp2_forward.1} parent=83 // pred_fallthru
          _
        // Predicated region
        $region117: #{vit_mlp2_forward.1} parent=83 // pred_check
          %p880 = pneg %p373
        $region118: #{vit_mlp2_forward.1} parent=83 // pred_check_branch
          %882 = sbr.rel (%p880) target = $region120
        $region119: #{vit_mlp2_forward.1} parent=83 // pred_region
          %p883 = scmp.lt.s32.totalorder %s40, 2
          %s884 = scalar_select %p883, %s40, 2
          %s885 = smul.addr %s884, 2
          %s886 = scalar_lea.vmem %s13, %s885
        $region120: #{vit_mlp2_forward.1} parent=83 // pred_fallthru
          _
        // Predicated region
        $region121: #{vit_mlp2_forward.1} parent=83 // pred_check
          %p887 = pneg %p399
        $region122: #{vit_mlp2_forward.1} parent=83 // pred_check_branch
          %889 = sbr.rel (%p887) target = $region124
        $region123: #{vit_mlp2_forward.1} parent=83 // pred_region
          %p890 = scmp.lt.s32.totalorder %s40, 2
          %s891 = scalar_select %p890, %s40, 2
          %s892 = smul.addr %s891, 32
          %s893 = smul.addr %s892, 4
          %s894 = scalar_lea.vmem %s14, %s893
        $region124: #{vit_mlp2_forward.1} parent=83 // pred_fallthru
          _
        // Predicated region
        $region125: #{vit_mlp2_forward.1} parent=83 // pred_check
          %p895 = pneg %p425
        $region126: #{vit_mlp2_forward.1} parent=83 // pred_check_branch
          %897 = sbr.rel (%p895) target = $region128
        $region127: #{vit_mlp2_forward.1} parent=83 // pred_region
          %p898 = scmp.lt.s32.totalorder %s40, 2
          %s899 = scalar_select %p898, %s40, 2
          %s900 = scalar_lea.vmem %s15, %s899
        $region128: #{vit_mlp2_forward.1} parent=83 // pred_fallthru
          _
      $region84: #{vit_mlp2_forward.1} parent=5 // pred_fallthru
        _
      %p901 = scmp.le.s32.totalorder 1, %s40
      %p902 = scmp.lt.s32.totalorder %s40, 4
      %p903 = pnand %p901, %p902
      %p904 = pneg %p903
      // Predicated region
      $region129: #{vit_mlp2_forward.1} parent=5 // pred_check
        _
      $region130: #{vit_mlp2_forward.1} parent=5 // pred_check_branch
        %906 = sbr.rel (%p903) target = $region132
      $region131: #{vit_mlp2_forward.1} parent=5 // pred_region
        %s907 = ssub.s32 %s40, 1
        %s908 = sand.u32 %s236, 1
        %s909 = scalar_lea.sflag [#allocation4], %s908
        %s910 = sand.u32 %s236, 1
        %s911 = smul.addr %s910, 64
        %s912 = scalar_lea.vmem [#allocation3], %s911
        // Predicated region
        $region133: #{vit_mlp2_forward.1} parent=131 // pred_check
          %p913 = pneg %p249
        $region134: #{vit_mlp2_forward.1} parent=131 // pred_check_branch
          %915 = sbr.rel (%p913) target = $region136
        $region135: #{vit_mlp2_forward.1} parent=131 // pred_region
          %917 = dma.done %s909, 1024
        $region136: #{vit_mlp2_forward.1} parent=131 // pred_fallthru
          _
        // Predicated region
        $region137: #{vit_mlp2_forward.1} parent=131 // pred_check
          %p918 = pneg %p578
        $region138: #{vit_mlp2_forward.1} parent=131 // pred_check_branch
          %920 = sbr.rel (%p918) target = $region140
        $region139: #{vit_mlp2_forward.1} parent=131 // pred_region
          %922 = dma.done [#allocation7], 4096
        $region140: #{vit_mlp2_forward.1} parent=131 // pred_fallthru
          _
        // Predicated region
        $region141: #{vit_mlp2_forward.1} parent=131 // pred_check
          %p923 = pneg %p620
        $region142: #{vit_mlp2_forward.1} parent=131 // pred_check_branch
          %925 = sbr.rel (%p923) target = $region144
        $region143: #{vit_mlp2_forward.1} parent=131 // pred_region
          %927 = dma.done [#allocation7], 16
        $region144: #{vit_mlp2_forward.1} parent=131 // pred_fallthru
          _
        // Predicated region
        $region145: #{vit_mlp2_forward.1} parent=131 // pred_check
          %p928 = pneg %p641
        $region146: #{vit_mlp2_forward.1} parent=131 // pred_check_branch
          %930 = sbr.rel (%p928) target = $region148
        $region147: #{vit_mlp2_forward.1} parent=131 // pred_region
          %932 = dma.done [#allocation10], 16
        $region148: #{vit_mlp2_forward.1} parent=131 // pred_fallthru
          _
        // Predicated region
        $region149: #{vit_mlp2_forward.1} parent=131 // pred_check
          %p933 = pneg %p683
        $region150: #{vit_mlp2_forward.1} parent=131 // pred_check_branch
          %935 = sbr.rel (%p933) target = $region152
        $region151: #{vit_mlp2_forward.1} parent=131 // pred_region
          %937 = dma.done [#allocation10], 16
        $region152: #{vit_mlp2_forward.1} parent=131 // pred_fallthru
          _
        %p938 = pneg %p61
        %p939 = pneg %p58
        %p940 = pneg %p82
        %p941 = pneg %p79
        %p942 = pneg %p103
        %p943 = pneg %p100
        %p944 = pneg %p124
        %p945 = pneg %p121
        %p946 = pneg %p145
        %p947 = pneg %p142
        %p948 = scmp.lt.s32.totalorder %s45, 2
        %s949 = scalar_select %p948, %s45, 2
        %s950 = scalar_lea.vmem %s5, %s949
        %p951 = pneg %p171
        %p952 = pneg %p168
        %p953 = scmp.lt.s32.totalorder %s45, 2
        %s954 = scalar_select %p953, %s45, 2
        %s955 = scalar_lea.vmem %s6, %s954
        %p956 = pneg %p197
        %p957 = pneg %p194
        %p958 = scmp.lt.s32.totalorder %s45, 2
        %s959 = scalar_select %p958, %s45, 2
        %s960 = smul.addr %s959, 48
        %s961 = smul.addr %s960, 4
        %s962 = scalar_lea.vmem %s7, %s961
        %p963 = pneg %p223
        %p964 = pneg %p220
        %s965 = sand.u32 %s236, 1
        %s966 = scalar_lea.sflag [#allocation4], %s965
        %s967 = sand.u32 %s236, 1
        %s968 = smul.addr %s967, 64
        %s969 = scalar_lea.vmem [#allocation3], %s968
        %p970 = pneg %p249
        %p971 = pneg %p246
        %p972 = scmp.lt.s32.totalorder %s45, 2
        %s973 = scalar_select %p972, %s45, 2
        %s974 = scalar_lea.vmem %s9, %s973
        %p975 = pneg %p275
        %p976 = pneg %p272
        %p977 = scmp.lt.s32.totalorder %s45, 2
        %s978 = scalar_select %p977, %s45, 2
        %s979 = scalar_lea.vmem %s10, %s978
        %p980 = pneg %p301
        %p981 = pneg %p298
        %p982 = scmp.lt.s32.totalorder %s45, 2
        %s983 = scalar_select %p982, %s45, 2
        %s984 = scalar_lea.vmem %s11, %s983
        %p985 = pneg %p327
        %p986 = pneg %p324
        %p987 = scmp.lt.s32.totalorder %s45, 2
        %s988 = scalar_select %p987, %s45, 2
        %s989 = smul.addr %s988, 32
        %s990 = smul.addr %s989, 4
        %s991 = scalar_lea.vmem %s12, %s990
        %p992 = pneg %p353
        %p993 = pneg %p350
        %p994 = scmp.lt.s32.totalorder %s45, 2
        %s995 = scalar_select %p994, %s45, 2
        %s996 = smul.addr %s995, 2
        %s997 = scalar_lea.vmem %s13, %s996
        %p998 = pneg %p379
        %p999 = pneg %p376
        %p1000 = scmp.lt.s32.totalorder %s45, 2
        %s1001 = scalar_select %p1000, %s45, 2
        %s1002 = smul.addr %s1001, 32
        %s1003 = smul.addr %s1002, 4
        %s1004 = scalar_lea.vmem %s14, %s1003
        %p1005 = pneg %p405
        %p1006 = pneg %p402
        %p1007 = scmp.lt.s32.totalorder %s45, 2
        %s1008 = scalar_select %p1007, %s45, 2
        %s1009 = scalar_lea.vmem %s15, %s1008
        %p1010 = pneg %p431
        %p1011 = pneg %p428
        %p1012 = pneg %p452
        %p1013 = pneg %p449
        %p1014 = pneg %p473
        %p1015 = pneg %p470
        %p1016 = pneg %p494
        %p1017 = pneg %p491
        %p1018 = pneg %p515
        %p1019 = pneg %p512
        %p1020 = pneg %p536
        %p1021 = pneg %p533
        %p1022 = pneg %p557
        %p1023 = pneg %p554
        %p1024 = pneg %p578
        %p1025 = pneg %p575
        %p1026 = pneg %p599
        %p1027 = pneg %p596
        %p1028 = pneg %p620
        %p1029 = pneg %p617
        %p1030 = pneg %p641
        %p1031 = pneg %p638
        %p1032 = pneg %p662
        %p1033 = pneg %p659
        %p1034 = pneg %p683
        %p1035 = pneg %p680
        %p1036 = pneg %p704
        %p1037 = pneg %p701
        %p1038 = scmp.lt.s32.totalorder %s45, 2
        %s1039 = scalar_select %p1038, %s45, 2
        %s1040 = scalar_lea.vmem %s5, %s1039
        %p1041 = scmp.lt.s32.totalorder %s45, 2
        %s1042 = scalar_select %p1041, %s45, 2
        %s1043 = scalar_lea.vmem %s6, %s1042
        %p1044 = scmp.lt.s32.totalorder %s45, 2
        %s1045 = scalar_select %p1044, %s45, 2
        %s1046 = smul.addr %s1045, 48
        %s1047 = smul.addr %s1046, 4
        %s1048 = scalar_lea.vmem %s7, %s1047
        %p1049 = scmp.lt.s32.totalorder %s45, 2
        %s1050 = scalar_select %p1049, %s45, 2
        %s1051 = scalar_lea.vmem %s9, %s1050
        %p1052 = scmp.lt.s32.totalorder %s45, 2
        %s1053 = scalar_select %p1052, %s45, 2
        %s1054 = scalar_lea.vmem %s10, %s1053
        %p1055 = scmp.lt.s32.totalorder %s45, 2
        %s1056 = scalar_select %p1055, %s45, 2
        %s1057 = scalar_lea.vmem %s11, %s1056
        %p1058 = scmp.lt.s32.totalorder %s45, 2
        %s1059 = scalar_select %p1058, %s45, 2
        %s1060 = smul.addr %s1059, 32
        %s1061 = smul.addr %s1060, 4
        %s1062 = scalar_lea.vmem %s12, %s1061
        %p1063 = scmp.lt.s32.totalorder %s45, 2
        %s1064 = scalar_select %p1063, %s45, 2
        %s1065 = smul.addr %s1064, 2
        %s1066 = scalar_lea.vmem %s13, %s1065
        %p1067 = scmp.lt.s32.totalorder %s45, 2
        %s1068 = scalar_select %p1067, %s45, 2
        %s1069 = smul.addr %s1068, 32
        %s1070 = smul.addr %s1069, 4
        %s1071 = scalar_lea.vmem %s14, %s1070
        %p1072 = scmp.lt.s32.totalorder %s45, 2
        %s1073 = scalar_select %p1072, %s45, 2
        %s1074 = scalar_lea.vmem %s15, %s1073
        %p1075 = scmp.eq.s32.totalorder %s45, 0
        // Predicated region
        $region153: #{vit_mlp2_forward.1} parent=131 // pred_check
          %p1076 = pneg %p1075
        $region154: #{vit_mlp2_forward.1} parent=131 // pred_check_branch
          %1078 = sbr.rel (%p1076) target = $region156
        $region155: #{vit_mlp2_forward.1} parent=131 // pred_region
          %v1079 = vld [vmem:[%s0] sm:$0xff]
          %v1080 = vld [vmem:[%s0 + $0x8] sm:$0xff]
          %v1081 = vld [vmem:[%s0 + $0x10] sm:$0xff]
          %v1082 = vld [vmem:[%s0 + $0x18] sm:$0xff]
          %v1083 = vld [vmem:[%s0 + $0x20] sm:$0xff]
          %v1084 = vld [vmem:[%s0 + $0x28] sm:$0xff]
          %v1085 = vld [vmem:[%s0 + $0x30] sm:$0xff]
          %v1086 = vld [vmem:[%s0 + $0x38] sm:$0xff]
          %v1087 = vld [vmem:[%s0 + $0x40] sm:$0xff]
          %v1088 = vld [vmem:[%s0 + $0x48] sm:$0xff]
          %v1089 = vld [vmem:[%s0 + $0x50] sm:$0xff]
          %v1090 = vld [vmem:[%s0 + $0x58] sm:$0x3f]
          %v1091 = vld [vmem:[%s1] sm:$0xf]
          %v1092 = vld [vmem:[%s1 + $0x4] sm:$0xf]
          %v1093 = vld [vmem:[%s1 + $0x8] sm:$0xf]
          %v1094 = vld [vmem:[%s1 + $0xc] sm:$0xf]
          %v1095 = vld [vmem:[%s1 + $0x10] sm:$0xf]
          %v1096 = vld [vmem:[%s1 + $0x14] sm:$0xf]
          %v1097 = vld [vmem:[%s1 + $0x18] sm:$0xf]
          %v1098 = vld [vmem:[%s1 + $0x1c] sm:$0xf]
          %v1099 = vld [vmem:[%s1 + $0x20] sm:$0xf]
          %v1100 = vld [vmem:[%s1 + $0x24] sm:$0xf]
          %v1101 = vld [vmem:[%s1 + $0x28] sm:$0xf]
          %v1102 = vld [vmem:[%s1 + $0x2c] sm:$0xf]
          %v1103 = vld [vmem:[%s1 + $0x30] sm:$0xf]
          %v1104 = vld [vmem:[%s1 + $0x34] sm:$0xf]
          %v1105 = vld [vmem:[%s1 + $0x38] sm:$0xf]
          %v1106 = vld [vmem:[%s1 + $0x3c] sm:$0xf]
          %v1107 = vld [vmem:[%s1 + $0x40] sm:$0xf]
          %v1108 = vld [vmem:[%s1 + $0x44] sm:$0xf]
          %v1109 = vld [vmem:[%s1 + $0x48] sm:$0xf]
          %v1110 = vld [vmem:[%s1 + $0x4c] sm:$0xf]
          %v1111 = vld [vmem:[%s1 + $0x50] sm:$0xf]
          %v1112 = vld [vmem:[%s1 + $0x54] sm:$0xf]
          %v1113 = vld [vmem:[%s1 + $0x58] sm:$0xf]
          %v1114 = vld [vmem:[%s1 + $0x5c] sm:$0xf]
          %v1115 = vld [vmem:[%s1 + $0x60] sm:$0xf]
          %v1116 = vld [vmem:[%s1 + $0x64] sm:$0xf]
          %v1117 = vld [vmem:[%s1 + $0x68] sm:$0xf]
          %v1118 = vld [vmem:[%s1 + $0x6c] sm:$0xf]
          %v1119 = vld [vmem:[%s1 + $0x70] sm:$0xf]
          %v1120 = vld [vmem:[%s1 + $0x74] sm:$0xf]
          %v1121 = vld [vmem:[%s1 + $0x78] sm:$0xf]
          %v1122 = vld [vmem:[%s1 + $0x7c] sm:$0xf]
          %v1123 = vld [vmem:[%s1 + $0x80] sm:$0xf]
          %v1124 = vld [vmem:[%s1 + $0x84] sm:$0xf]
          %v1125 = vld [vmem:[%s1 + $0x88] sm:$0xf]
          %v1126 = vld [vmem:[%s1 + $0x8c] sm:$0xf]
          %v1127 = vld [vmem:[%s1 + $0x90] sm:$0xf]
          %v1128 = vld [vmem:[%s1 + $0x94] sm:$0xf]
          %v1129 = vld [vmem:[%s1 + $0x98] sm:$0xf]
          %v1130 = vld [vmem:[%s1 + $0x9c] sm:$0xf]
          %v1131 = vld [vmem:[%s1 + $0xa0] sm:$0xf]
          %v1132 = vld [vmem:[%s1 + $0xa4] sm:$0xf]
          %v1133 = vld [vmem:[%s1 + $0xa8] sm:$0xf]
          %v1134 = vld [vmem:[%s1 + $0xac] sm:$0xf]
          %v1135 = vld [vmem:[%s1 + $0xb0] sm:$0xf]
          %v1136 = vld [vmem:[%s1 + $0xb4] sm:$0xf]
          %v1137 = vld [vmem:[%s1 + $0xb8] sm:$0xf]
          %v1138 = vld [vmem:[%s1 + $0xbc] sm:$0xf]
          %v1139 = vld [vmem:[%s1 + $0xc0] sm:$0xf]
          %v1140 = vld [vmem:[%s1 + $0xc4] sm:$0xf]
          %v1141 = vld [vmem:[%s1 + $0xc8] sm:$0xf]
          %v1142 = vld [vmem:[%s1 + $0xcc] sm:$0xf]
          %v1143 = vld [vmem:[%s1 + $0xd0] sm:$0xf]
          %v1144 = vld [vmem:[%s1 + $0xd4] sm:$0xf]
          %v1145 = vld [vmem:[%s1 + $0xd8] sm:$0xf]
          %v1146 = vld [vmem:[%s1 + $0xdc] sm:$0xf]
          %v1147 = vld [vmem:[%s1 + $0xe0] sm:$0xf]
          %v1148 = vld [vmem:[%s1 + $0xe4] sm:$0xf]
          %v1149 = vld [vmem:[%s1 + $0xe8] sm:$0xf]
          %v1150 = vld [vmem:[%s1 + $0xec] sm:$0xf]
          %v1151 = vld [vmem:[%s1 + $0xf0] sm:$0xf]
          %v1152 = vld [vmem:[%s1 + $0xf4] sm:$0xf]
          %v1153 = vld [vmem:[%s1 + $0xf8] sm:$0xf]
          %v1154 = vld [vmem:[%s1 + $0xfc] sm:$0xf]
          %v1155 = vld [vmem:[%s1 + $0x100] sm:$0xf]
          %v1156 = vld [vmem:[%s1 + $0x104] sm:$0xf]
          %v1157 = vld [vmem:[%s1 + $0x108] sm:$0xf]
          %v1158 = vld [vmem:[%s1 + $0x10c] sm:$0xf]
          %v1159 = vld [vmem:[%s1 + $0x110] sm:$0xf]
          %v1160 = vld [vmem:[%s1 + $0x114] sm:$0xf]
          %v1161 = vld [vmem:[%s1 + $0x118] sm:$0xf]
          %v1162 = vld [vmem:[%s1 + $0x11c] sm:$0xf]
          %v1163 = vld [vmem:[%s1 + $0x120] sm:$0xf]
          %v1164 = vld [vmem:[%s1 + $0x124] sm:$0xf]
          %v1165 = vld [vmem:[%s1 + $0x128] sm:$0xf]
          %v1166 = vld [vmem:[%s1 + $0x12c] sm:$0xf]
          %v1167 = vld [vmem:[%s1 + $0x130] sm:$0xf]
          %v1168 = vld [vmem:[%s1 + $0x134] sm:$0xf]
          %v1169 = vld [vmem:[%s1 + $0x138] sm:$0xf]
          %v1170 = vld [vmem:[%s1 + $0x13c] sm:$0xf]
          %v1171 = vld [vmem:[%s1 + $0x140] sm:$0xf]
          %v1172 = vld [vmem:[%s1 + $0x144] sm:$0xf]
          %v1173 = vld [vmem:[%s1 + $0x148] sm:$0xf]
          %v1174 = vld [vmem:[%s1 + $0x14c] sm:$0xf]
          %v1175 = vld [vmem:[%s1 + $0x150] sm:$0xf]
          %v1176 = vld [vmem:[%s1 + $0x154] sm:$0xf]
          %v1177 = vld [vmem:[%s1 + $0x158] sm:$0xf]
          %v1178 = vld [vmem:[%s1 + $0x15c] sm:$0xf]
          %v1179 = vld [vmem:[%s1 + $0x160] sm:$0xf]
          %v1180 = vld [vmem:[%s1 + $0x164] sm:$0xf]
          %v1181 = vld [vmem:[%s1 + $0x168] sm:$0xf]
          %v1182 = vld [vmem:[%s1 + $0x16c] sm:$0xf]
          %v1183 = vld [vmem:[%s1 + $0x170] sm:$0xf]
          %v1184 = vld [vmem:[%s1 + $0x174] sm:$0xf]
          %v1185 = vld [vmem:[%s1 + $0x178] sm:$0xf]
          %v1186 = vld [vmem:[%s1 + $0x17c] sm:$0xf]
          %v1187 = vld [vmem:[%s1 + $0x180] sm:$0xf]
          %v1188 = vld [vmem:[%s1 + $0x184] sm:$0xf]
          %v1189 = vld [vmem:[%s1 + $0x188] sm:$0xf]
          %v1190 = vld [vmem:[%s1 + $0x18c] sm:$0xf]
          %v1191 = vld [vmem:[%s1 + $0x190] sm:$0xf]
          %v1192 = vld [vmem:[%s1 + $0x194] sm:$0xf]
          %v1193 = vld [vmem:[%s1 + $0x198] sm:$0xf]
          %v1194 = vld [vmem:[%s1 + $0x19c] sm:$0xf]
          %v1195 = vld [vmem:[%s1 + $0x1a0] sm:$0xf]
          %v1196 = vld [vmem:[%s1 + $0x1a4] sm:$0xf]
          %v1197 = vld [vmem:[%s1 + $0x1a8] sm:$0xf]
          %v1198 = vld [vmem:[%s1 + $0x1ac] sm:$0xf]
          %v1199 = vld [vmem:[%s1 + $0x1b0] sm:$0xf]
          %v1200 = vld [vmem:[%s1 + $0x1b4] sm:$0xf]
          %v1201 = vld [vmem:[%s1 + $0x1b8] sm:$0xf]
          %v1202 = vld [vmem:[%s1 + $0x1bc] sm:$0xf]
          %v1203 = vld [vmem:[%s1 + $0x1c0] sm:$0xf]
          %v1204 = vld [vmem:[%s1 + $0x1c4] sm:$0xf]
          %v1205 = vld [vmem:[%s1 + $0x1c8] sm:$0xf]
          %v1206 = vld [vmem:[%s1 + $0x1cc] sm:$0xf]
          %v1207 = vld [vmem:[%s1 + $0x1d0] sm:$0xf]
          %v1208 = vld [vmem:[%s1 + $0x1d4] sm:$0xf]
          %v1209 = vld [vmem:[%s1 + $0x1d8] sm:$0xf]
          %v1210 = vld [vmem:[%s1 + $0x1dc] sm:$0xf]
          %v1211 = vld [vmem:[%s1 + $0x1e0] sm:$0xf]
          %v1212 = vld [vmem:[%s1 + $0x1e4] sm:$0xf]
          %v1213 = vld [vmem:[%s1 + $0x1e8] sm:$0xf]
          %v1214 = vld [vmem:[%s1 + $0x1ec] sm:$0xf]
          %v1215 = vld [vmem:[%s1 + $0x1f0] sm:$0xf]
          %v1216 = vld [vmem:[%s1 + $0x1f4] sm:$0xf]
          %v1217 = vld [vmem:[%s1 + $0x1f8] sm:$0xf]
          %v1218 = vld [vmem:[%s1 + $0x1fc] sm:$0xf]
          %v1219 = vld [vmem:[%s1 + $0x200] sm:$0xf]
          %v1220 = vld [vmem:[%s1 + $0x204] sm:$0xf]
          %v1221 = vld [vmem:[%s1 + $0x208] sm:$0xf]
          %v1222 = vld [vmem:[%s1 + $0x20c] sm:$0xf]
          %v1223 = vld [vmem:[%s1 + $0x210] sm:$0xf]
          %v1224 = vld [vmem:[%s1 + $0x214] sm:$0xf]
          %v1225 = vld [vmem:[%s1 + $0x218] sm:$0xf]
          %v1226 = vld [vmem:[%s1 + $0x21c] sm:$0xf]
          %v1227 = vld [vmem:[%s1 + $0x220] sm:$0xf]
          %v1228 = vld [vmem:[%s1 + $0x224] sm:$0xf]
          %v1229 = vld [vmem:[%s1 + $0x228] sm:$0xf]
          %v1230 = vld [vmem:[%s1 + $0x22c] sm:$0xf]
          %v1231 = vld [vmem:[%s1 + $0x230] sm:$0xf]
          %v1232 = vld [vmem:[%s1 + $0x234] sm:$0xf]
          %v1233 = vld [vmem:[%s1 + $0x238] sm:$0xf]
          %v1234 = vld [vmem:[%s1 + $0x23c] sm:$0xf]
          %v1235 = vld [vmem:[%s1 + $0x240] sm:$0xf]
          %v1236 = vld [vmem:[%s1 + $0x244] sm:$0xf]
          %v1237 = vld [vmem:[%s1 + $0x248] sm:$0xf]
          %v1238 = vld [vmem:[%s1 + $0x24c] sm:$0xf]
          %v1239 = vld [vmem:[%s1 + $0x250] sm:$0xf]
          %v1240 = vld [vmem:[%s1 + $0x254] sm:$0xf]
          %v1241 = vld [vmem:[%s1 + $0x258] sm:$0xf]
          %v1242 = vld [vmem:[%s1 + $0x25c] sm:$0xf]
          %v1243 = vld [vmem:[%s1 + $0x260] sm:$0xf]
          %v1244 = vld [vmem:[%s1 + $0x264] sm:$0xf]
          %v1245 = vld [vmem:[%s1 + $0x268] sm:$0xf]
          %v1246 = vld [vmem:[%s1 + $0x26c] sm:$0xf]
          %v1247 = vld [vmem:[%s1 + $0x270] sm:$0xf]
          %v1248 = vld [vmem:[%s1 + $0x274] sm:$0xf]
          %v1249 = vld [vmem:[%s1 + $0x278] sm:$0xf]
          %v1250 = vld [vmem:[%s1 + $0x27c] sm:$0xf]
          %v1251 = vld [vmem:[%s1 + $0x280] sm:$0xf]
          %v1252 = vld [vmem:[%s1 + $0x284] sm:$0xf]
          %v1253 = vld [vmem:[%s1 + $0x288] sm:$0xf]
          %v1254 = vld [vmem:[%s1 + $0x28c] sm:$0xf]
          %v1255 = vld [vmem:[%s1 + $0x290] sm:$0xf]
          %v1256 = vld [vmem:[%s1 + $0x294] sm:$0xf]
          %v1257 = vld [vmem:[%s1 + $0x298] sm:$0xf]
          %v1258 = vld [vmem:[%s1 + $0x29c] sm:$0xf]
          %v1259 = vld [vmem:[%s1 + $0x2a0] sm:$0xf]
          %v1260 = vld [vmem:[%s1 + $0x2a4] sm:$0xf]
          %v1261 = vld [vmem:[%s1 + $0x2a8] sm:$0xf]
          %v1262 = vld [vmem:[%s1 + $0x2ac] sm:$0xf]
          %v1263 = vld [vmem:[%s1 + $0x2b0] sm:$0xf]
          %v1264 = vld [vmem:[%s1 + $0x2b4] sm:$0xf]
          %v1265 = vld [vmem:[%s1 + $0x2b8] sm:$0xf]
          %v1266 = vld [vmem:[%s1 + $0x2bc] sm:$0xf]
          %v1267 = vld [vmem:[%s1 + $0x2c0] sm:$0xf]
          %v1268 = vld [vmem:[%s1 + $0x2c4] sm:$0xf]
          %v1269 = vld [vmem:[%s1 + $0x2c8] sm:$0xf]
          %v1270 = vld [vmem:[%s1 + $0x2cc] sm:$0xf]
          %v1271 = vld [vmem:[%s1 + $0x2d0] sm:$0xf]
          %v1272 = vld [vmem:[%s1 + $0x2d4] sm:$0xf]
          %v1273 = vld [vmem:[%s1 + $0x2d8] sm:$0xf]
          %v1274 = vld [vmem:[%s1 + $0x2dc] sm:$0xf]
          %v1275 = vld [vmem:[%s1 + $0x2e0] sm:$0xf]
          %v1276 = vld [vmem:[%s1 + $0x2e4] sm:$0xf]
          %v1277 = vld [vmem:[%s1 + $0x2e8] sm:$0xf]
          %v1278 = vld [vmem:[%s1 + $0x2ec] sm:$0xf]
          %v1279 = vld [vmem:[%s1 + $0x2f0] sm:$0xf]
          %v1280 = vld [vmem:[%s1 + $0x2f4] sm:$0xf]
          %v1281 = vld [vmem:[%s1 + $0x2f8] sm:$0xf]
          %v1282 = vld [vmem:[%s1 + $0x2fc] sm:$0xf]
          %v1283 = vld [vmem:[%s1 + $0x300] sm:$0xf]
          %v1284 = vld [vmem:[%s1 + $0x304] sm:$0xf]
          %v1285 = vld [vmem:[%s1 + $0x308] sm:$0xf]
          %v1286 = vld [vmem:[%s1 + $0x30c] sm:$0xf]
          %v1287 = vld [vmem:[%s1 + $0x310] sm:$0xf]
          %v1288 = vld [vmem:[%s1 + $0x314] sm:$0xf]
          %v1289 = vld [vmem:[%s1 + $0x318] sm:$0xf]
          %v1290 = vld [vmem:[%s1 + $0x31c] sm:$0xf]
          %v1291 = vld [vmem:[%s1 + $0x320] sm:$0xf]
          %v1292 = vld [vmem:[%s1 + $0x324] sm:$0xf]
          %v1293 = vld [vmem:[%s1 + $0x328] sm:$0xf]
          %v1294 = vld [vmem:[%s1 + $0x32c] sm:$0xf]
          %v1295 = vld [vmem:[%s1 + $0x330] sm:$0xf]
          %v1296 = vld [vmem:[%s1 + $0x334] sm:$0xf]
          %v1297 = vld [vmem:[%s1 + $0x338] sm:$0xf]
          %v1298 = vld [vmem:[%s1 + $0x33c] sm:$0xf]
          %v1299 = vld [vmem:[%s1 + $0x340] sm:$0xf]
          %v1300 = vld [vmem:[%s1 + $0x344] sm:$0xf]
          %v1301 = vld [vmem:[%s1 + $0x348] sm:$0xf]
          %v1302 = vld [vmem:[%s1 + $0x34c] sm:$0xf]
          %v1303 = vld [vmem:[%s1 + $0x350] sm:$0xf]
          %v1304 = vld [vmem:[%s1 + $0x354] sm:$0xf]
          %v1305 = vld [vmem:[%s1 + $0x358] sm:$0xf]
          %v1306 = vld [vmem:[%s1 + $0x35c] sm:$0xf]
          %v1307 = vld [vmem:[%s1 + $0x360] sm:$0xf]
          %v1308 = vld [vmem:[%s1 + $0x364] sm:$0xf]
          %v1309 = vld [vmem:[%s1 + $0x368] sm:$0xf]
          %v1310 = vld [vmem:[%s1 + $0x36c] sm:$0xf]
          %v1311 = vld [vmem:[%s1 + $0x370] sm:$0xf]
          %v1312 = vld [vmem:[%s1 + $0x374] sm:$0xf]
          %v1313 = vld [vmem:[%s1 + $0x378] sm:$0xf]
          %v1314 = vld [vmem:[%s1 + $0x37c] sm:$0xf]
          %v1315 = vld [vmem:[%s1 + $0x380] sm:$0xf]
          %v1316 = vld [vmem:[%s1 + $0x384] sm:$0xf]
          %v1317 = vld [vmem:[%s1 + $0x388] sm:$0xf]
          %v1318 = vld [vmem:[%s1 + $0x38c] sm:$0xf]
          %v1319 = vld [vmem:[%s1 + $0x390] sm:$0xf]
          %v1320 = vld [vmem:[%s1 + $0x394] sm:$0xf]
          %v1321 = vld [vmem:[%s1 + $0x398] sm:$0xf]
          %v1322 = vld [vmem:[%s1 + $0x39c] sm:$0xf]
          %v1323 = vld [vmem:[%s1 + $0x3a0] sm:$0xf]
          %v1324 = vld [vmem:[%s1 + $0x3a4] sm:$0xf]
          %v1325 = vld [vmem:[%s1 + $0x3a8] sm:$0xf]
          %v1326 = vld [vmem:[%s1 + $0x3ac] sm:$0xf]
          %v1327 = vld [vmem:[%s1 + $0x3b0] sm:$0xf]
          %v1328 = vld [vmem:[%s1 + $0x3b4] sm:$0xf]
          %v1329 = vld [vmem:[%s1 + $0x3b8] sm:$0xf]
          %v1330 = vld [vmem:[%s1 + $0x3bc] sm:$0xf]
          %v1331 = vld [vmem:[%s1 + $0x3c0] sm:$0xf]
          %v1332 = vld [vmem:[%s1 + $0x3c4] sm:$0xf]
          %v1333 = vld [vmem:[%s1 + $0x3c8] sm:$0xf]
          %v1334 = vld [vmem:[%s1 + $0x3cc] sm:$0xf]
          %v1335 = vld [vmem:[%s1 + $0x3d0] sm:$0xf]
          %v1336 = vld [vmem:[%s1 + $0x3d4] sm:$0xf]
          %v1337 = vld [vmem:[%s1 + $0x3d8] sm:$0xf]
          %v1338 = vld [vmem:[%s1 + $0x3dc] sm:$0xf]
          %v1339 = vld [vmem:[%s1 + $0x3e0] sm:$0xf]
          %v1340 = vld [vmem:[%s1 + $0x3e4] sm:$0xf]
          %v1341 = vld [vmem:[%s1 + $0x3e8] sm:$0xf]
          %v1342 = vld [vmem:[%s1 + $0x3ec] sm:$0xf]
          %v1343 = vld [vmem:[%s1 + $0x3f0] sm:$0xf]
          %v1344 = vld [vmem:[%s1 + $0x3f4] sm:$0xf]
          %v1345 = vld [vmem:[%s1 + $0x3f8] sm:$0xf]
          %v1346 = vld [vmem:[%s1 + $0x3fc] sm:$0xf]
          %v1347 = vld [vmem:[%s1 + $0x400] sm:$0xf]
          %v1348 = vld [vmem:[%s1 + $0x404] sm:$0xf]
          %v1349 = vld [vmem:[%s1 + $0x408] sm:$0xf]
          %v1350 = vld [vmem:[%s1 + $0x40c] sm:$0xf]
          %v1351 = vld [vmem:[%s1 + $0x410] sm:$0xf]
          %v1352 = vld [vmem:[%s1 + $0x414] sm:$0xf]
          %v1353 = vld [vmem:[%s1 + $0x418] sm:$0xf]
          %v1354 = vld [vmem:[%s1 + $0x41c] sm:$0xf]
          %v1355 = vld [vmem:[%s1 + $0x420] sm:$0xf]
          %v1356 = vld [vmem:[%s1 + $0x424] sm:$0xf]
          %v1357 = vld [vmem:[%s1 + $0x428] sm:$0xf]
          %v1358 = vld [vmem:[%s1 + $0x42c] sm:$0xf]
          %v1359 = vld [vmem:[%s1 + $0x430] sm:$0xf]
          %v1360 = vld [vmem:[%s1 + $0x434] sm:$0xf]
          %v1361 = vld [vmem:[%s1 + $0x438] sm:$0xf]
          %v1362 = vld [vmem:[%s1 + $0x43c] sm:$0xf]
          %v1363 = vld [vmem:[%s1 + $0x440] sm:$0xf]
          %v1364 = vld [vmem:[%s1 + $0x444] sm:$0xf]
          %v1365 = vld [vmem:[%s1 + $0x448] sm:$0xf]
          %v1366 = vld [vmem:[%s1 + $0x44c] sm:$0xf]
          %v1367 = vld [vmem:[%s1 + $0x450] sm:$0xf]
          %v1368 = vld [vmem:[%s1 + $0x454] sm:$0xf]
          %v1369 = vld [vmem:[%s1 + $0x458] sm:$0xf]
          %v1370 = vld [vmem:[%s1 + $0x45c] sm:$0xf]
          %v1371 = vld [vmem:[%s1 + $0x460] sm:$0xf]
          %v1372 = vld [vmem:[%s1 + $0x464] sm:$0xf]
          %v1373 = vld [vmem:[%s1 + $0x468] sm:$0xf]
          %v1374 = vld [vmem:[%s1 + $0x46c] sm:$0xf]
          %v1375 = vld [vmem:[%s1 + $0x470] sm:$0xf]
          %v1376 = vld [vmem:[%s1 + $0x474] sm:$0xf]
          %v1377 = vld [vmem:[%s1 + $0x478] sm:$0xf]
          %v1378 = vld [vmem:[%s1 + $0x47c] sm:$0xf]
          %v1379 = vld [vmem:[%s1 + $0x480] sm:$0xf]
          %v1380 = vld [vmem:[%s1 + $0x484] sm:$0xf]
          %v1381 = vld [vmem:[%s1 + $0x488] sm:$0xf]
          %v1382 = vld [vmem:[%s1 + $0x48c] sm:$0xf]
          %v1383 = vld [vmem:[%s1 + $0x490] sm:$0xf]
          %v1384 = vld [vmem:[%s1 + $0x494] sm:$0xf]
          %v1385 = vld [vmem:[%s1 + $0x498] sm:$0xf]
          %v1386 = vld [vmem:[%s1 + $0x49c] sm:$0xf]
          %v1387 = vld [vmem:[%s1 + $0x4a0] sm:$0xf]
          %v1388 = vld [vmem:[%s1 + $0x4a4] sm:$0xf]
          %v1389 = vld [vmem:[%s1 + $0x4a8] sm:$0xf]
          %v1390 = vld [vmem:[%s1 + $0x4ac] sm:$0xf]
          %v1391 = vld [vmem:[%s1 + $0x4b0] sm:$0xf]
          %v1392 = vld [vmem:[%s1 + $0x4b4] sm:$0xf]
          %v1393 = vld [vmem:[%s1 + $0x4b8] sm:$0xf]
          %v1394 = vld [vmem:[%s1 + $0x4bc] sm:$0xf]
          %v1395 = vld [vmem:[%s1 + $0x4c0] sm:$0xf]
          %v1396 = vld [vmem:[%s1 + $0x4c4] sm:$0xf]
          %v1397 = vld [vmem:[%s1 + $0x4c8] sm:$0xf]
          %v1398 = vld [vmem:[%s1 + $0x4cc] sm:$0xf]
          %v1399 = vld [vmem:[%s1 + $0x4d0] sm:$0xf]
          %v1400 = vld [vmem:[%s1 + $0x4d4] sm:$0xf]
          %v1401 = vld [vmem:[%s1 + $0x4d8] sm:$0xf]
          %v1402 = vld [vmem:[%s1 + $0x4dc] sm:$0xf]
          %v1403 = vld [vmem:[%s1 + $0x4e0] sm:$0xf]
          %v1404 = vld [vmem:[%s1 + $0x4e4] sm:$0xf]
          %v1405 = vld [vmem:[%s1 + $0x4e8] sm:$0xf]
          %v1406 = vld [vmem:[%s1 + $0x4ec] sm:$0xf]
          %v1407 = vld [vmem:[%s1 + $0x4f0] sm:$0xf]
          %v1408 = vld [vmem:[%s1 + $0x4f4] sm:$0xf]
          %v1409 = vld [vmem:[%s1 + $0x4f8] sm:$0xf]
          %v1410 = vld [vmem:[%s1 + $0x4fc] sm:$0xf]
          %v1411 = vld [vmem:[%s1 + $0x500] sm:$0xf]
          %v1412 = vld [vmem:[%s1 + $0x504] sm:$0xf]
          %v1413 = vld [vmem:[%s1 + $0x508] sm:$0xf]
          %v1414 = vld [vmem:[%s1 + $0x50c] sm:$0xf]
          %v1415 = vld [vmem:[%s1 + $0x510] sm:$0xf]
          %v1416 = vld [vmem:[%s1 + $0x514] sm:$0xf]
          %v1417 = vld [vmem:[%s1 + $0x518] sm:$0xf]
          %v1418 = vld [vmem:[%s1 + $0x51c] sm:$0xf]
          %v1419 = vld [vmem:[%s1 + $0x520] sm:$0xf]
          %v1420 = vld [vmem:[%s1 + $0x524] sm:$0xf]
          %v1421 = vld [vmem:[%s1 + $0x528] sm:$0xf]
          %v1422 = vld [vmem:[%s1 + $0x52c] sm:$0xf]
          %v1423 = vld [vmem:[%s1 + $0x530] sm:$0xf]
          %v1424 = vld [vmem:[%s1 + $0x534] sm:$0xf]
          %v1425 = vld [vmem:[%s1 + $0x538] sm:$0xf]
          %v1426 = vld [vmem:[%s1 + $0x53c] sm:$0xf]
          %v1427 = vld [vmem:[%s1 + $0x540] sm:$0xf]
          %v1428 = vld [vmem:[%s1 + $0x544] sm:$0xf]
          %v1429 = vld [vmem:[%s1 + $0x548] sm:$0xf]
          %v1430 = vld [vmem:[%s1 + $0x54c] sm:$0xf]
          %v1431 = vld [vmem:[%s1 + $0x550] sm:$0xf]
          %v1432 = vld [vmem:[%s1 + $0x554] sm:$0xf]
          %v1433 = vld [vmem:[%s1 + $0x558] sm:$0xf]
          %v1434 = vld [vmem:[%s1 + $0x55c] sm:$0xf]
          %v1435 = vld [vmem:[%s1 + $0x560] sm:$0xf]
          %v1436 = vld [vmem:[%s1 + $0x564] sm:$0xf]
          %v1437 = vld [vmem:[%s1 + $0x568] sm:$0xf]
          %v1438 = vld [vmem:[%s1 + $0x56c] sm:$0xf]
          %v1439 = vld [vmem:[%s1 + $0x570] sm:$0xf]
          %v1440 = vld [vmem:[%s1 + $0x574] sm:$0xf]
          %v1441 = vld [vmem:[%s1 + $0x578] sm:$0xf]
          %v1442 = vld [vmem:[%s1 + $0x57c] sm:$0xf]
          %v1443 = vld [vmem:[%s1 + $0x580] sm:$0xf]
          %v1444 = vld [vmem:[%s1 + $0x584] sm:$0xf]
          %v1445 = vld [vmem:[%s1 + $0x588] sm:$0xf]
          %v1446 = vld [vmem:[%s1 + $0x58c] sm:$0xf]
          %v1447 = vld [vmem:[%s1 + $0x590] sm:$0xf]
          %v1448 = vld [vmem:[%s1 + $0x594] sm:$0xf]
          %v1449 = vld [vmem:[%s1 + $0x598] sm:$0xf]
          %v1450 = vld [vmem:[%s1 + $0x59c] sm:$0xf]
          %v1451 = vld [vmem:[%s1 + $0x5a0] sm:$0xf]
          %v1452 = vld [vmem:[%s1 + $0x5a4] sm:$0xf]
          %v1453 = vld [vmem:[%s1 + $0x5a8] sm:$0xf]
          %v1454 = vld [vmem:[%s1 + $0x5ac] sm:$0xf]
          %v1455 = vld [vmem:[%s1 + $0x5b0] sm:$0xf]
          %v1456 = vld [vmem:[%s1 + $0x5b4] sm:$0xf]
          %v1457 = vld [vmem:[%s1 + $0x5b8] sm:$0xf]
          %v1458 = vld [vmem:[%s1 + $0x5bc] sm:$0xf]
          %v1459 = vld [vmem:[%s1 + $0x5c0] sm:$0xf]
          %v1460 = vld [vmem:[%s1 + $0x5c4] sm:$0xf]
          %v1461 = vld [vmem:[%s1 + $0x5c8] sm:$0xf]
          %v1462 = vld [vmem:[%s1 + $0x5cc] sm:$0xf]
          %v1463 = vld [vmem:[%s1 + $0x5d0] sm:$0xf]
          %v1464 = vld [vmem:[%s1 + $0x5d4] sm:$0xf]
          %v1465 = vld [vmem:[%s1 + $0x5d8] sm:$0xf]
          %v1466 = vld [vmem:[%s1 + $0x5dc] sm:$0xf]
          %v1467 = vld [vmem:[%s1 + $0x5e0] sm:$0xf]
          %v1468 = vld [vmem:[%s1 + $0x5e4] sm:$0xf]
          %v1469 = vld [vmem:[%s1 + $0x5e8] sm:$0xf]
          %v1470 = vld [vmem:[%s1 + $0x5ec] sm:$0xf]
          %v1471 = vld [vmem:[%s1 + $0x5f0] sm:$0xf]
          %v1472 = vld [vmem:[%s1 + $0x5f4] sm:$0xf]
          %v1473 = vld [vmem:[%s1 + $0x5f8] sm:$0xf]
          %v1474 = vld [vmem:[%s1 + $0x5fc] sm:$0xf]
          %v1475 = vld [vmem:[%s1 + $0x600] sm:$0xf]
          %v1476 = vld [vmem:[%s1 + $0x604] sm:$0xf]
          %v1477 = vld [vmem:[%s1 + $0x608] sm:$0xf]
          %v1478 = vld [vmem:[%s1 + $0x60c] sm:$0xf]
          %v1479 = vld [vmem:[%s1 + $0x610] sm:$0xf]
          %v1480 = vld [vmem:[%s1 + $0x614] sm:$0xf]
          %v1481 = vld [vmem:[%s1 + $0x618] sm:$0xf]
          %v1482 = vld [vmem:[%s1 + $0x61c] sm:$0xf]
          %v1483 = vld [vmem:[%s1 + $0x620] sm:$0xf]
          %v1484 = vld [vmem:[%s1 + $0x624] sm:$0xf]
          %v1485 = vld [vmem:[%s1 + $0x628] sm:$0xf]
          %v1486 = vld [vmem:[%s1 + $0x62c] sm:$0xf]
          %v1487 = vld [vmem:[%s1 + $0x630] sm:$0xf]
          %v1488 = vld [vmem:[%s1 + $0x634] sm:$0xf]
          %v1489 = vld [vmem:[%s1 + $0x638] sm:$0xf]
          %v1490 = vld [vmem:[%s1 + $0x63c] sm:$0xf]
          %v1491 = vld [vmem:[%s1 + $0x640] sm:$0xf]
          %v1492 = vld [vmem:[%s1 + $0x644] sm:$0xf]
          %v1493 = vld [vmem:[%s1 + $0x648] sm:$0xf]
          %v1494 = vld [vmem:[%s1 + $0x64c] sm:$0xf]
          %v1495 = vld [vmem:[%s1 + $0x650] sm:$0xf]
          %v1496 = vld [vmem:[%s1 + $0x654] sm:$0xf]
          %v1497 = vld [vmem:[%s1 + $0x658] sm:$0xf]
          %v1498 = vld [vmem:[%s1 + $0x65c] sm:$0xf]
          %v1499 = vld [vmem:[%s1 + $0x660] sm:$0xf]
          %v1500 = vld [vmem:[%s1 + $0x664] sm:$0xf]
          %v1501 = vld [vmem:[%s1 + $0x668] sm:$0xf]
          %v1502 = vld [vmem:[%s1 + $0x66c] sm:$0xf]
          %v1503 = vld [vmem:[%s1 + $0x670] sm:$0xf]
          %v1504 = vld [vmem:[%s1 + $0x674] sm:$0xf]
          %v1505 = vld [vmem:[%s1 + $0x678] sm:$0xf]
          %v1506 = vld [vmem:[%s1 + $0x67c] sm:$0xf]
          %v1507 = vld [vmem:[%s1 + $0x680] sm:$0xf]
          %v1508 = vld [vmem:[%s1 + $0x684] sm:$0xf]
          %v1509 = vld [vmem:[%s1 + $0x688] sm:$0xf]
          %v1510 = vld [vmem:[%s1 + $0x68c] sm:$0xf]
          %v1511 = vld [vmem:[%s1 + $0x690] sm:$0xf]
          %v1512 = vld [vmem:[%s1 + $0x694] sm:$0xf]
          %v1513 = vld [vmem:[%s1 + $0x698] sm:$0xf]
          %v1514 = vld [vmem:[%s1 + $0x69c] sm:$0xf]
          %v1515 = vld [vmem:[%s1 + $0x6a0] sm:$0xf]
          %v1516 = vld [vmem:[%s1 + $0x6a4] sm:$0xf]
          %v1517 = vld [vmem:[%s1 + $0x6a8] sm:$0xf]
          %v1518 = vld [vmem:[%s1 + $0x6ac] sm:$0xf]
          %v1519 = vld [vmem:[%s1 + $0x6b0] sm:$0xf]
          %v1520 = vld [vmem:[%s1 + $0x6b4] sm:$0xf]
          %v1521 = vld [vmem:[%s1 + $0x6b8] sm:$0xf]
          %v1522 = vld [vmem:[%s1 + $0x6bc] sm:$0xf]
          %v1523 = vld [vmem:[%s1 + $0x6c0] sm:$0xf]
          %v1524 = vld [vmem:[%s1 + $0x6c4] sm:$0xf]
          %v1525 = vld [vmem:[%s1 + $0x6c8] sm:$0xf]
          %v1526 = vld [vmem:[%s1 + $0x6cc] sm:$0xf]
          %v1527 = vld [vmem:[%s1 + $0x6d0] sm:$0xf]
          %v1528 = vld [vmem:[%s1 + $0x6d4] sm:$0xf]
          %v1529 = vld [vmem:[%s1 + $0x6d8] sm:$0xf]
          %v1530 = vld [vmem:[%s1 + $0x6dc] sm:$0xf]
          %v1531 = vld [vmem:[%s1 + $0x6e0] sm:$0xf]
          %v1532 = vld [vmem:[%s1 + $0x6e4] sm:$0xf]
          %v1533 = vld [vmem:[%s1 + $0x6e8] sm:$0xf]
          %v1534 = vld [vmem:[%s1 + $0x6ec] sm:$0xf]
          %v1535 = vld [vmem:[%s1 + $0x6f0] sm:$0xf]
          %v1536 = vld [vmem:[%s1 + $0x6f4] sm:$0xf]
          %v1537 = vld [vmem:[%s1 + $0x6f8] sm:$0xf]
          %v1538 = vld [vmem:[%s1 + $0x6fc] sm:$0xf]
          %v1539 = vld [vmem:[%s1 + $0x700] sm:$0xf]
          %v1540 = vld [vmem:[%s1 + $0x704] sm:$0xf]
          %v1541 = vld [vmem:[%s1 + $0x708] sm:$0xf]
          %v1542 = vld [vmem:[%s1 + $0x70c] sm:$0xf]
          %v1543 = vld [vmem:[%s1 + $0x710] sm:$0xf]
          %v1544 = vld [vmem:[%s1 + $0x714] sm:$0xf]
          %v1545 = vld [vmem:[%s1 + $0x718] sm:$0xf]
          %v1546 = vld [vmem:[%s1 + $0x71c] sm:$0xf]
          %v1547 = vld [vmem:[%s1 + $0x720] sm:$0xf]
          %v1548 = vld [vmem:[%s1 + $0x724] sm:$0xf]
          %v1549 = vld [vmem:[%s1 + $0x728] sm:$0xf]
          %v1550 = vld [vmem:[%s1 + $0x72c] sm:$0xf]
          %v1551 = vld [vmem:[%s1 + $0x730] sm:$0xf]
          %v1552 = vld [vmem:[%s1 + $0x734] sm:$0xf]
          %v1553 = vld [vmem:[%s1 + $0x738] sm:$0xf]
          %v1554 = vld [vmem:[%s1 + $0x73c] sm:$0xf]
          %v1555 = vld [vmem:[%s1 + $0x740] sm:$0xf]
          %v1556 = vld [vmem:[%s1 + $0x744] sm:$0xf]
          %v1557 = vld [vmem:[%s1 + $0x748] sm:$0xf]
          %v1558 = vld [vmem:[%s1 + $0x74c] sm:$0xf]
          %v1559 = vld [vmem:[%s1 + $0x750] sm:$0xf]
          %v1560 = vld [vmem:[%s1 + $0x754] sm:$0xf]
          %v1561 = vld [vmem:[%s1 + $0x758] sm:$0xf]
          %v1562 = vld [vmem:[%s1 + $0x75c] sm:$0xf]
          %v1563 = vld [vmem:[%s1 + $0x760] sm:$0xf]
          %v1564 = vld [vmem:[%s1 + $0x764] sm:$0xf]
          %v1565 = vld [vmem:[%s1 + $0x768] sm:$0xf]
          %v1566 = vld [vmem:[%s1 + $0x76c] sm:$0xf]
          %v1567 = vld [vmem:[%s1 + $0x770] sm:$0xf]
          %v1568 = vld [vmem:[%s1 + $0x774] sm:$0xf]
          %v1569 = vld [vmem:[%s1 + $0x778] sm:$0xf]
          %v1570 = vld [vmem:[%s1 + $0x77c] sm:$0xf]
          %v1571 = vld [vmem:[%s1 + $0x780] sm:$0xf]
          %v1572 = vld [vmem:[%s1 + $0x784] sm:$0xf]
          %v1573 = vld [vmem:[%s1 + $0x788] sm:$0xf]
          %v1574 = vld [vmem:[%s1 + $0x78c] sm:$0xf]
          %v1575 = vld [vmem:[%s1 + $0x790] sm:$0xf]
          %v1576 = vld [vmem:[%s1 + $0x794] sm:$0xf]
          %v1577 = vld [vmem:[%s1 + $0x798] sm:$0xf]
          %v1578 = vld [vmem:[%s1 + $0x79c] sm:$0xf]
          %v1579 = vld [vmem:[%s1 + $0x7a0] sm:$0xf]
          %v1580 = vld [vmem:[%s1 + $0x7a4] sm:$0xf]
          %v1581 = vld [vmem:[%s1 + $0x7a8] sm:$0xf]
          %v1582 = vld [vmem:[%s1 + $0x7ac] sm:$0xf]
          %v1583 = vld [vmem:[%s1 + $0x7b0] sm:$0xf]
          %v1584 = vld [vmem:[%s1 + $0x7b4] sm:$0xf]
          %v1585 = vld [vmem:[%s1 + $0x7b8] sm:$0xf]
          %v1586 = vld [vmem:[%s1 + $0x7bc] sm:$0xf]
          %v1587 = vld [vmem:[%s1 + $0x7c0] sm:$0xf]
          %v1588 = vld [vmem:[%s1 + $0x7c4] sm:$0xf]
          %v1589 = vld [vmem:[%s1 + $0x7c8] sm:$0xf]
          %v1590 = vld [vmem:[%s1 + $0x7cc] sm:$0xf]
          %v1591 = vld [vmem:[%s1 + $0x7d0] sm:$0xf]
          %v1592 = vld [vmem:[%s1 + $0x7d4] sm:$0xf]
          %v1593 = vld [vmem:[%s1 + $0x7d8] sm:$0xf]
          %v1594 = vld [vmem:[%s1 + $0x7dc] sm:$0xf]
          %v1595 = vld [vmem:[%s1 + $0x7e0] sm:$0xf]
          %v1596 = vld [vmem:[%s1 + $0x7e4] sm:$0xf]
          %v1597 = vld [vmem:[%s1 + $0x7e8] sm:$0xf]
          %v1598 = vld [vmem:[%s1 + $0x7ec] sm:$0xf]
          %v1599 = vld [vmem:[%s1 + $0x7f0] sm:$0xf]
          %v1600 = vld [vmem:[%s1 + $0x7f4] sm:$0xf]
          %v1601 = vld [vmem:[%s1 + $0x7f8] sm:$0xf]
          %v1602 = vld [vmem:[%s1 + $0x7fc] sm:$0xf]
          %v1603 = vld [vmem:[%s1 + $0x800] sm:$0xf]
          %v1604 = vld [vmem:[%s1 + $0x804] sm:$0xf]
          %v1605 = vld [vmem:[%s1 + $0x808] sm:$0xf]
          %v1606 = vld [vmem:[%s1 + $0x80c] sm:$0xf]
          %v1607 = vld [vmem:[%s1 + $0x810] sm:$0xf]
          %v1608 = vld [vmem:[%s1 + $0x814] sm:$0xf]
          %v1609 = vld [vmem:[%s1 + $0x818] sm:$0xf]
          %v1610 = vld [vmem:[%s1 + $0x81c] sm:$0xf]
          %v1611 = vld [vmem:[%s1 + $0x820] sm:$0xf]
          %v1612 = vld [vmem:[%s1 + $0x824] sm:$0xf]
          %v1613 = vld [vmem:[%s1 + $0x828] sm:$0xf]
          %v1614 = vld [vmem:[%s1 + $0x82c] sm:$0xf]
          %v1615 = vld [vmem:[%s1 + $0x830] sm:$0xf]
          %v1616 = vld [vmem:[%s1 + $0x834] sm:$0xf]
          %v1617 = vld [vmem:[%s1 + $0x838] sm:$0xf]
          %v1618 = vld [vmem:[%s1 + $0x83c] sm:$0xf]
          %v1619 = vld [vmem:[%s1 + $0x840] sm:$0xf]
          %v1620 = vld [vmem:[%s1 + $0x844] sm:$0xf]
          %v1621 = vld [vmem:[%s1 + $0x848] sm:$0xf]
          %v1622 = vld [vmem:[%s1 + $0x84c] sm:$0xf]
          %v1623 = vld [vmem:[%s1 + $0x850] sm:$0xf]
          %v1624 = vld [vmem:[%s1 + $0x854] sm:$0xf]
          %v1625 = vld [vmem:[%s1 + $0x858] sm:$0xf]
          %v1626 = vld [vmem:[%s1 + $0x85c] sm:$0xf]
          %v1627 = vld [vmem:[%s1 + $0x860] sm:$0xf]
          %v1628 = vld [vmem:[%s1 + $0x864] sm:$0xf]
          %v1629 = vld [vmem:[%s1 + $0x868] sm:$0xf]
          %v1630 = vld [vmem:[%s1 + $0x86c] sm:$0xf]
          %v1631 = vld [vmem:[%s1 + $0x870] sm:$0xf]
          %v1632 = vld [vmem:[%s1 + $0x874] sm:$0xf]
          %v1633 = vld [vmem:[%s1 + $0x878] sm:$0xf]
          %v1634 = vld [vmem:[%s1 + $0x87c] sm:$0xf]
          %v1635 = vld [vmem:[%s1 + $0x880] sm:$0xf]
          %v1636 = vld [vmem:[%s1 + $0x884] sm:$0xf]
          %v1637 = vld [vmem:[%s1 + $0x888] sm:$0xf]
          %v1638 = vld [vmem:[%s1 + $0x88c] sm:$0xf]
          %v1639 = vld [vmem:[%s1 + $0x890] sm:$0xf]
          %v1640 = vld [vmem:[%s1 + $0x894] sm:$0xf]
          %v1641 = vld [vmem:[%s1 + $0x898] sm:$0xf]
          %v1642 = vld [vmem:[%s1 + $0x89c] sm:$0xf]
          %v1643 = vld [vmem:[%s1 + $0x8a0] sm:$0xf]
          %v1644 = vld [vmem:[%s1 + $0x8a4] sm:$0xf]
          %v1645 = vld [vmem:[%s1 + $0x8a8] sm:$0xf]
          %v1646 = vld [vmem:[%s1 + $0x8ac] sm:$0xf]
          %v1647 = vld [vmem:[%s1 + $0x8b0] sm:$0xf]
          %v1648 = vld [vmem:[%s1 + $0x8b4] sm:$0xf]
          %v1649 = vld [vmem:[%s1 + $0x8b8] sm:$0xf]
          %v1650 = vld [vmem:[%s1 + $0x8bc] sm:$0xf]
          %v1651 = vld [vmem:[%s1 + $0x8c0] sm:$0xf]
          %v1652 = vld [vmem:[%s1 + $0x8c4] sm:$0xf]
          %v1653 = vld [vmem:[%s1 + $0x8c8] sm:$0xf]
          %v1654 = vld [vmem:[%s1 + $0x8cc] sm:$0xf]
          %v1655 = vld [vmem:[%s1 + $0x8d0] sm:$0xf]
          %v1656 = vld [vmem:[%s1 + $0x8d4] sm:$0xf]
          %v1657 = vld [vmem:[%s1 + $0x8d8] sm:$0xf]
          %v1658 = vld [vmem:[%s1 + $0x8dc] sm:$0xf]
          %v1659 = vld [vmem:[%s1 + $0x8e0] sm:$0xf]
          %v1660 = vld [vmem:[%s1 + $0x8e4] sm:$0xf]
          %v1661 = vld [vmem:[%s1 + $0x8e8] sm:$0xf]
          %v1662 = vld [vmem:[%s1 + $0x8ec] sm:$0xf]
          %v1663 = vld [vmem:[%s1 + $0x8f0] sm:$0xf]
          %v1664 = vld [vmem:[%s1 + $0x8f4] sm:$0xf]
          %v1665 = vld [vmem:[%s1 + $0x8f8] sm:$0xf]
          %v1666 = vld [vmem:[%s1 + $0x8fc] sm:$0xf]
          %v1667 = vld [vmem:[%s1 + $0x900] sm:$0xf]
          %v1668 = vld [vmem:[%s1 + $0x904] sm:$0xf]
          %v1669 = vld [vmem:[%s1 + $0x908] sm:$0xf]
          %v1670 = vld [vmem:[%s1 + $0x90c] sm:$0xf]
          %v1671 = vld [vmem:[%s1 + $0x910] sm:$0xf]
          %v1672 = vld [vmem:[%s1 + $0x914] sm:$0xf]
          %v1673 = vld [vmem:[%s1 + $0x918] sm:$0xf]
          %v1674 = vld [vmem:[%s1 + $0x91c] sm:$0xf]
          %v1675 = vld [vmem:[%s1 + $0x920] sm:$0xf]
          %v1676 = vld [vmem:[%s1 + $0x924] sm:$0xf]
          %v1677 = vld [vmem:[%s1 + $0x928] sm:$0xf]
          %v1678 = vld [vmem:[%s1 + $0x92c] sm:$0xf]
          %v1679 = vld [vmem:[%s1 + $0x930] sm:$0xf]
          %v1680 = vld [vmem:[%s1 + $0x934] sm:$0xf]
          %v1681 = vld [vmem:[%s1 + $0x938] sm:$0xf]
          %v1682 = vld [vmem:[%s1 + $0x93c] sm:$0xf]
          %v1683 = vld [vmem:[%s1 + $0x940] sm:$0xf]
          %v1684 = vld [vmem:[%s1 + $0x944] sm:$0xf]
          %v1685 = vld [vmem:[%s1 + $0x948] sm:$0xf]
          %v1686 = vld [vmem:[%s1 + $0x94c] sm:$0xf]
          %v1687 = vld [vmem:[%s1 + $0x950] sm:$0xf]
          %v1688 = vld [vmem:[%s1 + $0x954] sm:$0xf]
          %v1689 = vld [vmem:[%s1 + $0x958] sm:$0xf]
          %v1690 = vld [vmem:[%s1 + $0x95c] sm:$0xf]
          %v1691 = vld [vmem:[%s1 + $0x960] sm:$0xf]
          %v1692 = vld [vmem:[%s1 + $0x964] sm:$0xf]
          %v1693 = vld [vmem:[%s1 + $0x968] sm:$0xf]
          %v1694 = vld [vmem:[%s1 + $0x96c] sm:$0xf]
          %v1695 = vld [vmem:[%s1 + $0x970] sm:$0xf]
          %v1696 = vld [vmem:[%s1 + $0x974] sm:$0xf]
          %v1697 = vld [vmem:[%s1 + $0x978] sm:$0xf]
          %v1698 = vld [vmem:[%s1 + $0x97c] sm:$0xf]
          %v1699 = vld [vmem:[%s1 + $0x980] sm:$0xf]
          %v1700 = vld [vmem:[%s1 + $0x984] sm:$0xf]
          %v1701 = vld [vmem:[%s1 + $0x988] sm:$0xf]
          %v1702 = vld [vmem:[%s1 + $0x98c] sm:$0xf]
          %v1703 = vld [vmem:[%s1 + $0x990] sm:$0xf]
          %v1704 = vld [vmem:[%s1 + $0x994] sm:$0xf]
          %v1705 = vld [vmem:[%s1 + $0x998] sm:$0xf]
          %v1706 = vld [vmem:[%s1 + $0x99c] sm:$0xf]
          %v1707 = vld [vmem:[%s1 + $0x9a0] sm:$0xf]
          %v1708 = vld [vmem:[%s1 + $0x9a4] sm:$0xf]
          %v1709 = vld [vmem:[%s1 + $0x9a8] sm:$0xf]
          %v1710 = vld [vmem:[%s1 + $0x9ac] sm:$0xf]
          %v1711 = vld [vmem:[%s1 + $0x9b0] sm:$0xf]
          %v1712 = vld [vmem:[%s1 + $0x9b4] sm:$0xf]
          %v1713 = vld [vmem:[%s1 + $0x9b8] sm:$0xf]
          %v1714 = vld [vmem:[%s1 + $0x9bc] sm:$0xf]
          %v1715 = vld [vmem:[%s1 + $0x9c0] sm:$0xf]
          %v1716 = vld [vmem:[%s1 + $0x9c4] sm:$0xf]
          %v1717 = vld [vmem:[%s1 + $0x9c8] sm:$0xf]
          %v1718 = vld [vmem:[%s1 + $0x9cc] sm:$0xf]
          %v1719 = vld [vmem:[%s1 + $0x9d0] sm:$0xf]
          %v1720 = vld [vmem:[%s1 + $0x9d4] sm:$0xf]
          %v1721 = vld [vmem:[%s1 + $0x9d8] sm:$0xf]
          %v1722 = vld [vmem:[%s1 + $0x9dc] sm:$0xf]
          %v1723 = vld [vmem:[%s1 + $0x9e0] sm:$0xf]
          %v1724 = vld [vmem:[%s1 + $0x9e4] sm:$0xf]
          %v1725 = vld [vmem:[%s1 + $0x9e8] sm:$0xf]
          %v1726 = vld [vmem:[%s1 + $0x9ec] sm:$0xf]
          %v1727 = vld [vmem:[%s1 + $0x9f0] sm:$0xf]
          %v1728 = vld [vmem:[%s1 + $0x9f4] sm:$0xf]
          %v1729 = vld [vmem:[%s1 + $0x9f8] sm:$0xf]
          %v1730 = vld [vmem:[%s1 + $0x9fc] sm:$0xf]
          %v1731 = vld [vmem:[%s1 + $0xa00] sm:$0xf]
          %v1732 = vld [vmem:[%s1 + $0xa04] sm:$0xf]
          %v1733 = vld [vmem:[%s1 + $0xa08] sm:$0xf]
          %v1734 = vld [vmem:[%s1 + $0xa0c] sm:$0xf]
          %v1735 = vld [vmem:[%s1 + $0xa10] sm:$0xf]
          %v1736 = vld [vmem:[%s1 + $0xa14] sm:$0xf]
          %v1737 = vld [vmem:[%s1 + $0xa18] sm:$0xf]
          %v1738 = vld [vmem:[%s1 + $0xa1c] sm:$0xf]
          %v1739 = vld [vmem:[%s1 + $0xa20] sm:$0xf]
          %v1740 = vld [vmem:[%s1 + $0xa24] sm:$0xf]
          %v1741 = vld [vmem:[%s1 + $0xa28] sm:$0xf]
          %v1742 = vld [vmem:[%s1 + $0xa2c] sm:$0xf]
          %v1743 = vld [vmem:[%s1 + $0xa30] sm:$0xf]
          %v1744 = vld [vmem:[%s1 + $0xa34] sm:$0xf]
          %v1745 = vld [vmem:[%s1 + $0xa38] sm:$0xf]
          %v1746 = vld [vmem:[%s1 + $0xa3c] sm:$0xf]
          %v1747 = vld [vmem:[%s1 + $0xa40] sm:$0xf]
          %v1748 = vld [vmem:[%s1 + $0xa44] sm:$0xf]
          %v1749 = vld [vmem:[%s1 + $0xa48] sm:$0xf]
          %v1750 = vld [vmem:[%s1 + $0xa4c] sm:$0xf]
          %v1751 = vld [vmem:[%s1 + $0xa50] sm:$0xf]
          %v1752 = vld [vmem:[%s1 + $0xa54] sm:$0xf]
          %v1753 = vld [vmem:[%s1 + $0xa58] sm:$0xf]
          %v1754 = vld [vmem:[%s1 + $0xa5c] sm:$0xf]
          %v1755 = vld [vmem:[%s1 + $0xa60] sm:$0xf]
          %v1756 = vld [vmem:[%s1 + $0xa64] sm:$0xf]
          %v1757 = vld [vmem:[%s1 + $0xa68] sm:$0xf]
          %v1758 = vld [vmem:[%s1 + $0xa6c] sm:$0xf]
          %v1759 = vld [vmem:[%s1 + $0xa70] sm:$0xf]
          %v1760 = vld [vmem:[%s1 + $0xa74] sm:$0xf]
          %v1761 = vld [vmem:[%s1 + $0xa78] sm:$0xf]
          %v1762 = vld [vmem:[%s1 + $0xa7c] sm:$0xf]
          %v1763 = vld [vmem:[%s1 + $0xa80] sm:$0xf]
          %v1764 = vld [vmem:[%s1 + $0xa84] sm:$0xf]
          %v1765 = vld [vmem:[%s1 + $0xa88] sm:$0xf]
          %v1766 = vld [vmem:[%s1 + $0xa8c] sm:$0xf]
          %v1767 = vld [vmem:[%s1 + $0xa90] sm:$0xf]
          %v1768 = vld [vmem:[%s1 + $0xa94] sm:$0xf]
          %v1769 = vld [vmem:[%s1 + $0xa98] sm:$0xf]
          %v1770 = vld [vmem:[%s1 + $0xa9c] sm:$0xf]
          %v1771 = vld [vmem:[%s1 + $0xaa0] sm:$0xf]
          %v1772 = vld [vmem:[%s1 + $0xaa4] sm:$0xf]
          %v1773 = vld [vmem:[%s1 + $0xaa8] sm:$0xf]
          %v1774 = vld [vmem:[%s1 + $0xaac] sm:$0xf]
          %v1775 = vld [vmem:[%s1 + $0xab0] sm:$0xf]
          %v1776 = vld [vmem:[%s1 + $0xab4] sm:$0xf]
          %v1777 = vld [vmem:[%s1 + $0xab8] sm:$0xf]
          %v1778 = vld [vmem:[%s1 + $0xabc] sm:$0xf]
          %v1779 = vld [vmem:[%s1 + $0xac0] sm:$0xf]
          %v1780 = vld [vmem:[%s1 + $0xac4] sm:$0xf]
          %v1781 = vld [vmem:[%s1 + $0xac8] sm:$0xf]
          %v1782 = vld [vmem:[%s1 + $0xacc] sm:$0xf]
          %v1783 = vld [vmem:[%s1 + $0xad0] sm:$0xf]
          %v1784 = vld [vmem:[%s1 + $0xad4] sm:$0xf]
          %v1785 = vld [vmem:[%s1 + $0xad8] sm:$0xf]
          %v1786 = vld [vmem:[%s1 + $0xadc] sm:$0xf]
          %v1787 = vld [vmem:[%s1 + $0xae0] sm:$0xf]
          %v1788 = vld [vmem:[%s1 + $0xae4] sm:$0xf]
          %v1789 = vld [vmem:[%s1 + $0xae8] sm:$0xf]
          %v1790 = vld [vmem:[%s1 + $0xaec] sm:$0xf]
          %v1791 = vld [vmem:[%s1 + $0xaf0] sm:$0xf]
          %v1792 = vld [vmem:[%s1 + $0xaf4] sm:$0xf]
          %v1793 = vld [vmem:[%s1 + $0xaf8] sm:$0xf]
          %v1794 = vld [vmem:[%s1 + $0xafc] sm:$0xf]
          %v1795 = vld [vmem:[%s1 + $0xb00] sm:$0xf]
          %v1796 = vld [vmem:[%s1 + $0xb04] sm:$0xf]
          %v1797 = vld [vmem:[%s1 + $0xb08] sm:$0xf]
          %v1798 = vld [vmem:[%s1 + $0xb0c] sm:$0xf]
          %v1799 = vld [vmem:[%s1 + $0xb10] sm:$0xf]
          %v1800 = vld [vmem:[%s1 + $0xb14] sm:$0xf]
          %v1801 = vld [vmem:[%s1 + $0xb18] sm:$0xf]
          %v1802 = vld [vmem:[%s1 + $0xb1c] sm:$0xf]
          %v1803 = vld [vmem:[%s1 + $0xb20] sm:$0xf]
          %v1804 = vld [vmem:[%s1 + $0xb24] sm:$0xf]
          %v1805 = vld [vmem:[%s1 + $0xb28] sm:$0xf]
          %v1806 = vld [vmem:[%s1 + $0xb2c] sm:$0xf]
          %v1807 = vld [vmem:[%s1 + $0xb30] sm:$0xf]
          %v1808 = vld [vmem:[%s1 + $0xb34] sm:$0xf]
          %v1809 = vld [vmem:[%s1 + $0xb38] sm:$0xf]
          %v1810 = vld [vmem:[%s1 + $0xb3c] sm:$0xf]
          %v1811 = vld [vmem:[%s1 + $0xb40] sm:$0xf]
          %v1812 = vld [vmem:[%s1 + $0xb44] sm:$0xf]
          %v1813 = vld [vmem:[%s1 + $0xb48] sm:$0xf]
          %v1814 = vld [vmem:[%s1 + $0xb4c] sm:$0xf]
          %v1815 = vld [vmem:[%s1 + $0xb50] sm:$0xf]
          %v1816 = vld [vmem:[%s1 + $0xb54] sm:$0xf]
          %v1817 = vld [vmem:[%s1 + $0xb58] sm:$0xf]
          %v1818 = vld [vmem:[%s1 + $0xb5c] sm:$0xf]
          %v1819 = vld [vmem:[%s1 + $0xb60] sm:$0xf]
          %v1820 = vld [vmem:[%s1 + $0xb64] sm:$0xf]
          %v1821 = vld [vmem:[%s1 + $0xb68] sm:$0xf]
          %v1822 = vld [vmem:[%s1 + $0xb6c] sm:$0xf]
          %v1823 = vld [vmem:[%s1 + $0xb70] sm:$0xf]
          %v1824 = vld [vmem:[%s1 + $0xb74] sm:$0xf]
          %v1825 = vld [vmem:[%s1 + $0xb78] sm:$0xf]
          %v1826 = vld [vmem:[%s1 + $0xb7c] sm:$0xf]
          %v1827 = vld [vmem:[%s1 + $0xb80] sm:$0xf]
          %v1828 = vld [vmem:[%s1 + $0xb84] sm:$0xf]
          %v1829 = vld [vmem:[%s1 + $0xb88] sm:$0xf]
          %v1830 = vld [vmem:[%s1 + $0xb8c] sm:$0xf]
          %v1831 = vld [vmem:[%s1 + $0xb90] sm:$0xf]
          %v1832 = vld [vmem:[%s1 + $0xb94] sm:$0xf]
          %v1833 = vld [vmem:[%s1 + $0xb98] sm:$0xf]
          %v1834 = vld [vmem:[%s1 + $0xb9c] sm:$0xf]
          %v1835 = vld [vmem:[%s1 + $0xba0] sm:$0xf]
          %v1836 = vld [vmem:[%s1 + $0xba4] sm:$0xf]
          %v1837 = vld [vmem:[%s1 + $0xba8] sm:$0xf]
          %v1838 = vld [vmem:[%s1 + $0xbac] sm:$0xf]
          %v1839 = vld [vmem:[%s1 + $0xbb0] sm:$0xf]
          %v1840 = vld [vmem:[%s1 + $0xbb4] sm:$0xf]
          %v1841 = vld [vmem:[%s1 + $0xbb8] sm:$0xf]
          %v1842 = vld [vmem:[%s1 + $0xbbc] sm:$0xf]
          %v1843 = vld [vmem:[%s2] sm:$0xf]
          %1845 = vst [vmem:[#allocation1] ss:$4 sm:$0xff] %v1079
          %s1847 = scalar_lea.vmem [#allocation1], 32
          %1848 = vst [vmem:[%s1847] ss:$4 sm:$0xff] %v1080
          %v1849 = vld.sshfl [vmem:[#allocation1] sm:$0xff pattern:$0x73625140]
          %v1850 = vld.sshfl [vmem:[#allocation1 + $0x8] sm:$0xff pattern:$0x73625140]
          %v1851 = vld.sshfl [vmem:[#allocation1 + $0x10] sm:$0xff pattern:$0x73625140]
          %v1852 = vld.sshfl [vmem:[#allocation1 + $0x18] sm:$0xff pattern:$0x73625140]
          %v1853 = vld.sshfl [vmem:[#allocation1 + $0x20] sm:$0xff pattern:$0x73625140]
          %v1854 = vld.sshfl [vmem:[#allocation1 + $0x28] sm:$0xff pattern:$0x73625140]
          %v1855 = vld.sshfl [vmem:[#allocation1 + $0x30] sm:$0xff pattern:$0x73625140]
          %v1856 = vld.sshfl [vmem:[#allocation1 + $0x38] sm:$0xff pattern:$0x73625140]
          %1858 = vst [vmem:[#allocation1] ss:$4 sm:$0xff] %v1081
          %1860 = vst [vmem:[%s1847] ss:$4 sm:$0xff] %v1082
          %v1861 = vld.sshfl [vmem:[#allocation1] sm:$0xff pattern:$0x73625140]
          %v1862 = vld.sshfl [vmem:[#allocation1 + $0x8] sm:$0xff pattern:$0x73625140]
          %v1863 = vld.sshfl [vmem:[#allocation1 + $0x10] sm:$0xff pattern:$0x73625140]
          %v1864 = vld.sshfl [vmem:[#allocation1 + $0x18] sm:$0xff pattern:$0x73625140]
          %v1865 = vld.sshfl [vmem:[#allocation1 + $0x20] sm:$0xff pattern:$0x73625140]
          %v1866 = vld.sshfl [vmem:[#allocation1 + $0x28] sm:$0xff pattern:$0x73625140]
          %v1867 = vld.sshfl [vmem:[#allocation1 + $0x30] sm:$0xff pattern:$0x73625140]
          %v1868 = vld.sshfl [vmem:[#allocation1 + $0x38] sm:$0xff pattern:$0x73625140]
          %1870 = vst [vmem:[#allocation1] ss:$4 sm:$0xff] %v1083
          %1872 = vst [vmem:[%s1847] ss:$4 sm:$0xff] %v1084
          %v1873 = vld.sshfl [vmem:[#allocation1] sm:$0xff pattern:$0x73625140]
          %v1874 = vld.sshfl [vmem:[#allocation1 + $0x8] sm:$0xff pattern:$0x73625140]
          %v1875 = vld.sshfl [vmem:[#allocation1 + $0x10] sm:$0xff pattern:$0x73625140]
          %v1876 = vld.sshfl [vmem:[#allocation1 + $0x18] sm:$0xff pattern:$0x73625140]
          %v1877 = vld.sshfl [vmem:[#allocation1 + $0x20] sm:$0xff pattern:$0x73625140]
          %v1878 = vld.sshfl [vmem:[#allocation1 + $0x28] sm:$0xff pattern:$0x73625140]
          %v1879 = vld.sshfl [vmem:[#allocation1 + $0x30] sm:$0xff pattern:$0x73625140]
          %v1880 = vld.sshfl [vmem:[#allocation1 + $0x38] sm:$0xff pattern:$0x73625140]
          %1882 = vst [vmem:[#allocation1] ss:$4 sm:$0xff] %v1085
          %1884 = vst [vmem:[%s1847] ss:$4 sm:$0xff] %v1086
          %v1885 = vld.sshfl [vmem:[#allocation1] sm:$0xff pattern:$0x73625140]
          %v1886 = vld.sshfl [vmem:[#allocation1 + $0x8] sm:$0xff pattern:$0x73625140]
          %v1887 = vld.sshfl [vmem:[#allocation1 + $0x10] sm:$0xff pattern:$0x73625140]
          %v1888 = vld.sshfl [vmem:[#allocation1 + $0x18] sm:$0xff pattern:$0x73625140]
          %v1889 = vld.sshfl [vmem:[#allocation1 + $0x20] sm:$0xff pattern:$0x73625140]
          %v1890 = vld.sshfl [vmem:[#allocation1 + $0x28] sm:$0xff pattern:$0x73625140]
          %v1891 = vld.sshfl [vmem:[#allocation1 + $0x30] sm:$0xff pattern:$0x73625140]
          %v1892 = vld.sshfl [vmem:[#allocation1 + $0x38] sm:$0xff pattern:$0x73625140]
          %1894 = vst [vmem:[#allocation1] ss:$4 sm:$0xff] %v1087
          %1896 = vst [vmem:[%s1847] ss:$4 sm:$0xff] %v1088
          %v1897 = vld.sshfl [vmem:[#allocation1] sm:$0xff pattern:$0x73625140]
          %v1898 = vld.sshfl [vmem:[#allocation1 + $0x8] sm:$0xff pattern:$0x73625140]
          %v1899 = vld.sshfl [vmem:[#allocation1 + $0x10] sm:$0xff pattern:$0x73625140]
          %v1900 = vld.sshfl [vmem:[#allocation1 + $0x18] sm:$0xff pattern:$0x73625140]
          %v1901 = vld.sshfl [vmem:[#allocation1 + $0x20] sm:$0xff pattern:$0x73625140]
          %v1902 = vld.sshfl [vmem:[#allocation1 + $0x28] sm:$0xff pattern:$0x73625140]
          %v1903 = vld.sshfl [vmem:[#allocation1 + $0x30] sm:$0xff pattern:$0x73625140]
          %v1904 = vld.sshfl [vmem:[#allocation1 + $0x38] sm:$0xff pattern:$0x73625140]
          %1906 = vst [vmem:[#allocation1] ss:$4 sm:$0xff] %v1089
          %1908 = vst [vmem:[%s1847] ss:$4 sm:$0xff] %v1090
          %v1909 = vld.sshfl [vmem:[#allocation1] sm:$0xff pattern:$0x73625140]
          %v1910 = vld.sshfl [vmem:[#allocation1 + $0x8] sm:$0xff pattern:$0x73625140]
          %v1911 = vld.sshfl [vmem:[#allocation1 + $0x10] sm:$0xff pattern:$0x73625140]
          %v1912 = vld.sshfl [vmem:[#allocation1 + $0x18] sm:$0xff pattern:$0x73625140]
          %v1913 = vld.sshfl [vmem:[#allocation1 + $0x20] sm:$0xff pattern:$0x73625140]
          %v1914 = vld.sshfl [vmem:[#allocation1 + $0x28] sm:$0xff pattern:$0x73625140]
          %v1915 = vld.sshfl [vmem:[#allocation1 + $0x30] sm:$0xff pattern:$0x73625140]
          %v2715 = vunpack.c.l.b16 %v1091
          %v2716 = vunpack.c.l.b16 %v1092
          %v2717 = vunpack.c.l.b16 %v1093
          %v2718 = vunpack.c.l.b16 %v1094
          %v2719 = vunpack.c.l.b16 %v1095
          %v2720 = vunpack.c.l.b16 %v1096
          %v2721 = vunpack.c.l.b16 %v1097
          %v2722 = vunpack.c.l.b16 %v1098
          %v2723 = vunpack.c.l.b16 %v1099
          %v2724 = vunpack.c.l.b16 %v1100
          %v2725 = vunpack.c.l.b16 %v1101
          %v2726 = vunpack.c.l.b16 %v1102
          %v2727 = vunpack.c.l.b16 %v1103
          %v2728 = vunpack.c.l.b16 %v1104
          %v2729 = vunpack.c.l.b16 %v1105
          %v2730 = vunpack.c.l.b16 %v1106
          %v2731 = vunpack.c.l.b16 %v1107
          %v2732 = vunpack.c.l.b16 %v1108
          %v2733 = vunpack.c.l.b16 %v1109
          %v2734 = vunpack.c.l.b16 %v1110
          %v2735 = vunpack.c.l.b16 %v1111
          %v2736 = vunpack.c.l.b16 %v1112
          %v2737 = vunpack.c.l.b16 %v1113
          %v2738 = vunpack.c.l.b16 %v1114
          %v2739 = vunpack.c.l.b16 %v1115
          %v2740 = vunpack.c.l.b16 %v1116
          %v2741 = vunpack.c.l.b16 %v1117
          %v2742 = vunpack.c.l.b16 %v1118
          %v2743 = vunpack.c.l.b16 %v1119
          %v2744 = vunpack.c.l.b16 %v1120
          %v2745 = vunpack.c.l.b16 %v1121
          %v2746 = vunpack.c.l.b16 %v1122
          %v2747 = vunpack.c.l.b16 %v1123
          %v2748 = vunpack.c.l.b16 %v1124
          %v2749 = vunpack.c.l.b16 %v1125
          %v2750 = vunpack.c.l.b16 %v1126
          %v2751 = vunpack.c.l.b16 %v1127
          %v2752 = vunpack.c.l.b16 %v1128
          %v2753 = vunpack.c.l.b16 %v1129
          %v2754 = vunpack.c.l.b16 %v1130
          %v2755 = vunpack.c.l.b16 %v1131
          %v2756 = vunpack.c.l.b16 %v1132
          %v2757 = vunpack.c.l.b16 %v1133
          %v2758 = vunpack.c.l.b16 %v1134
          %v2759 = vunpack.c.l.b16 %v1135
          %v2760 = vunpack.c.l.b16 %v1136
          %v2761 = vunpack.c.l.b16 %v1137
          %v2762 = vunpack.c.l.b16 %v1138
          %v2763 = vunpack.c.l.b16 %v1139
          %v2764 = vunpack.c.l.b16 %v1140
          %v2765 = vunpack.c.l.b16 %v1141
          %v2766 = vunpack.c.l.b16 %v1142
          %v2767 = vunpack.c.l.b16 %v1143
          %v2768 = vunpack.c.l.b16 %v1144
          %v2769 = vunpack.c.l.b16 %v1145
          %v2770 = vunpack.c.l.b16 %v1146
          %v2771 = vunpack.c.l.b16 %v1147
          %v2772 = vunpack.c.l.b16 %v1148
          %v2773 = vunpack.c.l.b16 %v1149
          %v2774 = vunpack.c.l.b16 %v1150
          %v2775 = vunpack.c.l.b16 %v1151
          %v2776 = vunpack.c.l.b16 %v1152
          %v2777 = vunpack.c.l.b16 %v1153
          %v2778 = vunpack.c.l.b16 %v1154
          %v2779 = vunpack.c.l.b16 %v1155
          %v2780 = vunpack.c.l.b16 %v1156
          %v2781 = vunpack.c.l.b16 %v1157
          %v2782 = vunpack.c.l.b16 %v1158
          %v2783 = vunpack.c.l.b16 %v1159
          %v2784 = vunpack.c.l.b16 %v1160
          %v2785 = vunpack.c.l.b16 %v1161
          %v2786 = vunpack.c.l.b16 %v1162
          %v2787 = vunpack.c.l.b16 %v1163
          %v2788 = vunpack.c.l.b16 %v1164
          %v2789 = vunpack.c.l.b16 %v1165
          %v2790 = vunpack.c.l.b16 %v1166
          %v2791 = vunpack.c.l.b16 %v1167
          %v2792 = vunpack.c.l.b16 %v1168
          %v2793 = vunpack.c.l.b16 %v1169
          %v2794 = vunpack.c.l.b16 %v1170
          %v2795 = vunpack.c.l.b16 %v1171
          %v2796 = vunpack.c.l.b16 %v1172
          %v2797 = vunpack.c.l.b16 %v1173
          %v2798 = vunpack.c.l.b16 %v1174
          %v2799 = vunpack.c.l.b16 %v1175
          %v2800 = vunpack.c.l.b16 %v1176
          %v2801 = vunpack.c.l.b16 %v1177
          %v2802 = vunpack.c.l.b16 %v1178
          %v2803 = vunpack.c.l.b16 %v1179
          %v2804 = vunpack.c.l.b16 %v1180
          %v2805 = vunpack.c.l.b16 %v1181
          %v2806 = vunpack.c.l.b16 %v1182
          %v2807 = vunpack.c.l.b16 %v1183
          %v2808 = vunpack.c.l.b16 %v1184
          %v2809 = vunpack.c.l.b16 %v1185
          %v2810 = vunpack.c.l.b16 %v1186
          %v2811 = vunpack.c.l.b16 %v1187
          %v2812 = vunpack.c.l.b16 %v1188
          %v2813 = vunpack.c.l.b16 %v1189
          %v2814 = vunpack.c.l.b16 %v1190
          %v2815 = vunpack.c.l.b16 %v1191
          %v2816 = vunpack.c.l.b16 %v1192
          %v2817 = vunpack.c.l.b16 %v1193
          %v2818 = vunpack.c.l.b16 %v1194
          %v2819 = vunpack.c.l.b16 %v1195
          %v2820 = vunpack.c.l.b16 %v1196
          %v2821 = vunpack.c.l.b16 %v1197
          %v2822 = vunpack.c.l.b16 %v1198
          %v2823 = vunpack.c.l.b16 %v1199
          %v2824 = vunpack.c.l.b16 %v1200
          %v2825 = vunpack.c.l.b16 %v1201
          %v2826 = vunpack.c.l.b16 %v1202
          %v2827 = vunpack.c.l.b16 %v1203
          %v2828 = vunpack.c.l.b16 %v1204
          %v2829 = vunpack.c.l.b16 %v1205
          %v2830 = vunpack.c.l.b16 %v1206
          %v2831 = vunpack.c.l.b16 %v1207
          %v2832 = vunpack.c.l.b16 %v1208
          %v2833 = vunpack.c.l.b16 %v1209
          %v2834 = vunpack.c.l.b16 %v1210
          %v2835 = vunpack.c.l.b16 %v1211
          %v2836 = vunpack.c.l.b16 %v1212
          %v2837 = vunpack.c.l.b16 %v1213
          %v2838 = vunpack.c.l.b16 %v1214
          %v2839 = vunpack.c.l.b16 %v1215
          %v2840 = vunpack.c.l.b16 %v1216
          %v2841 = vunpack.c.l.b16 %v1217
          %v2842 = vunpack.c.l.b16 %v1218
          %v2843 = vunpack.c.l.b16 %v1219
          %v2844 = vunpack.c.l.b16 %v1220
          %v2845 = vunpack.c.l.b16 %v1221
          %v2846 = vunpack.c.l.b16 %v1222
          %v2847 = vunpack.c.l.b16 %v1223
          %v2848 = vunpack.c.l.b16 %v1224
          %v2849 = vunpack.c.l.b16 %v1225
          %v2850 = vunpack.c.l.b16 %v1226
          %v2851 = vunpack.c.l.b16 %v1227
          %v2852 = vunpack.c.l.b16 %v1228
          %v2853 = vunpack.c.l.b16 %v1229
          %v2854 = vunpack.c.l.b16 %v1230
          %v2855 = vunpack.c.l.b16 %v1231
          %v2856 = vunpack.c.l.b16 %v1232
          %v2857 = vunpack.c.l.b16 %v1233
          %v2858 = vunpack.c.l.b16 %v1234
          %v2859 = vunpack.c.l.b16 %v1235
          %v2860 = vunpack.c.l.b16 %v1236
          %v2861 = vunpack.c.l.b16 %v1237
          %v2862 = vunpack.c.l.b16 %v1238
          %v2863 = vunpack.c.l.b16 %v1239
          %v2864 = vunpack.c.l.b16 %v1240
          %v2865 = vunpack.c.l.b16 %v1241
          %v2866 = vunpack.c.l.b16 %v1242
          %v2867 = vunpack.c.l.b16 %v1243
          %v2868 = vunpack.c.l.b16 %v1244
          %v2869 = vunpack.c.l.b16 %v1245
          %v2870 = vunpack.c.l.b16 %v1246
          %v2871 = vunpack.c.l.b16 %v1247
          %v2872 = vunpack.c.l.b16 %v1248
          %v2873 = vunpack.c.l.b16 %v1249
          %v2874 = vunpack.c.l.b16 %v1250
          %v2875 = vunpack.c.l.b16 %v1251
          %v2876 = vunpack.c.l.b16 %v1252
          %v2877 = vunpack.c.l.b16 %v1253
          %v2878 = vunpack.c.l.b16 %v1254
          %v2879 = vunpack.c.l.b16 %v1255
          %v2880 = vunpack.c.l.b16 %v1256
          %v2881 = vunpack.c.l.b16 %v1257
          %v2882 = vunpack.c.l.b16 %v1258
          %v2883 = vunpack.c.l.b16 %v1259
          %v2884 = vunpack.c.l.b16 %v1260
          %v2885 = vunpack.c.l.b16 %v1261
          %v2886 = vunpack.c.l.b16 %v1262
          %v2887 = vunpack.c.l.b16 %v1263
          %v2888 = vunpack.c.l.b16 %v1264
          %v2889 = vunpack.c.l.b16 %v1265
          %v2890 = vunpack.c.l.b16 %v1266
          %v2891 = vunpack.c.l.b16 %v1267
          %v2892 = vunpack.c.l.b16 %v1268
          %v2893 = vunpack.c.l.b16 %v1269
          %v2894 = vunpack.c.l.b16 %v1270
          %v2895 = vunpack.c.l.b16 %v1271
          %v2896 = vunpack.c.l.b16 %v1272
          %v2897 = vunpack.c.l.b16 %v1273
          %v2898 = vunpack.c.l.b16 %v1274
          %v2899 = vunpack.c.l.b16 %v1275
          %v2900 = vunpack.c.l.b16 %v1276
          %v2901 = vunpack.c.l.b16 %v1277
          %v2902 = vunpack.c.l.b16 %v1278
          %v2903 = vunpack.c.l.b16 %v1279
          %v2904 = vunpack.c.l.b16 %v1280
          %v2905 = vunpack.c.l.b16 %v1281
          %v2906 = vunpack.c.l.b16 %v1282
          %v2907 = vunpack.c.l.b16 %v1283
          %v2908 = vunpack.c.l.b16 %v1284
          %v2909 = vunpack.c.l.b16 %v1285
          %v2910 = vunpack.c.l.b16 %v1286
          %v2911 = vunpack.c.l.b16 %v1287
          %v2912 = vunpack.c.l.b16 %v1288
          %v2913 = vunpack.c.l.b16 %v1289
          %v2914 = vunpack.c.l.b16 %v1290
          %v2915 = vunpack.c.l.b16 %v1291
          %v2916 = vunpack.c.l.b16 %v1292
          %v2917 = vunpack.c.l.b16 %v1293
          %v2918 = vunpack.c.l.b16 %v1294
          %v2919 = vunpack.c.l.b16 %v1295
          %v2920 = vunpack.c.l.b16 %v1296
          %v2921 = vunpack.c.l.b16 %v1297
          %v2922 = vunpack.c.l.b16 %v1298
          %v2923 = vunpack.c.l.b16 %v1299
          %v2924 = vunpack.c.l.b16 %v1300
          %v2925 = vunpack.c.l.b16 %v1301
          %v2926 = vunpack.c.l.b16 %v1302
          %v2927 = vunpack.c.l.b16 %v1303
          %v2928 = vunpack.c.l.b16 %v1304
          %v2929 = vunpack.c.l.b16 %v1305
          %v2930 = vunpack.c.l.b16 %v1306
          %v2931 = vunpack.c.l.b16 %v1307
          %v2932 = vunpack.c.l.b16 %v1308
          %v2933 = vunpack.c.l.b16 %v1309
          %v2934 = vunpack.c.l.b16 %v1310
          %v2935 = vunpack.c.l.b16 %v1311
          %v2936 = vunpack.c.l.b16 %v1312
          %v2937 = vunpack.c.l.b16 %v1313
          %v2938 = vunpack.c.l.b16 %v1314
          %v2939 = vunpack.c.l.b16 %v1315
          %v2940 = vunpack.c.l.b16 %v1316
          %v2941 = vunpack.c.l.b16 %v1317
          %v2942 = vunpack.c.l.b16 %v1318
          %v2943 = vunpack.c.l.b16 %v1319
          %v2944 = vunpack.c.l.b16 %v1320
          %v2945 = vunpack.c.l.b16 %v1321
          %v2946 = vunpack.c.l.b16 %v1322
          %v2947 = vunpack.c.l.b16 %v1323
          %v2948 = vunpack.c.l.b16 %v1324
          %v2949 = vunpack.c.l.b16 %v1325
          %v2950 = vunpack.c.l.b16 %v1326
          %v2951 = vunpack.c.l.b16 %v1327
          %v2952 = vunpack.c.l.b16 %v1328
          %v2953 = vunpack.c.l.b16 %v1329
          %v2954 = vunpack.c.l.b16 %v1330
          %v2955 = vunpack.c.l.b16 %v1331
          %v2956 = vunpack.c.l.b16 %v1332
          %v2957 = vunpack.c.l.b16 %v1333
          %v2958 = vunpack.c.l.b16 %v1334
          %v2959 = vunpack.c.l.b16 %v1335
          %v2960 = vunpack.c.l.b16 %v1336
          %v2961 = vunpack.c.l.b16 %v1337
          %v2962 = vunpack.c.l.b16 %v1338
          %v2963 = vunpack.c.l.b16 %v1339
          %v2964 = vunpack.c.l.b16 %v1340
          %v2965 = vunpack.c.l.b16 %v1341
          %v2966 = vunpack.c.l.b16 %v1342
          %v2967 = vunpack.c.l.b16 %v1343
          %v2968 = vunpack.c.l.b16 %v1344
          %v2969 = vunpack.c.l.b16 %v1345
          %v2970 = vunpack.c.l.b16 %v1346
          %v2971 = vunpack.c.l.b16 %v1347
          %v2972 = vunpack.c.l.b16 %v1348
          %v2973 = vunpack.c.l.b16 %v1349
          %v2974 = vunpack.c.l.b16 %v1350
          %v2975 = vunpack.c.l.b16 %v1351
          %v2976 = vunpack.c.l.b16 %v1352
          %v2977 = vunpack.c.l.b16 %v1353
          %v2978 = vunpack.c.l.b16 %v1354
          %v2979 = vunpack.c.l.b16 %v1355
          %v2980 = vunpack.c.l.b16 %v1356
          %v2981 = vunpack.c.l.b16 %v1357
          %v2982 = vunpack.c.l.b16 %v1358
          %v2983 = vunpack.c.l.b16 %v1359
          %v2984 = vunpack.c.l.b16 %v1360
          %v2985 = vunpack.c.l.b16 %v1361
          %v2986 = vunpack.c.l.b16 %v1362
          %v2987 = vunpack.c.l.b16 %v1363
          %v2988 = vunpack.c.l.b16 %v1364
          %v2989 = vunpack.c.l.b16 %v1365
          %v2990 = vunpack.c.l.b16 %v1366
          %v2991 = vunpack.c.l.b16 %v1367
          %v2992 = vunpack.c.l.b16 %v1368
          %v2993 = vunpack.c.l.b16 %v1369
          %v2994 = vunpack.c.l.b16 %v1370
          %v2995 = vunpack.c.l.b16 %v1371
          %v2996 = vunpack.c.l.b16 %v1372
          %v2997 = vunpack.c.l.b16 %v1373
          %v2998 = vunpack.c.l.b16 %v1374
          %v2999 = vunpack.c.l.b16 %v1375
          %v3000 = vunpack.c.l.b16 %v1376
          %v3001 = vunpack.c.l.b16 %v1377
          %v3002 = vunpack.c.l.b16 %v1378
          %v3003 = vunpack.c.l.b16 %v1379
          %v3004 = vunpack.c.l.b16 %v1380
          %v3005 = vunpack.c.l.b16 %v1381
          %v3006 = vunpack.c.l.b16 %v1382
          %v3007 = vunpack.c.l.b16 %v1383
          %v3008 = vunpack.c.l.b16 %v1384
          %v3009 = vunpack.c.l.b16 %v1385
          %v3010 = vunpack.c.l.b16 %v1386
          %v3011 = vunpack.c.l.b16 %v1387
          %v3012 = vunpack.c.l.b16 %v1388
          %v3013 = vunpack.c.l.b16 %v1389
          %v3014 = vunpack.c.l.b16 %v1390
          %v3015 = vunpack.c.l.b16 %v1391
          %v3016 = vunpack.c.l.b16 %v1392
          %v3017 = vunpack.c.l.b16 %v1393
          %v3018 = vunpack.c.l.b16 %v1394
          %v3019 = vunpack.c.l.b16 %v1395
          %v3020 = vunpack.c.l.b16 %v1396
          %v3021 = vunpack.c.l.b16 %v1397
          %v3022 = vunpack.c.l.b16 %v1398
          %v3023 = vunpack.c.l.b16 %v1399
          %v3024 = vunpack.c.l.b16 %v1400
          %v3025 = vunpack.c.l.b16 %v1401
          %v3026 = vunpack.c.l.b16 %v1402
          %v3027 = vunpack.c.l.b16 %v1403
          %v3028 = vunpack.c.l.b16 %v1404
          %v3029 = vunpack.c.l.b16 %v1405
          %v3030 = vunpack.c.l.b16 %v1406
          %v3031 = vunpack.c.l.b16 %v1407
          %v3032 = vunpack.c.l.b16 %v1408
          %v3033 = vunpack.c.l.b16 %v1409
          %v3034 = vunpack.c.l.b16 %v1410
          %v3035 = vunpack.c.l.b16 %v1411
          %v3036 = vunpack.c.l.b16 %v1412
          %v3037 = vunpack.c.l.b16 %v1413
          %v3038 = vunpack.c.l.b16 %v1414
          %v3039 = vunpack.c.l.b16 %v1415
          %v3040 = vunpack.c.l.b16 %v1416
          %v3041 = vunpack.c.l.b16 %v1417
          %v3042 = vunpack.c.l.b16 %v1418
          %v3043 = vunpack.c.l.b16 %v1419
          %v3044 = vunpack.c.l.b16 %v1420
          %v3045 = vunpack.c.l.b16 %v1421
          %v3046 = vunpack.c.l.b16 %v1422
          %v3047 = vunpack.c.l.b16 %v1423
          %v3048 = vunpack.c.l.b16 %v1424
          %v3049 = vunpack.c.l.b16 %v1425
          %v3050 = vunpack.c.l.b16 %v1426
          %v3051 = vunpack.c.l.b16 %v1427
          %v3052 = vunpack.c.l.b16 %v1428
          %v3053 = vunpack.c.l.b16 %v1429
          %v3054 = vunpack.c.l.b16 %v1430
          %v3055 = vunpack.c.l.b16 %v1431
          %v3056 = vunpack.c.l.b16 %v1432
          %v3057 = vunpack.c.l.b16 %v1433
          %v3058 = vunpack.c.l.b16 %v1434
          %v3059 = vunpack.c.l.b16 %v1435
          %v3060 = vunpack.c.l.b16 %v1436
          %v3061 = vunpack.c.l.b16 %v1437
          %v3062 = vunpack.c.l.b16 %v1438
          %v3063 = vunpack.c.l.b16 %v1439
          %v3064 = vunpack.c.l.b16 %v1440
          %v3065 = vunpack.c.l.b16 %v1441
          %v3066 = vunpack.c.l.b16 %v1442
          %v3067 = vunpack.c.l.b16 %v1443
          %v3068 = vunpack.c.l.b16 %v1444
          %v3069 = vunpack.c.l.b16 %v1445
          %v3070 = vunpack.c.l.b16 %v1446
          %v3071 = vunpack.c.l.b16 %v1447
          %v3072 = vunpack.c.l.b16 %v1448
          %v3073 = vunpack.c.l.b16 %v1449
          %v3074 = vunpack.c.l.b16 %v1450
          %v3075 = vunpack.c.l.b16 %v1451
          %v3076 = vunpack.c.l.b16 %v1452
          %v3077 = vunpack.c.l.b16 %v1453
          %v3078 = vunpack.c.l.b16 %v1454
          %v3079 = vunpack.c.l.b16 %v1455
          %v3080 = vunpack.c.l.b16 %v1456
          %v3081 = vunpack.c.l.b16 %v1457
          %v3082 = vunpack.c.l.b16 %v1458
          %v3083 = vunpack.c.l.b16 %v1459
          %v3084 = vunpack.c.l.b16 %v1460
          %v3085 = vunpack.c.l.b16 %v1461
          %v3086 = vunpack.c.l.b16 %v1462
          %v3087 = vunpack.c.l.b16 %v1463
          %v3088 = vunpack.c.l.b16 %v1464
          %v3089 = vunpack.c.l.b16 %v1465
          %v3090 = vunpack.c.l.b16 %v1466
          %v3091 = vunpack.c.l.b16 %v1467
          %v3092 = vunpack.c.l.b16 %v1468
          %v3093 = vunpack.c.l.b16 %v1469
          %v3094 = vunpack.c.l.b16 %v1470
          %v3095 = vunpack.c.l.b16 %v1471
          %v3096 = vunpack.c.l.b16 %v1472
          %v3097 = vunpack.c.l.b16 %v1473
          %v3098 = vunpack.c.l.b16 %v1474
          %v3099 = vunpack.c.l.b16 %v1475
          %v3100 = vunpack.c.l.b16 %v1476
          %v3101 = vunpack.c.l.b16 %v1477
          %v3102 = vunpack.c.l.b16 %v1478
          %v3103 = vunpack.c.l.b16 %v1479
          %v3104 = vunpack.c.l.b16 %v1480
          %v3105 = vunpack.c.l.b16 %v1481
          %v3106 = vunpack.c.l.b16 %v1482
          %v3107 = vunpack.c.l.b16 %v1483
          %v3108 = vunpack.c.l.b16 %v1484
          %v3109 = vunpack.c.l.b16 %v1485
          %v3110 = vunpack.c.l.b16 %v1486
          %v3111 = vunpack.c.l.b16 %v1487
          %v3112 = vunpack.c.l.b16 %v1488
          %v3113 = vunpack.c.l.b16 %v1489
          %v3114 = vunpack.c.l.b16 %v1490
          %v3115 = vunpack.c.l.b16 %v1491
          %v3116 = vunpack.c.l.b16 %v1492
          %v3117 = vunpack.c.l.b16 %v1493
          %v3118 = vunpack.c.l.b16 %v1494
          %v3119 = vunpack.c.l.b16 %v1495
          %v3120 = vunpack.c.l.b16 %v1496
          %v3121 = vunpack.c.l.b16 %v1497
          %v3122 = vunpack.c.l.b16 %v1498
          %v3123 = vunpack.c.l.b16 %v1499
          %v3124 = vunpack.c.l.b16 %v1500
          %v3125 = vunpack.c.l.b16 %v1501
          %v3126 = vunpack.c.l.b16 %v1502
          %v3127 = vunpack.c.l.b16 %v1503
          %v3128 = vunpack.c.l.b16 %v1504
          %v3129 = vunpack.c.l.b16 %v1505
          %v3130 = vunpack.c.l.b16 %v1506
          %v3131 = vunpack.c.l.b16 %v1507
          %v3132 = vunpack.c.l.b16 %v1508
          %v3133 = vunpack.c.l.b16 %v1509
          %v3134 = vunpack.c.l.b16 %v1510
          %v3135 = vunpack.c.l.b16 %v1511
          %v3136 = vunpack.c.l.b16 %v1512
          %v3137 = vunpack.c.l.b16 %v1513
          %v3138 = vunpack.c.l.b16 %v1514
          %v3139 = vunpack.c.l.b16 %v1515
          %v3140 = vunpack.c.l.b16 %v1516
          %v3141 = vunpack.c.l.b16 %v1517
          %v3142 = vunpack.c.l.b16 %v1518
          %v3143 = vunpack.c.l.b16 %v1519
          %v3144 = vunpack.c.l.b16 %v1520
          %v3145 = vunpack.c.l.b16 %v1521
          %v3146 = vunpack.c.l.b16 %v1522
          %v3147 = vunpack.c.l.b16 %v1523
          %v3148 = vunpack.c.l.b16 %v1524
          %v3149 = vunpack.c.l.b16 %v1525
          %v3150 = vunpack.c.l.b16 %v1526
          %v3151 = vunpack.c.l.b16 %v1527
          %v3152 = vunpack.c.l.b16 %v1528
          %v3153 = vunpack.c.l.b16 %v1529
          %v3154 = vunpack.c.l.b16 %v1530
          %v3155 = vunpack.c.l.b16 %v1531
          %v3156 = vunpack.c.l.b16 %v1532
          %v3157 = vunpack.c.l.b16 %v1533
          %v3158 = vunpack.c.l.b16 %v1534
          %v3159 = vunpack.c.l.b16 %v1535
          %v3160 = vunpack.c.l.b16 %v1536
          %v3161 = vunpack.c.l.b16 %v1537
          %v3162 = vunpack.c.l.b16 %v1538
          %v3163 = vunpack.c.l.b16 %v1539
          %v3164 = vunpack.c.l.b16 %v1540
          %v3165 = vunpack.c.l.b16 %v1541
          %v3166 = vunpack.c.l.b16 %v1542
          %v3167 = vunpack.c.l.b16 %v1543
          %v3168 = vunpack.c.l.b16 %v1544
          %v3169 = vunpack.c.l.b16 %v1545
          %v3170 = vunpack.c.l.b16 %v1546
          %v3171 = vunpack.c.l.b16 %v1547
          %v3172 = vunpack.c.l.b16 %v1548
          %v3173 = vunpack.c.l.b16 %v1549
          %v3174 = vunpack.c.l.b16 %v1550
          %v3175 = vunpack.c.l.b16 %v1551
          %v3176 = vunpack.c.l.b16 %v1552
          %v3177 = vunpack.c.l.b16 %v1553
          %v3178 = vunpack.c.l.b16 %v1554
          %v3179 = vunpack.c.l.b16 %v1555
          %v3180 = vunpack.c.l.b16 %v1556
          %v3181 = vunpack.c.l.b16 %v1557
          %v3182 = vunpack.c.l.b16 %v1558
          %v3183 = vunpack.c.l.b16 %v1559
          %v3184 = vunpack.c.l.b16 %v1560
          %v3185 = vunpack.c.l.b16 %v1561
          %v3186 = vunpack.c.l.b16 %v1562
          %v3187 = vunpack.c.l.b16 %v1563
          %v3188 = vunpack.c.l.b16 %v1564
          %v3189 = vunpack.c.l.b16 %v1565
          %v3190 = vunpack.c.l.b16 %v1566
          %v3191 = vunpack.c.l.b16 %v1567
          %v3192 = vunpack.c.l.b16 %v1568
          %v3193 = vunpack.c.l.b16 %v1569
          %v3194 = vunpack.c.l.b16 %v1570
          %v3195 = vunpack.c.l.b16 %v1571
          %v3196 = vunpack.c.l.b16 %v1572
          %v3197 = vunpack.c.l.b16 %v1573
          %v3198 = vunpack.c.l.b16 %v1574
          %v3199 = vunpack.c.l.b16 %v1575
          %v3200 = vunpack.c.l.b16 %v1576
          %v3201 = vunpack.c.l.b16 %v1577
          %v3202 = vunpack.c.l.b16 %v1578
          %v3203 = vunpack.c.l.b16 %v1579
          %v3204 = vunpack.c.l.b16 %v1580
          %v3205 = vunpack.c.l.b16 %v1581
          %v3206 = vunpack.c.l.b16 %v1582
          %v3207 = vunpack.c.l.b16 %v1583
          %v3208 = vunpack.c.l.b16 %v1584
          %v3209 = vunpack.c.l.b16 %v1585
          %v3210 = vunpack.c.l.b16 %v1586
          %v3211 = vunpack.c.l.b16 %v1587
          %v3212 = vunpack.c.l.b16 %v1588
          %v3213 = vunpack.c.l.b16 %v1589
          %v3214 = vunpack.c.l.b16 %v1590
          %v3215 = vunpack.c.l.b16 %v1591
          %v3216 = vunpack.c.l.b16 %v1592
          %v3217 = vunpack.c.l.b16 %v1593
          %v3218 = vunpack.c.l.b16 %v1594
          %v3219 = vunpack.c.l.b16 %v1595
          %v3220 = vunpack.c.l.b16 %v1596
          %v3221 = vunpack.c.l.b16 %v1597
          %v3222 = vunpack.c.l.b16 %v1598
          %v3223 = vunpack.c.l.b16 %v1599
          %v3224 = vunpack.c.l.b16 %v1600
          %v3225 = vunpack.c.l.b16 %v1601
          %v3226 = vunpack.c.l.b16 %v1602
          %v3227 = vunpack.c.l.b16 %v1603
          %v3228 = vunpack.c.l.b16 %v1604
          %v3229 = vunpack.c.l.b16 %v1605
          %v3230 = vunpack.c.l.b16 %v1606
          %v3231 = vunpack.c.l.b16 %v1607
          %v3232 = vunpack.c.l.b16 %v1608
          %v3233 = vunpack.c.l.b16 %v1609
          %v3234 = vunpack.c.l.b16 %v1610
          %v3235 = vunpack.c.l.b16 %v1611
          %v3236 = vunpack.c.l.b16 %v1612
          %v3237 = vunpack.c.l.b16 %v1613
          %v3238 = vunpack.c.l.b16 %v1614
          %v3239 = vunpack.c.l.b16 %v1615
          %v3240 = vunpack.c.l.b16 %v1616
          %v3241 = vunpack.c.l.b16 %v1617
          %v3242 = vunpack.c.l.b16 %v1618
          %v3243 = vunpack.c.l.b16 %v1619
          %v3244 = vunpack.c.l.b16 %v1620
          %v3245 = vunpack.c.l.b16 %v1621
          %v3246 = vunpack.c.l.b16 %v1622
          %v3247 = vunpack.c.l.b16 %v1623
          %v3248 = vunpack.c.l.b16 %v1624
          %v3249 = vunpack.c.l.b16 %v1625
          %v3250 = vunpack.c.l.b16 %v1626
          %v3251 = vunpack.c.l.b16 %v1627
          %v3252 = vunpack.c.l.b16 %v1628
          %v3253 = vunpack.c.l.b16 %v1629
          %v3254 = vunpack.c.l.b16 %v1630
          %v3255 = vunpack.c.l.b16 %v1631
          %v3256 = vunpack.c.l.b16 %v1632
          %v3257 = vunpack.c.l.b16 %v1633
          %v3258 = vunpack.c.l.b16 %v1634
          %v3259 = vunpack.c.l.b16 %v1635
          %v3260 = vunpack.c.l.b16 %v1636
          %v3261 = vunpack.c.l.b16 %v1637
          %v3262 = vunpack.c.l.b16 %v1638
          %v3263 = vunpack.c.l.b16 %v1639
          %v3264 = vunpack.c.l.b16 %v1640
          %v3265 = vunpack.c.l.b16 %v1641
          %v3266 = vunpack.c.l.b16 %v1642
          %v3267 = vunpack.c.l.b16 %v1643
          %v3268 = vunpack.c.l.b16 %v1644
          %v3269 = vunpack.c.l.b16 %v1645
          %v3270 = vunpack.c.l.b16 %v1646
          %v3271 = vunpack.c.l.b16 %v1647
          %v3272 = vunpack.c.l.b16 %v1648
          %v3273 = vunpack.c.l.b16 %v1649
          %v3274 = vunpack.c.l.b16 %v1650
          %v3275 = vunpack.c.l.b16 %v1651
          %v3276 = vunpack.c.l.b16 %v1652
          %v3277 = vunpack.c.l.b16 %v1653
          %v3278 = vunpack.c.l.b16 %v1654
          %v3279 = vunpack.c.l.b16 %v1655
          %v3280 = vunpack.c.l.b16 %v1656
          %v3281 = vunpack.c.l.b16 %v1657
          %v3282 = vunpack.c.l.b16 %v1658
          %v3283 = vunpack.c.l.b16 %v1659
          %v3284 = vunpack.c.l.b16 %v1660
          %v3285 = vunpack.c.l.b16 %v1661
          %v3286 = vunpack.c.l.b16 %v1662
          %v3287 = vunpack.c.l.b16 %v1663
          %v3288 = vunpack.c.l.b16 %v1664
          %v3289 = vunpack.c.l.b16 %v1665
          %v3290 = vunpack.c.l.b16 %v1666
          %v3291 = vunpack.c.l.b16 %v1667
          %v3292 = vunpack.c.l.b16 %v1668
          %v3293 = vunpack.c.l.b16 %v1669
          %v3294 = vunpack.c.l.b16 %v1670
          %v3295 = vunpack.c.l.b16 %v1671
          %v3296 = vunpack.c.l.b16 %v1672
          %v3297 = vunpack.c.l.b16 %v1673
          %v3298 = vunpack.c.l.b16 %v1674
          %v3299 = vunpack.c.l.b16 %v1675
          %v3300 = vunpack.c.l.b16 %v1676
          %v3301 = vunpack.c.l.b16 %v1677
          %v3302 = vunpack.c.l.b16 %v1678
          %v3303 = vunpack.c.l.b16 %v1679
          %v3304 = vunpack.c.l.b16 %v1680
          %v3305 = vunpack.c.l.b16 %v1681
          %v3306 = vunpack.c.l.b16 %v1682
          %v3307 = vunpack.c.l.b16 %v1683
          %v3308 = vunpack.c.l.b16 %v1684
          %v3309 = vunpack.c.l.b16 %v1685
          %v3310 = vunpack.c.l.b16 %v1686
          %v3311 = vunpack.c.l.b16 %v1687
          %v3312 = vunpack.c.l.b16 %v1688
          %v3313 = vunpack.c.l.b16 %v1689
          %v3314 = vunpack.c.l.b16 %v1690
          %v3315 = vunpack.c.l.b16 %v1691
          %v3316 = vunpack.c.l.b16 %v1692
          %v3317 = vunpack.c.l.b16 %v1693
          %v3318 = vunpack.c.l.b16 %v1694
          %v3319 = vunpack.c.l.b16 %v1695
          %v3320 = vunpack.c.l.b16 %v1696
          %v3321 = vunpack.c.l.b16 %v1697
          %v3322 = vunpack.c.l.b16 %v1698
          %v3323 = vunpack.c.l.b16 %v1699
          %v3324 = vunpack.c.l.b16 %v1700
          %v3325 = vunpack.c.l.b16 %v1701
          %v3326 = vunpack.c.l.b16 %v1702
          %v3327 = vunpack.c.l.b16 %v1703
          %v3328 = vunpack.c.l.b16 %v1704
          %v3329 = vunpack.c.l.b16 %v1705
          %v3330 = vunpack.c.l.b16 %v1706
          %v3331 = vunpack.c.l.b16 %v1707
          %v3332 = vunpack.c.l.b16 %v1708
          %v3333 = vunpack.c.l.b16 %v1709
          %v3334 = vunpack.c.l.b16 %v1710
          %v3335 = vunpack.c.l.b16 %v1711
          %v3336 = vunpack.c.l.b16 %v1712
          %v3337 = vunpack.c.l.b16 %v1713
          %v3338 = vunpack.c.l.b16 %v1714
          %v3339 = vunpack.c.l.b16 %v1715
          %v3340 = vunpack.c.l.b16 %v1716
          %v3341 = vunpack.c.l.b16 %v1717
          %v3342 = vunpack.c.l.b16 %v1718
          %v3343 = vunpack.c.l.b16 %v1719
          %v3344 = vunpack.c.l.b16 %v1720
          %v3345 = vunpack.c.l.b16 %v1721
          %v3346 = vunpack.c.l.b16 %v1722
          %v3347 = vunpack.c.l.b16 %v1723
          %v3348 = vunpack.c.l.b16 %v1724
          %v3349 = vunpack.c.l.b16 %v1725
          %v3350 = vunpack.c.l.b16 %v1726
          %v3351 = vunpack.c.l.b16 %v1727
          %v3352 = vunpack.c.l.b16 %v1728
          %v3353 = vunpack.c.l.b16 %v1729
          %v3354 = vunpack.c.l.b16 %v1730
          %v3355 = vunpack.c.l.b16 %v1731
          %v3356 = vunpack.c.l.b16 %v1732
          %v3357 = vunpack.c.l.b16 %v1733
          %v3358 = vunpack.c.l.b16 %v1734
          %v3359 = vunpack.c.l.b16 %v1735
          %v3360 = vunpack.c.l.b16 %v1736
          %v3361 = vunpack.c.l.b16 %v1737
          %v3362 = vunpack.c.l.b16 %v1738
          %v3363 = vunpack.c.l.b16 %v1739
          %v3364 = vunpack.c.l.b16 %v1740
          %v3365 = vunpack.c.l.b16 %v1741
          %v3366 = vunpack.c.l.b16 %v1742
          %v3367 = vunpack.c.l.b16 %v1743
          %v3368 = vunpack.c.l.b16 %v1744
          %v3369 = vunpack.c.l.b16 %v1745
          %v3370 = vunpack.c.l.b16 %v1746
          %v3371 = vunpack.c.l.b16 %v1747
          %v3372 = vunpack.c.l.b16 %v1748
          %v3373 = vunpack.c.l.b16 %v1749
          %v3374 = vunpack.c.l.b16 %v1750
          %v3375 = vunpack.c.l.b16 %v1751
          %v3376 = vunpack.c.l.b16 %v1752
          %v3377 = vunpack.c.l.b16 %v1753
          %v3378 = vunpack.c.l.b16 %v1754
          %v3379 = vunpack.c.l.b16 %v1755
          %v3380 = vunpack.c.l.b16 %v1756
          %v3381 = vunpack.c.l.b16 %v1757
          %v3382 = vunpack.c.l.b16 %v1758
          %v3383 = vunpack.c.l.b16 %v1759
          %v3384 = vunpack.c.l.b16 %v1760
          %v3385 = vunpack.c.l.b16 %v1761
          %v3386 = vunpack.c.l.b16 %v1762
          %v3387 = vunpack.c.l.b16 %v1763
          %v3388 = vunpack.c.l.b16 %v1764
          %v3389 = vunpack.c.l.b16 %v1765
          %v3390 = vunpack.c.l.b16 %v1766
          %v3391 = vunpack.c.l.b16 %v1767
          %v3392 = vunpack.c.l.b16 %v1768
          %v3393 = vunpack.c.l.b16 %v1769
          %v3394 = vunpack.c.l.b16 %v1770
          %v3395 = vunpack.c.l.b16 %v1771
          %v3396 = vunpack.c.l.b16 %v1772
          %v3397 = vunpack.c.l.b16 %v1773
          %v3398 = vunpack.c.l.b16 %v1774
          %v3399 = vunpack.c.l.b16 %v1775
          %v3400 = vunpack.c.l.b16 %v1776
          %v3401 = vunpack.c.l.b16 %v1777
          %v3402 = vunpack.c.l.b16 %v1778
          %v3403 = vunpack.c.l.b16 %v1779
          %v3404 = vunpack.c.l.b16 %v1780
          %v3405 = vunpack.c.l.b16 %v1781
          %v3406 = vunpack.c.l.b16 %v1782
          %v3407 = vunpack.c.l.b16 %v1783
          %v3408 = vunpack.c.l.b16 %v1784
          %v3409 = vunpack.c.l.b16 %v1785
          %v3410 = vunpack.c.l.b16 %v1786
          %v3411 = vunpack.c.l.b16 %v1787
          %v3412 = vunpack.c.l.b16 %v1788
          %v3413 = vunpack.c.l.b16 %v1789
          %v3414 = vunpack.c.l.b16 %v1790
          %v3415 = vunpack.c.l.b16 %v1791
          %v3416 = vunpack.c.l.b16 %v1792
          %v3417 = vunpack.c.l.b16 %v1793
          %v3418 = vunpack.c.l.b16 %v1794
          %v3419 = vunpack.c.l.b16 %v1795
          %v3420 = vunpack.c.l.b16 %v1796
          %v3421 = vunpack.c.l.b16 %v1797
          %v3422 = vunpack.c.l.b16 %v1798
          %v3423 = vunpack.c.l.b16 %v1799
          %v3424 = vunpack.c.l.b16 %v1800
          %v3425 = vunpack.c.l.b16 %v1801
          %v3426 = vunpack.c.l.b16 %v1802
          %v3427 = vunpack.c.l.b16 %v1803
          %v3428 = vunpack.c.l.b16 %v1804
          %v3429 = vunpack.c.l.b16 %v1805
          %v3430 = vunpack.c.l.b16 %v1806
          %v3431 = vunpack.c.l.b16 %v1807
          %v3432 = vunpack.c.l.b16 %v1808
          %v3433 = vunpack.c.l.b16 %v1809
          %v3434 = vunpack.c.l.b16 %v1810
          %v3435 = vunpack.c.l.b16 %v1811
          %v3436 = vunpack.c.l.b16 %v1812
          %v3437 = vunpack.c.l.b16 %v1813
          %v3438 = vunpack.c.l.b16 %v1814
          %v3439 = vunpack.c.l.b16 %v1815
          %v3440 = vunpack.c.l.b16 %v1816
          %v3441 = vunpack.c.l.b16 %v1817
          %v3442 = vunpack.c.l.b16 %v1818
          %v3443 = vunpack.c.l.b16 %v1819
          %v3444 = vunpack.c.l.b16 %v1820
          %v3445 = vunpack.c.l.b16 %v1821
          %v3446 = vunpack.c.l.b16 %v1822
          %v3447 = vunpack.c.l.b16 %v1823
          %v3448 = vunpack.c.l.b16 %v1824
          %v3449 = vunpack.c.l.b16 %v1825
          %v3450 = vunpack.c.l.b16 %v1826
          %v3451 = vunpack.c.l.b16 %v1827
          %v3452 = vunpack.c.l.b16 %v1828
          %v3453 = vunpack.c.l.b16 %v1829
          %v3454 = vunpack.c.l.b16 %v1830
          %v3455 = vunpack.c.l.b16 %v1831
          %v3456 = vunpack.c.l.b16 %v1832
          %v3457 = vunpack.c.l.b16 %v1833
          %v3458 = vunpack.c.l.b16 %v1834
          %v3459 = vunpack.c.l.b16 %v1835
          %v3460 = vunpack.c.l.b16 %v1836
          %v3461 = vunpack.c.l.b16 %v1837
          %v3462 = vunpack.c.l.b16 %v1838
          %v3463 = vunpack.c.l.b16 %v1839
          %v3464 = vunpack.c.l.b16 %v1840
          %v3465 = vunpack.c.l.b16 %v1841
          %v3466 = vunpack.c.l.b16 %v1842
          %v3467 = vpack.c.b16 %v2716, %v2715
          %v3468 = vpack.c.b16 %v2718, %v2717
          %v3469 = vpack.c.b16 %v2720, %v2719
          %v3470 = vpack.c.b16 %v2722, %v2721
          %v3471 = vpack.c.b16 %v2724, %v2723
          %v3472 = vpack.c.b16 %v2726, %v2725
          %v3473 = vpack.c.b16 %v2728, %v2727
          %v3474 = vpack.c.b16 %v2730, %v2729
          %v3475 = vpack.c.b16 %v2732, %v2731
          %v3476 = vpack.c.b16 %v2734, %v2733
          %v3477 = vpack.c.b16 %v2736, %v2735
          %v3478 = vpack.c.b16 %v2738, %v2737
          %v3479 = vpack.c.b16 %v2740, %v2739
          %v3480 = vpack.c.b16 %v2742, %v2741
          %v3481 = vpack.c.b16 %v2744, %v2743
          %v3482 = vpack.c.b16 %v2746, %v2745
          %v3483 = vpack.c.b16 %v2748, %v2747
          %v3484 = vpack.c.b16 %v2750, %v2749
          %v3485 = vpack.c.b16 %v2752, %v2751
          %v3486 = vpack.c.b16 %v2754, %v2753
          %v3487 = vpack.c.b16 %v2756, %v2755
          %v3488 = vpack.c.b16 %v2758, %v2757
          %v3489 = vpack.c.b16 %v2760, %v2759
          %v3490 = vpack.c.b16 %v2762, %v2761
          %v3491 = vpack.c.b16 %v2764, %v2763
          %v3492 = vpack.c.b16 %v2766, %v2765
          %v3493 = vpack.c.b16 %v2768, %v2767
          %v3494 = vpack.c.b16 %v2770, %v2769
          %v3495 = vpack.c.b16 %v2772, %v2771
          %v3496 = vpack.c.b16 %v2774, %v2773
          %v3497 = vpack.c.b16 %v2776, %v2775
          %v3498 = vpack.c.b16 %v2778, %v2777
          %v3499 = vpack.c.b16 %v2780, %v2779
          %v3500 = vpack.c.b16 %v2782, %v2781
          %v3501 = vpack.c.b16 %v2784, %v2783
          %v3502 = vpack.c.b16 %v2786, %v2785
          %v3503 = vpack.c.b16 %v2788, %v2787
          %v3504 = vpack.c.b16 %v2790, %v2789
          %v3505 = vpack.c.b16 %v2792, %v2791
          %v3506 = vpack.c.b16 %v2794, %v2793
          %v3507 = vpack.c.b16 %v2796, %v2795
          %v3508 = vpack.c.b16 %v2798, %v2797
          %v3509 = vpack.c.b16 %v2800, %v2799
          %v3510 = vpack.c.b16 %v2802, %v2801
          %v3511 = vpack.c.b16 %v2804, %v2803
          %v3512 = vpack.c.b16 %v2806, %v2805
          %v3513 = vpack.c.b16 %v2808, %v2807
          %v3514 = vpack.c.b16 %v2810, %v2809
          %v3515 = vpack.c.b16 %v2812, %v2811
          %v3516 = vpack.c.b16 %v2814, %v2813
          %v3517 = vpack.c.b16 %v2816, %v2815
          %v3518 = vpack.c.b16 %v2818, %v2817
          %v3519 = vpack.c.b16 %v2820, %v2819
          %v3520 = vpack.c.b16 %v2822, %v2821
          %v3521 = vpack.c.b16 %v2824, %v2823
          %v3522 = vpack.c.b16 %v2826, %v2825
          %v3523 = vpack.c.b16 %v2828, %v2827
          %v3524 = vpack.c.b16 %v2830, %v2829
          %v3525 = vpack.c.b16 %v2832, %v2831
          %v3526 = vpack.c.b16 %v2834, %v2833
          %v3527 = vpack.c.b16 %v2836, %v2835
          %v3528 = vpack.c.b16 %v2838, %v2837
          %v3529 = vpack.c.b16 %v2840, %v2839
          %v3530 = vpack.c.b16 %v2842, %v2841
          %v3531 = vpack.c.b16 %v2844, %v2843
          %v3532 = vpack.c.b16 %v2846, %v2845
          %v3533 = vpack.c.b16 %v2848, %v2847
          %v3534 = vpack.c.b16 %v2850, %v2849
          %v3535 = vpack.c.b16 %v2852, %v2851
          %v3536 = vpack.c.b16 %v2854, %v2853
          %v3537 = vpack.c.b16 %v2856, %v2855
          %v3538 = vpack.c.b16 %v2858, %v2857
          %v3539 = vpack.c.b16 %v2860, %v2859
          %v3540 = vpack.c.b16 %v2862, %v2861
          %v3541 = vpack.c.b16 %v2864, %v2863
          %v3542 = vpack.c.b16 %v2866, %v2865
          %v3543 = vpack.c.b16 %v2868, %v2867
          %v3544 = vpack.c.b16 %v2870, %v2869
          %v3545 = vpack.c.b16 %v2872, %v2871
          %v3546 = vpack.c.b16 %v2874, %v2873
          %v3547 = vpack.c.b16 %v2876, %v2875
          %v3548 = vpack.c.b16 %v2878, %v2877
          %v3549 = vpack.c.b16 %v2880, %v2879
          %v3550 = vpack.c.b16 %v2882, %v2881
          %v3551 = vpack.c.b16 %v2884, %v2883
          %v3552 = vpack.c.b16 %v2886, %v2885
          %v3553 = vpack.c.b16 %v2888, %v2887
          %v3554 = vpack.c.b16 %v2890, %v2889
          %v3555 = vpack.c.b16 %v2892, %v2891
          %v3556 = vpack.c.b16 %v2894, %v2893
          %v3557 = vpack.c.b16 %v2896, %v2895
          %v3558 = vpack.c.b16 %v2898, %v2897
          %v3559 = vpack.c.b16 %v2900, %v2899
          %v3560 = vpack.c.b16 %v2902, %v2901
          %v3561 = vpack.c.b16 %v2904, %v2903
          %v3562 = vpack.c.b16 %v2906, %v2905
          %v3563 = vpack.c.b16 %v2908, %v2907
          %v3564 = vpack.c.b16 %v2910, %v2909
          %v3565 = vpack.c.b16 %v2912, %v2911
          %v3566 = vpack.c.b16 %v2914, %v2913
          %v3567 = vpack.c.b16 %v2916, %v2915
          %v3568 = vpack.c.b16 %v2918, %v2917
          %v3569 = vpack.c.b16 %v2920, %v2919
          %v3570 = vpack.c.b16 %v2922, %v2921
          %v3571 = vpack.c.b16 %v2924, %v2923
          %v3572 = vpack.c.b16 %v2926, %v2925
          %v3573 = vpack.c.b16 %v2928, %v2927
          %v3574 = vpack.c.b16 %v2930, %v2929
          %v3575 = vpack.c.b16 %v2932, %v2931
          %v3576 = vpack.c.b16 %v2934, %v2933
          %v3577 = vpack.c.b16 %v2936, %v2935
          %v3578 = vpack.c.b16 %v2938, %v2937
          %v3579 = vpack.c.b16 %v2940, %v2939
          %v3580 = vpack.c.b16 %v2942, %v2941
          %v3581 = vpack.c.b16 %v2944, %v2943
          %v3582 = vpack.c.b16 %v2946, %v2945
          %v3583 = vpack.c.b16 %v2948, %v2947
          %v3584 = vpack.c.b16 %v2950, %v2949
          %v3585 = vpack.c.b16 %v2952, %v2951
          %v3586 = vpack.c.b16 %v2954, %v2953
          %v3587 = vpack.c.b16 %v2956, %v2955
          %v3588 = vpack.c.b16 %v2958, %v2957
          %v3589 = vpack.c.b16 %v2960, %v2959
          %v3590 = vpack.c.b16 %v2962, %v2961
          %v3591 = vpack.c.b16 %v2964, %v2963
          %v3592 = vpack.c.b16 %v2966, %v2965
          %v3593 = vpack.c.b16 %v2968, %v2967
          %v3594 = vpack.c.b16 %v2970, %v2969
          %v3595 = vpack.c.b16 %v2972, %v2971
          %v3596 = vpack.c.b16 %v2974, %v2973
          %v3597 = vpack.c.b16 %v2976, %v2975
          %v3598 = vpack.c.b16 %v2978, %v2977
          %v3599 = vpack.c.b16 %v2980, %v2979
          %v3600 = vpack.c.b16 %v2982, %v2981
          %v3601 = vpack.c.b16 %v2984, %v2983
          %v3602 = vpack.c.b16 %v2986, %v2985
          %v3603 = vpack.c.b16 %v2988, %v2987
          %v3604 = vpack.c.b16 %v2990, %v2989
          %v3605 = vpack.c.b16 %v2992, %v2991
          %v3606 = vpack.c.b16 %v2994, %v2993
          %v3607 = vpack.c.b16 %v2996, %v2995
          %v3608 = vpack.c.b16 %v2998, %v2997
          %v3609 = vpack.c.b16 %v3000, %v2999
          %v3610 = vpack.c.b16 %v3002, %v3001
          %v3611 = vpack.c.b16 %v3004, %v3003
          %v3612 = vpack.c.b16 %v3006, %v3005
          %v3613 = vpack.c.b16 %v3008, %v3007
          %v3614 = vpack.c.b16 %v3010, %v3009
          %v3615 = vpack.c.b16 %v3012, %v3011
          %v3616 = vpack.c.b16 %v3014, %v3013
          %v3617 = vpack.c.b16 %v3016, %v3015
          %v3618 = vpack.c.b16 %v3018, %v3017
          %v3619 = vpack.c.b16 %v3020, %v3019
          %v3620 = vpack.c.b16 %v3022, %v3021
          %v3621 = vpack.c.b16 %v3024, %v3023
          %v3622 = vpack.c.b16 %v3026, %v3025
          %v3623 = vpack.c.b16 %v3028, %v3027
          %v3624 = vpack.c.b16 %v3030, %v3029
          %v3625 = vpack.c.b16 %v3032, %v3031
          %v3626 = vpack.c.b16 %v3034, %v3033
          %v3627 = vpack.c.b16 %v3036, %v3035
          %v3628 = vpack.c.b16 %v3038, %v3037
          %v3629 = vpack.c.b16 %v3040, %v3039
          %v3630 = vpack.c.b16 %v3042, %v3041
          %v3631 = vpack.c.b16 %v3044, %v3043
          %v3632 = vpack.c.b16 %v3046, %v3045
          %v3633 = vpack.c.b16 %v3048, %v3047
          %v3634 = vpack.c.b16 %v3050, %v3049
          %v3635 = vpack.c.b16 %v3052, %v3051
          %v3636 = vpack.c.b16 %v3054, %v3053
          %v3637 = vpack.c.b16 %v3056, %v3055
          %v3638 = vpack.c.b16 %v3058, %v3057
          %v3639 = vpack.c.b16 %v3060, %v3059
          %v3640 = vpack.c.b16 %v3062, %v3061
          %v3641 = vpack.c.b16 %v3064, %v3063
          %v3642 = vpack.c.b16 %v3066, %v3065
          %v3643 = vpack.c.b16 %v3068, %v3067
          %v3644 = vpack.c.b16 %v3070, %v3069
          %v3645 = vpack.c.b16 %v3072, %v3071
          %v3646 = vpack.c.b16 %v3074, %v3073
          %v3647 = vpack.c.b16 %v3076, %v3075
          %v3648 = vpack.c.b16 %v3078, %v3077
          %v3649 = vpack.c.b16 %v3080, %v3079
          %v3650 = vpack.c.b16 %v3082, %v3081
          %v3651 = vpack.c.b16 %v3084, %v3083
          %v3652 = vpack.c.b16 %v3086, %v3085
          %v3653 = vpack.c.b16 %v3088, %v3087
          %v3654 = vpack.c.b16 %v3090, %v3089
          %v3655 = vpack.c.b16 %v3092, %v3091
          %v3656 = vpack.c.b16 %v3094, %v3093
          %v3657 = vpack.c.b16 %v3096, %v3095
          %v3658 = vpack.c.b16 %v3098, %v3097
          %v3659 = vpack.c.b16 %v3100, %v3099
          %v3660 = vpack.c.b16 %v3102, %v3101
          %v3661 = vpack.c.b16 %v3104, %v3103
          %v3662 = vpack.c.b16 %v3106, %v3105
          %v3663 = vpack.c.b16 %v3108, %v3107
          %v3664 = vpack.c.b16 %v3110, %v3109
          %v3665 = vpack.c.b16 %v3112, %v3111
          %v3666 = vpack.c.b16 %v3114, %v3113
          %v3667 = vpack.c.b16 %v3116, %v3115
          %v3668 = vpack.c.b16 %v3118, %v3117
          %v3669 = vpack.c.b16 %v3120, %v3119
          %v3670 = vpack.c.b16 %v3122, %v3121
          %v3671 = vpack.c.b16 %v3124, %v3123
          %v3672 = vpack.c.b16 %v3126, %v3125
          %v3673 = vpack.c.b16 %v3128, %v3127
          %v3674 = vpack.c.b16 %v3130, %v3129
          %v3675 = vpack.c.b16 %v3132, %v3131
          %v3676 = vpack.c.b16 %v3134, %v3133
          %v3677 = vpack.c.b16 %v3136, %v3135
          %v3678 = vpack.c.b16 %v3138, %v3137
          %v3679 = vpack.c.b16 %v3140, %v3139
          %v3680 = vpack.c.b16 %v3142, %v3141
          %v3681 = vpack.c.b16 %v3144, %v3143
          %v3682 = vpack.c.b16 %v3146, %v3145
          %v3683 = vpack.c.b16 %v3148, %v3147
          %v3684 = vpack.c.b16 %v3150, %v3149
          %v3685 = vpack.c.b16 %v3152, %v3151
          %v3686 = vpack.c.b16 %v3154, %v3153
          %v3687 = vpack.c.b16 %v3156, %v3155
          %v3688 = vpack.c.b16 %v3158, %v3157
          %v3689 = vpack.c.b16 %v3160, %v3159
          %v3690 = vpack.c.b16 %v3162, %v3161
          %v3691 = vpack.c.b16 %v3164, %v3163
          %v3692 = vpack.c.b16 %v3166, %v3165
          %v3693 = vpack.c.b16 %v3168, %v3167
          %v3694 = vpack.c.b16 %v3170, %v3169
          %v3695 = vpack.c.b16 %v3172, %v3171
          %v3696 = vpack.c.b16 %v3174, %v3173
          %v3697 = vpack.c.b16 %v3176, %v3175
          %v3698 = vpack.c.b16 %v3178, %v3177
          %v3699 = vpack.c.b16 %v3180, %v3179
          %v3700 = vpack.c.b16 %v3182, %v3181
          %v3701 = vpack.c.b16 %v3184, %v3183
          %v3702 = vpack.c.b16 %v3186, %v3185
          %v3703 = vpack.c.b16 %v3188, %v3187
          %v3704 = vpack.c.b16 %v3190, %v3189
          %v3705 = vpack.c.b16 %v3192, %v3191
          %v3706 = vpack.c.b16 %v3194, %v3193
          %v3707 = vpack.c.b16 %v3196, %v3195
          %v3708 = vpack.c.b16 %v3198, %v3197
          %v3709 = vpack.c.b16 %v3200, %v3199
          %v3710 = vpack.c.b16 %v3202, %v3201
          %v3711 = vpack.c.b16 %v3204, %v3203
          %v3712 = vpack.c.b16 %v3206, %v3205
          %v3713 = vpack.c.b16 %v3208, %v3207
          %v3714 = vpack.c.b16 %v3210, %v3209
          %v3715 = vpack.c.b16 %v3212, %v3211
          %v3716 = vpack.c.b16 %v3214, %v3213
          %v3717 = vpack.c.b16 %v3216, %v3215
          %v3718 = vpack.c.b16 %v3218, %v3217
          %v3719 = vpack.c.b16 %v3220, %v3219
          %v3720 = vpack.c.b16 %v3222, %v3221
          %v3721 = vpack.c.b16 %v3224, %v3223
          %v3722 = vpack.c.b16 %v3226, %v3225
          %v3723 = vpack.c.b16 %v3228, %v3227
          %v3724 = vpack.c.b16 %v3230, %v3229
          %v3725 = vpack.c.b16 %v3232, %v3231
          %v3726 = vpack.c.b16 %v3234, %v3233
          %v3727 = vpack.c.b16 %v3236, %v3235
          %v3728 = vpack.c.b16 %v3238, %v3237
          %v3729 = vpack.c.b16 %v3240, %v3239
          %v3730 = vpack.c.b16 %v3242, %v3241
          %v3731 = vpack.c.b16 %v3244, %v3243
          %v3732 = vpack.c.b16 %v3246, %v3245
          %v3733 = vpack.c.b16 %v3248, %v3247
          %v3734 = vpack.c.b16 %v3250, %v3249
          %v3735 = vpack.c.b16 %v3252, %v3251
          %v3736 = vpack.c.b16 %v3254, %v3253
          %v3737 = vpack.c.b16 %v3256, %v3255
          %v3738 = vpack.c.b16 %v3258, %v3257
          %v3739 = vpack.c.b16 %v3260, %v3259
          %v3740 = vpack.c.b16 %v3262, %v3261
          %v3741 = vpack.c.b16 %v3264, %v3263
          %v3742 = vpack.c.b16 %v3266, %v3265
          %v3743 = vpack.c.b16 %v3268, %v3267
          %v3744 = vpack.c.b16 %v3270, %v3269
          %v3745 = vpack.c.b16 %v3272, %v3271
          %v3746 = vpack.c.b16 %v3274, %v3273
          %v3747 = vpack.c.b16 %v3276, %v3275
          %v3748 = vpack.c.b16 %v3278, %v3277
          %v3749 = vpack.c.b16 %v3280, %v3279
          %v3750 = vpack.c.b16 %v3282, %v3281
          %v3751 = vpack.c.b16 %v3284, %v3283
          %v3752 = vpack.c.b16 %v3286, %v3285
          %v3753 = vpack.c.b16 %v3288, %v3287
          %v3754 = vpack.c.b16 %v3290, %v3289
          %v3755 = vpack.c.b16 %v3292, %v3291
          %v3756 = vpack.c.b16 %v3294, %v3293
          %v3757 = vpack.c.b16 %v3296, %v3295
          %v3758 = vpack.c.b16 %v3298, %v3297
          %v3759 = vpack.c.b16 %v3300, %v3299
          %v3760 = vpack.c.b16 %v3302, %v3301
          %v3761 = vpack.c.b16 %v3304, %v3303
          %v3762 = vpack.c.b16 %v3306, %v3305
          %v3763 = vpack.c.b16 %v3308, %v3307
          %v3764 = vpack.c.b16 %v3310, %v3309
          %v3765 = vpack.c.b16 %v3312, %v3311
          %v3766 = vpack.c.b16 %v3314, %v3313
          %v3767 = vpack.c.b16 %v3316, %v3315
          %v3768 = vpack.c.b16 %v3318, %v3317
          %v3769 = vpack.c.b16 %v3320, %v3319
          %v3770 = vpack.c.b16 %v3322, %v3321
          %v3771 = vpack.c.b16 %v3324, %v3323
          %v3772 = vpack.c.b16 %v3326, %v3325
          %v3773 = vpack.c.b16 %v3328, %v3327
          %v3774 = vpack.c.b16 %v3330, %v3329
          %v3775 = vpack.c.b16 %v3332, %v3331
          %v3776 = vpack.c.b16 %v3334, %v3333
          %v3777 = vpack.c.b16 %v3336, %v3335
          %v3778 = vpack.c.b16 %v3338, %v3337
          %v3779 = vpack.c.b16 %v3340, %v3339
          %v3780 = vpack.c.b16 %v3342, %v3341
          %v3781 = vpack.c.b16 %v3344, %v3343
          %v3782 = vpack.c.b16 %v3346, %v3345
          %v3783 = vpack.c.b16 %v3348, %v3347
          %v3784 = vpack.c.b16 %v3350, %v3349
          %v3785 = vpack.c.b16 %v3352, %v3351
          %v3786 = vpack.c.b16 %v3354, %v3353
          %v3787 = vpack.c.b16 %v3356, %v3355
          %v3788 = vpack.c.b16 %v3358, %v3357
          %v3789 = vpack.c.b16 %v3360, %v3359
          %v3790 = vpack.c.b16 %v3362, %v3361
          %v3791 = vpack.c.b16 %v3364, %v3363
          %v3792 = vpack.c.b16 %v3366, %v3365
          %v3793 = vpack.c.b16 %v3368, %v3367
          %v3794 = vpack.c.b16 %v3370, %v3369
          %v3795 = vpack.c.b16 %v3372, %v3371
          %v3796 = vpack.c.b16 %v3374, %v3373
          %v3797 = vpack.c.b16 %v3376, %v3375
          %v3798 = vpack.c.b16 %v3378, %v3377
          %v3799 = vpack.c.b16 %v3380, %v3379
          %v3800 = vpack.c.b16 %v3382, %v3381
          %v3801 = vpack.c.b16 %v3384, %v3383
          %v3802 = vpack.c.b16 %v3386, %v3385
          %v3803 = vpack.c.b16 %v3388, %v3387
          %v3804 = vpack.c.b16 %v3390, %v3389
          %v3805 = vpack.c.b16 %v3392, %v3391
          %v3806 = vpack.c.b16 %v3394, %v3393
          %v3807 = vpack.c.b16 %v3396, %v3395
          %v3808 = vpack.c.b16 %v3398, %v3397
          %v3809 = vpack.c.b16 %v3400, %v3399
          %v3810 = vpack.c.b16 %v3402, %v3401
          %v3811 = vpack.c.b16 %v3404, %v3403
          %v3812 = vpack.c.b16 %v3406, %v3405
          %v3813 = vpack.c.b16 %v3408, %v3407
          %v3814 = vpack.c.b16 %v3410, %v3409
          %v3815 = vpack.c.b16 %v3412, %v3411
          %v3816 = vpack.c.b16 %v3414, %v3413
          %v3817 = vpack.c.b16 %v3416, %v3415
          %v3818 = vpack.c.b16 %v3418, %v3417
          %v3819 = vpack.c.b16 %v3420, %v3419
          %v3820 = vpack.c.b16 %v3422, %v3421
          %v3821 = vpack.c.b16 %v3424, %v3423
          %v3822 = vpack.c.b16 %v3426, %v3425
          %v3823 = vpack.c.b16 %v3428, %v3427
          %v3824 = vpack.c.b16 %v3430, %v3429
          %v3825 = vpack.c.b16 %v3432, %v3431
          %v3826 = vpack.c.b16 %v3434, %v3433
          %v3827 = vpack.c.b16 %v3436, %v3435
          %v3828 = vpack.c.b16 %v3438, %v3437
          %v3829 = vpack.c.b16 %v3440, %v3439
          %v3830 = vpack.c.b16 %v3442, %v3441
          %v3831 = vpack.c.b16 %v3444, %v3443
          %v3832 = vpack.c.b16 %v3446, %v3445
          %v3833 = vpack.c.b16 %v3448, %v3447
          %v3834 = vpack.c.b16 %v3450, %v3449
          %v3835 = vpack.c.b16 %v3452, %v3451
          %v3836 = vpack.c.b16 %v3454, %v3453
          %v3837 = vpack.c.b16 %v3456, %v3455
          %v3838 = vpack.c.b16 %v3458, %v3457
          %v3839 = vpack.c.b16 %v3460, %v3459
          %v3840 = vpack.c.b16 %v3462, %v3461
          %v3841 = vpack.c.b16 %v3464, %v3463
          %v3842 = vpack.c.b16 %v3466, %v3465
          %4219 = vmatpush.bf16.msra.mxu0 %v3474
          %4220 = vmatpush.bf16.msra.mxu0 %v3473
          %4221 = vmatpush.bf16.msra.mxu0 %v3472
          %4222 = vmatpush.bf16.msra.mxu0 %v3471
          %4223 = vmatpush.bf16.msra.mxu0 %v3470
          %4224 = vmatpush.bf16.msra.mxu0 %v3469
          %4225 = vmatpush.bf16.msra.mxu0 %v3468
          %4226 = vmatpush.bf16.msra.mxu0 %v3467
          %4227 = vmatmul.bf16.gmra.mxu0 %v1849
          %v4228 = vpop.f32.mrf.mxu0
          %v4229 = vadd.f32 %v1843, %v4228
          %v4230 = vpop.f32.mrf.mxu0
          %4231 = vdwg.mxu0
          %4232 = vmatpush.bf16.msra.mxu0 %v3482
          %4233 = vmatpush.bf16.msra.mxu0 %v3481
          %4234 = vmatpush.bf16.msra.mxu0 %v3480
          %4235 = vmatpush.bf16.msra.mxu0 %v3479
          %4236 = vmatpush.bf16.msra.mxu0 %v3478
          %4237 = vmatpush.bf16.msra.mxu0 %v3477
          %4238 = vmatpush.bf16.msra.mxu0 %v3476
          %4239 = vmatpush.bf16.msra.mxu0 %v3475
          %4240 = vmatmul.bf16.gmra.mxu0 %v1850
          %v4241 = vpop.f32.mrf.mxu0
          %v4242 = vadd.f32 %v4229, %v4241
          %v4243 = vpop.f32.mrf.mxu0
          %4244 = vdwg.mxu0
          %4245 = vmatpush.bf16.msra.mxu0 %v3490
          %4246 = vmatpush.bf16.msra.mxu0 %v3489
          %4247 = vmatpush.bf16.msra.mxu0 %v3488
          %4248 = vmatpush.bf16.msra.mxu0 %v3487
          %4249 = vmatpush.bf16.msra.mxu0 %v3486
          %4250 = vmatpush.bf16.msra.mxu0 %v3485
          %4251 = vmatpush.bf16.msra.mxu0 %v3484
          %4252 = vmatpush.bf16.msra.mxu0 %v3483
          %4253 = vmatmul.bf16.gmra.mxu0 %v1851
          %v4254 = vpop.f32.mrf.mxu0
          %v4255 = vadd.f32 %v4242, %v4254
          %v4256 = vpop.f32.mrf.mxu0
          %4257 = vdwg.mxu0
          %4258 = vmatpush.bf16.msra.mxu0 %v3498
          %4259 = vmatpush.bf16.msra.mxu0 %v3497
          %4260 = vmatpush.bf16.msra.mxu0 %v3496
          %4261 = vmatpush.bf16.msra.mxu0 %v3495
          %4262 = vmatpush.bf16.msra.mxu0 %v3494
          %4263 = vmatpush.bf16.msra.mxu0 %v3493
          %4264 = vmatpush.bf16.msra.mxu0 %v3492
          %4265 = vmatpush.bf16.msra.mxu0 %v3491
          %4266 = vmatmul.bf16.gmra.mxu0 %v1852
          %v4267 = vpop.f32.mrf.mxu0
          %v4268 = vadd.f32 %v4255, %v4267
          %v4269 = vpop.f32.mrf.mxu0
          %4270 = vdwg.mxu0
          %4271 = vmatpush.bf16.msra.mxu0 %v3506
          %4272 = vmatpush.bf16.msra.mxu0 %v3505
          %4273 = vmatpush.bf16.msra.mxu0 %v3504
          %4274 = vmatpush.bf16.msra.mxu0 %v3503
          %4275 = vmatpush.bf16.msra.mxu0 %v3502
          %4276 = vmatpush.bf16.msra.mxu0 %v3501
          %4277 = vmatpush.bf16.msra.mxu0 %v3500
          %4278 = vmatpush.bf16.msra.mxu0 %v3499
          %4279 = vmatmul.bf16.gmra.mxu0 %v1853
          %v4280 = vpop.f32.mrf.mxu0
          %v4281 = vadd.f32 %v4268, %v4280
          %v4282 = vpop.f32.mrf.mxu0
          %4283 = vdwg.mxu0
          %4284 = vmatpush.bf16.msra.mxu0 %v3514
          %4285 = vmatpush.bf16.msra.mxu0 %v3513
          %4286 = vmatpush.bf16.msra.mxu0 %v3512
          %4287 = vmatpush.bf16.msra.mxu0 %v3511
          %4288 = vmatpush.bf16.msra.mxu0 %v3510
          %4289 = vmatpush.bf16.msra.mxu0 %v3509
          %4290 = vmatpush.bf16.msra.mxu0 %v3508
          %4291 = vmatpush.bf16.msra.mxu0 %v3507
          %4292 = vmatmul.bf16.gmra.mxu0 %v1854
          %v4293 = vpop.f32.mrf.mxu0
          %v4294 = vadd.f32 %v4281, %v4293
          %v4295 = vpop.f32.mrf.mxu0
          %4296 = vdwg.mxu0
          %4297 = vmatpush.bf16.msra.mxu0 %v3522
          %4298 = vmatpush.bf16.msra.mxu0 %v3521
          %4299 = vmatpush.bf16.msra.mxu0 %v3520
          %4300 = vmatpush.bf16.msra.mxu0 %v3519
          %4301 = vmatpush.bf16.msra.mxu0 %v3518
          %4302 = vmatpush.bf16.msra.mxu0 %v3517
          %4303 = vmatpush.bf16.msra.mxu0 %v3516
          %4304 = vmatpush.bf16.msra.mxu0 %v3515
          %4305 = vmatmul.bf16.gmra.mxu0 %v1855
          %v4306 = vpop.f32.mrf.mxu0
          %v4307 = vadd.f32 %v4294, %v4306
          %v4308 = vpop.f32.mrf.mxu0
          %4309 = vdwg.mxu0
          %4310 = vmatpush.bf16.msra.mxu0 %v3530
          %4311 = vmatpush.bf16.msra.mxu0 %v3529
          %4312 = vmatpush.bf16.msra.mxu0 %v3528
          %4313 = vmatpush.bf16.msra.mxu0 %v3527
          %4314 = vmatpush.bf16.msra.mxu0 %v3526
          %4315 = vmatpush.bf16.msra.mxu0 %v3525
          %4316 = vmatpush.bf16.msra.mxu0 %v3524
          %4317 = vmatpush.bf16.msra.mxu0 %v3523
          %4318 = vmatmul.bf16.gmra.mxu0 %v1856
          %v4319 = vpop.f32.mrf.mxu0
          %v4320 = vadd.f32 %v4307, %v4319
          %v4321 = vpop.f32.mrf.mxu0
          %4322 = vdwg.mxu0
          %4323 = vmatpush.bf16.msra.mxu0 %v3538
          %4324 = vmatpush.bf16.msra.mxu0 %v3537
          %4325 = vmatpush.bf16.msra.mxu0 %v3536
          %4326 = vmatpush.bf16.msra.mxu0 %v3535
          %4327 = vmatpush.bf16.msra.mxu0 %v3534
          %4328 = vmatpush.bf16.msra.mxu0 %v3533
          %4329 = vmatpush.bf16.msra.mxu0 %v3532
          %4330 = vmatpush.bf16.msra.mxu0 %v3531
          %4331 = vmatmul.bf16.gmra.mxu0 %v1861
          %v4332 = vpop.f32.mrf.mxu0
          %v4333 = vadd.f32 %v4320, %v4332
          %v4334 = vpop.f32.mrf.mxu0
          %4335 = vdwg.mxu0
          %4336 = vmatpush.bf16.msra.mxu0 %v3546
          %4337 = vmatpush.bf16.msra.mxu0 %v3545
          %4338 = vmatpush.bf16.msra.mxu0 %v3544
          %4339 = vmatpush.bf16.msra.mxu0 %v3543
          %4340 = vmatpush.bf16.msra.mxu0 %v3542
          %4341 = vmatpush.bf16.msra.mxu0 %v3541
          %4342 = vmatpush.bf16.msra.mxu0 %v3540
          %4343 = vmatpush.bf16.msra.mxu0 %v3539
          %4344 = vmatmul.bf16.gmra.mxu0 %v1862
          %v4345 = vpop.f32.mrf.mxu0
          %v4346 = vadd.f32 %v4333, %v4345
          %v4347 = vpop.f32.mrf.mxu0
          %4348 = vdwg.mxu0
          %4349 = vmatpush.bf16.msra.mxu0 %v3554
          %4350 = vmatpush.bf16.msra.mxu0 %v3553
          %4351 = vmatpush.bf16.msra.mxu0 %v3552
          %4352 = vmatpush.bf16.msra.mxu0 %v3551
          %4353 = vmatpush.bf16.msra.mxu0 %v3550
          %4354 = vmatpush.bf16.msra.mxu0 %v3549
          %4355 = vmatpush.bf16.msra.mxu0 %v3548
          %4356 = vmatpush.bf16.msra.mxu0 %v3547
          %4357 = vmatmul.bf16.gmra.mxu0 %v1863
          %v4358 = vpop.f32.mrf.mxu0
          %v4359 = vadd.f32 %v4346, %v4358
          %v4360 = vpop.f32.mrf.mxu0
          %4361 = vdwg.mxu0
          %4362 = vmatpush.bf16.msra.mxu0 %v3562
          %4363 = vmatpush.bf16.msra.mxu0 %v3561
          %4364 = vmatpush.bf16.msra.mxu0 %v3560
          %4365 = vmatpush.bf16.msra.mxu0 %v3559
          %4366 = vmatpush.bf16.msra.mxu0 %v3558
          %4367 = vmatpush.bf16.msra.mxu0 %v3557
          %4368 = vmatpush.bf16.msra.mxu0 %v3556
          %4369 = vmatpush.bf16.msra.mxu0 %v3555
          %4370 = vmatmul.bf16.gmra.mxu0 %v1864
          %v4371 = vpop.f32.mrf.mxu0
          %v4372 = vadd.f32 %v4359, %v4371
          %v4373 = vpop.f32.mrf.mxu0
          %4374 = vdwg.mxu0
          %4375 = vmatpush.bf16.msra.mxu0 %v3570
          %4376 = vmatpush.bf16.msra.mxu0 %v3569
          %4377 = vmatpush.bf16.msra.mxu0 %v3568
          %4378 = vmatpush.bf16.msra.mxu0 %v3567
          %4379 = vmatpush.bf16.msra.mxu0 %v3566
          %4380 = vmatpush.bf16.msra.mxu0 %v3565
          %4381 = vmatpush.bf16.msra.mxu0 %v3564
          %4382 = vmatpush.bf16.msra.mxu0 %v3563
          %4383 = vmatmul.bf16.gmra.mxu0 %v1865
          %v4384 = vpop.f32.mrf.mxu0
          %v4385 = vadd.f32 %v4372, %v4384
          %v4386 = vpop.f32.mrf.mxu0
          %4387 = vdwg.mxu0
          %4388 = vmatpush.bf16.msra.mxu0 %v3578
          %4389 = vmatpush.bf16.msra.mxu0 %v3577
          %4390 = vmatpush.bf16.msra.mxu0 %v3576
          %4391 = vmatpush.bf16.msra.mxu0 %v3575
          %4392 = vmatpush.bf16.msra.mxu0 %v3574
          %4393 = vmatpush.bf16.msra.mxu0 %v3573
          %4394 = vmatpush.bf16.msra.mxu0 %v3572
          %4395 = vmatpush.bf16.msra.mxu0 %v3571
          %4396 = vmatmul.bf16.gmra.mxu0 %v1866
          %v4397 = vpop.f32.mrf.mxu0
          %v4398 = vadd.f32 %v4385, %v4397
          %v4399 = vpop.f32.mrf.mxu0
          %4400 = vdwg.mxu0
          %4401 = vmatpush.bf16.msra.mxu0 %v3586
          %4402 = vmatpush.bf16.msra.mxu0 %v3585
          %4403 = vmatpush.bf16.msra.mxu0 %v3584
          %4404 = vmatpush.bf16.msra.mxu0 %v3583
          %4405 = vmatpush.bf16.msra.mxu0 %v3582
          %4406 = vmatpush.bf16.msra.mxu0 %v3581
          %4407 = vmatpush.bf16.msra.mxu0 %v3580
          %4408 = vmatpush.bf16.msra.mxu0 %v3579
          %4409 = vmatmul.bf16.gmra.mxu0 %v1867
          %v4410 = vpop.f32.mrf.mxu0
          %v4411 = vadd.f32 %v4398, %v4410
          %v4412 = vpop.f32.mrf.mxu0
          %4413 = vdwg.mxu0
          %4414 = vmatpush.bf16.msra.mxu0 %v3594
          %4415 = vmatpush.bf16.msra.mxu0 %v3593
          %4416 = vmatpush.bf16.msra.mxu0 %v3592
          %4417 = vmatpush.bf16.msra.mxu0 %v3591
          %4418 = vmatpush.bf16.msra.mxu0 %v3590
          %4419 = vmatpush.bf16.msra.mxu0 %v3589
          %4420 = vmatpush.bf16.msra.mxu0 %v3588
          %4421 = vmatpush.bf16.msra.mxu0 %v3587
          %4422 = vmatmul.bf16.gmra.mxu0 %v1868
          %v4423 = vpop.f32.mrf.mxu0
          %v4424 = vadd.f32 %v4411, %v4423
          %v4425 = vpop.f32.mrf.mxu0
          %4426 = vdwg.mxu0
          %4427 = vmatpush.bf16.msra.mxu0 %v3602
          %4428 = vmatpush.bf16.msra.mxu0 %v3601
          %4429 = vmatpush.bf16.msra.mxu0 %v3600
          %4430 = vmatpush.bf16.msra.mxu0 %v3599
          %4431 = vmatpush.bf16.msra.mxu0 %v3598
          %4432 = vmatpush.bf16.msra.mxu0 %v3597
          %4433 = vmatpush.bf16.msra.mxu0 %v3596
          %4434 = vmatpush.bf16.msra.mxu0 %v3595
          %4435 = vmatmul.bf16.gmra.mxu0 %v1873
          %v4436 = vpop.f32.mrf.mxu0
          %v4437 = vadd.f32 %v4424, %v4436
          %v4438 = vpop.f32.mrf.mxu0
          %4439 = vdwg.mxu0
          %4440 = vmatpush.bf16.msra.mxu0 %v3610
          %4441 = vmatpush.bf16.msra.mxu0 %v3609
          %4442 = vmatpush.bf16.msra.mxu0 %v3608
          %4443 = vmatpush.bf16.msra.mxu0 %v3607
          %4444 = vmatpush.bf16.msra.mxu0 %v3606
          %4445 = vmatpush.bf16.msra.mxu0 %v3605
          %4446 = vmatpush.bf16.msra.mxu0 %v3604
          %4447 = vmatpush.bf16.msra.mxu0 %v3603
          %4448 = vmatmul.bf16.gmra.mxu0 %v1874
          %v4449 = vpop.f32.mrf.mxu0
          %v4450 = vadd.f32 %v4437, %v4449
          %v4451 = vpop.f32.mrf.mxu0
          %4452 = vdwg.mxu0
          %4453 = vmatpush.bf16.msra.mxu0 %v3618
          %4454 = vmatpush.bf16.msra.mxu0 %v3617
          %4455 = vmatpush.bf16.msra.mxu0 %v3616
          %4456 = vmatpush.bf16.msra.mxu0 %v3615
          %4457 = vmatpush.bf16.msra.mxu0 %v3614
          %4458 = vmatpush.bf16.msra.mxu0 %v3613
          %4459 = vmatpush.bf16.msra.mxu0 %v3612
          %4460 = vmatpush.bf16.msra.mxu0 %v3611
          %4461 = vmatmul.bf16.gmra.mxu0 %v1875
          %v4462 = vpop.f32.mrf.mxu0
          %v4463 = vadd.f32 %v4450, %v4462
          %v4464 = vpop.f32.mrf.mxu0
          %4465 = vdwg.mxu0
          %4466 = vmatpush.bf16.msra.mxu0 %v3626
          %4467 = vmatpush.bf16.msra.mxu0 %v3625
          %4468 = vmatpush.bf16.msra.mxu0 %v3624
          %4469 = vmatpush.bf16.msra.mxu0 %v3623
          %4470 = vmatpush.bf16.msra.mxu0 %v3622
          %4471 = vmatpush.bf16.msra.mxu0 %v3621
          %4472 = vmatpush.bf16.msra.mxu0 %v3620
          %4473 = vmatpush.bf16.msra.mxu0 %v3619
          %4474 = vmatmul.bf16.gmra.mxu0 %v1876
          %v4475 = vpop.f32.mrf.mxu0
          %v4476 = vadd.f32 %v4463, %v4475
          %v4477 = vpop.f32.mrf.mxu0
          %4478 = vdwg.mxu0
          %4479 = vmatpush.bf16.msra.mxu0 %v3634
          %4480 = vmatpush.bf16.msra.mxu0 %v3633
          %4481 = vmatpush.bf16.msra.mxu0 %v3632
          %4482 = vmatpush.bf16.msra.mxu0 %v3631
          %4483 = vmatpush.bf16.msra.mxu0 %v3630
          %4484 = vmatpush.bf16.msra.mxu0 %v3629
          %4485 = vmatpush.bf16.msra.mxu0 %v3628
          %4486 = vmatpush.bf16.msra.mxu0 %v3627
          %4487 = vmatmul.bf16.gmra.mxu0 %v1877
          %v4488 = vpop.f32.mrf.mxu0
          %v4489 = vadd.f32 %v4476, %v4488
          %v4490 = vpop.f32.mrf.mxu0
          %4491 = vdwg.mxu0
          %4492 = vmatpush.bf16.msra.mxu0 %v3642
          %4493 = vmatpush.bf16.msra.mxu0 %v3641
          %4494 = vmatpush.bf16.msra.mxu0 %v3640
          %4495 = vmatpush.bf16.msra.mxu0 %v3639
          %4496 = vmatpush.bf16.msra.mxu0 %v3638
          %4497 = vmatpush.bf16.msra.mxu0 %v3637
          %4498 = vmatpush.bf16.msra.mxu0 %v3636
          %4499 = vmatpush.bf16.msra.mxu0 %v3635
          %4500 = vmatmul.bf16.gmra.mxu0 %v1878
          %v4501 = vpop.f32.mrf.mxu0
          %v4502 = vadd.f32 %v4489, %v4501
          %v4503 = vpop.f32.mrf.mxu0
          %4504 = vdwg.mxu0
          %4505 = vmatpush.bf16.msra.mxu0 %v3650
          %4506 = vmatpush.bf16.msra.mxu0 %v3649
          %4507 = vmatpush.bf16.msra.mxu0 %v3648
          %4508 = vmatpush.bf16.msra.mxu0 %v3647
          %4509 = vmatpush.bf16.msra.mxu0 %v3646
          %4510 = vmatpush.bf16.msra.mxu0 %v3645
          %4511 = vmatpush.bf16.msra.mxu0 %v3644
          %4512 = vmatpush.bf16.msra.mxu0 %v3643
          %4513 = vmatmul.bf16.gmra.mxu0 %v1879
          %v4514 = vpop.f32.mrf.mxu0
          %v4515 = vadd.f32 %v4502, %v4514
          %v4516 = vpop.f32.mrf.mxu0
          %4517 = vdwg.mxu0
          %4518 = vmatpush.bf16.msra.mxu0 %v3658
          %4519 = vmatpush.bf16.msra.mxu0 %v3657
          %4520 = vmatpush.bf16.msra.mxu0 %v3656
          %4521 = vmatpush.bf16.msra.mxu0 %v3655
          %4522 = vmatpush.bf16.msra.mxu0 %v3654
          %4523 = vmatpush.bf16.msra.mxu0 %v3653
          %4524 = vmatpush.bf16.msra.mxu0 %v3652
          %4525 = vmatpush.bf16.msra.mxu0 %v3651
          %4526 = vmatmul.bf16.gmra.mxu0 %v1880
          %v4527 = vpop.f32.mrf.mxu0
          %v4528 = vadd.f32 %v4515, %v4527
          %v4529 = vpop.f32.mrf.mxu0
          %4530 = vdwg.mxu0
          %4531 = vmatpush.bf16.msra.mxu0 %v3666
          %4532 = vmatpush.bf16.msra.mxu0 %v3665
          %4533 = vmatpush.bf16.msra.mxu0 %v3664
          %4534 = vmatpush.bf16.msra.mxu0 %v3663
          %4535 = vmatpush.bf16.msra.mxu0 %v3662
          %4536 = vmatpush.bf16.msra.mxu0 %v3661
          %4537 = vmatpush.bf16.msra.mxu0 %v3660
          %4538 = vmatpush.bf16.msra.mxu0 %v3659
          %4539 = vmatmul.bf16.gmra.mxu0 %v1885
          %v4540 = vpop.f32.mrf.mxu0
          %v4541 = vadd.f32 %v4528, %v4540
          %v4542 = vpop.f32.mrf.mxu0
          %4543 = vdwg.mxu0
          %4544 = vmatpush.bf16.msra.mxu0 %v3674
          %4545 = vmatpush.bf16.msra.mxu0 %v3673
          %4546 = vmatpush.bf16.msra.mxu0 %v3672
          %4547 = vmatpush.bf16.msra.mxu0 %v3671
          %4548 = vmatpush.bf16.msra.mxu0 %v3670
          %4549 = vmatpush.bf16.msra.mxu0 %v3669
          %4550 = vmatpush.bf16.msra.mxu0 %v3668
          %4551 = vmatpush.bf16.msra.mxu0 %v3667
          %4552 = vmatmul.bf16.gmra.mxu0 %v1886
          %v4553 = vpop.f32.mrf.mxu0
          %v4554 = vadd.f32 %v4541, %v4553
          %v4555 = vpop.f32.mrf.mxu0
          %4556 = vdwg.mxu0
          %4557 = vmatpush.bf16.msra.mxu0 %v3682
          %4558 = vmatpush.bf16.msra.mxu0 %v3681
          %4559 = vmatpush.bf16.msra.mxu0 %v3680
          %4560 = vmatpush.bf16.msra.mxu0 %v3679
          %4561 = vmatpush.bf16.msra.mxu0 %v3678
          %4562 = vmatpush.bf16.msra.mxu0 %v3677
          %4563 = vmatpush.bf16.msra.mxu0 %v3676
          %4564 = vmatpush.bf16.msra.mxu0 %v3675
          %4565 = vmatmul.bf16.gmra.mxu0 %v1887
          %v4566 = vpop.f32.mrf.mxu0
          %v4567 = vadd.f32 %v4554, %v4566
          %v4568 = vpop.f32.mrf.mxu0
          %4569 = vdwg.mxu0
          %4570 = vmatpush.bf16.msra.mxu0 %v3690
          %4571 = vmatpush.bf16.msra.mxu0 %v3689
          %4572 = vmatpush.bf16.msra.mxu0 %v3688
          %4573 = vmatpush.bf16.msra.mxu0 %v3687
          %4574 = vmatpush.bf16.msra.mxu0 %v3686
          %4575 = vmatpush.bf16.msra.mxu0 %v3685
          %4576 = vmatpush.bf16.msra.mxu0 %v3684
          %4577 = vmatpush.bf16.msra.mxu0 %v3683
          %4578 = vmatmul.bf16.gmra.mxu0 %v1888
          %v4579 = vpop.f32.mrf.mxu0
          %v4580 = vadd.f32 %v4567, %v4579
          %v4581 = vpop.f32.mrf.mxu0
          %4582 = vdwg.mxu0
          %4583 = vmatpush.bf16.msra.mxu0 %v3698
          %4584 = vmatpush.bf16.msra.mxu0 %v3697
          %4585 = vmatpush.bf16.msra.mxu0 %v3696
          %4586 = vmatpush.bf16.msra.mxu0 %v3695
          %4587 = vmatpush.bf16.msra.mxu0 %v3694
          %4588 = vmatpush.bf16.msra.mxu0 %v3693
          %4589 = vmatpush.bf16.msra.mxu0 %v3692
          %4590 = vmatpush.bf16.msra.mxu0 %v3691
          %4591 = vmatmul.bf16.gmra.mxu0 %v1889
          %v4592 = vpop.f32.mrf.mxu0
          %v4593 = vadd.f32 %v4580, %v4592
          %v4594 = vpop.f32.mrf.mxu0
          %4595 = vdwg.mxu0
          %4596 = vmatpush.bf16.msra.mxu0 %v3706
          %4597 = vmatpush.bf16.msra.mxu0 %v3705
          %4598 = vmatpush.bf16.msra.mxu0 %v3704
          %4599 = vmatpush.bf16.msra.mxu0 %v3703
          %4600 = vmatpush.bf16.msra.mxu0 %v3702
          %4601 = vmatpush.bf16.msra.mxu0 %v3701
          %4602 = vmatpush.bf16.msra.mxu0 %v3700
          %4603 = vmatpush.bf16.msra.mxu0 %v3699
          %4604 = vmatmul.bf16.gmra.mxu0 %v1890
          %v4605 = vpop.f32.mrf.mxu0
          %v4606 = vadd.f32 %v4593, %v4605
          %v4607 = vpop.f32.mrf.mxu0
          %4608 = vdwg.mxu0
          %4609 = vmatpush.bf16.msra.mxu0 %v3714
          %4610 = vmatpush.bf16.msra.mxu0 %v3713
          %4611 = vmatpush.bf16.msra.mxu0 %v3712
          %4612 = vmatpush.bf16.msra.mxu0 %v3711
          %4613 = vmatpush.bf16.msra.mxu0 %v3710
          %4614 = vmatpush.bf16.msra.mxu0 %v3709
          %4615 = vmatpush.bf16.msra.mxu0 %v3708
          %4616 = vmatpush.bf16.msra.mxu0 %v3707
          %4617 = vmatmul.bf16.gmra.mxu0 %v1891
          %v4618 = vpop.f32.mrf.mxu0
          %v4619 = vadd.f32 %v4606, %v4618
          %v4620 = vpop.f32.mrf.mxu0
          %4621 = vdwg.mxu0
          %4622 = vmatpush.bf16.msra.mxu0 %v3722
          %4623 = vmatpush.bf16.msra.mxu0 %v3721
          %4624 = vmatpush.bf16.msra.mxu0 %v3720
          %4625 = vmatpush.bf16.msra.mxu0 %v3719
          %4626 = vmatpush.bf16.msra.mxu0 %v3718
          %4627 = vmatpush.bf16.msra.mxu0 %v3717
          %4628 = vmatpush.bf16.msra.mxu0 %v3716
          %4629 = vmatpush.bf16.msra.mxu0 %v3715
          %4630 = vmatmul.bf16.gmra.mxu0 %v1892
          %v4631 = vpop.f32.mrf.mxu0
          %v4632 = vadd.f32 %v4619, %v4631
          %v4633 = vpop.f32.mrf.mxu0
          %4634 = vdwg.mxu0
          %4635 = vmatpush.bf16.msra.mxu0 %v3730
          %4636 = vmatpush.bf16.msra.mxu0 %v3729
          %4637 = vmatpush.bf16.msra.mxu0 %v3728
          %4638 = vmatpush.bf16.msra.mxu0 %v3727
          %4639 = vmatpush.bf16.msra.mxu0 %v3726
          %4640 = vmatpush.bf16.msra.mxu0 %v3725
          %4641 = vmatpush.bf16.msra.mxu0 %v3724
          %4642 = vmatpush.bf16.msra.mxu0 %v3723
          %4643 = vmatmul.bf16.gmra.mxu0 %v1897
          %v4644 = vpop.f32.mrf.mxu0
          %v4645 = vadd.f32 %v4632, %v4644
          %v4646 = vpop.f32.mrf.mxu0
          %4647 = vdwg.mxu0
          %4648 = vmatpush.bf16.msra.mxu0 %v3738
          %4649 = vmatpush.bf16.msra.mxu0 %v3737
          %4650 = vmatpush.bf16.msra.mxu0 %v3736
          %4651 = vmatpush.bf16.msra.mxu0 %v3735
          %4652 = vmatpush.bf16.msra.mxu0 %v3734
          %4653 = vmatpush.bf16.msra.mxu0 %v3733
          %4654 = vmatpush.bf16.msra.mxu0 %v3732
          %4655 = vmatpush.bf16.msra.mxu0 %v3731
          %4656 = vmatmul.bf16.gmra.mxu0 %v1898
          %v4657 = vpop.f32.mrf.mxu0
          %v4658 = vadd.f32 %v4645, %v4657
          %v4659 = vpop.f32.mrf.mxu0
          %4660 = vdwg.mxu0
          %4661 = vmatpush.bf16.msra.mxu0 %v3746
          %4662 = vmatpush.bf16.msra.mxu0 %v3745
          %4663 = vmatpush.bf16.msra.mxu0 %v3744
          %4664 = vmatpush.bf16.msra.mxu0 %v3743
          %4665 = vmatpush.bf16.msra.mxu0 %v3742
          %4666 = vmatpush.bf16.msra.mxu0 %v3741
          %4667 = vmatpush.bf16.msra.mxu0 %v3740
          %4668 = vmatpush.bf16.msra.mxu0 %v3739
          %4669 = vmatmul.bf16.gmra.mxu0 %v1899
          %v4670 = vpop.f32.mrf.mxu0
          %v4671 = vadd.f32 %v4658, %v4670
          %v4672 = vpop.f32.mrf.mxu0
          %4673 = vdwg.mxu0
          %4674 = vmatpush.bf16.msra.mxu0 %v3754
          %4675 = vmatpush.bf16.msra.mxu0 %v3753
          %4676 = vmatpush.bf16.msra.mxu0 %v3752
          %4677 = vmatpush.bf16.msra.mxu0 %v3751
          %4678 = vmatpush.bf16.msra.mxu0 %v3750
          %4679 = vmatpush.bf16.msra.mxu0 %v3749
          %4680 = vmatpush.bf16.msra.mxu0 %v3748
          %4681 = vmatpush.bf16.msra.mxu0 %v3747
          %4682 = vmatmul.bf16.gmra.mxu0 %v1900
          %v4683 = vpop.f32.mrf.mxu0
          %v4684 = vadd.f32 %v4671, %v4683
          %v4685 = vpop.f32.mrf.mxu0
          %4686 = vdwg.mxu0
          %4687 = vmatpush.bf16.msra.mxu0 %v3762
          %4688 = vmatpush.bf16.msra.mxu0 %v3761
          %4689 = vmatpush.bf16.msra.mxu0 %v3760
          %4690 = vmatpush.bf16.msra.mxu0 %v3759
          %4691 = vmatpush.bf16.msra.mxu0 %v3758
          %4692 = vmatpush.bf16.msra.mxu0 %v3757
          %4693 = vmatpush.bf16.msra.mxu0 %v3756
          %4694 = vmatpush.bf16.msra.mxu0 %v3755
          %4695 = vmatmul.bf16.gmra.mxu0 %v1901
          %v4696 = vpop.f32.mrf.mxu0
          %v4697 = vadd.f32 %v4684, %v4696
          %v4698 = vpop.f32.mrf.mxu0
          %4699 = vdwg.mxu0
          %4700 = vmatpush.bf16.msra.mxu0 %v3770
          %4701 = vmatpush.bf16.msra.mxu0 %v3769
          %4702 = vmatpush.bf16.msra.mxu0 %v3768
          %4703 = vmatpush.bf16.msra.mxu0 %v3767
          %4704 = vmatpush.bf16.msra.mxu0 %v3766
          %4705 = vmatpush.bf16.msra.mxu0 %v3765
          %4706 = vmatpush.bf16.msra.mxu0 %v3764
          %4707 = vmatpush.bf16.msra.mxu0 %v3763
          %4708 = vmatmul.bf16.gmra.mxu0 %v1902
          %v4709 = vpop.f32.mrf.mxu0
          %v4710 = vadd.f32 %v4697, %v4709
          %v4711 = vpop.f32.mrf.mxu0
          %4712 = vdwg.mxu0
          %4713 = vmatpush.bf16.msra.mxu0 %v3778
          %4714 = vmatpush.bf16.msra.mxu0 %v3777
          %4715 = vmatpush.bf16.msra.mxu0 %v3776
          %4716 = vmatpush.bf16.msra.mxu0 %v3775
          %4717 = vmatpush.bf16.msra.mxu0 %v3774
          %4718 = vmatpush.bf16.msra.mxu0 %v3773
          %4719 = vmatpush.bf16.msra.mxu0 %v3772
          %4720 = vmatpush.bf16.msra.mxu0 %v3771
          %4721 = vmatmul.bf16.gmra.mxu0 %v1903
          %v4722 = vpop.f32.mrf.mxu0
          %v4723 = vadd.f32 %v4710, %v4722
          %v4724 = vpop.f32.mrf.mxu0
          %4725 = vdwg.mxu0
          %4726 = vmatpush.bf16.msra.mxu0 %v3786
          %4727 = vmatpush.bf16.msra.mxu0 %v3785
          %4728 = vmatpush.bf16.msra.mxu0 %v3784
          %4729 = vmatpush.bf16.msra.mxu0 %v3783
          %4730 = vmatpush.bf16.msra.mxu0 %v3782
          %4731 = vmatpush.bf16.msra.mxu0 %v3781
          %4732 = vmatpush.bf16.msra.mxu0 %v3780
          %4733 = vmatpush.bf16.msra.mxu0 %v3779
          %4734 = vmatmul.bf16.gmra.mxu0 %v1904
          %v4735 = vpop.f32.mrf.mxu0
          %v4736 = vadd.f32 %v4723, %v4735
          %v4737 = vpop.f32.mrf.mxu0
          %4738 = vdwg.mxu0
          %4739 = vmatpush.bf16.msra.mxu0 %v3794
          %4740 = vmatpush.bf16.msra.mxu0 %v3793
          %4741 = vmatpush.bf16.msra.mxu0 %v3792
          %4742 = vmatpush.bf16.msra.mxu0 %v3791
          %4743 = vmatpush.bf16.msra.mxu0 %v3790
          %4744 = vmatpush.bf16.msra.mxu0 %v3789
          %4745 = vmatpush.bf16.msra.mxu0 %v3788
          %4746 = vmatpush.bf16.msra.mxu0 %v3787
          %4747 = vmatmul.bf16.gmra.mxu0 %v1909
          %v4748 = vpop.f32.mrf.mxu0
          %v4749 = vadd.f32 %v4736, %v4748
          %v4750 = vpop.f32.mrf.mxu0
          %4751 = vdwg.mxu0
          %4752 = vmatpush.bf16.msra.mxu0 %v3802
          %4753 = vmatpush.bf16.msra.mxu0 %v3801
          %4754 = vmatpush.bf16.msra.mxu0 %v3800
          %4755 = vmatpush.bf16.msra.mxu0 %v3799
          %4756 = vmatpush.bf16.msra.mxu0 %v3798
          %4757 = vmatpush.bf16.msra.mxu0 %v3797
          %4758 = vmatpush.bf16.msra.mxu0 %v3796
          %4759 = vmatpush.bf16.msra.mxu0 %v3795
          %4760 = vmatmul.bf16.gmra.mxu0 %v1910
          %v4761 = vpop.f32.mrf.mxu0
          %v4762 = vadd.f32 %v4749, %v4761
          %v4763 = vpop.f32.mrf.mxu0
          %4764 = vdwg.mxu0
          %4765 = vmatpush.bf16.msra.mxu0 %v3810
          %4766 = vmatpush.bf16.msra.mxu0 %v3809
          %4767 = vmatpush.bf16.msra.mxu0 %v3808
          %4768 = vmatpush.bf16.msra.mxu0 %v3807
          %4769 = vmatpush.bf16.msra.mxu0 %v3806
          %4770 = vmatpush.bf16.msra.mxu0 %v3805
          %4771 = vmatpush.bf16.msra.mxu0 %v3804
          %4772 = vmatpush.bf16.msra.mxu0 %v3803
          %4773 = vmatmul.bf16.gmra.mxu0 %v1911
          %v4774 = vpop.f32.mrf.mxu0
          %v4775 = vadd.f32 %v4762, %v4774
          %v4776 = vpop.f32.mrf.mxu0
          %4777 = vdwg.mxu0
          %4778 = vmatpush.bf16.msra.mxu0 %v3818
          %4779 = vmatpush.bf16.msra.mxu0 %v3817
          %4780 = vmatpush.bf16.msra.mxu0 %v3816
          %4781 = vmatpush.bf16.msra.mxu0 %v3815
          %4782 = vmatpush.bf16.msra.mxu0 %v3814
          %4783 = vmatpush.bf16.msra.mxu0 %v3813
          %4784 = vmatpush.bf16.msra.mxu0 %v3812
          %4785 = vmatpush.bf16.msra.mxu0 %v3811
          %4786 = vmatmul.bf16.gmra.mxu0 %v1912
          %v4787 = vpop.f32.mrf.mxu0
          %v4788 = vadd.f32 %v4775, %v4787
          %v4789 = vpop.f32.mrf.mxu0
          %4790 = vdwg.mxu0
          %4791 = vmatpush.bf16.msra.mxu0 %v3826
          %4792 = vmatpush.bf16.msra.mxu0 %v3825
          %4793 = vmatpush.bf16.msra.mxu0 %v3824
          %4794 = vmatpush.bf16.msra.mxu0 %v3823
          %4795 = vmatpush.bf16.msra.mxu0 %v3822
          %4796 = vmatpush.bf16.msra.mxu0 %v3821
          %4797 = vmatpush.bf16.msra.mxu0 %v3820
          %4798 = vmatpush.bf16.msra.mxu0 %v3819
          %4799 = vmatmul.bf16.gmra.mxu0 %v1913
          %v4800 = vpop.f32.mrf.mxu0
          %v4801 = vadd.f32 %v4788, %v4800
          %v4802 = vpop.f32.mrf.mxu0
          %4803 = vdwg.mxu0
          %4804 = vmatpush.bf16.msra.mxu0 %v3834
          %4805 = vmatpush.bf16.msra.mxu0 %v3833
          %4806 = vmatpush.bf16.msra.mxu0 %v3832
          %4807 = vmatpush.bf16.msra.mxu0 %v3831
          %4808 = vmatpush.bf16.msra.mxu0 %v3830
          %4809 = vmatpush.bf16.msra.mxu0 %v3829
          %4810 = vmatpush.bf16.msra.mxu0 %v3828
          %4811 = vmatpush.bf16.msra.mxu0 %v3827
          %4812 = vmatmul.bf16.gmra.mxu0 %v1914
          %v4813 = vpop.f32.mrf.mxu0
          %v4814 = vadd.f32 %v4801, %v4813
          %v4815 = vpop.f32.mrf.mxu0
          %4816 = vdwg.mxu0
          %4817 = vmatpush.bf16.msra.mxu0 %v3842
          %4818 = vmatpush.bf16.msra.mxu0 %v3841
          %4819 = vmatpush.bf16.msra.mxu0 %v3840
          %4820 = vmatpush.bf16.msra.mxu0 %v3839
          %4821 = vmatpush.bf16.msra.mxu0 %v3838
          %4822 = vmatpush.bf16.msra.mxu0 %v3837
          %4823 = vmatpush.bf16.msra.mxu0 %v3836
          %4824 = vmatpush.bf16.msra.mxu0 %v3835
          %4825 = vmatmul.bf16.gmra.mxu0 %v1915
          %v4826 = vpop.f32.mrf.mxu0
          %v4827 = vadd.f32 %v4814, %v4826
          %v4828 = vpop.f32.mrf.mxu0
          %4829 = vdwg.mxu0
          %4830 = vst [vmem:[#allocation2] sm:$0xf] %v4827
        $region156: #{vit_mlp2_forward.1} parent=131 // pred_fallthru
          _
        %v4831 = vld [vmem:[#allocation2] sm:$0xf]
        %v4832 = vld [vmem:[%s1040] sm:$0x1]
        %v4833 = vld [vmem:[%s1043] sm:$0x1]
        %vm4834 = vcmask 1043456
        %v4835 = vsel %vm4834, %v4831, 0.0
        %4836 = vadd.xlane.f32.xlu0 %v4835
        %v4837 = vpop.xlane.xlu0 %4836
        %v4838 = vrcp.pop 128.0
        %v4839 = vmul.f32 128.0, %v4838
        %v4840 = vsub.f32 1.0, %v4839
        %v4841 = vmul.f32 %v4838, %v4840
        %v4842 = vadd.f32 %v4838, %v4841
        %vm4843 = vweird.f32 %v4838
        %v4844 = vsel %vm4843, %v4838, %v4842
        %v4845 = vmul.f32 %v4837, %v4844
        %v4846 = vsub.f32 %v4831, %v4845
        %v4847 = vmul.f32 %v4846, %v4846
        %v4848 = vsel %vm4834, %v4847, 0.0
        %4849 = vadd.xlane.f32.xlu0 %v4848
        %v4850 = vpop.xlane.xlu0 %4849
        %v4851 = vmul.f32 %v4850, %v4844
        %v4852 = vadd.f32 %v4851, 1e-05
        %v4853 = vrsqrt.pop %v4852
        %v4854 = vmul.f32 %v4853, %v4852
        %v4855 = vmul.f32 %v4854, %v4853
        %v4856 = vmul.f32 0.5, %v4855
        %v4857 = vsub.f32 1.5, %v4856
        %v4858 = vmul.f32 %v4853, %v4857
        %vm4859 = vweird.f32 %v4852
        %vm4860 = vweird.f32 %v4853
        %vm4861 = vmor %vm4859, %vm4860
        %v4862 = vsel %vm4861, %v4853, %v4858
        %v4863 = vmul.f32 %v4846, %v4862
        %v4865 = vperm.slane %v4832, 0
        %v4867 = vmul.f32 %v4863, %v4865
        %v4869 = vperm.slane %v4833, 0
        %v4871 = vadd.f32 %v4867, %v4869
        %v4872 = vpack.c.bf16 %v4871, %v4871
        %v4873 = vld [vmem:[%s1048] sm:$0xff]
        %v4874 = vld [vmem:[%s1048 + $0x8] sm:$0xf]
        %v4875 = vld [vmem:[%s1048 + $0xc] sm:$0xff]
        %v4876 = vld [vmem:[%s1048 + $0x14] sm:$0xf]
        %v4877 = vld [vmem:[%s1048 + $0x18] sm:$0xff]
        %v4878 = vld [vmem:[%s1048 + $0x20] sm:$0xf]
        %v4879 = vld [vmem:[%s1048 + $0x24] sm:$0xff]
        %v4880 = vld [vmem:[%s1048 + $0x2c] sm:$0xf]
        %v4881 = vld [vmem:[%s1048 + $0x30] sm:$0xff]
        %v4882 = vld [vmem:[%s1048 + $0x38] sm:$0xf]
        %v4883 = vld [vmem:[%s1048 + $0x3c] sm:$0xff]
        %v4884 = vld [vmem:[%s1048 + $0x44] sm:$0xf]
        %v4885 = vld [vmem:[%s1048 + $0x48] sm:$0xff]
        %v4886 = vld [vmem:[%s1048 + $0x50] sm:$0xf]
        %v4887 = vld [vmem:[%s1048 + $0x54] sm:$0xff]
        %v4888 = vld [vmem:[%s1048 + $0x5c] sm:$0xf]
        %v4889 = vld [vmem:[%s1048 + $0x60] sm:$0xff]
        %v4890 = vld [vmem:[%s1048 + $0x68] sm:$0xf]
        %v4891 = vld [vmem:[%s1048 + $0x6c] sm:$0xff]
        %v4892 = vld [vmem:[%s1048 + $0x74] sm:$0xf]
        %v4893 = vld [vmem:[%s1048 + $0x78] sm:$0xff]
        %v4894 = vld [vmem:[%s1048 + $0x80] sm:$0xf]
        %v4895 = vld [vmem:[%s1048 + $0x84] sm:$0xff]
        %v4896 = vld [vmem:[%s1048 + $0x8c] sm:$0xf]
        %v4897 = vld [vmem:[%s1048 + $0x90] sm:$0xff]
        %v4898 = vld [vmem:[%s1048 + $0x98] sm:$0xf]
        %v4899 = vld [vmem:[%s1048 + $0x9c] sm:$0xff]
        %v4900 = vld [vmem:[%s1048 + $0xa4] sm:$0xf]
        %v4901 = vld [vmem:[%s1048 + $0xa8] sm:$0xff]
        %v4902 = vld [vmem:[%s1048 + $0xb0] sm:$0xf]
        %v4903 = vld [vmem:[%s1048 + $0xb4] sm:$0xff]
        %v4904 = vld [vmem:[%s1048 + $0xbc] sm:$0xf]
        %v4937 = vunpack.c.l.b16 %v4873
        %v4938 = vunpack.c.h.b16 %v4873
        %v4939 = vunpack.c.l.b16 %v4874
        %v4940 = vunpack.c.l.b16 %v4875
        %v4941 = vunpack.c.h.b16 %v4875
        %v4942 = vunpack.c.l.b16 %v4876
        %v4943 = vunpack.c.l.b16 %v4877
        %v4944 = vunpack.c.h.b16 %v4877
        %v4945 = vunpack.c.l.b16 %v4878
        %v4946 = vunpack.c.l.b16 %v4879
        %v4947 = vunpack.c.h.b16 %v4879
        %v4948 = vunpack.c.l.b16 %v4880
        %v4949 = vunpack.c.l.b16 %v4881
        %v4950 = vunpack.c.h.b16 %v4881
        %v4951 = vunpack.c.l.b16 %v4882
        %v4952 = vunpack.c.l.b16 %v4883
        %v4953 = vunpack.c.h.b16 %v4883
        %v4954 = vunpack.c.l.b16 %v4884
        %v4955 = vunpack.c.l.b16 %v4885
        %v4956 = vunpack.c.h.b16 %v4885
        %v4957 = vunpack.c.l.b16 %v4886
        %v4958 = vunpack.c.l.b16 %v4887
        %v4959 = vunpack.c.h.b16 %v4887
        %v4960 = vunpack.c.l.b16 %v4888
        %v4961 = vunpack.c.l.b16 %v4889
        %v4962 = vunpack.c.h.b16 %v4889
        %v4963 = vunpack.c.l.b16 %v4890
        %v4964 = vunpack.c.l.b16 %v4891
        %v4965 = vunpack.c.h.b16 %v4891
        %v4966 = vunpack.c.l.b16 %v4892
        %v4967 = vunpack.c.l.b16 %v4893
        %v4968 = vunpack.c.h.b16 %v4893
        %v4969 = vunpack.c.l.b16 %v4894
        %v4970 = vunpack.c.l.b16 %v4895
        %v4971 = vunpack.c.h.b16 %v4895
        %v4972 = vunpack.c.l.b16 %v4896
        %v4973 = vunpack.c.l.b16 %v4897
        %v4974 = vunpack.c.h.b16 %v4897
        %v4975 = vunpack.c.l.b16 %v4898
        %v4976 = vunpack.c.l.b16 %v4899
        %v4977 = vunpack.c.h.b16 %v4899
        %v4978 = vunpack.c.l.b16 %v4900
        %v4979 = vunpack.c.l.b16 %v4901
        %v4980 = vunpack.c.h.b16 %v4901
        %v4981 = vunpack.c.l.b16 %v4902
        %v4982 = vunpack.c.l.b16 %v4903
        %v4983 = vunpack.c.h.b16 %v4903
        %v4984 = vunpack.c.l.b16 %v4904
        %v4985 = vpack.c.b16 %v4940, %v4937
        %v4986 = vpack.c.b16 %v4941, %v4938
        %v4987 = vpack.c.b16 %v4942, %v4939
        %v4988 = vpack.c.b16 %v4946, %v4943
        %v4989 = vpack.c.b16 %v4947, %v4944
        %v4990 = vpack.c.b16 %v4948, %v4945
        %v4991 = vpack.c.b16 %v4952, %v4949
        %v4992 = vpack.c.b16 %v4953, %v4950
        %v4993 = vpack.c.b16 %v4954, %v4951
        %v4994 = vpack.c.b16 %v4958, %v4955
        %v4995 = vpack.c.b16 %v4959, %v4956
        %v4996 = vpack.c.b16 %v4960, %v4957
        %v4997 = vpack.c.b16 %v4964, %v4961
        %v4998 = vpack.c.b16 %v4965, %v4962
        %v4999 = vpack.c.b16 %v4966, %v4963
        %v5000 = vpack.c.b16 %v4970, %v4967
        %v5001 = vpack.c.b16 %v4971, %v4968
        %v5002 = vpack.c.b16 %v4972, %v4969
        %v5003 = vpack.c.b16 %v4976, %v4973
        %v5004 = vpack.c.b16 %v4977, %v4974
        %v5005 = vpack.c.b16 %v4978, %v4975
        %v5006 = vpack.c.b16 %v4982, %v4979
        %v5007 = vpack.c.b16 %v4983, %v4980
        %v5008 = vpack.c.b16 %v4984, %v4981
        %5033 = vmatpush.bf16.msra.mxu0 %v5006
        %5034 = vmatpush.bf16.msra.mxu0 %v5003
        %5035 = vmatpush.bf16.msra.mxu0 %v5000
        %5036 = vmatpush.bf16.msra.mxu0 %v4997
        %5037 = vmatpush.bf16.msra.mxu0 %v4994
        %5038 = vmatpush.bf16.msra.mxu0 %v4991
        %5039 = vmatpush.bf16.msra.mxu0 %v4988
        %5040 = vmatpush.bf16.msra.mxu0 %v4985
        %5041 = vmatmul.bf16.gmra.mxu0 %v4872
        %v5042 = vpop.f32.mrf.mxu0
        %v5043 = vadd.f32 0.0, %v5042
        %v5044 = vpop.f32.mrf.mxu0
        %5045 = vdwg.mxu0
        %5046 = vmatpush.bf16.msra.mxu0 %v5007
        %5047 = vmatpush.bf16.msra.mxu0 %v5004
        %5048 = vmatpush.bf16.msra.mxu0 %v5001
        %5049 = vmatpush.bf16.msra.mxu0 %v4998
        %5050 = vmatpush.bf16.msra.mxu0 %v4995
        %5051 = vmatpush.bf16.msra.mxu0 %v4992
        %5052 = vmatpush.bf16.msra.mxu0 %v4989
        %5053 = vmatpush.bf16.msra.mxu0 %v4986
        %5054 = vmatmul.bf16.gmra.mxu0 %v4872
        %v5055 = vpop.f32.mrf.mxu0
        %v5056 = vadd.f32 0.0, %v5055
        %v5057 = vpop.f32.mrf.mxu0
        %5058 = vdwg.mxu0
        %5059 = vmatpush.bf16.msra.mxu0 %v5008
        %5060 = vmatpush.bf16.msra.mxu0 %v5005
        %5061 = vmatpush.bf16.msra.mxu0 %v5002
        %5062 = vmatpush.bf16.msra.mxu0 %v4999
        %5063 = vmatpush.bf16.msra.mxu0 %v4996
        %5064 = vmatpush.bf16.msra.mxu0 %v4993
        %5065 = vmatpush.bf16.msra.mxu0 %v4990
        %5066 = vmatpush.bf16.msra.mxu0 %v4987
        %5067 = vmatmul.bf16.gmra.mxu0 %v4872
        %v5068 = vpop.f32.mrf.mxu0
        %v5069 = vadd.f32 0.0, %v5068
        %v5070 = vpop.f32.mrf.mxu0
        %5071 = vdwg.mxu0
        %v5073 = vrot.slane %v5043, 1
        %v5074 = vrot.slane %v5043, 2
        %v5075 = vrot.slane %v5043, 3
        %v5076 = vperm.slane %v5043, 0
        %v5077 = vperm.slane %v5073, 0
        %v5078 = vperm.slane %v5074, 0
        %v5079 = vperm.slane %v5075, 0
        %v5084 = vmul.f32 %v5076, %v5056
        %v5085 = vmul.f32 %v5077, %v5056
        %v5086 = vmul.f32 %v5078, %v5056
        %v5087 = vmul.f32 %v5079, %v5056
        %v5088 = vld [vmem:[%s3] sm:$0xff]
        %v5089 = vld [vmem:[%s3 + $0x8] sm:$0xff]
        %v5090 = vld [vmem:[%s3 + $0x10] sm:$0xff]
        %v5091 = vld [vmem:[%s3 + $0x18] sm:$0xff]
        %v5092 = vld [vmem:[%s3 + $0x20] sm:$0xff]
        %v5093 = vld [vmem:[%s3 + $0x28] sm:$0xff]
        %v5094 = vld [vmem:[%s3 + $0x30] sm:$0xff]
        %v5095 = vld [vmem:[%s3 + $0x38] sm:$0xff]
        %v5096 = vld [vmem:[%s3 + $0x40] sm:$0xff]
        %v5097 = vld [vmem:[%s3 + $0x48] sm:$0xff]
        %v5098 = vld [vmem:[%s3 + $0x50] sm:$0xff]
        %v5099 = vld [vmem:[%s3 + $0x58] sm:$0xff]
        %v5100 = vld [vmem:[%s3 + $0x60] sm:$0xff]
        %v5101 = vld [vmem:[%s3 + $0x68] sm:$0xff]
        %v5102 = vld [vmem:[%s3 + $0x70] sm:$0xff]
        %v5103 = vld [vmem:[%s3 + $0x78] sm:$0xff]
        %v5104 = vld [vmem:[%s4] sm:$0xff]
        %v5105 = vld [vmem:[%s4 + $0x8] sm:$0xff]
        %5107 = vset.pattern.permute.xlu0 0
        %5108 = vperm.xlu0 %5107, %v5104
        %v5109 = vpop.permute.xlu0 %5108
        %5112 = vset.pattern.permute.xlu0 0
        %5113 = vperm.xlu0 %5112, %v5105
        %v5114 = vpop.permute.xlu0 %5113
        %5120 = vst [vmem:[#allocation1] ss:$2 sm:$0xff] %v5084
        %s5121 = scalar_lea.vmem [#allocation1], 1
        %5122 = vst [vmem:[%s5121] ss:$2 sm:$0xff] %v5085
        %s5123 = scalar_lea.vmem [#allocation1], 16
        %5124 = vst [vmem:[%s5123] ss:$2 sm:$0xff] %v5086
        %s5125 = scalar_lea.vmem [#allocation1], 17
        %5126 = vst [vmem:[%s5125] ss:$2 sm:$0xff] %v5087
        %v5127 = vld.sshfl [vmem:[#allocation1] sm:$0xff pattern:$0x75316420]
        %v5128 = vld.sshfl [vmem:[#allocation1 + $0x10] sm:$0xff pattern:$0x75316420]
        %5131 = vmatpush.msra.mxu0 %v5103
        %5132 = vmatpush.msra.mxu0 %v5102
        %5133 = vmatpush.msra.mxu0 %v5101
        %5134 = vmatpush.msra.mxu0 %v5100
        %5135 = vmatpush.msra.mxu0 %v5099
        %5136 = vmatpush.msra.mxu0 %v5098
        %5137 = vmatpush.msra.mxu0 %v5097
        %5138 = vmatpush.msra.mxu0 %v5096
        %5139 = vmatpush.msra.mxu0 %v5095
        %5140 = vmatpush.msra.mxu0 %v5094
        %5141 = vmatpush.msra.mxu0 %v5093
        %5142 = vmatpush.msra.mxu0 %v5092
        %5143 = vmatpush.msra.mxu0 %v5091
        %5144 = vmatpush.msra.mxu0 %v5090
        %5145 = vmatpush.msra.mxu0 %v5089
        %5146 = vmatpush.msra.mxu0 %v5088
        %5147 = vmatmul.f32.gmra.mxu0 %v5127
        %v5148 = vpop.f32.mrf.mxu0
        %v5149 = vadd.f32 %v5109, %v5148
        %5150 = vmatmul.f32.gmra.mxu0 %v5128
        %v5151 = vpop.f32.mrf.mxu0
        %v5152 = vadd.f32 %v5114, %v5151
        %5153 = vdwg.mxu0
        %v5156 = vrot.slane %v5149, 4
        %v5157 = vrot.slane %v5152, 4
        %v5160 = vsel %vm4834, %v5149, -inf
        %v5161 = vrot.slane %v5160, 4
        %v5162 = vmax.f32 %v5160, %v5161
        %v5163 = vrot.slane %v5162, 2
        %v5164 = vmax.f32 %v5162, %v5163
        %v5165 = vrot.slane %v5164, 1
        %v5166 = vmax.f32 %v5164, %v5165
        %v5167 = vsel %vm4834, %v5156, -inf
        %v5168 = vrot.slane %v5167, 4
        %v5169 = vmax.f32 %v5167, %v5168
        %v5170 = vrot.slane %v5169, 2
        %v5171 = vmax.f32 %v5169, %v5170
        %v5172 = vrot.slane %v5171, 1
        %v5173 = vmax.f32 %v5171, %v5172
        %v5174 = vsel %vm4834, %v5152, -inf
        %v5175 = vrot.slane %v5174, 4
        %v5176 = vmax.f32 %v5174, %v5175
        %v5177 = vrot.slane %v5176, 2
        %v5178 = vmax.f32 %v5176, %v5177
        %v5179 = vrot.slane %v5178, 1
        %v5180 = vmax.f32 %v5178, %v5179
        %v5181 = vsel %vm4834, %v5157, -inf
        %v5182 = vrot.slane %v5181, 4
        %v5183 = vmax.f32 %v5181, %v5182
        %v5184 = vrot.slane %v5183, 2
        %v5185 = vmax.f32 %v5183, %v5184
        %v5186 = vrot.slane %v5185, 1
        %v5187 = vmax.f32 %v5185, %v5186
        %v5188 = vsub.f32 %v5149, %v5166
        %v5189 = vsub.f32 %v5156, %v5173
        %v5190 = vsub.f32 %v5152, %v5180
        %v5191 = vsub.f32 %v5157, %v5187
        %v5192 = vmul.f32 %v5188, 1.442695
        %v5193 = vpow.pop %v5192
        %v5194 = vmul.f32 %v5189, 1.442695
        %v5195 = vpow.pop %v5194
        %v5196 = vmul.f32 %v5190, 1.442695
        %v5197 = vpow.pop %v5196
        %v5198 = vmul.f32 %v5191, 1.442695
        %v5199 = vpow.pop %v5198
        %v5200 = vsel %vm4834, %v5193, 0.0
        %v5201 = vrot.slane %v5200, 4
        %v5202 = vadd.f32 %v5200, %v5201
        %v5203 = vrot.slane %v5202, 2
        %v5204 = vadd.f32 %v5202, %v5203
        %v5205 = vrot.slane %v5204, 1
        %v5206 = vadd.f32 %v5204, %v5205
        %v5207 = vsel %vm4834, %v5195, 0.0
        %v5208 = vrot.slane %v5207, 4
        %v5209 = vadd.f32 %v5207, %v5208
        %v5210 = vrot.slane %v5209, 2
        %v5211 = vadd.f32 %v5209, %v5210
        %v5212 = vrot.slane %v5211, 1
        %v5213 = vadd.f32 %v5211, %v5212
        %v5214 = vsel %vm4834, %v5197, 0.0
        %v5215 = vrot.slane %v5214, 4
        %v5216 = vadd.f32 %v5214, %v5215
        %v5217 = vrot.slane %v5216, 2
        %v5218 = vadd.f32 %v5216, %v5217
        %v5219 = vrot.slane %v5218, 1
        %v5220 = vadd.f32 %v5218, %v5219
        %v5221 = vsel %vm4834, %v5199, 0.0
        %v5222 = vrot.slane %v5221, 4
        %v5223 = vadd.f32 %v5221, %v5222
        %v5224 = vrot.slane %v5223, 2
        %v5225 = vadd.f32 %v5223, %v5224
        %v5226 = vrot.slane %v5225, 1
        %v5227 = vadd.f32 %v5225, %v5226
        %v5228 = vrcp.pop %v5206
        %v5229 = vmul.f32 %v5206, %v5228
        %v5230 = vsub.f32 1.0, %v5229
        %v5231 = vmul.f32 %v5228, %v5230
        %v5232 = vadd.f32 %v5228, %v5231
        %vm5233 = vweird.f32 %v5206
        %vm5234 = vweird.f32 %v5228
        %vm5235 = vmor %vm5233, %vm5234
        %v5236 = vsel %vm5235, %v5228, %v5232
        %v5237 = vand.u32 2147483647, %v5206
        %vm5238 = vcmp.eq.f32.partialorder %v5237, 8.507059e+37
        %v5239 = vand.u32 %v5206, 2147483648
        %v5240 = vor.u32 1.1754944e-38, %v5239
        %v5241 = vsel %vm5238, %v5240, %v5236
        %v5242 = vmul.f32 %v5193, %v5241
        %v5243 = vrcp.pop %v5213
        %v5244 = vmul.f32 %v5213, %v5243
        %v5245 = vsub.f32 1.0, %v5244
        %v5246 = vmul.f32 %v5243, %v5245
        %v5247 = vadd.f32 %v5243, %v5246
        %vm5248 = vweird.f32 %v5213
        %vm5249 = vweird.f32 %v5243
        %vm5250 = vmor %vm5248, %vm5249
        %v5251 = vsel %vm5250, %v5243, %v5247
        %v5252 = vand.u32 2147483647, %v5213
        %vm5253 = vcmp.eq.f32.partialorder %v5252, 8.507059e+37
        %v5254 = vand.u32 %v5213, 2147483648
        %v5255 = vor.u32 1.1754944e-38, %v5254
        %v5256 = vsel %vm5253, %v5255, %v5251
        %v5257 = vmul.f32 %v5195, %v5256
        %v5258 = vrcp.pop %v5220
        %v5259 = vmul.f32 %v5220, %v5258
        %v5260 = vsub.f32 1.0, %v5259
        %v5261 = vmul.f32 %v5258, %v5260
        %v5262 = vadd.f32 %v5258, %v5261
        %vm5263 = vweird.f32 %v5220
        %vm5264 = vweird.f32 %v5258
        %vm5265 = vmor %vm5263, %vm5264
        %v5266 = vsel %vm5265, %v5258, %v5262
        %v5267 = vand.u32 2147483647, %v5220
        %vm5268 = vcmp.eq.f32.partialorder %v5267, 8.507059e+37
        %v5269 = vand.u32 %v5220, 2147483648
        %v5270 = vor.u32 1.1754944e-38, %v5269
        %v5271 = vsel %vm5268, %v5270, %v5266
        %v5272 = vmul.f32 %v5197, %v5271
        %v5273 = vrcp.pop %v5227
        %v5274 = vmul.f32 %v5227, %v5273
        %v5275 = vsub.f32 1.0, %v5274
        %v5276 = vmul.f32 %v5273, %v5275
        %v5277 = vadd.f32 %v5273, %v5276
        %vm5278 = vweird.f32 %v5227
        %vm5279 = vweird.f32 %v5273
        %vm5280 = vmor %vm5278, %vm5279
        %v5281 = vsel %vm5280, %v5273, %v5277
        %v5282 = vand.u32 2147483647, %v5227
        %vm5283 = vcmp.eq.f32.partialorder %v5282, 8.507059e+37
        %v5284 = vand.u32 %v5227, 2147483648
        %v5285 = vor.u32 1.1754944e-38, %v5284
        %v5286 = vsel %vm5283, %v5285, %v5281
        %v5287 = vmul.f32 %v5199, %v5286
        %v5288 = vmul.f32 %v5242, %v5069
        %v5289 = vmul.f32 %v5257, %v5069
        %v5290 = vmul.f32 %v5272, %v5069
        %v5291 = vmul.f32 %v5287, %v5069
        %v5292 = vsel %vm4834, %v5288, 0.0
        %v5293 = vrot.slane %v5292, 4
        %v5294 = vadd.f32 %v5292, %v5293
        %v5295 = vrot.slane %v5294, 2
        %v5296 = vadd.f32 %v5294, %v5295
        %v5297 = vrot.slane %v5296, 1
        %v5298 = vadd.f32 %v5296, %v5297
        %v5299 = vsel %vm4834, %v5289, 0.0
        %v5300 = vrot.slane %v5299, 4
        %v5301 = vadd.f32 %v5299, %v5300
        %v5302 = vrot.slane %v5301, 2
        %v5303 = vadd.f32 %v5301, %v5302
        %v5304 = vrot.slane %v5303, 1
        %v5305 = vadd.f32 %v5303, %v5304
        %v5306 = vsel %vm4834, %v5290, 0.0
        %v5307 = vrot.slane %v5306, 4
        %v5308 = vadd.f32 %v5306, %v5307
        %v5309 = vrot.slane %v5308, 2
        %v5310 = vadd.f32 %v5308, %v5309
        %v5311 = vrot.slane %v5310, 1
        %v5312 = vadd.f32 %v5310, %v5311
        %v5313 = vsel %vm4834, %v5291, 0.0
        %v5314 = vrot.slane %v5313, 4
        %v5315 = vadd.f32 %v5313, %v5314
        %v5316 = vrot.slane %v5315, 2
        %v5317 = vadd.f32 %v5315, %v5316
        %v5318 = vrot.slane %v5317, 1
        %v5319 = vadd.f32 %v5317, %v5318
        %v5320 = vpack.c.bf16 %v5298, %v5298
        %v5321 = vpack.c.bf16 %v5305, %v5305
        %v5322 = vpack.c.bf16 %v5312, %v5312
        %v5323 = vpack.c.bf16 %v5319, %v5319
        %v5324 = vld [vmem:[%s912] sm:$0xf]
        %v5325 = vld [vmem:[%s912 + $0x4] sm:$0xf]
        %v5326 = vld [vmem:[%s912 + $0x8] sm:$0xf]
        %v5327 = vld [vmem:[%s912 + $0xc] sm:$0xf]
        %v5328 = vld [vmem:[%s912 + $0x10] sm:$0xf]
        %v5329 = vld [vmem:[%s912 + $0x14] sm:$0xf]
        %v5330 = vld [vmem:[%s912 + $0x18] sm:$0xf]
        %v5331 = vld [vmem:[%s912 + $0x1c] sm:$0xf]
        %v5332 = vld [vmem:[%s912 + $0x20] sm:$0xf]
        %v5333 = vld [vmem:[%s912 + $0x24] sm:$0xf]
        %v5334 = vld [vmem:[%s912 + $0x28] sm:$0xf]
        %v5335 = vld [vmem:[%s912 + $0x2c] sm:$0xf]
        %v5336 = vld [vmem:[%s912 + $0x30] sm:$0xf]
        %v5337 = vld [vmem:[%s912 + $0x34] sm:$0xf]
        %v5338 = vld [vmem:[%s912 + $0x38] sm:$0xf]
        %v5339 = vld [vmem:[%s912 + $0x3c] sm:$0xf]
        %v5344 = vunpack.c.l.b16 %v5320
        %v5345 = vunpack.c.l.b16 %v5321
        %v5346 = vunpack.c.l.b16 %v5322
        %v5347 = vunpack.c.l.b16 %v5323
        %vm5348 = vcmask 1041409
        %v5349 = vsel %vm5348, %v5345, %v5344
        %vm5350 = vcmask 1042434
        %v5351 = vsel %vm5350, %v5346, %v5349
        %vm5352 = vcmask 1043459
        %v5353 = vsel %vm5352, %v5347, %v5351
        %v5354 = vpack.c.b16 %v5353, %v5353
        %v5372 = vunpack.c.l.b16 %v5324
        %v5373 = vunpack.c.l.b16 %v5325
        %v5374 = vunpack.c.l.b16 %v5326
        %v5375 = vunpack.c.l.b16 %v5327
        %v5376 = vunpack.c.l.b16 %v5328
        %v5377 = vunpack.c.l.b16 %v5329
        %v5378 = vunpack.c.l.b16 %v5330
        %v5379 = vunpack.c.l.b16 %v5331
        %v5380 = vunpack.c.l.b16 %v5332
        %v5381 = vunpack.c.l.b16 %v5333
        %v5382 = vunpack.c.l.b16 %v5334
        %v5383 = vunpack.c.l.b16 %v5335
        %v5384 = vunpack.c.l.b16 %v5336
        %v5385 = vunpack.c.l.b16 %v5337
        %v5386 = vunpack.c.l.b16 %v5338
        %v5387 = vunpack.c.l.b16 %v5339
        %v5388 = vpack.c.b16 %v5373, %v5372
        %v5389 = vpack.c.b16 %v5375, %v5374
        %v5390 = vpack.c.b16 %v5377, %v5376
        %v5391 = vpack.c.b16 %v5379, %v5378
        %v5392 = vpack.c.b16 %v5381, %v5380
        %v5393 = vpack.c.b16 %v5383, %v5382
        %v5394 = vpack.c.b16 %v5385, %v5384
        %v5395 = vpack.c.b16 %v5387, %v5386
        %5404 = vmatpush.bf16.msra.mxu0 %v5395
        %5405 = vmatpush.bf16.msra.mxu0 %v5394
        %5406 = vmatpush.bf16.msra.mxu0 %v5393
        %5407 = vmatpush.bf16.msra.mxu0 %v5392
        %5408 = vmatpush.bf16.msra.mxu0 %v5391
        %5409 = vmatpush.bf16.msra.mxu0 %v5390
        %5410 = vmatpush.bf16.msra.mxu0 %v5389
        %5411 = vmatpush.bf16.msra.mxu0 %v5388
        %5412 = vmatmul.bf16.gmra.mxu0 %v5354
        %v5413 = vpop.f32.mrf.mxu0
        %v5414 = vadd.f32 0.0, %v5413
        %v5415 = vpop.f32.mrf.mxu0
        %5416 = vdwg.mxu0
        %v5417 = vadd.f32 %v4831, %v5414
        %v5418 = vld [vmem:[%s1051] sm:$0x1]
        %v5420 = vperm.slane %v5418, 0
        %v5422 = vadd.f32 %v5417, %v5420
        %v5423 = vld [vmem:[%s1054] sm:$0x1]
        %v5424 = vld [vmem:[%s1057] sm:$0x1]
        %v5425 = vsel %vm4834, %v5422, 0.0
        %5426 = vadd.xlane.f32.xlu0 %v5425
        %v5427 = vpop.xlane.xlu0 %5426
        %v5428 = vmul.f32 %v5427, %v4844
        %v5429 = vsub.f32 %v5422, %v5428
        %v5430 = vmul.f32 %v5429, %v5429
        %v5431 = vsel %vm4834, %v5430, 0.0
        %5432 = vadd.xlane.f32.xlu0 %v5431
        %v5433 = vpop.xlane.xlu0 %5432
        %v5434 = vmul.f32 %v5433, %v4844
        %v5435 = vadd.f32 %v5434, 1e-05
        %v5436 = vrsqrt.pop %v5435
        %v5437 = vmul.f32 %v5436, %v5435
        %v5438 = vmul.f32 %v5437, %v5436
        %v5439 = vmul.f32 0.5, %v5438
        %v5440 = vsub.f32 1.5, %v5439
        %v5441 = vmul.f32 %v5436, %v5440
        %vm5442 = vweird.f32 %v5435
        %vm5443 = vweird.f32 %v5436
        %vm5444 = vmor %vm5442, %vm5443
        %v5445 = vsel %vm5444, %v5436, %v5441
        %v5446 = vmul.f32 %v5429, %v5445
        %v5448 = vperm.slane %v5423, 0
        %v5450 = vmul.f32 %v5446, %v5448
        %v5452 = vperm.slane %v5424, 0
        %v5454 = vadd.f32 %v5450, %v5452
        %v5455 = vpack.c.bf16 %v5454, %v5454
        %v5456 = vld [vmem:[%s1062] sm:$0xff]
        %v5457 = vld [vmem:[%s1062 + $0x8] sm:$0xff]
        %v5458 = vld [vmem:[%s1062 + $0x10] sm:$0xff]
        %v5459 = vld [vmem:[%s1062 + $0x18] sm:$0xff]
        %v5460 = vld [vmem:[%s1062 + $0x20] sm:$0xff]
        %v5461 = vld [vmem:[%s1062 + $0x28] sm:$0xff]
        %v5462 = vld [vmem:[%s1062 + $0x30] sm:$0xff]
        %v5463 = vld [vmem:[%s1062 + $0x38] sm:$0xff]
        %v5464 = vld [vmem:[%s1062 + $0x40] sm:$0xff]
        %v5465 = vld [vmem:[%s1062 + $0x48] sm:$0xff]
        %v5466 = vld [vmem:[%s1062 + $0x50] sm:$0xff]
        %v5467 = vld [vmem:[%s1062 + $0x58] sm:$0xff]
        %v5468 = vld [vmem:[%s1062 + $0x60] sm:$0xff]
        %v5469 = vld [vmem:[%s1062 + $0x68] sm:$0xff]
        %v5470 = vld [vmem:[%s1062 + $0x70] sm:$0xff]
        %v5471 = vld [vmem:[%s1062 + $0x78] sm:$0xff]
        %v5472 = vld [vmem:[%s1066] sm:$0x3]
        %v5474 = vperm.slane %v5472, 0
        %v5475 = vperm.slane %v5472, 1
        %v5494 = vunpack.c.l.b16 %v5456
        %v5495 = vunpack.c.h.b16 %v5456
        %v5496 = vunpack.c.l.b16 %v5457
        %v5497 = vunpack.c.h.b16 %v5457
        %v5498 = vunpack.c.l.b16 %v5458
        %v5499 = vunpack.c.h.b16 %v5458
        %v5500 = vunpack.c.l.b16 %v5459
        %v5501 = vunpack.c.h.b16 %v5459
        %v5502 = vunpack.c.l.b16 %v5460
        %v5503 = vunpack.c.h.b16 %v5460
        %v5504 = vunpack.c.l.b16 %v5461
        %v5505 = vunpack.c.h.b16 %v5461
        %v5506 = vunpack.c.l.b16 %v5462
        %v5507 = vunpack.c.h.b16 %v5462
        %v5508 = vunpack.c.l.b16 %v5463
        %v5509 = vunpack.c.h.b16 %v5463
        %v5510 = vunpack.c.l.b16 %v5464
        %v5511 = vunpack.c.h.b16 %v5464
        %v5512 = vunpack.c.l.b16 %v5465
        %v5513 = vunpack.c.h.b16 %v5465
        %v5514 = vunpack.c.l.b16 %v5466
        %v5515 = vunpack.c.h.b16 %v5466
        %v5516 = vunpack.c.l.b16 %v5467
        %v5517 = vunpack.c.h.b16 %v5467
        %v5518 = vunpack.c.l.b16 %v5468
        %v5519 = vunpack.c.h.b16 %v5468
        %v5520 = vunpack.c.l.b16 %v5469
        %v5521 = vunpack.c.h.b16 %v5469
        %v5522 = vunpack.c.l.b16 %v5470
        %v5523 = vunpack.c.h.b16 %v5470
        %v5524 = vunpack.c.l.b16 %v5471
        %v5525 = vunpack.c.h.b16 %v5471
        %v5526 = vpack.c.b16 %v5496, %v5494
        %v5527 = vpack.c.b16 %v5497, %v5495
        %v5528 = vpack.c.b16 %v5500, %v5498
        %v5529 = vpack.c.b16 %v5501, %v5499
        %v5530 = vpack.c.b16 %v5504, %v5502
        %v5531 = vpack.c.b16 %v5505, %v5503
        %v5532 = vpack.c.b16 %v5508, %v5506
        %v5533 = vpack.c.b16 %v5509, %v5507
        %v5534 = vpack.c.b16 %v5512, %v5510
        %v5535 = vpack.c.b16 %v5513, %v5511
        %v5536 = vpack.c.b16 %v5516, %v5514
        %v5537 = vpack.c.b16 %v5517, %v5515
        %v5538 = vpack.c.b16 %v5520, %v5518
        %v5539 = vpack.c.b16 %v5521, %v5519
        %v5540 = vpack.c.b16 %v5524, %v5522
        %v5541 = vpack.c.b16 %v5525, %v5523
        %5558 = vmatpush.bf16.msra.mxu0 %v5540
        %5559 = vmatpush.bf16.msra.mxu0 %v5538
        %5560 = vmatpush.bf16.msra.mxu0 %v5536
        %5561 = vmatpush.bf16.msra.mxu0 %v5534
        %5562 = vmatpush.bf16.msra.mxu0 %v5532
        %5563 = vmatpush.bf16.msra.mxu0 %v5530
        %5564 = vmatpush.bf16.msra.mxu0 %v5528
        %5565 = vmatpush.bf16.msra.mxu0 %v5526
        %5566 = vmatmul.bf16.gmra.mxu0 %v5455
        %v5567 = vpop.f32.mrf.mxu0
        %v5568 = vadd.f32 %v5474, %v5567
        %v5569 = vpop.f32.mrf.mxu0
        %5570 = vdwg.mxu0
        %5571 = vmatpush.bf16.msra.mxu0 %v5541
        %5572 = vmatpush.bf16.msra.mxu0 %v5539
        %5573 = vmatpush.bf16.msra.mxu0 %v5537
        %5574 = vmatpush.bf16.msra.mxu0 %v5535
        %5575 = vmatpush.bf16.msra.mxu0 %v5533
        %5576 = vmatpush.bf16.msra.mxu0 %v5531
        %5577 = vmatpush.bf16.msra.mxu0 %v5529
        %5578 = vmatpush.bf16.msra.mxu0 %v5527
        %5579 = vmatmul.bf16.gmra.mxu0 %v5455
        %v5580 = vpop.f32.mrf.mxu0
        %v5581 = vadd.f32 %v5475, %v5580
        %v5582 = vpop.f32.mrf.mxu0
        %5583 = vdwg.mxu0
        %v5584 = vmul.f32 %v5568, 0.5
        %v5585 = vmul.f32 %v5581, 0.5
        %v5586 = vrcp.pop 1.4142135
        %v5587 = vmul.f32 1.4142135, %v5586
        %v5588 = vsub.f32 1.0, %v5587
        %v5589 = vmul.f32 %v5586, %v5588
        %v5590 = vadd.f32 %v5586, %v5589
        %vm5591 = vweird.f32 %v5586
        %v5592 = vsel %vm5591, %v5586, %v5590
        %v5593 = vmul.f32 %v5568, %v5592
        %v5594 = vmul.f32 %v5581, %v5592
        %v5595 = vmul.f32 %v5593, %v5593
        %v5596 = vmin.f32 16.0, %v5595
        %v5597 = vmul.f32 %v5596, 2.1237322e-06
        %v5598 = vadd.f32 %v5597, 0.00028619796
        %v5599 = vmul.f32 %v5596, %v5598
        %v5600 = vadd.f32 %v5599, 0.0036580483
        %v5601 = vmul.f32 %v5596, %v5600
        %v5602 = vadd.f32 %v5601, 0.05243302
        %v5603 = vmul.f32 %v5596, %v5602
        %v5604 = vadd.f32 %v5603, 0.18741608
        %v5605 = vmul.f32 %v5596, %v5604
        %v5606 = vadd.f32 %v5605, 1.1283791
        %v5607 = vmul.f32 %v5593, %v5606
        %v5608 = vmul.f32 %v5596, 3.8918573e-05
        %v5609 = vadd.f32 %v5608, 0.001143296
        %v5610 = vmul.f32 %v5596, %v5609
        %v5611 = vadd.f32 %v5610, 0.014752088
        %v5612 = vmul.f32 %v5596, %v5611
        %v5613 = vadd.f32 %v5612, 0.112945676
        %v5614 = vmul.f32 %v5596, %v5613
        %v5615 = vadd.f32 %v5614, 0.4994258
        %v5616 = vmul.f32 %v5596, %v5615
        %v5617 = vadd.f32 %v5616, 1.0
        %v5618 = vrcp.pop %v5617
        %v5619 = vmul.f32 %v5617, %v5618
        %v5620 = vsub.f32 1.0, %v5619
        %v5621 = vmul.f32 %v5618, %v5620
        %v5622 = vadd.f32 %v5618, %v5621
        %vm5623 = vweird.f32 %v5617
        %vm5624 = vweird.f32 %v5618
        %vm5625 = vmor %vm5623, %vm5624
        %v5626 = vsel %vm5625, %v5618, %v5622
        %v5627 = vand.u32 2147483647, %v5617
        %vm5628 = vcmp.eq.f32.partialorder %v5627, 8.507059e+37
        %v5629 = vand.u32 %v5617, 2147483648
        %v5630 = vor.u32 1.1754944e-38, %v5629
        %v5631 = vsel %vm5628, %v5630, %v5626
        %v5632 = vmul.f32 %v5607, %v5631
        %v5633 = vmin.f32 %v5632, 1.0
        %v5634 = vmax.f32 %v5633, -1.0
        %v5635 = vmul.f32 %v5594, %v5594
        %v5636 = vmin.f32 16.0, %v5635
        %v5637 = vmul.f32 %v5636, 2.1237322e-06
        %v5638 = vadd.f32 %v5637, 0.00028619796
        %v5639 = vmul.f32 %v5636, %v5638
        %v5640 = vadd.f32 %v5639, 0.0036580483
        %v5641 = vmul.f32 %v5636, %v5640
        %v5642 = vadd.f32 %v5641, 0.05243302
        %v5643 = vmul.f32 %v5636, %v5642
        %v5644 = vadd.f32 %v5643, 0.18741608
        %v5645 = vmul.f32 %v5636, %v5644
        %v5646 = vadd.f32 %v5645, 1.1283791
        %v5647 = vmul.f32 %v5594, %v5646
        %v5648 = vmul.f32 %v5636, 3.8918573e-05
        %v5649 = vadd.f32 %v5648, 0.001143296
        %v5650 = vmul.f32 %v5636, %v5649
        %v5651 = vadd.f32 %v5650, 0.014752088
        %v5652 = vmul.f32 %v5636, %v5651
        %v5653 = vadd.f32 %v5652, 0.112945676
        %v5654 = vmul.f32 %v5636, %v5653
        %v5655 = vadd.f32 %v5654, 0.4994258
        %v5656 = vmul.f32 %v5636, %v5655
        %v5657 = vadd.f32 %v5656, 1.0
        %v5658 = vrcp.pop %v5657
        %v5659 = vmul.f32 %v5657, %v5658
        %v5660 = vsub.f32 1.0, %v5659
        %v5661 = vmul.f32 %v5658, %v5660
        %v5662 = vadd.f32 %v5658, %v5661
        %vm5663 = vweird.f32 %v5657
        %vm5664 = vweird.f32 %v5658
        %vm5665 = vmor %vm5663, %vm5664
        %v5666 = vsel %vm5665, %v5658, %v5662
        %v5667 = vand.u32 2147483647, %v5657
        %vm5668 = vcmp.eq.f32.partialorder %v5667, 8.507059e+37
        %v5669 = vand.u32 %v5657, 2147483648
        %v5670 = vor.u32 1.1754944e-38, %v5669
        %v5671 = vsel %vm5668, %v5670, %v5666
        %v5672 = vmul.f32 %v5647, %v5671
        %v5673 = vmin.f32 %v5672, 1.0
        %v5674 = vmax.f32 %v5673, -1.0
        %v5675 = vadd.f32 %v5634, 1.0
        %v5676 = vadd.f32 %v5674, 1.0
        %v5677 = vmul.f32 %v5584, %v5675
        %v5678 = vmul.f32 %v5585, %v5676
        %v5679 = vpack.c.bf16 %v5677, %v5677
        %v5680 = vpack.c.bf16 %v5678, %v5678
        %v5681 = vld [vmem:[%s1071] sm:$0xf]
        %v5682 = vld [vmem:[%s1071 + $0x4] sm:$0xf]
        %v5683 = vld [vmem:[%s1071 + $0x8] sm:$0xf]
        %v5684 = vld [vmem:[%s1071 + $0xc] sm:$0xf]
        %v5685 = vld [vmem:[%s1071 + $0x10] sm:$0xf]
        %v5686 = vld [vmem:[%s1071 + $0x14] sm:$0xf]
        %v5687 = vld [vmem:[%s1071 + $0x18] sm:$0xf]
        %v5688 = vld [vmem:[%s1071 + $0x1c] sm:$0xf]
        %v5689 = vld [vmem:[%s1071 + $0x20] sm:$0xf]
        %v5690 = vld [vmem:[%s1071 + $0x24] sm:$0xf]
        %v5691 = vld [vmem:[%s1071 + $0x28] sm:$0xf]
        %v5692 = vld [vmem:[%s1071 + $0x2c] sm:$0xf]
        %v5693 = vld [vmem:[%s1071 + $0x30] sm:$0xf]
        %v5694 = vld [vmem:[%s1071 + $0x34] sm:$0xf]
        %v5695 = vld [vmem:[%s1071 + $0x38] sm:$0xf]
        %v5696 = vld [vmem:[%s1071 + $0x3c] sm:$0xf]
        %v5697 = vld [vmem:[%s1071 + $0x40] sm:$0xf]
        %v5698 = vld [vmem:[%s1071 + $0x44] sm:$0xf]
        %v5699 = vld [vmem:[%s1071 + $0x48] sm:$0xf]
        %v5700 = vld [vmem:[%s1071 + $0x4c] sm:$0xf]
        %v5701 = vld [vmem:[%s1071 + $0x50] sm:$0xf]
        %v5702 = vld [vmem:[%s1071 + $0x54] sm:$0xf]
        %v5703 = vld [vmem:[%s1071 + $0x58] sm:$0xf]
        %v5704 = vld [vmem:[%s1071 + $0x5c] sm:$0xf]
        %v5705 = vld [vmem:[%s1071 + $0x60] sm:$0xf]
        %v5706 = vld [vmem:[%s1071 + $0x64] sm:$0xf]
        %v5707 = vld [vmem:[%s1071 + $0x68] sm:$0xf]
        %v5708 = vld [vmem:[%s1071 + $0x6c] sm:$0xf]
        %v5709 = vld [vmem:[%s1071 + $0x70] sm:$0xf]
        %v5710 = vld [vmem:[%s1071 + $0x74] sm:$0xf]
        %v5711 = vld [vmem:[%s1071 + $0x78] sm:$0xf]
        %v5712 = vld [vmem:[%s1071 + $0x7c] sm:$0xf]
        %v5713 = vld [vmem:[%s1074] sm:$0x1]
        %v5715 = vperm.slane %v5713, 0
        %v5749 = vunpack.c.l.b16 %v5681
        %v5750 = vunpack.c.l.b16 %v5682
        %v5751 = vunpack.c.l.b16 %v5683
        %v5752 = vunpack.c.l.b16 %v5684
        %v5753 = vunpack.c.l.b16 %v5685
        %v5754 = vunpack.c.l.b16 %v5686
        %v5755 = vunpack.c.l.b16 %v5687
        %v5756 = vunpack.c.l.b16 %v5688
        %v5757 = vunpack.c.l.b16 %v5689
        %v5758 = vunpack.c.l.b16 %v5690
        %v5759 = vunpack.c.l.b16 %v5691
        %v5760 = vunpack.c.l.b16 %v5692
        %v5761 = vunpack.c.l.b16 %v5693
        %v5762 = vunpack.c.l.b16 %v5694
        %v5763 = vunpack.c.l.b16 %v5695
        %v5764 = vunpack.c.l.b16 %v5696
        %v5765 = vunpack.c.l.b16 %v5697
        %v5766 = vunpack.c.l.b16 %v5698
        %v5767 = vunpack.c.l.b16 %v5699
        %v5768 = vunpack.c.l.b16 %v5700
        %v5769 = vunpack.c.l.b16 %v5701
        %v5770 = vunpack.c.l.b16 %v5702
        %v5771 = vunpack.c.l.b16 %v5703
        %v5772 = vunpack.c.l.b16 %v5704
        %v5773 = vunpack.c.l.b16 %v5705
        %v5774 = vunpack.c.l.b16 %v5706
        %v5775 = vunpack.c.l.b16 %v5707
        %v5776 = vunpack.c.l.b16 %v5708
        %v5777 = vunpack.c.l.b16 %v5709
        %v5778 = vunpack.c.l.b16 %v5710
        %v5779 = vunpack.c.l.b16 %v5711
        %v5780 = vunpack.c.l.b16 %v5712
        %v5781 = vpack.c.b16 %v5750, %v5749
        %v5782 = vpack.c.b16 %v5752, %v5751
        %v5783 = vpack.c.b16 %v5754, %v5753
        %v5784 = vpack.c.b16 %v5756, %v5755
        %v5785 = vpack.c.b16 %v5758, %v5757
        %v5786 = vpack.c.b16 %v5760, %v5759
        %v5787 = vpack.c.b16 %v5762, %v5761
        %v5788 = vpack.c.b16 %v5764, %v5763
        %v5789 = vpack.c.b16 %v5766, %v5765
        %v5790 = vpack.c.b16 %v5768, %v5767
        %v5791 = vpack.c.b16 %v5770, %v5769
        %v5792 = vpack.c.b16 %v5772, %v5771
        %v5793 = vpack.c.b16 %v5774, %v5773
        %v5794 = vpack.c.b16 %v5776, %v5775
        %v5795 = vpack.c.b16 %v5778, %v5777
        %v5796 = vpack.c.b16 %v5780, %v5779
        %5813 = vmatpush.bf16.msra.mxu0 %v5788
        %5814 = vmatpush.bf16.msra.mxu0 %v5787
        %5815 = vmatpush.bf16.msra.mxu0 %v5786
        %5816 = vmatpush.bf16.msra.mxu0 %v5785
        %5817 = vmatpush.bf16.msra.mxu0 %v5784
        %5818 = vmatpush.bf16.msra.mxu0 %v5783
        %5819 = vmatpush.bf16.msra.mxu0 %v5782
        %5820 = vmatpush.bf16.msra.mxu0 %v5781
        %5821 = vmatmul.bf16.gmra.mxu0 %v5679
        %v5822 = vpop.f32.mrf.mxu0
        %v5823 = vadd.f32 %v5715, %v5822
        %v5824 = vpop.f32.mrf.mxu0
        %5825 = vdwg.mxu0
        %5826 = vmatpush.bf16.msra.mxu0 %v5796
        %5827 = vmatpush.bf16.msra.mxu0 %v5795
        %5828 = vmatpush.bf16.msra.mxu0 %v5794
        %5829 = vmatpush.bf16.msra.mxu0 %v5793
        %5830 = vmatpush.bf16.msra.mxu0 %v5792
        %5831 = vmatpush.bf16.msra.mxu0 %v5791
        %5832 = vmatpush.bf16.msra.mxu0 %v5790
        %5833 = vmatpush.bf16.msra.mxu0 %v5789
        %5834 = vmatmul.bf16.gmra.mxu0 %v5680
        %v5835 = vpop.f32.mrf.mxu0
        %v5836 = vadd.f32 %v5823, %v5835
        %v5837 = vpop.f32.mrf.mxu0
        %5838 = vdwg.mxu0
        %v5839 = vadd.f32 %v5422, %v5836
        %5840 = vst [vmem:[#allocation2] sm:$0xf] %v5839
        %p5841 = scmp.eq.s32.totalorder %s45, 2
        // Predicated region
        $region157: #{vit_mlp2_forward.1} parent=131 // pred_check
          %p5842 = pneg %p5841
        $region158: #{vit_mlp2_forward.1} parent=131 // pred_check_branch
          %5844 = sbr.rel (%p5842) target = $region160
        $region159: #{vit_mlp2_forward.1} parent=131 // pred_region
          %v5845 = vld [vmem:[%s16] sm:$0x1]
          %v5846 = vld [vmem:[%s17] sm:$0x1]
          %v5847 = vsel %vm4834, %v5839, 0.0
          %5848 = vadd.xlane.f32.xlu0 %v5847
          %v5849 = vpop.xlane.xlu0 %5848
          %v5850 = vmul.f32 %v5849, %v4844
          %v5851 = vsub.f32 %v5839, %v5850
          %v5852 = vmul.f32 %v5851, %v5851
          %v5853 = vsel %vm4834, %v5852, 0.0
          %5854 = vadd.xlane.f32.xlu0 %v5853
          %v5855 = vpop.xlane.xlu0 %5854
          %v5856 = vmul.f32 %v5855, %v4844
          %v5857 = vadd.f32 %v5856, 1e-05
          %v5858 = vrsqrt.pop %v5857
          %v5859 = vmul.f32 %v5858, %v5857
          %v5860 = vmul.f32 %v5859, %v5858
          %v5861 = vmul.f32 0.5, %v5860
          %v5862 = vsub.f32 1.5, %v5861
          %v5863 = vmul.f32 %v5858, %v5862
          %vm5864 = vweird.f32 %v5857
          %vm5865 = vweird.f32 %v5858
          %vm5866 = vmor %vm5864, %vm5865
          %v5867 = vsel %vm5866, %v5858, %v5863
          %v5868 = vmul.f32 %v5851, %v5867
          %v5870 = vperm.slane %v5845, 0
          %v5872 = vmul.f32 %v5868, %v5870
          %v5874 = vperm.slane %v5846, 0
          %v5876 = vadd.f32 %v5872, %v5874
          %v5877 = vpack.c.bf16 %v5876, %v5876
          %v5879 = vrot.slane %v5877, 3
          %vm5880 = vcmask 1040384
          %v5883 = vsel %vm5880, %v5877, %v5879
          %v5884 = vsel %vm5348, %v5877, %v5879
          %v5886 = vrot.slane %v5884, 1
          %v5887 = vld [vmem:[%s19] sm:$0xf]
          %v5888 = vld [vmem:[%s18] sm:$0xff]
          %v5889 = vld [vmem:[%s18 + $0x8] sm:$0xff]
          %v5890 = vld [vmem:[%s18 + $0x10] sm:$0xff]
          %v5891 = vld [vmem:[%s18 + $0x18] sm:$0xff]
          %v5892 = vld [vmem:[%s18 + $0x20] sm:$0xff]
          %v5893 = vld [vmem:[%s18 + $0x28] sm:$0xff]
          %v5894 = vld [vmem:[%s18 + $0x30] sm:$0xff]
          %v5895 = vld [vmem:[%s18 + $0x38] sm:$0xff]
          %v5896 = vld [vmem:[%s18 + $0x40] sm:$0xff]
          %v5897 = vld [vmem:[%s18 + $0x48] sm:$0xff]
          %v5898 = vld [vmem:[%s18 + $0x50] sm:$0xff]
          %v5899 = vld [vmem:[%s18 + $0x58] sm:$0xff]
          %v5900 = vld [vmem:[%s18 + $0x60] sm:$0xff]
          %v5901 = vld [vmem:[%s18 + $0x68] sm:$0xff]
          %v5902 = vld [vmem:[%s18 + $0x70] sm:$0xff]
          %v5903 = vld [vmem:[%s18 + $0x78] sm:$0xff]
          %v5904 = vld [vmem:[%s18 + $0x80] sm:$0xff]
          %v5905 = vld [vmem:[%s18 + $0x88] sm:$0xff]
          %v5906 = vld [vmem:[%s18 + $0x90] sm:$0xff]
          %v5907 = vld [vmem:[%s18 + $0x98] sm:$0xff]
          %v5908 = vld [vmem:[%s18 + $0xa0] sm:$0xff]
          %v5909 = vld [vmem:[%s18 + $0xa8] sm:$0xff]
          %v5910 = vld [vmem:[%s18 + $0xb0] sm:$0xff]
          %v5911 = vld [vmem:[%s18 + $0xb8] sm:$0xff]
          %v5912 = vld [vmem:[%s18 + $0xc0] sm:$0xff]
          %v5913 = vld [vmem:[%s18 + $0xc8] sm:$0xff]
          %v5914 = vld [vmem:[%s18 + $0xd0] sm:$0xff]
          %v5915 = vld [vmem:[%s18 + $0xd8] sm:$0xff]
          %v5916 = vld [vmem:[%s18 + $0xe0] sm:$0xff]
          %v5917 = vld [vmem:[%s18 + $0xe8] sm:$0xff]
          %v5918 = vld [vmem:[%s18 + $0xf0] sm:$0xff]
          %v5919 = vld [vmem:[%s18 + $0xf8] sm:$0xff]
          %5920 = vst [vmem:[#allocation1] ss:$9 sm:$0xff] %v5883
          %v5921 = vld [vmem:[#allocation1] sm:$0xff]
          %5924 = vst [vmem:[#allocation1] ss:$9 sm:$0xff] %v5886
          %v5925 = vld [vmem:[#allocation1] sm:$0xff]
          %v5927 = vunpack.c.l.b16 %v5921
          %v5928 = vunpack.c.l.b16 %v5925
          %v5929 = vrot.slane %v5928, 7
          %v5930 = vsel %vm5348, %v5929, %v5927
          %v5931 = vpack.c.b16 %v5930, %v5930
          %v5965 = vunpack.c.l.b16 %v5888
          %v5966 = vunpack.c.h.b16 %v5888
          %v5967 = vunpack.c.l.b16 %v5889
          %v5968 = vunpack.c.h.b16 %v5889
          %v5969 = vunpack.c.l.b16 %v5890
          %v5970 = vunpack.c.h.b16 %v5890
          %v5971 = vunpack.c.l.b16 %v5891
          %v5972 = vunpack.c.h.b16 %v5891
          %v5973 = vunpack.c.l.b16 %v5892
          %v5974 = vunpack.c.h.b16 %v5892
          %v5975 = vunpack.c.l.b16 %v5893
          %v5976 = vunpack.c.h.b16 %v5893
          %v5977 = vunpack.c.l.b16 %v5894
          %v5978 = vunpack.c.h.b16 %v5894
          %v5979 = vunpack.c.l.b16 %v5895
          %v5980 = vunpack.c.h.b16 %v5895
          %v5981 = vunpack.c.l.b16 %v5896
          %v5982 = vunpack.c.h.b16 %v5896
          %v5983 = vunpack.c.l.b16 %v5897
          %v5984 = vunpack.c.h.b16 %v5897
          %v5985 = vunpack.c.l.b16 %v5898
          %v5986 = vunpack.c.h.b16 %v5898
          %v5987 = vunpack.c.l.b16 %v5899
          %v5988 = vunpack.c.h.b16 %v5899
          %v5989 = vunpack.c.l.b16 %v5900
          %v5990 = vunpack.c.h.b16 %v5900
          %v5991 = vunpack.c.l.b16 %v5901
          %v5992 = vunpack.c.h.b16 %v5901
          %v5993 = vunpack.c.l.b16 %v5902
          %v5994 = vunpack.c.h.b16 %v5902
          %v5995 = vunpack.c.l.b16 %v5903
          %v5996 = vunpack.c.h.b16 %v5903
          %v5997 = vunpack.c.l.b16 %v5904
          %v5998 = vunpack.c.h.b16 %v5904
          %v5999 = vunpack.c.l.b16 %v5905
          %v6000 = vunpack.c.h.b16 %v5905
          %v6001 = vunpack.c.l.b16 %v5906
          %v6002 = vunpack.c.h.b16 %v5906
          %v6003 = vunpack.c.l.b16 %v5907
          %v6004 = vunpack.c.h.b16 %v5907
          %v6005 = vunpack.c.l.b16 %v5908
          %v6006 = vunpack.c.h.b16 %v5908
          %v6007 = vunpack.c.l.b16 %v5909
          %v6008 = vunpack.c.h.b16 %v5909
          %v6009 = vunpack.c.l.b16 %v5910
          %v6010 = vunpack.c.h.b16 %v5910
          %v6011 = vunpack.c.l.b16 %v5911
          %v6012 = vunpack.c.h.b16 %v5911
          %v6013 = vunpack.c.l.b16 %v5912
          %v6014 = vunpack.c.h.b16 %v5912
          %v6015 = vunpack.c.l.b16 %v5913
          %v6016 = vunpack.c.h.b16 %v5913
          %v6017 = vunpack.c.l.b16 %v5914
          %v6018 = vunpack.c.h.b16 %v5914
          %v6019 = vunpack.c.l.b16 %v5915
          %v6020 = vunpack.c.h.b16 %v5915
          %v6021 = vunpack.c.l.b16 %v5916
          %v6022 = vunpack.c.h.b16 %v5916
          %v6023 = vunpack.c.l.b16 %v5917
          %v6024 = vunpack.c.h.b16 %v5917
          %v6025 = vunpack.c.l.b16 %v5918
          %v6026 = vunpack.c.h.b16 %v5918
          %v6027 = vunpack.c.l.b16 %v5919
          %v6028 = vunpack.c.h.b16 %v5919
          %v6029 = vpack.c.b16 %v5969, %v5965
          %v6030 = vpack.c.b16 %v5970, %v5966
          %v6031 = vpack.c.b16 %v5971, %v5967
          %v6032 = vpack.c.b16 %v5972, %v5968
          %v6033 = vpack.c.b16 %v5977, %v5973
          %v6034 = vpack.c.b16 %v5978, %v5974
          %v6035 = vpack.c.b16 %v5979, %v5975
          %v6036 = vpack.c.b16 %v5980, %v5976
          %v6037 = vpack.c.b16 %v5985, %v5981
          %v6038 = vpack.c.b16 %v5986, %v5982
          %v6039 = vpack.c.b16 %v5987, %v5983
          %v6040 = vpack.c.b16 %v5988, %v5984
          %v6041 = vpack.c.b16 %v5993, %v5989
          %v6042 = vpack.c.b16 %v5994, %v5990
          %v6043 = vpack.c.b16 %v5995, %v5991
          %v6044 = vpack.c.b16 %v5996, %v5992
          %v6045 = vpack.c.b16 %v6001, %v5997
          %v6046 = vpack.c.b16 %v6002, %v5998
          %v6047 = vpack.c.b16 %v6003, %v5999
          %v6048 = vpack.c.b16 %v6004, %v6000
          %v6049 = vpack.c.b16 %v6009, %v6005
          %v6050 = vpack.c.b16 %v6010, %v6006
          %v6051 = vpack.c.b16 %v6011, %v6007
          %v6052 = vpack.c.b16 %v6012, %v6008
          %v6053 = vpack.c.b16 %v6017, %v6013
          %v6054 = vpack.c.b16 %v6018, %v6014
          %v6055 = vpack.c.b16 %v6019, %v6015
          %v6056 = vpack.c.b16 %v6020, %v6016
          %v6057 = vpack.c.b16 %v6025, %v6021
          %v6058 = vpack.c.b16 %v6026, %v6022
          %v6059 = vpack.c.b16 %v6027, %v6023
          %v6060 = vpack.c.b16 %v6028, %v6024
          %6093 = vmatpush.bf16.msra.mxu0 %v6057
          %6094 = vmatpush.bf16.msra.mxu0 %v6053
          %6095 = vmatpush.bf16.msra.mxu0 %v6049
          %6096 = vmatpush.bf16.msra.mxu0 %v6045
          %6097 = vmatpush.bf16.msra.mxu0 %v6041
          %6098 = vmatpush.bf16.msra.mxu0 %v6037
          %6099 = vmatpush.bf16.msra.mxu0 %v6033
          %6100 = vmatpush.bf16.msra.mxu0 %v6029
          %6101 = vmatmul.bf16.gmra.mxu0 %v5931
          %v6102 = vpop.f32.mrf.mxu0
          %v6103 = vadd.f32 0.0, %v6102
          %v6104 = vpop.f32.mrf.mxu0
          %6105 = vdwg.mxu0
          %6106 = vmatpush.bf16.msra.mxu0 %v6058
          %6107 = vmatpush.bf16.msra.mxu0 %v6054
          %6108 = vmatpush.bf16.msra.mxu0 %v6050
          %6109 = vmatpush.bf16.msra.mxu0 %v6046
          %6110 = vmatpush.bf16.msra.mxu0 %v6042
          %6111 = vmatpush.bf16.msra.mxu0 %v6038
          %6112 = vmatpush.bf16.msra.mxu0 %v6034
          %6113 = vmatpush.bf16.msra.mxu0 %v6030
          %6114 = vmatmul.bf16.gmra.mxu0 %v5931
          %v6115 = vpop.f32.mrf.mxu0
          %v6116 = vadd.f32 0.0, %v6115
          %v6117 = vpop.f32.mrf.mxu0
          %6118 = vdwg.mxu0
          %6119 = vmatpush.bf16.msra.mxu0 %v6059
          %6120 = vmatpush.bf16.msra.mxu0 %v6055
          %6121 = vmatpush.bf16.msra.mxu0 %v6051
          %6122 = vmatpush.bf16.msra.mxu0 %v6047
          %6123 = vmatpush.bf16.msra.mxu0 %v6043
          %6124 = vmatpush.bf16.msra.mxu0 %v6039
          %6125 = vmatpush.bf16.msra.mxu0 %v6035
          %6126 = vmatpush.bf16.msra.mxu0 %v6031
          %6127 = vmatmul.bf16.gmra.mxu0 %v5931
          %v6128 = vpop.f32.mrf.mxu0
          %v6129 = vadd.f32 0.0, %v6128
          %v6130 = vpop.f32.mrf.mxu0
          %6131 = vdwg.mxu0
          %6132 = vmatpush.bf16.msra.mxu0 %v6060
          %6133 = vmatpush.bf16.msra.mxu0 %v6056
          %6134 = vmatpush.bf16.msra.mxu0 %v6052
          %6135 = vmatpush.bf16.msra.mxu0 %v6048
          %6136 = vmatpush.bf16.msra.mxu0 %v6044
          %6137 = vmatpush.bf16.msra.mxu0 %v6040
          %6138 = vmatpush.bf16.msra.mxu0 %v6036
          %6139 = vmatpush.bf16.msra.mxu0 %v6032
          %6140 = vmatmul.bf16.gmra.mxu0 %v5931
          %v6141 = vpop.f32.mrf.mxu0
          %v6142 = vadd.f32 0.0, %v6141
          %v6143 = vpop.f32.mrf.mxu0
          %6144 = vdwg.mxu0
          %v6146 = vperm.slane %v5887, 0
          %v6147 = vperm.slane %v5887, 1
          %v6148 = vperm.slane %v5887, 2
          %v6149 = vperm.slane %v5887, 3
          %v6154 = vadd.f32 %v6146, %v6103
          %v6155 = vadd.f32 %v6147, %v6116
          %v6156 = vadd.f32 %v6148, %v6129
          %v6157 = vadd.f32 %v6149, %v6142
          %s6158 = scalar_lea.vmem %s18, 256
          %v6159 = vld [vmem:[%s6158] sm:$0xff]
          %v6160 = vld [vmem:[%s6158 + $0x8] sm:$0xff]
          %v6161 = vld [vmem:[%s6158 + $0x10] sm:$0xff]
          %v6162 = vld [vmem:[%s6158 + $0x18] sm:$0xff]
          %v6163 = vld [vmem:[%s6158 + $0x20] sm:$0xff]
          %v6164 = vld [vmem:[%s6158 + $0x28] sm:$0xff]
          %v6165 = vld [vmem:[%s6158 + $0x30] sm:$0xff]
          %v6166 = vld [vmem:[%s6158 + $0x38] sm:$0xff]
          %v6167 = vld [vmem:[%s6158 + $0x40] sm:$0xff]
          %v6168 = vld [vmem:[%s6158 + $0x48] sm:$0xff]
          %v6169 = vld [vmem:[%s6158 + $0x50] sm:$0xff]
          %v6170 = vld [vmem:[%s6158 + $0x58] sm:$0xff]
          %v6171 = vld [vmem:[%s6158 + $0x60] sm:$0xff]
          %v6172 = vld [vmem:[%s6158 + $0x68] sm:$0xff]
          %v6173 = vld [vmem:[%s6158 + $0x70] sm:$0xff]
          %v6174 = vld [vmem:[%s6158 + $0x78] sm:$0xff]
          %v6175 = vld [vmem:[%s6158 + $0x80] sm:$0xff]
          %v6176 = vld [vmem:[%s6158 + $0x88] sm:$0xff]
          %v6177 = vld [vmem:[%s6158 + $0x90] sm:$0xff]
          %v6178 = vld [vmem:[%s6158 + $0x98] sm:$0xff]
          %v6179 = vld [vmem:[%s6158 + $0xa0] sm:$0xff]
          %v6180 = vld [vmem:[%s6158 + $0xa8] sm:$0xff]
          %v6181 = vld [vmem:[%s6158 + $0xb0] sm:$0xff]
          %v6182 = vld [vmem:[%s6158 + $0xb8] sm:$0xff]
          %v6183 = vld [vmem:[%s6158 + $0xc0] sm:$0xff]
          %v6184 = vld [vmem:[%s6158 + $0xc8] sm:$0xff]
          %v6185 = vld [vmem:[%s6158 + $0xd0] sm:$0xff]
          %v6186 = vld [vmem:[%s6158 + $0xd8] sm:$0xff]
          %v6187 = vld [vmem:[%s6158 + $0xe0] sm:$0xff]
          %v6188 = vld [vmem:[%s6158 + $0xe8] sm:$0xff]
          %v6189 = vld [vmem:[%s6158 + $0xf0] sm:$0xff]
          %v6190 = vld [vmem:[%s6158 + $0xf8] sm:$0xff]
          %6191 = vst [vmem:[#allocation1] ss:$9 sm:$0xff] %v5883
          %v6192 = vld [vmem:[#allocation1] sm:$0xff]
          %6194 = vst [vmem:[#allocation1] ss:$9 sm:$0xff] %v5886
          %v6195 = vld [vmem:[#allocation1] sm:$0xff]
          %v6197 = vunpack.c.l.b16 %v6192
          %v6198 = vunpack.c.l.b16 %v6195
          %v6199 = vrot.slane %v6197, 1
          %v6200 = vsel %vm5348, %v6198, %v6199
          %v6201 = vpack.c.b16 %v6200, %v6200
          %v6235 = vunpack.c.l.b16 %v6159
          %v6236 = vunpack.c.h.b16 %v6159
          %v6237 = vunpack.c.l.b16 %v6160
          %v6238 = vunpack.c.h.b16 %v6160
          %v6239 = vunpack.c.l.b16 %v6161
          %v6240 = vunpack.c.h.b16 %v6161
          %v6241 = vunpack.c.l.b16 %v6162
          %v6242 = vunpack.c.h.b16 %v6162
          %v6243 = vunpack.c.l.b16 %v6163
          %v6244 = vunpack.c.h.b16 %v6163
          %v6245 = vunpack.c.l.b16 %v6164
          %v6246 = vunpack.c.h.b16 %v6164
          %v6247 = vunpack.c.l.b16 %v6165
          %v6248 = vunpack.c.h.b16 %v6165
          %v6249 = vunpack.c.l.b16 %v6166
          %v6250 = vunpack.c.h.b16 %v6166
          %v6251 = vunpack.c.l.b16 %v6167
          %v6252 = vunpack.c.h.b16 %v6167
          %v6253 = vunpack.c.l.b16 %v6168
          %v6254 = vunpack.c.h.b16 %v6168
          %v6255 = vunpack.c.l.b16 %v6169
          %v6256 = vunpack.c.h.b16 %v6169
          %v6257 = vunpack.c.l.b16 %v6170
          %v6258 = vunpack.c.h.b16 %v6170
          %v6259 = vunpack.c.l.b16 %v6171
          %v6260 = vunpack.c.h.b16 %v6171
          %v6261 = vunpack.c.l.b16 %v6172
          %v6262 = vunpack.c.h.b16 %v6172
          %v6263 = vunpack.c.l.b16 %v6173
          %v6264 = vunpack.c.h.b16 %v6173
          %v6265 = vunpack.c.l.b16 %v6174
          %v6266 = vunpack.c.h.b16 %v6174
          %v6267 = vunpack.c.l.b16 %v6175
          %v6268 = vunpack.c.h.b16 %v6175
          %v6269 = vunpack.c.l.b16 %v6176
          %v6270 = vunpack.c.h.b16 %v6176
          %v6271 = vunpack.c.l.b16 %v6177
          %v6272 = vunpack.c.h.b16 %v6177
          %v6273 = vunpack.c.l.b16 %v6178
          %v6274 = vunpack.c.h.b16 %v6178
          %v6275 = vunpack.c.l.b16 %v6179
          %v6276 = vunpack.c.h.b16 %v6179
          %v6277 = vunpack.c.l.b16 %v6180
          %v6278 = vunpack.c.h.b16 %v6180
          %v6279 = vunpack.c.l.b16 %v6181
          %v6280 = vunpack.c.h.b16 %v6181
          %v6281 = vunpack.c.l.b16 %v6182
          %v6282 = vunpack.c.h.b16 %v6182
          %v6283 = vunpack.c.l.b16 %v6183
          %v6284 = vunpack.c.h.b16 %v6183
          %v6285 = vunpack.c.l.b16 %v6184
          %v6286 = vunpack.c.h.b16 %v6184
          %v6287 = vunpack.c.l.b16 %v6185
          %v6288 = vunpack.c.h.b16 %v6185
          %v6289 = vunpack.c.l.b16 %v6186
          %v6290 = vunpack.c.h.b16 %v6186
          %v6291 = vunpack.c.l.b16 %v6187
          %v6292 = vunpack.c.h.b16 %v6187
          %v6293 = vunpack.c.l.b16 %v6188
          %v6294 = vunpack.c.h.b16 %v6188
          %v6295 = vunpack.c.l.b16 %v6189
          %v6296 = vunpack.c.h.b16 %v6189
          %v6297 = vunpack.c.l.b16 %v6190
          %v6298 = vunpack.c.h.b16 %v6190
          %v6299 = vpack.c.b16 %v6239, %v6235
          %v6300 = vpack.c.b16 %v6240, %v6236
          %v6301 = vpack.c.b16 %v6241, %v6237
          %v6302 = vpack.c.b16 %v6242, %v6238
          %v6303 = vpack.c.b16 %v6247, %v6243
          %v6304 = vpack.c.b16 %v6248, %v6244
          %v6305 = vpack.c.b16 %v6249, %v6245
          %v6306 = vpack.c.b16 %v6250, %v6246
          %v6307 = vpack.c.b16 %v6255, %v6251
          %v6308 = vpack.c.b16 %v6256, %v6252
          %v6309 = vpack.c.b16 %v6257, %v6253
          %v6310 = vpack.c.b16 %v6258, %v6254
          %v6311 = vpack.c.b16 %v6263, %v6259
          %v6312 = vpack.c.b16 %v6264, %v6260
          %v6313 = vpack.c.b16 %v6265, %v6261
          %v6314 = vpack.c.b16 %v6266, %v6262
          %v6315 = vpack.c.b16 %v6271, %v6267
          %v6316 = vpack.c.b16 %v6272, %v6268
          %v6317 = vpack.c.b16 %v6273, %v6269
          %v6318 = vpack.c.b16 %v6274, %v6270
          %v6319 = vpack.c.b16 %v6279, %v6275
          %v6320 = vpack.c.b16 %v6280, %v6276
          %v6321 = vpack.c.b16 %v6281, %v6277
          %v6322 = vpack.c.b16 %v6282, %v6278
          %v6323 = vpack.c.b16 %v6287, %v6283
          %v6324 = vpack.c.b16 %v6288, %v6284
          %v6325 = vpack.c.b16 %v6289, %v6285
          %v6326 = vpack.c.b16 %v6290, %v6286
          %v6327 = vpack.c.b16 %v6295, %v6291
          %v6328 = vpack.c.b16 %v6296, %v6292
          %v6329 = vpack.c.b16 %v6297, %v6293
          %v6330 = vpack.c.b16 %v6298, %v6294
          %6363 = vmatpush.bf16.msra.mxu0 %v6327
          %6364 = vmatpush.bf16.msra.mxu0 %v6323
          %6365 = vmatpush.bf16.msra.mxu0 %v6319
          %6366 = vmatpush.bf16.msra.mxu0 %v6315
          %6367 = vmatpush.bf16.msra.mxu0 %v6311
          %6368 = vmatpush.bf16.msra.mxu0 %v6307
          %6369 = vmatpush.bf16.msra.mxu0 %v6303
          %6370 = vmatpush.bf16.msra.mxu0 %v6299
          %6371 = vmatmul.bf16.gmra.mxu0 %v6201
          %v6372 = vpop.f32.mrf.mxu0
          %v6373 = vadd.f32 0.0, %v6372
          %v6374 = vpop.f32.mrf.mxu0
          %6375 = vdwg.mxu0
          %6376 = vmatpush.bf16.msra.mxu0 %v6328
          %6377 = vmatpush.bf16.msra.mxu0 %v6324
          %6378 = vmatpush.bf16.msra.mxu0 %v6320
          %6379 = vmatpush.bf16.msra.mxu0 %v6316
          %6380 = vmatpush.bf16.msra.mxu0 %v6312
          %6381 = vmatpush.bf16.msra.mxu0 %v6308
          %6382 = vmatpush.bf16.msra.mxu0 %v6304
          %6383 = vmatpush.bf16.msra.mxu0 %v6300
          %6384 = vmatmul.bf16.gmra.mxu0 %v6201
          %v6385 = vpop.f32.mrf.mxu0
          %v6386 = vadd.f32 0.0, %v6385
          %v6387 = vpop.f32.mrf.mxu0
          %6388 = vdwg.mxu0
          %6389 = vmatpush.bf16.msra.mxu0 %v6329
          %6390 = vmatpush.bf16.msra.mxu0 %v6325
          %6391 = vmatpush.bf16.msra.mxu0 %v6321
          %6392 = vmatpush.bf16.msra.mxu0 %v6317
          %6393 = vmatpush.bf16.msra.mxu0 %v6313
          %6394 = vmatpush.bf16.msra.mxu0 %v6309
          %6395 = vmatpush.bf16.msra.mxu0 %v6305
          %6396 = vmatpush.bf16.msra.mxu0 %v6301
          %6397 = vmatmul.bf16.gmra.mxu0 %v6201
          %v6398 = vpop.f32.mrf.mxu0
          %v6399 = vadd.f32 0.0, %v6398
          %v6400 = vpop.f32.mrf.mxu0
          %6401 = vdwg.mxu0
          %6402 = vmatpush.bf16.msra.mxu0 %v6330
          %6403 = vmatpush.bf16.msra.mxu0 %v6326
          %6404 = vmatpush.bf16.msra.mxu0 %v6322
          %6405 = vmatpush.bf16.msra.mxu0 %v6318
          %6406 = vmatpush.bf16.msra.mxu0 %v6314
          %6407 = vmatpush.bf16.msra.mxu0 %v6310
          %6408 = vmatpush.bf16.msra.mxu0 %v6306
          %6409 = vmatpush.bf16.msra.mxu0 %v6302
          %6410 = vmatmul.bf16.gmra.mxu0 %v6201
          %v6411 = vpop.f32.mrf.mxu0
          %v6412 = vadd.f32 0.0, %v6411
          %v6413 = vpop.f32.mrf.mxu0
          %6414 = vdwg.mxu0
          %v6415 = vadd.f32 %v6154, %v6373
          %v6416 = vadd.f32 %v6155, %v6386
          %v6417 = vadd.f32 %v6156, %v6399
          %v6418 = vadd.f32 %v6157, %v6412
          %v6419 = vld [vmem:[%s20] sm:$0xf]
          %v6421 = vperm.slane %v6419, 0
          %v6422 = vperm.slane %v6419, 1
          %v6423 = vperm.slane %v6419, 2
          %v6424 = vperm.slane %v6419, 3
          %v6429 = vmul.f32 %v6415, %v6421
          %v6430 = vmul.f32 %v6416, %v6422
          %v6431 = vmul.f32 %v6417, %v6423
          %v6432 = vmul.f32 %v6418, %v6424
          %v6433 = vld [vmem:[%s21] sm:$0xf]
          %v6435 = vperm.slane %v6433, 0
          %v6436 = vperm.slane %v6433, 1
          %v6437 = vperm.slane %v6433, 2
          %v6438 = vperm.slane %v6433, 3
          %v6443 = vadd.f32 %v6429, %v6435
          %v6444 = vadd.f32 %v6430, %v6436
          %v6445 = vadd.f32 %v6431, %v6437
          %v6446 = vadd.f32 %v6432, %v6438
          %vm6447 = vcmp.ge.f32.partialorder %v6443, 0.0
          %vm6448 = vcmp.ge.f32.partialorder %v6444, 0.0
          %vm6449 = vcmp.ge.f32.partialorder %v6445, 0.0
          %vm6450 = vcmp.ge.f32.partialorder %v6446, 0.0
          %v6451 = vmul.f32 %v6443, 0.01
          %v6452 = vmul.f32 %v6444, 0.01
          %v6453 = vmul.f32 %v6445, 0.01
          %v6454 = vmul.f32 %v6446, 0.01
          %v6455 = vsel %vm6447, %v6443, %v6451
          %v6456 = vsel %vm6448, %v6444, %v6452
          %v6457 = vsel %vm6449, %v6445, %v6453
          %v6458 = vsel %vm6450, %v6446, %v6454
          %v6459 = vpack.c.bf16 %v6455, %v6455
          %v6460 = vpack.c.bf16 %v6456, %v6456
          %v6461 = vpack.c.bf16 %v6457, %v6457
          %v6462 = vpack.c.bf16 %v6458, %v6458
          %v6463 = vld [vmem:[#allocation6] sm:$0xf]
          %v6464 = vld [vmem:[#allocation6 + $0x4] sm:$0xf]
          %v6465 = vld [vmem:[#allocation6 + $0x8] sm:$0xf]
          %v6466 = vld [vmem:[#allocation6 + $0xc] sm:$0xf]
          %v6467 = vld [vmem:[#allocation6 + $0x10] sm:$0xf]
          %v6468 = vld [vmem:[#allocation6 + $0x14] sm:$0xf]
          %v6469 = vld [vmem:[#allocation6 + $0x18] sm:$0xf]
          %v6470 = vld [vmem:[#allocation6 + $0x1c] sm:$0xf]
          %v6471 = vld [vmem:[#allocation6 + $0x20] sm:$0xf]
          %v6472 = vld [vmem:[#allocation6 + $0x24] sm:$0xf]
          %v6473 = vld [vmem:[#allocation6 + $0x28] sm:$0xf]
          %v6474 = vld [vmem:[#allocation6 + $0x2c] sm:$0xf]
          %v6475 = vld [vmem:[#allocation6 + $0x30] sm:$0xf]
          %v6476 = vld [vmem:[#allocation6 + $0x34] sm:$0xf]
          %v6477 = vld [vmem:[#allocation6 + $0x38] sm:$0xf]
          %v6478 = vld [vmem:[#allocation6 + $0x3c] sm:$0xf]
          %v6479 = vld [vmem:[#allocation6 + $0x40] sm:$0xf]
          %v6480 = vld [vmem:[#allocation6 + $0x44] sm:$0xf]
          %v6481 = vld [vmem:[#allocation6 + $0x48] sm:$0xf]
          %v6482 = vld [vmem:[#allocation6 + $0x4c] sm:$0xf]
          %v6483 = vld [vmem:[#allocation6 + $0x50] sm:$0xf]
          %v6484 = vld [vmem:[#allocation6 + $0x54] sm:$0xf]
          %v6485 = vld [vmem:[#allocation6 + $0x58] sm:$0xf]
          %v6486 = vld [vmem:[#allocation6 + $0x5c] sm:$0xf]
          %v6487 = vld [vmem:[#allocation6 + $0x60] sm:$0xf]
          %v6488 = vld [vmem:[#allocation6 + $0x64] sm:$0xf]
          %v6489 = vld [vmem:[#allocation6 + $0x68] sm:$0xf]
          %v6490 = vld [vmem:[#allocation6 + $0x6c] sm:$0xf]
          %v6491 = vld [vmem:[#allocation6 + $0x70] sm:$0xf]
          %v6492 = vld [vmem:[#allocation6 + $0x74] sm:$0xf]
          %v6493 = vld [vmem:[#allocation6 + $0x78] sm:$0xf]
          %v6494 = vld [vmem:[#allocation6 + $0x7c] sm:$0xf]
          %v6495 = vld [vmem:[#allocation6 + $0x80] sm:$0xf]
          %v6496 = vld [vmem:[#allocation6 + $0x84] sm:$0xf]
          %v6497 = vld [vmem:[#allocation6 + $0x88] sm:$0xf]
          %v6498 = vld [vmem:[#allocation6 + $0x8c] sm:$0xf]
          %v6499 = vld [vmem:[#allocation6 + $0x90] sm:$0xf]
          %v6500 = vld [vmem:[#allocation6 + $0x94] sm:$0xf]
          %v6501 = vld [vmem:[#allocation6 + $0x98] sm:$0xf]
          %v6502 = vld [vmem:[#allocation6 + $0x9c] sm:$0xf]
          %v6503 = vld [vmem:[#allocation6 + $0xa0] sm:$0xf]
          %v6504 = vld [vmem:[#allocation6 + $0xa4] sm:$0xf]
          %v6505 = vld [vmem:[#allocation6 + $0xa8] sm:$0xf]
          %v6506 = vld [vmem:[#allocation6 + $0xac] sm:$0xf]
          %v6507 = vld [vmem:[#allocation6 + $0xb0] sm:$0xf]
          %v6508 = vld [vmem:[#allocation6 + $0xb4] sm:$0xf]
          %v6509 = vld [vmem:[#allocation6 + $0xb8] sm:$0xf]
          %v6510 = vld [vmem:[#allocation6 + $0xbc] sm:$0xf]
          %v6511 = vld [vmem:[#allocation6 + $0xc0] sm:$0xf]
          %v6512 = vld [vmem:[#allocation6 + $0xc4] sm:$0xf]
          %v6513 = vld [vmem:[#allocation6 + $0xc8] sm:$0xf]
          %v6514 = vld [vmem:[#allocation6 + $0xcc] sm:$0xf]
          %v6515 = vld [vmem:[#allocation6 + $0xd0] sm:$0xf]
          %v6516 = vld [vmem:[#allocation6 + $0xd4] sm:$0xf]
          %v6517 = vld [vmem:[#allocation6 + $0xd8] sm:$0xf]
          %v6518 = vld [vmem:[#allocation6 + $0xdc] sm:$0xf]
          %v6519 = vld [vmem:[#allocation6 + $0xe0] sm:$0xf]
          %v6520 = vld [vmem:[#allocation6 + $0xe4] sm:$0xf]
          %v6521 = vld [vmem:[#allocation6 + $0xe8] sm:$0xf]
          %v6522 = vld [vmem:[#allocation6 + $0xec] sm:$0xf]
          %v6523 = vld [vmem:[#allocation6 + $0xf0] sm:$0xf]
          %v6524 = vld [vmem:[#allocation6 + $0xf4] sm:$0xf]
          %v6525 = vld [vmem:[#allocation6 + $0xf8] sm:$0xf]
          %v6526 = vld [vmem:[#allocation6 + $0xfc] sm:$0xf]
          %v6527 = vld [vmem:[%s23] sm:$0x1]
          %v6529 = vperm.slane %v6527, 0
          %v6595 = vunpack.c.l.b16 %v6463
          %v6596 = vunpack.c.l.b16 %v6464
          %v6597 = vunpack.c.l.b16 %v6465
          %v6598 = vunpack.c.l.b16 %v6466
          %v6599 = vunpack.c.l.b16 %v6467
          %v6600 = vunpack.c.l.b16 %v6468
          %v6601 = vunpack.c.l.b16 %v6469
          %v6602 = vunpack.c.l.b16 %v6470
          %v6603 = vunpack.c.l.b16 %v6471
          %v6604 = vunpack.c.l.b16 %v6472
          %v6605 = vunpack.c.l.b16 %v6473
          %v6606 = vunpack.c.l.b16 %v6474
          %v6607 = vunpack.c.l.b16 %v6475
          %v6608 = vunpack.c.l.b16 %v6476
          %v6609 = vunpack.c.l.b16 %v6477
          %v6610 = vunpack.c.l.b16 %v6478
          %v6611 = vunpack.c.l.b16 %v6479
          %v6612 = vunpack.c.l.b16 %v6480
          %v6613 = vunpack.c.l.b16 %v6481
          %v6614 = vunpack.c.l.b16 %v6482
          %v6615 = vunpack.c.l.b16 %v6483
          %v6616 = vunpack.c.l.b16 %v6484
          %v6617 = vunpack.c.l.b16 %v6485
          %v6618 = vunpack.c.l.b16 %v6486
          %v6619 = vunpack.c.l.b16 %v6487
          %v6620 = vunpack.c.l.b16 %v6488
          %v6621 = vunpack.c.l.b16 %v6489
          %v6622 = vunpack.c.l.b16 %v6490
          %v6623 = vunpack.c.l.b16 %v6491
          %v6624 = vunpack.c.l.b16 %v6492
          %v6625 = vunpack.c.l.b16 %v6493
          %v6626 = vunpack.c.l.b16 %v6494
          %v6627 = vunpack.c.l.b16 %v6495
          %v6628 = vunpack.c.l.b16 %v6496
          %v6629 = vunpack.c.l.b16 %v6497
          %v6630 = vunpack.c.l.b16 %v6498
          %v6631 = vunpack.c.l.b16 %v6499
          %v6632 = vunpack.c.l.b16 %v6500
          %v6633 = vunpack.c.l.b16 %v6501
          %v6634 = vunpack.c.l.b16 %v6502
          %v6635 = vunpack.c.l.b16 %v6503
          %v6636 = vunpack.c.l.b16 %v6504
          %v6637 = vunpack.c.l.b16 %v6505
          %v6638 = vunpack.c.l.b16 %v6506
          %v6639 = vunpack.c.l.b16 %v6507
          %v6640 = vunpack.c.l.b16 %v6508
          %v6641 = vunpack.c.l.b16 %v6509
          %v6642 = vunpack.c.l.b16 %v6510
          %v6643 = vunpack.c.l.b16 %v6511
          %v6644 = vunpack.c.l.b16 %v6512
          %v6645 = vunpack.c.l.b16 %v6513
          %v6646 = vunpack.c.l.b16 %v6514
          %v6647 = vunpack.c.l.b16 %v6515
          %v6648 = vunpack.c.l.b16 %v6516
          %v6649 = vunpack.c.l.b16 %v6517
          %v6650 = vunpack.c.l.b16 %v6518
          %v6651 = vunpack.c.l.b16 %v6519
          %v6652 = vunpack.c.l.b16 %v6520
          %v6653 = vunpack.c.l.b16 %v6521
          %v6654 = vunpack.c.l.b16 %v6522
          %v6655 = vunpack.c.l.b16 %v6523
          %v6656 = vunpack.c.l.b16 %v6524
          %v6657 = vunpack.c.l.b16 %v6525
          %v6658 = vunpack.c.l.b16 %v6526
          %v6659 = vpack.c.b16 %v6596, %v6595
          %v6660 = vpack.c.b16 %v6598, %v6597
          %v6661 = vpack.c.b16 %v6600, %v6599
          %v6662 = vpack.c.b16 %v6602, %v6601
          %v6663 = vpack.c.b16 %v6604, %v6603
          %v6664 = vpack.c.b16 %v6606, %v6605
          %v6665 = vpack.c.b16 %v6608, %v6607
          %v6666 = vpack.c.b16 %v6610, %v6609
          %v6667 = vpack.c.b16 %v6612, %v6611
          %v6668 = vpack.c.b16 %v6614, %v6613
          %v6669 = vpack.c.b16 %v6616, %v6615
          %v6670 = vpack.c.b16 %v6618, %v6617
          %v6671 = vpack.c.b16 %v6620, %v6619
          %v6672 = vpack.c.b16 %v6622, %v6621
          %v6673 = vpack.c.b16 %v6624, %v6623
          %v6674 = vpack.c.b16 %v6626, %v6625
          %v6675 = vpack.c.b16 %v6628, %v6627
          %v6676 = vpack.c.b16 %v6630, %v6629
          %v6677 = vpack.c.b16 %v6632, %v6631
          %v6678 = vpack.c.b16 %v6634, %v6633
          %v6679 = vpack.c.b16 %v6636, %v6635
          %v6680 = vpack.c.b16 %v6638, %v6637
          %v6681 = vpack.c.b16 %v6640, %v6639
          %v6682 = vpack.c.b16 %v6642, %v6641
          %v6683 = vpack.c.b16 %v6644, %v6643
          %v6684 = vpack.c.b16 %v6646, %v6645
          %v6685 = vpack.c.b16 %v6648, %v6647
          %v6686 = vpack.c.b16 %v6650, %v6649
          %v6687 = vpack.c.b16 %v6652, %v6651
          %v6688 = vpack.c.b16 %v6654, %v6653
          %v6689 = vpack.c.b16 %v6656, %v6655
          %v6690 = vpack.c.b16 %v6658, %v6657
          %6723 = vmatpush.bf16.msra.mxu0 %v6666
          %6724 = vmatpush.bf16.msra.mxu0 %v6665
          %6725 = vmatpush.bf16.msra.mxu0 %v6664
          %6726 = vmatpush.bf16.msra.mxu0 %v6663
          %6727 = vmatpush.bf16.msra.mxu0 %v6662
          %6728 = vmatpush.bf16.msra.mxu0 %v6661
          %6729 = vmatpush.bf16.msra.mxu0 %v6660
          %6730 = vmatpush.bf16.msra.mxu0 %v6659
          %6731 = vmatmul.bf16.gmra.mxu0 %v6459
          %v6732 = vpop.f32.mrf.mxu0
          %v6733 = vadd.f32 %v6529, %v6732
          %v6734 = vpop.f32.mrf.mxu0
          %6735 = vdwg.mxu0
          %6736 = vmatpush.bf16.msra.mxu0 %v6674
          %6737 = vmatpush.bf16.msra.mxu0 %v6673
          %6738 = vmatpush.bf16.msra.mxu0 %v6672
          %6739 = vmatpush.bf16.msra.mxu0 %v6671
          %6740 = vmatpush.bf16.msra.mxu0 %v6670
          %6741 = vmatpush.bf16.msra.mxu0 %v6669
          %6742 = vmatpush.bf16.msra.mxu0 %v6668
          %6743 = vmatpush.bf16.msra.mxu0 %v6667
          %6744 = vmatmul.bf16.gmra.mxu0 %v6460
          %v6745 = vpop.f32.mrf.mxu0
          %v6746 = vadd.f32 %v6733, %v6745
          %v6747 = vpop.f32.mrf.mxu0
          %6748 = vdwg.mxu0
          %6749 = vmatpush.bf16.msra.mxu0 %v6682
          %6750 = vmatpush.bf16.msra.mxu0 %v6681
          %6751 = vmatpush.bf16.msra.mxu0 %v6680
          %6752 = vmatpush.bf16.msra.mxu0 %v6679
          %6753 = vmatpush.bf16.msra.mxu0 %v6678
          %6754 = vmatpush.bf16.msra.mxu0 %v6677
          %6755 = vmatpush.bf16.msra.mxu0 %v6676
          %6756 = vmatpush.bf16.msra.mxu0 %v6675
          %6757 = vmatmul.bf16.gmra.mxu0 %v6461
          %v6758 = vpop.f32.mrf.mxu0
          %v6759 = vadd.f32 %v6746, %v6758
          %v6760 = vpop.f32.mrf.mxu0
          %6761 = vdwg.mxu0
          %6762 = vmatpush.bf16.msra.mxu0 %v6690
          %6763 = vmatpush.bf16.msra.mxu0 %v6689
          %6764 = vmatpush.bf16.msra.mxu0 %v6688
          %6765 = vmatpush.bf16.msra.mxu0 %v6687
          %6766 = vmatpush.bf16.msra.mxu0 %v6686
          %6767 = vmatpush.bf16.msra.mxu0 %v6685
          %6768 = vmatpush.bf16.msra.mxu0 %v6684
          %6769 = vmatpush.bf16.msra.mxu0 %v6683
          %6770 = vmatmul.bf16.gmra.mxu0 %v6462
          %v6771 = vpop.f32.mrf.mxu0
          %v6772 = vadd.f32 %v6759, %v6771
          %v6773 = vpop.f32.mrf.mxu0
          %6774 = vdwg.mxu0
          %v6775 = vld [vmem:[#allocation8] sm:$0x1]
          %v6777 = vperm.slane %v6775, 0
          %v6779 = vmul.f32 %v6772, %v6777
          %v6780 = vld [vmem:[#allocation9] sm:$0x1]
          %v6782 = vperm.slane %v6780, 0
          %v6784 = vadd.f32 %v6779, %v6782
          %vm6785 = vcmp.ge.f32.partialorder %v6784, 0.0
          %v6786 = vmul.f32 %v6784, 0.01
          %v6787 = vsel %vm6785, %v6784, %v6786
          %v6788 = vld [vmem:[%s26] sm:$0xff]
          %v6789 = vld [vmem:[%s26 + $0x8] sm:$0xff]
          %v6790 = vld [vmem:[%s26 + $0x10] sm:$0xff]
          %v6791 = vld [vmem:[%s26 + $0x18] sm:$0xff]
          %v6792 = vld [vmem:[%s26 + $0x20] sm:$0xff]
          %v6793 = vld [vmem:[%s26 + $0x28] sm:$0xff]
          %v6794 = vld [vmem:[%s26 + $0x30] sm:$0xff]
          %v6795 = vld [vmem:[%s26 + $0x38] sm:$0xff]
          %v6796 = vld [vmem:[%s26 + $0x40] sm:$0xff]
          %v6797 = vld [vmem:[%s26 + $0x48] sm:$0xff]
          %v6798 = vld [vmem:[%s26 + $0x50] sm:$0xff]
          %v6799 = vld [vmem:[%s26 + $0x58] sm:$0xff]
          %v6800 = vld [vmem:[%s26 + $0x60] sm:$0xff]
          %v6801 = vld [vmem:[%s26 + $0x68] sm:$0xff]
          %v6802 = vld [vmem:[%s26 + $0x70] sm:$0xff]
          %v6803 = vld [vmem:[%s26 + $0x78] sm:$0xff]
          %v6804 = vld [vmem:[#allocation11] sm:$0x1]
          %v6806 = vperm.slane %v6804, 0
          %6808 = vmatpush.msra.mxu0 %v6803
          %6809 = vmatpush.msra.mxu0 %v6802
          %6810 = vmatpush.msra.mxu0 %v6801
          %6811 = vmatpush.msra.mxu0 %v6800
          %6812 = vmatpush.msra.mxu0 %v6799
          %6813 = vmatpush.msra.mxu0 %v6798
          %6814 = vmatpush.msra.mxu0 %v6797
          %6815 = vmatpush.msra.mxu0 %v6796
          %6816 = vmatpush.msra.mxu0 %v6795
          %6817 = vmatpush.msra.mxu0 %v6794
          %6818 = vmatpush.msra.mxu0 %v6793
          %6819 = vmatpush.msra.mxu0 %v6792
          %6820 = vmatpush.msra.mxu0 %v6791
          %6821 = vmatpush.msra.mxu0 %v6790
          %6822 = vmatpush.msra.mxu0 %v6789
          %6823 = vmatpush.msra.mxu0 %v6788
          %6824 = vmatmul.f32.gmra.mxu0 %v6787
          %v6825 = vpop.f32.mrf.mxu0
          %v6826 = vadd.f32 %v6806, %v6825
          %6827 = vdwg.mxu0
          %v6828 = vmul.f32 %v6826, %v6826
          %vm6829 = vcmask 17408
          %v6830 = vsel %vm6829, %v6828, 0.0
          %6831 = vadd.xlane.f32.xlu0 %v6830
          %v6832 = vpop.xlane.xlu0 %6831
          %v6833 = vrsqrt.pop %v6832
          %v6834 = vmul.f32 %v6833, %v6832
          %v6835 = vmul.f32 %v6834, %v6833
          %v6836 = vmul.f32 0.5, %v6835
          %v6837 = vsub.f32 1.5, %v6836
          %v6838 = vmul.f32 %v6833, %v6837
          %v6839 = vmul.f32 %v6832, %v6838
          %vm6840 = vcmp.eq.f32.partialorder %v6832, inf
          %v6841 = vsel %vm6840, %v6832, %v6839
          %vm6842 = vcmp.eq.f32.partialorder %v6832, 0.0
          %v6843 = vand.u32 %v6832, 2147483648
          %v6844 = vsel %vm6842, %v6843, %v6841
          %v6845 = vmax.f32 %v6844, 1e-12
          %v6846 = vrcp.pop %v6845
          %v6847 = vmul.f32 %v6845, %v6846
          %v6848 = vsub.f32 1.0, %v6847
          %v6849 = vmul.f32 %v6846, %v6848
          %v6850 = vadd.f32 %v6846, %v6849
          %vm6851 = vweird.f32 %v6845
          %vm6852 = vweird.f32 %v6846
          %vm6853 = vmor %vm6851, %vm6852
          %v6854 = vsel %vm6853, %v6846, %v6850
          %v6855 = vand.u32 2147483647, %v6845
          %vm6856 = vcmp.eq.f32.partialorder %v6855, 8.507059e+37
          %v6857 = vand.u32 %v6845, 2147483648
          %v6858 = vor.u32 1.1754944e-38, %v6857
          %v6859 = vsel %vm6856, %v6858, %v6854
          %v6860 = vmul.f32 %v6826, %v6859
          %6861 = vst.msk [vmem:[#allocation12] sm:$0x3] %vm6829, %v6860
        $region160: #{vit_mlp2_forward.1} parent=131 // pred_fallthru
          _
        // Predicated region
        $region161: #{vit_mlp2_forward.1} parent=131 // pred_check
          %p6862 = pneg %p701
        $region162: #{vit_mlp2_forward.1} parent=131 // pred_check_branch
          %6864 = sbr.rel (%p6862) target = $region164
        $region163: #{vit_mlp2_forward.1} parent=131 // pred_region
          %6866 = vsyncadd [#allocation5], 0
          %s6868 = sshll.u32 [#allocation12], 4
          %s6869 = int_to_ptr.vmem [resolvable:$true] %s6868
          %s6870 = sshll.u32 %s28, 4
          %s6871 = int_to_ptr.hbm [resolvable:$true] %s6870
          %6873 = dma.vmem_to_hbm [thread:$0]  %s6869, 32, %s6871, [#allocation5]
        $region164: #{vit_mlp2_forward.1} parent=131 // pred_fallthru
          _
        // Predicated region
        $region165: #{vit_mlp2_forward.1} parent=131 // pred_check
          %p6874 = pneg %p701
        $region166: #{vit_mlp2_forward.1} parent=131 // pred_check_branch
          %6876 = sbr.rel (%p6874) target = $region168
        $region167: #{vit_mlp2_forward.1} parent=131 // pred_region
          %6878 = dma.done [#allocation5], 32
        $region168: #{vit_mlp2_forward.1} parent=131 // pred_fallthru
          _
      $region132: #{vit_mlp2_forward.1} parent=5 // pred_fallthru
        _
      %p6879 = scmp.le.s32.totalorder 2, %s40
      // Predicated region
      $region169: #{vit_mlp2_forward.1} parent=5 // pred_check
        %p6880 = pneg %p6879
      $region170: #{vit_mlp2_forward.1} parent=5 // pred_check_branch
        %6882 = sbr.rel (%p6880) target = $region172
      $region171: #{vit_mlp2_forward.1} parent=5 // pred_region
        %s6883 = ssub.s32 %s40, 2
      $region172: #{vit_mlp2_forward.1} parent=5 // pred_fallthru
        _
    $region6: #{vit_mlp2_forward.1} parent=1 // loop_footer
      %s44 = sadd.s32 1, %s40
    $region7: #{vit_mlp2_forward.1} parent=1 // loop_footer_branch
      %39 = sbr.rel target = $region3
    $region8: #{vit_mlp2_forward.1} parent=1 // loop_exit
      _
    %6884 = vsyncpa [#allocation4], 1
    %s6885 = scalar_lea.sflag [#allocation4], 1
    %6886 = vsyncpa %s6885, 1
    %6887 = vsyncpa [#allocation7], 1
    %6888 = vsyncpa [#allocation10], 1
    %6889 = vsyncpa [#allocation5], 1
    %s6890 = scalar_lea.sflag [#allocation5], 1
    %6891 = vsyncpa %s6890, 1

</llo_original>
